<compile_context>
chip_gen: v6e
topology: v6e:2x2x1
jax: 0.10.0
libtpu: 0.0.40
codegen_flags: <defaults>
</compile_context>

<pallas_src>
import functools
import math

import jax
import jax.numpy as jnp
from jax.experimental import pallas as pl
from jax.experimental.pallas import tpu as pltpu

D_MARIAN = 512      # Marian d_model (cross_alignment_linear output dim)
D_WHISPER = 1024    # Whisper encoder hidden size (cross_alignment_linear input dim)
VOCAB = 256         # synthetic vocab for lm_head
N_MELS = 80
N_MELS_PAD = 128    # mel/K dim zero-padded to a lane-aligned 128


def _round_up(x, m):
    return ((x + m - 1) // m) * m


# ---------------------------------------------------------------------------
# Pallas kernels
# ---------------------------------------------------------------------------
def _linear_kernel(x_ref, w_ref, b_ref, o_ref, *, activation):
    """o = act(x @ w + b) for one (bm, K)x(K, bn) tile."""
    acc = jnp.dot(x_ref[...], w_ref[...], preferred_element_type=jnp.float32)
    acc = acc + b_ref[...].astype(jnp.float32)
    if activation == "gelu":
        # TODO(synk): PyTorch nn.GELU default is exact erf; tanh approx used here.
        acc = jax.nn.gelu(acc, approximate=True)
    o_ref[...] = acc.astype(o_ref.dtype)


def _linear_res_kernel(x_ref, w_ref, b_ref, r_ref, o_ref, *, activation):
    """o = act(x @ w + b) + residual, residual add fused into the epilogue."""
    acc = jnp.dot(x_ref[...], w_ref[...], preferred_element_type=jnp.float32)
    acc = acc + b_ref[...].astype(jnp.float32)
    if activation == "gelu":
        acc = jax.nn.gelu(acc, approximate=True)
    acc = acc + r_ref[...].astype(jnp.float32)
    o_ref[...] = acc.astype(o_ref.dtype)


def pallas_linear(x, w, b, *, activation=None, residual=None, out_dtype=None,
                  bm=256, bn=2048):
    """x: (M, K) bf16, w: (K, N) bf16, b: (1, N) f32 -> (M, N).

    Tiled over M and N (2-D grid, both 'parallel'); tails are zero-padded and
    sliced off, so M / N need not be multiples of the tile sizes.  N-tiling
    keeps the resident weight block small (mandatory for a real ~61k-vocab
    lm_head on v7x's 64 MiB VMEM).
    """
    M, K = x.shape
    Kw, N = w.shape
    assert K == Kw
    out_dtype = out_dtype or x.dtype

    bm = min(bm, _round_up(M, 16))       # 16-row granularity (bf16 sublane pack)
    bn = min(bn, _round_up(N, 128))      # lane-dense output tiles
    M_pad = _round_up(M, bm)
    N_pad = _round_up(N, bn)

    if M_pad != M:
        x = jnp.pad(x, ((0, M_pad - M), (0, 0)))
        if residual is not None:
            residual = jnp.pad(residual, ((0, M_pad - M), (0, 0)))
    if N_pad != N:
        w = jnp.pad(w, ((0, 0), (0, N_pad - N)))
        b = jnp.pad(b, ((0, 0), (0, N_pad - N)))
        if residual is not None:
            residual = jnp.pad(residual, ((0, 0), (0, N_pad - N)))

    in_specs = [
        pl.BlockSpec((bm, K), lambda i, j: (i, 0)),
        pl.BlockSpec((K, bn), lambda i, j: (0, j)),
        pl.BlockSpec((1, bn), lambda i, j: (0, j)),
    ]
    args = [x, w, b]
    if residual is not None:
        in_specs.append(pl.BlockSpec((bm, bn), lambda i, j: (i, j)))
        args.append(residual)
        kern = functools.partial(_linear_res_kernel, activation=activation)
    else:
        kern = functools.partial(_linear_kernel, activation=activation)

    out = pl.pallas_call(
        kern,
        out_shape=jax.ShapeDtypeStruct((M_pad, N_pad), out_dtype),
        grid_spec=pltpu.PrefetchScalarGridSpec(
            num_scalar_prefetch=0,
            grid=(M_pad // bm, N_pad // bn),
            in_specs=in_specs,
            out_specs=pl.BlockSpec((bm, bn), lambda i, j: (i, j)),
        ),
        compiler_params=pltpu.CompilerParams(
            dimension_semantics=("parallel", "parallel")),
    )(*args)

    if M_pad != M or N_pad != N:
        out = out[:M, :N]
    return out


def _xattn_kernel(q_ref, kv_ref, res_ref, o_ref, m_sc, l_sc, acc_sc, *,
                  scale, kv_len, block_k, head_dim):
    """Flash-style online-softmax cross attention, one (batch, kv-block) step.

    kv_ref packs K and V along the last dim ((1, bk, 2*D)); residual (decoder
    embedding) is added in the finalize step so `dec_emb + attn` is fused.
    """
    kv_i = pl.program_id(1)

    @pl.when(kv_i == 0)
    def _():
        m_sc[...] = jnp.full_like(m_sc, -jnp.inf)
        l_sc[...] = jnp.zeros_like(l_sc)
        acc_sc[...] = jnp.zeros_like(acc_sc)

    q = q_ref[0]                       # (Tq, D)  bf16
    kvb = kv_ref[0]                    # (bk, 2D) bf16
    k = kvb[:, :head_dim]              # lane-aligned static slice (no relayout)
    v = kvb[:, head_dim:]

    # QK^T without materializing k.T: contract on the last dim of both.
    s = jax.lax.dot_general(q, k, dimension_numbers=(((1,), (1,)), ((), ())),
                            preferred_element_type=jnp.float32) * scale
    col = kv_i * block_k + jax.lax.broadcasted_iota(jnp.int32, s.shape, 1)
    s = jnp.where(col < kv_len, s, -jnp.inf)      # mask padded key positions

    m_prev = m_sc[0]                                              # (Tq, 1)
    m_new = jnp.maximum(m_prev, jnp.max(s, axis=-1, keepdims=True))
    alpha = jnp.exp(m_prev - m_new)
    p = jnp.exp(s - m_new)
    l_sc[0] = alpha * l_sc[0] + jnp.sum(p, axis=-1, keepdims=True)
    acc_sc[0] = alpha * acc_sc[0] + jnp.dot(
        p.astype(v.dtype), v, preferred_element_type=jnp.float32)
    m_sc[0] = m_new

    @pl.when(kv_i == pl.num_programs(1) - 1)
    def _():
        o_ref[0] = (acc_sc[0] / l_sc[0]
                    + res_ref[0].astype(jnp.float32)).astype(o_ref.dtype)


def pallas_cross_attention(q, kv, residual, *, block_k=512):
    """q: (B, Tq, D), kv: (B, Tk, 2D) packed K|V, residual: (B, Tq, D)."""
    B, Tq, D = q.shape
    _, Tk, D2 = kv.shape
    assert D2 == 2 * D and residual.shape == q.shape

    bk = min(block_k, _round_up(Tk, 16))
    Tk_pad = _round_up(Tk, bk)
    if Tk_pad != Tk:
        kv = jnp.pad(kv, ((0, 0), (0, Tk_pad - Tk), (0, 0)))

    kern = functools.partial(_xattn_kernel, scale=1.0 / math.sqrt(D),
                             kv_len=Tk, block_k=bk, head_dim=D)
    return pl.pallas_call(
        kern,
        out_shape=jax.ShapeDtypeStruct((B, Tq, D), q.dtype),
        grid_spec=pltpu.PrefetchScalarGridSpec(
            num_scalar_prefetch=0,
            grid=(B, Tk_pad // bk),
            in_specs=[
                pl.BlockSpec((1, Tq, D), lambda b, kvi: (b, 0, 0)),
                pl.BlockSpec((1, bk, D2), lambda b, kvi: (b, kvi, 0)),
                pl.BlockSpec((1, Tq, D), lambda b, kvi: (b, 0, 0)),
            ],
            out_specs=pl.BlockSpec((1, Tq, D), lambda b, kvi: (b, 0, 0)),
            scratch_shapes=[
                pltpu.VMEM((1, Tq, 1), jnp.float32),   # running max
                pltpu.VMEM((1, Tq, 1), jnp.float32),   # running denom
                pltpu.VMEM((1, Tq, D), jnp.float32),   # output accumulator
            ],
        ),
        compiler_params=pltpu.CompilerParams(
            dimension_semantics=("parallel", "arbitrary")),
    )(q, kv, residual)


# ---------------------------------------------------------------------------
# Deterministic parameter init (synthetic; no checkpoint load)
# ---------------------------------------------------------------------------
def init_params(key):
    ks = jax.random.split(key, 16)
    s = 0.02

    def w(k, shape):
        return (s * jax.random.normal(k, shape)).astype(jnp.bfloat16)

    def b(n):
        return jnp.zeros((1, n), jnp.float32)

    return {
        # shared Marian embedding (stand-in)
        "marian_embed": w(ks[0], (VOCAB, D_MARIAN)),
        # Whisper-encoder stand-in projection (mel bins zero-padded to 128 -> 1024)
        "whisper_proj_w": w(ks[1], (N_MELS_PAD, D_WHISPER)),
        "whisper_proj_b": b(D_WHISPER),
        # Marian-encoder stand-in FFN
        "enc_ffn_w": w(ks[2], (D_MARIAN, D_MARIAN)),
        "enc_ffn_b": b(D_MARIAN),
        # cross_alignment_linear = nn.Linear(1024, 512)  (exact shape from __init__)
        "cross_w": w(ks[3], (D_WHISPER, D_MARIAN)),
        "cross_b": b(D_MARIAN),
        # Marian-decoder stand-in: Q projection + fused K|V projection + FFN
        "q_w": w(ks[4], (D_MARIAN, D_MARIAN)),
        "q_b": b(D_MARIAN),
        "kv_w": w(ks[5], (D_MARIAN, 2 * D_MARIAN)),
        "kv_b": b(2 * D_MARIAN),
        "dec_ffn_w": w(ks[6], (D_MARIAN, D_MARIAN)),
        "dec_ffn_b": b(D_MARIAN),
        # output_layer = marian lm_head (Linear 512 -> vocab)
        "lm_head_w": w(ks[7], (D_MARIAN, VOCAB)),
        "lm_head_b": b(VOCAB),
    }


# ---------------------------------------------------------------------------
# Forward pass (mirrors CustomModel.forward)
# ---------------------------------------------------------------------------
def custom_model_forward(params, english_input_ids, hindi_input_ids,
                         speech_features, hindi_attention_mask=None,
                         english_attention_mask=None):
    B, T = english_input_ids.shape

    # ---- marian_encoder(english_input_ids).last_hidden_state ----------------
    # TODO(synk): pretrained Marian encoder stack replaced by embedding +
    # Pallas FFN residual block; english_attention_mask not applied.
    enc_emb = jnp.take(params["marian_embed"], english_input_ids, axis=0)   # (B,T,512) bf16
    enc_flat = enc_emb.reshape(B * T, D_MARIAN)
    marian_enc = pallas_linear(
        enc_flat, params["enc_ffn_w"], params["enc_ffn_b"],
        activation="gelu", residual=enc_flat,                               # fused residual
    ).reshape(B, T, D_MARIAN)

    # ---- whisper_encoder(speech_features) + cross_alignment_linear + concat --
    if speech_features is None:
        combined = marian_enc
    else:
        # TODO(synk): pretrained Whisper conv-subsample + transformer stack not
        # reproducible without its checkpoint; stand-in = stride-2 temporal
        # pooling + Pallas linear(mel->1024)+GELU.
        Bs, n_mels, S = speech_features.shape
        sp = speech_features.reshape(Bs, n_mels, S // 2, 2).mean(axis=-1)   # stride-2 subsample
        sp = jnp.transpose(sp, (0, 2, 1))                                   # (B, S/2, mel)
        T_sp = S // 2
        sp = jnp.pad(sp, ((0, 0), (0, 0), (0, N_MELS_PAD - n_mels)))        # mel 80 -> 128
        sp = sp.astype(jnp.bfloat16)
        whisper_h = pallas_linear(
            sp.reshape(Bs * T_sp, N_MELS_PAD),
            params["whisper_proj_w"], params["whisper_proj_b"],
            activation="gelu",
        ).reshape(Bs, T_sp, D_WHISPER)

        # cross_alignment_linear (exact semantics: Linear 1024 -> 512)
        cross = pallas_linear(
            whisper_h.reshape(Bs * T_sp, D_WHISPER),
            params["cross_w"], params["cross_b"],
        ).reshape(Bs, T_sp, D_MARIAN)
        combined = jnp.concatenate([marian_enc, cross], axis=1)            # (B, T+T_sp, 512)

    # ---- marian_decoder(hindi_ids, encoder_hidden_states=combined) ----------
    # TODO(synk): pretrained Marian decoder stack replaced by embedding +
    # single-head Pallas cross-attention over `combined` + Pallas FFN;
    # hindi_attention_mask not applied.
    Tk = combined.shape[1]
    dec_emb = jnp.take(params["marian_embed"], hindi_input_ids, axis=0)     # (B,T,512) bf16

    q = pallas_linear(dec_emb.reshape(B * T, D_MARIAN),
                      params["q_w"], params["q_b"]).reshape(B, T, D_MARIAN)
    kv = pallas_linear(combined.reshape(B * Tk, D_MARIAN),                  # fused K|V matmul
                       params["kv_w"], params["kv_b"]).reshape(B, Tk, 2 * D_MARIAN)

    dec_h = pallas_cross_attention(q, kv, dec_emb)                          # attn + dec_emb fused
    dec_flat = dec_h.reshape(B * T, D_MARIAN)
    dec_out = pallas_linear(
        dec_flat, params["dec_ffn_w"], params["dec_ffn_b"],
        activation="gelu", residual=dec_flat,                               # fused residual
    ).reshape(B, T, D_MARIAN)

    # ---- lm_head (N-tiled; f32 logits) ---------------------------------------
    logits = pallas_linear(
        dec_out.reshape(B * T, D_MARIAN),
        params["lm_head_w"], params["lm_head_b"],
        out_dtype=jnp.float32,
    ).reshape(B, T, VOCAB)
    return logits


# ---------------------------------------------------------------------------
if __name__ == "__main__":
    key = jax.random.PRNGKey(0)
    k_par, k_en, k_hi, k_sp = jax.random.split(key, 4)

    params = init_params(k_par)

    B, T = 2, 16                    # small synthetic shapes (module uses 128)
    S_FRAMES = 64                   # small stand-in for Whisper's 3000 frames

    english_input_ids = jax.random.randint(k_en, (B, T), 0, VOCAB, dtype=jnp.int32)
    hindi_input_ids = jax.random.randint(k_hi, (B, T), 0, VOCAB, dtype=jnp.int32)
    speech_features = jax.random.normal(k_sp, (B, N_MELS, S_FRAMES), dtype=jnp.float32)
    hindi_attention_mask = jnp.ones((B, T), jnp.int32)
    english_attention_mask = jnp.ones((B, T), jnp.int32)

    logits = jax.jit(custom_model_forward)(
        params, english_input_ids, hindi_input_ids, speech_features,
        hindi_attention_mask, english_attention_mask)
    jax.block_until_ready(logits)

    assert logits.shape == (B, T, VOCAB), logits.shape
    assert jnp.all(jnp.isfinite(logits))
    print("KERNEL_OK")
</pallas_src>

<mosaic_0001>
module attributes {stable_mosaic.version = 11 : i64} {
  func.func @_linear_kernel(%arg0: i32, %arg1: i32, %arg2: memref<32x512xbf16, #tpu.memory_space<vmem>>, %arg3: memref<512x512xbf16, #tpu.memory_space<vmem>>, %arg4: memref<1x512xf32, #tpu.memory_space<vmem>>, %arg5: memref<32x512xbf16, #tpu.memory_space<vmem>>) attributes {dimension_semantics = [#tpu.dimension_semantics<parallel>, #tpu.dimension_semantics<parallel>], iteration_bounds = array<i64: 1, 1>, scalar_prefetch = 0 : i64, scratch_operands = 0 : i64, tpu.core_type = #tpu.core_type<tc>, window_params = [{transform_indices = @transform_0, window_bounds = array<i64: 32, 512>}, {transform_indices = @transform_1, window_bounds = array<i64: 512, 512>}, {transform_indices = @transform_2, window_bounds = array<i64: 1, 512>}, {transform_indices = @transform_3, window_bounds = array<i64: 32, 512>}]} {
    %c0 = arith.constant 0 : index
    %c0_0 = arith.constant 0 : index
    %0 = vector.load %arg2[%c0, %c0_0] : memref<32x512xbf16, #tpu.memory_space<vmem>>, vector<32x512xbf16>
    %c0_1 = arith.constant 0 : index
    %c0_2 = arith.constant 0 : index
    %1 = vector.load %arg3[%c0_1, %c0_2] : memref<512x512xbf16, #tpu.memory_space<vmem>>, vector<512x512xbf16>
    %cst = arith.constant dense<0.000000e+00> : vector<32x512xf32>
    %2 = tpu.matmul %0, %1, %cst {dimension_numbers = #tpu.dot_dimension_numbers<[1], [0], [0], [1], [0, 0, 1, 1], [], []>} : vector<32x512xbf16>, vector<512x512xbf16>, vector<32x512xf32> -> vector<32x512xf32>
    %c0_3 = arith.constant 0 : index
    %c0_4 = arith.constant 0 : index
    %3 = vector.load %arg4[%c0_3, %c0_4] : memref<1x512xf32, #tpu.memory_space<vmem>>, vector<1x512xf32>
    %4 = vector.broadcast %3 : vector<1x512xf32> to vector<32x512xf32>
    %5 = arith.addf %2, %4 : vector<32x512xf32>
    %6 = arith.truncf %5 : vector<32x512xf32> to vector<32x512xbf16>
    %c0_5 = arith.constant 0 : index
    %c0_6 = arith.constant 0 : index
    %7 = vector.load %arg5[%c0_5, %c0_6] : memref<32x512xbf16, #tpu.memory_space<vmem>>, vector<32x512xbf16>
    tpu.vector_store %arg5[%c0_5, %c0_6], %6 {strides = array<i32>} : memref<32x512xbf16, #tpu.memory_space<vmem>>, vector<32x512xbf16>,
    return
  }
  func.func @transform_0(%arg0: i32, %arg1: i32) -> (i32, i32) {
    %c0_i32 = arith.constant 0 : i32
    %c0_i32_0 = arith.constant 0 : i32
    return %arg0, %c0_i32 : i32, i32
  }
  func.func @transform_1(%arg0: i32, %arg1: i32) -> (i32, i32) {
    %c0_i32 = arith.constant 0 : i32
    %c0_i32_0 = arith.constant 0 : i32
    return %c0_i32, %arg1 : i32, i32
  }
  func.func @transform_2(%arg0: i32, %arg1: i32) -> (i32, i32) {
    %c0_i32 = arith.constant 0 : i32
    %c0_i32_0 = arith.constant 0 : i32
    return %c0_i32, %arg1 : i32, i32
  }
  func.func @transform_3(%arg0: i32, %arg1: i32) -> (i32, i32) {
    %c0_i32 = arith.constant 0 : i32
    return %arg0, %arg1 : i32, i32
  }
}

module attributes {stable_mosaic.version = 11 : i64} {
  func.func @_linear_res_kernel(%arg0: i32, %arg1: i32, %arg2: memref<32x512xbf16, #tpu.memory_space<vmem>>, %arg3: memref<512x512xbf16, #tpu.memory_space<vmem>>, %arg4: memref<1x512xf32, #tpu.memory_space<vmem>>, %arg5: memref<32x512xbf16, #tpu.memory_space<vmem>>, %arg6: memref<32x512xbf16, #tpu.memory_space<vmem>>) attributes {dimension_semantics = [#tpu.dimension_semantics<parallel>, #tpu.dimension_semantics<parallel>], iteration_bounds = array<i64: 1, 1>, scalar_prefetch = 0 : i64, scratch_operands = 0 : i64, tpu.core_type = #tpu.core_type<tc>, window_params = [{transform_indices = @transform_0, window_bounds = array<i64: 32, 512>}, {transform_indices = @transform_1, window_bounds = array<i64: 512, 512>}, {transform_indices = @transform_2, window_bounds = array<i64: 1, 512>}, {transform_indices = @transform_3, window_bounds = array<i64: 32, 512>}, {transform_indices = @transform_4, window_bounds = array<i64: 32, 512>}]} {
    %c0 = arith.constant 0 : index
    %c0_0 = arith.constant 0 : index
    %0 = vector.load %arg2[%c0, %c0_0] : memref<32x512xbf16, #tpu.memory_space<vmem>>, vector<32x512xbf16>
    %c0_1 = arith.constant 0 : index
    %c0_2 = arith.constant 0 : index
    %1 = vector.load %arg3[%c0_1, %c0_2] : memref<512x512xbf16, #tpu.memory_space<vmem>>, vector<512x512xbf16>
    %cst = arith.constant dense<0.000000e+00> : vector<32x512xf32>
    %2 = tpu.matmul %0, %1, %cst {dimension_numbers = #tpu.dot_dimension_numbers<[1], [0], [0], [1], [0, 0, 1, 1], [], []>} : vector<32x512xbf16>, vector<512x512xbf16>, vector<32x512xf32> -> vector<32x512xf32>
    %c0_3 = arith.constant 0 : index
    %c0_4 = arith.constant 0 : index
    %3 = vector.load %arg4[%c0_3, %c0_4] : memref<1x512xf32, #tpu.memory_space<vmem>>, vector<1x512xf32>
    %4 = vector.broadcast %3 : vector<1x512xf32> to vector<32x512xf32>
    %5 = arith.addf %2, %4 : vector<32x512xf32>
    %6 = arith.mulf %5, %5 : vector<32x512xf32>
    %7 = arith.mulf %5, %6 : vector<32x512xf32>
    %cst_5 = arith.constant 4.471500e-02 : f32
    %8 = vector.broadcast %cst_5 : f32 to vector<32x512xf32>
    %9 = arith.mulf %8, %7 : vector<32x512xf32>
    %10 = arith.addf %5, %9 : vector<32x512xf32>
    %cst_6 = arith.constant 0.797884583 : f32
    %11 = vector.broadcast %cst_6 : f32 to vector<32x512xf32>
    %12 = arith.mulf %11, %10 : vector<32x512xf32>
    %13 = math.tanh %12 : vector<32x512xf32>
    %cst_7 = arith.constant 1.000000e+00 : f32
    %14 = vector.broadcast %cst_7 : f32 to vector<32x512xf32>
    %15 = arith.addf %14, %13 : vector<32x512xf32>
    %cst_8 = arith.constant 5.000000e-01 : f32
    %16 = vector.broadcast %cst_8 : f32 to vector<32x512xf32>
    %17 = arith.mulf %16, %15 : vector<32x512xf32>
    %18 = arith.mulf %5, %17 : vector<32x512xf32>
    %c0_9 = arith.constant 0 : index
    %c0_10 = arith.constant 0 : index
    %19 = vector.load %arg5[%c0_9, %c0_10] : memref<32x512xbf16, #tpu.memory_space<vmem>>, vector<32x512xbf16>
    %20 = arith.extf %19 : vector<32x512xbf16> to vector<32x512xf32>
    %21 = arith.addf %18, %20 : vector<32x512xf32>
    %22 = arith.truncf %21 : vector<32x512xf32> to vector<32x512xbf16>
    %c0_11 = arith.constant 0 : index
    %c0_12 = arith.constant 0 : index
    %23 = vector.load %arg6[%c0_11, %c0_12] : memref<32x512xbf16, #tpu.memory_space<vmem>>, vector<32x512xbf16>
    tpu.vector_store %arg6[%c0_11, %c0_12], %22 {strides = array<i32>} : memref<32x512xbf16, #tpu.memory_space<vmem>>, vector<32x512xbf16>,
    return
  }
  func.func @transform_0(%arg0: i32, %arg1: i32) -> (i32, i32) {
    %c0_i32 = arith.constant 0 : i32
    %c0_i32_0 = arith.constant 0 : i32
    return %arg0, %c0_i32 : i32, i32
  }
  func.func @transform_1(%arg0: i32, %arg1: i32) -> (i32, i32) {
    %c0_i32 = arith.constant 0 : i32
    %c0_i32_0 = arith.constant 0 : i32
    return %c0_i32, %arg1 : i32, i32
  }
  func.func @transform_2(%arg0: i32, %arg1: i32) -> (i32, i32) {
    %c0_i32 = arith.constant 0 : i32
    %c0_i32_0 = arith.constant 0 : i32
    return %c0_i32, %arg1 : i32, i32
  }
  func.func @transform_3(%arg0: i32, %arg1: i32) -> (i32, i32) {
    %c0_i32 = arith.constant 0 : i32
    return %arg0, %arg1 : i32, i32
  }
  func.func @transform_4(%arg0: i32, %arg1: i32) -> (i32, i32) {
    %c0_i32 = arith.constant 0 : i32
    return %arg0, %arg1 : i32, i32
  }
}

module attributes {stable_mosaic.version = 11 : i64} {
  func.func @_linear_kernel(%arg0: i32, %arg1: i32, %arg2: memref<64x128xbf16, #tpu.memory_space<vmem>>, %arg3: memref<128x1024xbf16, #tpu.memory_space<vmem>>, %arg4: memref<1x1024xf32, #tpu.memory_space<vmem>>, %arg5: memref<64x1024xbf16, #tpu.memory_space<vmem>>) attributes {dimension_semantics = [#tpu.dimension_semantics<parallel>, #tpu.dimension_semantics<parallel>], iteration_bounds = array<i64: 1, 1>, scalar_prefetch = 0 : i64, scratch_operands = 0 : i64, tpu.core_type = #tpu.core_type<tc>, window_params = [{transform_indices = @transform_0, window_bounds = array<i64: 64, 128>}, {transform_indices = @transform_1, window_bounds = array<i64: 128, 1024>}, {transform_indices = @transform_2, window_bounds = array<i64: 1, 1024>}, {transform_indices = @transform_3, window_bounds = array<i64: 64, 1024>}]} {
    %c0 = arith.constant 0 : index
    %c0_0 = arith.constant 0 : index
    %0 = vector.load %arg2[%c0, %c0_0] : memref<64x128xbf16, #tpu.memory_space<vmem>>, vector<64x128xbf16>
    %c0_1 = arith.constant 0 : index
    %c0_2 = arith.constant 0 : index
    %1 = vector.load %arg3[%c0_1, %c0_2] : memref<128x1024xbf16, #tpu.memory_space<vmem>>, vector<128x1024xbf16>
    %cst = arith.constant dense<0.000000e+00> : vector<64x1024xf32>
    %2 = tpu.matmul %0, %1, %cst {dimension_numbers = #tpu.dot_dimension_numbers<[1], [0], [0], [1], [0, 0, 1, 1], [], []>} : vector<64x128xbf16>, vector<128x1024xbf16>, vector<64x1024xf32> -> vector<64x1024xf32>
    %c0_3 = arith.constant 0 : index
    %c0_4 = arith.constant 0 : index
    %3 = vector.load %arg4[%c0_3, %c0_4] : memref<1x1024xf32, #tpu.memory_space<vmem>>, vector<1x1024xf32>
    %4 = vector.broadcast %3 : vector<1x1024xf32> to vector<64x1024xf32>
    %5 = arith.addf %2, %4 : vector<64x1024xf32>
    %6 = arith.mulf %5, %5 : vector<64x1024xf32>
    %7 = arith.mulf %5, %6 : vector<64x1024xf32>
    %cst_5 = arith.constant 4.471500e-02 : f32
    %8 = vector.broadcast %cst_5 : f32 to vector<64x1024xf32>
    %9 = arith.mulf %8, %7 : vector<64x1024xf32>
    %10 = arith.addf %5, %9 : vector<64x1024xf32>
    %cst_6 = arith.constant 0.797884583 : f32
    %11 = vector.broadcast %cst_6 : f32 to vector<64x1024xf32>
    %12 = arith.mulf %11, %10 : vector<64x1024xf32>
    %13 = math.tanh %12 : vector<64x1024xf32>
    %cst_7 = arith.constant 1.000000e+00 : f32
    %14 = vector.broadcast %cst_7 : f32 to vector<64x1024xf32>
    %15 = arith.addf %14, %13 : vector<64x1024xf32>
    %cst_8 = arith.constant 5.000000e-01 : f32
    %16 = vector.broadcast %cst_8 : f32 to vector<64x1024xf32>
    %17 = arith.mulf %16, %15 : vector<64x1024xf32>
    %18 = arith.mulf %5, %17 : vector<64x1024xf32>
    %19 = arith.truncf %18 : vector<64x1024xf32> to vector<64x1024xbf16>
    %c0_9 = arith.constant 0 : index
    %c0_10 = arith.constant 0 : index
    %20 = vector.load %arg5[%c0_9, %c0_10] : memref<64x1024xbf16, #tpu.memory_space<vmem>>, vector<64x1024xbf16>
    tpu.vector_store %arg5[%c0_9, %c0_10], %19 {strides = array<i32>} : memref<64x1024xbf16, #tpu.memory_space<vmem>>, vector<64x1024xbf16>,
    return
  }
  func.func @transform_0(%arg0: i32, %arg1: i32) -> (i32, i32) {
    %c0_i32 = arith.constant 0 : i32
    %c0_i32_0 = arith.constant 0 : i32
    return %arg0, %c0_i32 : i32, i32
  }
  func.func @transform_1(%arg0: i32, %arg1: i32) -> (i32, i32) {
    %c0_i32 = arith.constant 0 : i32
    %c0_i32_0 = arith.constant 0 : i32
    return %c0_i32, %arg1 : i32, i32
  }
  func.func @transform_2(%arg0: i32, %arg1: i32) -> (i32, i32) {
    %c0_i32 = arith.constant 0 : i32
    %c0_i32_0 = arith.constant 0 : i32
    return %c0_i32, %arg1 : i32, i32
  }
  func.func @transform_3(%arg0: i32, %arg1: i32) -> (i32, i32) {
    %c0_i32 = arith.constant 0 : i32
    return %arg0, %arg1 : i32, i32
  }
}

module attributes {stable_mosaic.version = 11 : i64} {
  func.func @_linear_kernel(%arg0: i32, %arg1: i32, %arg2: memref<64x1024xbf16, #tpu.memory_space<vmem>>, %arg3: memref<1024x512xbf16, #tpu.memory_space<vmem>>, %arg4: memref<1x512xf32, #tpu.memory_space<vmem>>, %arg5: memref<64x512xbf16, #tpu.memory_space<vmem>>) attributes {dimension_semantics = [#tpu.dimension_semantics<parallel>, #tpu.dimension_semantics<parallel>], iteration_bounds = array<i64: 1, 1>, scalar_prefetch = 0 : i64, scratch_operands = 0 : i64, tpu.core_type = #tpu.core_type<tc>, window_params = [{transform_indices = @transform_0, window_bounds = array<i64: 64, 1024>}, {transform_indices = @transform_1, window_bounds = array<i64: 1024, 512>}, {transform_indices = @transform_2, window_bounds = array<i64: 1, 512>}, {transform_indices = @transform_3, window_bounds = array<i64: 64, 512>}]} {
    %c0 = arith.constant 0 : index
    %c0_0 = arith.constant 0 : index
    %0 = vector.load %arg2[%c0, %c0_0] : memref<64x1024xbf16, #tpu.memory_space<vmem>>, vector<64x1024xbf16>
    %c0_1 = arith.constant 0 : index
    %c0_2 = arith.constant 0 : index
    %1 = vector.load %arg3[%c0_1, %c0_2] : memref<1024x512xbf16, #tpu.memory_space<vmem>>, vector<1024x512xbf16>
    %cst = arith.constant dense<0.000000e+00> : vector<64x512xf32>
    %2 = tpu.matmul %0, %1, %cst {dimension_numbers = #tpu.dot_dimension_numbers<[1], [0], [0], [1], [0, 0, 1, 1], [], []>} : vector<64x1024xbf16>, vector<1024x512xbf16>, vector<64x512xf32> -> vector<64x512xf32>
    %c0_3 = arith.constant 0 : index
    %c0_4 = arith.constant 0 : index
    %3 = vector.load %arg4[%c0_3, %c0_4] : memref<1x512xf32, #tpu.memory_space<vmem>>, vector<1x512xf32>
    %4 = vector.broadcast %3 : vector<1x512xf32> to vector<64x512xf32>
    %5 = arith.addf %2, %4 : vector<64x512xf32>
    %6 = arith.truncf %5 : vector<64x512xf32> to vector<64x512xbf16>
    %c0_5 = arith.constant 0 : index
    %c0_6 = arith.constant 0 : index
    %7 = vector.load %arg5[%c0_5, %c0_6] : memref<64x512xbf16, #tpu.memory_space<vmem>>, vector<64x512xbf16>
    tpu.vector_store %arg5[%c0_5, %c0_6], %6 {strides = array<i32>} : memref<64x512xbf16, #tpu.memory_space<vmem>>, vector<64x512xbf16>,
    return
  }
  func.func @transform_0(%arg0: i32, %arg1: i32) -> (i32, i32) {
    %c0_i32 = arith.constant 0 : i32
    %c0_i32_0 = arith.constant 0 : i32
    return %arg0, %c0_i32 : i32, i32
  }
  func.func @transform_1(%arg0: i32, %arg1: i32) -> (i32, i32) {
    %c0_i32 = arith.constant 0 : i32
    %c0_i32_0 = arith.constant 0 : i32
    return %c0_i32, %arg1 : i32, i32
  }
  func.func @transform_2(%arg0: i32, %arg1: i32) -> (i32, i32) {
    %c0_i32 = arith.constant 0 : i32
    %c0_i32_0 = arith.constant 0 : i32
    return %c0_i32, %arg1 : i32, i32
  }
  func.func @transform_3(%arg0: i32, %arg1: i32) -> (i32, i32) {
    %c0_i32 = arith.constant 0 : i32
    return %arg0, %arg1 : i32, i32
  }
}

module attributes {stable_mosaic.version = 11 : i64} {
  func.func @_linear_kernel(%arg0: i32, %arg1: i32, %arg2: memref<96x512xbf16, #tpu.memory_space<vmem>>, %arg3: memref<512x1024xbf16, #tpu.memory_space<vmem>>, %arg4: memref<1x1024xf32, #tpu.memory_space<vmem>>, %arg5: memref<96x1024xbf16, #tpu.memory_space<vmem>>) attributes {dimension_semantics = [#tpu.dimension_semantics<parallel>, #tpu.dimension_semantics<parallel>], iteration_bounds = array<i64: 1, 1>, scalar_prefetch = 0 : i64, scratch_operands = 0 : i64, tpu.core_type = #tpu.core_type<tc>, window_params = [{transform_indices = @transform_0, window_bounds = array<i64: 96, 512>}, {transform_indices = @transform_1, window_bounds = array<i64: 512, 1024>}, {transform_indices = @transform_2, window_bounds = array<i64: 1, 1024>}, {transform_indices = @transform_3, window_bounds = array<i64: 96, 1024>}]} {
    %c0 = arith.constant 0 : index
    %c0_0 = arith.constant 0 : index
    %0 = vector.load %arg2[%c0, %c0_0] : memref<96x512xbf16, #tpu.memory_space<vmem>>, vector<96x512xbf16>
    %c0_1 = arith.constant 0 : index
    %c0_2 = arith.constant 0 : index
    %1 = vector.load %arg3[%c0_1, %c0_2] : memref<512x1024xbf16, #tpu.memory_space<vmem>>, vector<512x1024xbf16>
    %cst = arith.constant dense<0.000000e+00> : vector<96x1024xf32>
    %2 = tpu.matmul %0, %1, %cst {dimension_numbers = #tpu.dot_dimension_numbers<[1], [0], [0], [1], [0, 0, 1, 1], [], []>} : vector<96x512xbf16>, vector<512x1024xbf16>, vector<96x1024xf32> -> vector<96x1024xf32>
    %c0_3 = arith.constant 0 : index
    %c0_4 = arith.constant 0 : index
    %3 = vector.load %arg4[%c0_3, %c0_4] : memref<1x1024xf32, #tpu.memory_space<vmem>>, vector<1x1024xf32>
    %4 = vector.broadcast %3 : vector<1x1024xf32> to vector<96x1024xf32>
    %5 = arith.addf %2, %4 : vector<96x1024xf32>
    %6 = arith.truncf %5 : vector<96x1024xf32> to vector<96x1024xbf16>
    %c0_5 = arith.constant 0 : index
    %c0_6 = arith.constant 0 : index
    %7 = vector.load %arg5[%c0_5, %c0_6] : memref<96x1024xbf16, #tpu.memory_space<vmem>>, vector<96x1024xbf16>
    tpu.vector_store %arg5[%c0_5, %c0_6], %6 {strides = array<i32>} : memref<96x1024xbf16, #tpu.memory_space<vmem>>, vector<96x1024xbf16>,
    return
  }
  func.func @transform_0(%arg0: i32, %arg1: i32) -> (i32, i32) {
    %c0_i32 = arith.constant 0 : i32
    %c0_i32_0 = arith.constant 0 : i32
    return %arg0, %c0_i32 : i32, i32
  }
  func.func @transform_1(%arg0: i32, %arg1: i32) -> (i32, i32) {
    %c0_i32 = arith.constant 0 : i32
    %c0_i32_0 = arith.constant 0 : i32
    return %c0_i32, %arg1 : i32, i32
  }
  func.func @transform_2(%arg0: i32, %arg1: i32) -> (i32, i32) {
    %c0_i32 = arith.constant 0 : i32
    %c0_i32_0 = arith.constant 0 : i32
    return %c0_i32, %arg1 : i32, i32
  }
  func.func @transform_3(%arg0: i32, %arg1: i32) -> (i32, i32) {
    %c0_i32 = arith.constant 0 : i32
    return %arg0, %arg1 : i32, i32
  }
}

module attributes {stable_mosaic.version = 11 : i64} {
  func.func @_xattn_kernel(%arg0: i32, %arg1: i32, %arg2: memref<1x16x512xbf16, #tpu.memory_space<vmem>>, %arg3: memref<1x48x1024xbf16, #tpu.memory_space<vmem>>, %arg4: memref<1x16x512xbf16, #tpu.memory_space<vmem>>, %arg5: memref<1x16x512xbf16, #tpu.memory_space<vmem>>, %arg6: memref<1x16x1xf32, #tpu.memory_space<vmem>>, %arg7: memref<1x16x1xf32, #tpu.memory_space<vmem>>, %arg8: memref<1x16x512xf32, #tpu.memory_space<vmem>>) attributes {dimension_semantics = [#tpu.dimension_semantics<parallel>, #tpu.dimension_semantics<arbitrary>], iteration_bounds = array<i64: 2, 1>, scalar_prefetch = 0 : i64, scratch_operands = 3 : i64, tpu.core_type = #tpu.core_type<tc>, window_params = [{transform_indices = @transform_0, window_bounds = array<i64: 1, 16, 512>}, {transform_indices = @transform_1, window_bounds = array<i64: 1, 48, 1024>}, {transform_indices = @transform_2, window_bounds = array<i64: 1, 16, 512>}, {transform_indices = @transform_3, window_bounds = array<i64: 1, 16, 512>}]} {
    %c0_i32 = arith.constant 0 : i32
    %0 = arith.cmpi eq, %arg1, %c0_i32 : i32
    %1 = arith.extui %0 : i1 to i32
    %c0_i32_0 = arith.constant 0 : i32
    %2 = arith.cmpi ne, %1, %c0_i32_0 : i32
    scf.if %2 {
      %cst_32 = arith.constant 0xFF800000 : f32
      %55 = vector.broadcast %cst_32 : f32 to vector<1x16x1xf32>
      %c0_33 = arith.constant 0 : index
      %c0_34 = arith.constant 0 : index
      %c0_35 = arith.constant 0 : index
      %56 = vector.load %arg6[%c0_33, %c0_34, %c0_35] : memref<1x16x1xf32, #tpu.memory_space<vmem>>, vector<1x16x1xf32>
      tpu.vector_store %arg6[%c0_33, %c0_34, %c0_35], %55 {strides = array<i32>} : memref<1x16x1xf32, #tpu.memory_space<vmem>>, vector<1x16x1xf32>,
      %cst_36 = arith.constant 0.000000e+00 : f32
      %57 = vector.broadcast %cst_36 : f32 to vector<1x16x1xf32>
      %c0_37 = arith.constant 0 : index
      %c0_38 = arith.constant 0 : index
      %c0_39 = arith.constant 0 : index
      %58 = vector.load %arg7[%c0_37, %c0_38, %c0_39] : memref<1x16x1xf32, #tpu.memory_space<vmem>>, vector<1x16x1xf32>
      tpu.vector_store %arg7[%c0_37, %c0_38, %c0_39], %57 {strides = array<i32>} : memref<1x16x1xf32, #tpu.memory_space<vmem>>, vector<1x16x1xf32>,
      %cst_40 = arith.constant 0.000000e+00 : f32
      %59 = vector.broadcast %cst_40 : f32 to vector<1x16x512xf32>
      %c0_41 = arith.constant 0 : index
      %c0_42 = arith.constant 0 : index
      %c0_43 = arith.constant 0 : index
      %60 = vector.load %arg8[%c0_41, %c0_42, %c0_43] : memref<1x16x512xf32, #tpu.memory_space<vmem>>, vector<1x16x512xf32>
      tpu.vector_store %arg8[%c0_41, %c0_42, %c0_43], %59 {strides = array<i32>} : memref<1x16x512xf32, #tpu.memory_space<vmem>>, vector<1x16x512xf32>,
    } else {
    }
    %c0 = arith.constant 0 : index
    %c0_1 = arith.constant 0 : index
    %c0_2 = arith.constant 0 : index
    %3 = vector.load %arg2[%c0, %c0_1, %c0_2] : memref<1x16x512xbf16, #tpu.memory_space<vmem>>, vector<1x16x512xbf16>
    %4 = vector.shape_cast %3 : vector<1x16x512xbf16> to vector<16x512xbf16>
    %c0_3 = arith.constant 0 : index
    %c0_4 = arith.constant 0 : index
    %c0_5 = arith.constant 0 : index
    %5 = vector.load %arg3[%c0_3, %c0_4, %c0_5] : memref<1x48x1024xbf16, #tpu.memory_space<vmem>>, vector<1x48x1024xbf16>
    %6 = vector.shape_cast %5 : vector<1x48x1024xbf16> to vector<48x1024xbf16>
    %7 = vector.extract_strided_slice %6 {offsets = [0, 0], sizes = [48, 512], strides = [1, 1]} : vector<48x1024xbf16> to vector<48x512xbf16>
    %8 = vector.extract_strided_slice %6 {offsets = [0, 512], sizes = [48, 512], strides = [1, 1]} : vector<48x1024xbf16> to vector<48x512xbf16>
    %cst = arith.constant dense<0.000000e+00> : vector<16x48xf32>
    %9 = tpu.matmul %4, %7, %cst {dimension_numbers = #tpu.dot_dimension_numbers<[1], [1], [0], [0], [0, 0, 1, 0], [], []>} : vector<16x512xbf16>, vector<48x512xbf16>, vector<16x48xf32> -> vector<16x48xf32>
    %cst_6 = arith.constant 0.0441941731 : f32
    %10 = vector.broadcast %cst_6 : f32 to vector<16x48xf32>
    %11 = arith.mulf %9, %10 : vector<16x48xf32>
    %c48_i32 = arith.constant 48 : i32
    %12 = arith.muli %arg1, %c48_i32 : i32
    %13 = tpu.iota {dimensions = array<i32: 1>} : vector<16x48xi32>
    %14 = vector.broadcast %12 : i32 to vector<16x48xi32>
    %15 = arith.addi %14, %13 : vector<16x48xi32>
    %c48_i32_7 = arith.constant 48 : i32
    %16 = vector.broadcast %c48_i32_7 : i32 to vector<16x48xi32>
    %17 = arith.cmpi slt, %15, %16 : vector<16x48xi32>
    %cst_8 = arith.constant 0xFF800000 : f32
    %18 = vector.broadcast %cst_8 : f32 to vector<16x48xf32>
    %19 = arith.select %17, %11, %18 : vector<16x48xi1>, vector<16x48xf32>
    %c0_9 = arith.constant 0 : index
    %c0_10 = arith.constant 0 : index
    %c0_11 = arith.constant 0 : index
    %20 = vector.load %arg6[%c0_9, %c0_10, %c0_11] : memref<1x16x1xf32, #tpu.memory_space<vmem>>, vector<1x16x1xf32>
    %21 = vector.shape_cast %20 : vector<1x16x1xf32> to vector<16x1xf32>
    %cst_12 = arith.constant dense<0xFF800000> : vector<16xf32>
    %22 = vector.multi_reduction <maximumf>, %19, %cst_12 [1] : vector<16x48xf32> to vector<16xf32>
    %23 = vector.shape_cast %22 : vector<16xf32> to vector<16x1xf32>
    %24 = arith.maximumf %21, %23 : vector<16x1xf32>
    %25 = arith.subf %21, %24 : vector<16x1xf32>
    %26 = math.exp %25 : vector<16x1xf32>
    %27 = vector.broadcast %24 : vector<16x1xf32> to vector<16x48xf32>
    %28 = arith.subf %19, %27 : vector<16x48xf32>
    %29 = math.exp %28 : vector<16x48xf32>
    %c0_13 = arith.constant 0 : index
    %c0_14 = arith.constant 0 : index
    %c0_15 = arith.constant 0 : index
    %30 = vector.load %arg7[%c0_13, %c0_14, %c0_15] : memref<1x16x1xf32, #tpu.memory_space<vmem>>, vector<1x16x1xf32>
    %31 = vector.shape_cast %30 : vector<1x16x1xf32> to vector<16x1xf32>
    %32 = arith.mulf %26, %31 : vector<16x1xf32>
    %cst_16 = arith.constant dense<0.000000e+00> : vector<16xf32>
    %33 = vector.multi_reduction <add>, %29, %cst_16 [1] : vector<16x48xf32> to vector<16xf32>
    %34 = vector.shape_cast %33 : vector<16xf32> to vector<16x1xf32>
    %35 = arith.addf %32, %34 : vector<16x1xf32>
    %c0_17 = arith.constant 0 : index
    %c0_18 = arith.constant 0 : index
    %c0_19 = arith.constant 0 : index
    %36 = vector.load %arg7[%c0_17, %c0_18, %c0_19] : memref<1x16x1xf32, #tpu.memory_space<vmem>>, vector<1x16x1xf32>
    %37 = vector.shape_cast %36 : vector<1x16x1xf32> to vector<16x1xf32>
    %38 = vector.shape_cast %35 : vector<16x1xf32> to vector<1x16x1xf32>
    tpu.vector_store %arg7[%c0_17, %c0_18, %c0_19], %38 {strides = array<i32>} : memref<1x16x1xf32, #tpu.memory_space<vmem>>, vector<1x16x1xf32>,
    %c0_20 = arith.constant 0 : index
    %c0_21 = arith.constant 0 : index
    %c0_22 = arith.constant 0 : index
    %39 = vector.load %arg8[%c0_20, %c0_21, %c0_22] : memref<1x16x512xf32, #tpu.memory_space<vmem>>, vector<1x16x512xf32>
    %40 = vector.shape_cast %39 : vector<1x16x512xf32> to vector<16x512xf32>
    %41 = vector.broadcast %26 : vector<16x1xf32> to vector<16x512xf32>
    %42 = arith.mulf %41, %40 : vector<16x512xf32>
    %43 = arith.truncf %29 : vector<16x48xf32> to vector<16x48xbf16>
    %cst_23 = arith.constant dense<0.000000e+00> : vector<16x512xf32>
    %44 = tpu.matmul %43, %8, %cst_23 {dimension_numbers = #tpu.dot_dimension_numbers<[1], [0], [0], [1], [0, 0, 1, 1], [], []>} : vector<16x48xbf16>, vector<48x512xbf16>, vector<16x512xf32> -> vector<16x512xf32>
    %45 = arith.addf %42, %44 : vector<16x512xf32>
    %c0_24 = arith.constant 0 : index
    %c0_25 = arith.constant 0 : index
    %c0_26 = arith.constant 0 : index
    %46 = vector.load %arg8[%c0_24, %c0_25, %c0_26] : memref<1x16x512xf32, #tpu.memory_space<vmem>>, vector<1x16x512xf32>
    %47 = vector.shape_cast %46 : vector<1x16x512xf32> to vector<16x512xf32>
    %48 = vector.shape_cast %45 : vector<16x512xf32> to vector<1x16x512xf32>
    tpu.vector_store %arg8[%c0_24, %c0_25, %c0_26], %48 {strides = array<i32>} : memref<1x16x512xf32, #tpu.memory_space<vmem>>, vector<1x16x512xf32>,
    %c0_27 = arith.constant 0 : index
    %c0_28 = arith.constant 0 : index
    %c0_29 = arith.constant 0 : index
    %49 = vector.load %arg6[%c0_27, %c0_28, %c0_29] : memref<1x16x1xf32, #tpu.memory_space<vmem>>, vector<1x16x1xf32>
    %50 = vector.shape_cast %49 : vector<1x16x1xf32> to vector<16x1xf32>
    %51 = vector.shape_cast %24 : vector<16x1xf32> to vector<1x16x1xf32>
    tpu.vector_store %arg6[%c0_27, %c0_28, %c0_29], %51 {strides = array<i32>} : memref<1x16x1xf32, #tpu.memory_space<vmem>>, vector<1x16x1xf32>,
    %c0_i32_30 = arith.constant 0 : i32
    %52 = arith.cmpi eq, %arg1, %c0_i32_30 : i32
    %53 = arith.extui %52 : i1 to i32
    %c0_i32_31 = arith.constant 0 : i32
    %54 = arith.cmpi ne, %53, %c0_i32_31 : i32
    scf.if %54 {
      %c0_32 = arith.constant 0 : index
      %c0_33 = arith.constant 0 : index
      %c0_34 = arith.constant 0 : index
      %55 = vector.load %arg8[%c0_32, %c0_33, %c0_34] : memref<1x16x512xf32, #tpu.memory_space<vmem>>, vector<1x16x512xf32>
      %56 = vector.shape_cast %55 : vector<1x16x512xf32> to vector<16x512xf32>
      %c0_35 = arith.constant 0 : index
      %c0_36 = arith.constant 0 : index
      %c0_37 = arith.constant 0 : index
      %57 = vector.load %arg7[%c0_35, %c0_36, %c0_37] : memref<1x16x1xf32, #tpu.memory_space<vmem>>, vector<1x16x1xf32>
      %58 = vector.shape_cast %57 : vector<1x16x1xf32> to vector<16x1xf32>
      %59 = vector.broadcast %58 : vector<16x1xf32> to vector<16x512xf32>
      %60 = arith.divf %56, %59 : vector<16x512xf32>
      %c0_38 = arith.constant 0 : index
      %c0_39 = arith.constant 0 : index
      %c0_40 = arith.constant 0 : index
      %61 = vector.load %arg4[%c0_38, %c0_39, %c0_40] : memref<1x16x512xbf16, #tpu.memory_space<vmem>>, vector<1x16x512xbf16>
      %62 = vector.shape_cast %61 : vector<1x16x512xbf16> to vector<16x512xbf16>
      %63 = arith.extf %62 : vector<16x512xbf16> to vector<16x512xf32>
      %64 = arith.addf %60, %63 : vector<16x512xf32>
      %65 = arith.truncf %64 : vector<16x512xf32> to vector<16x512xbf16>
      %c0_41 = arith.constant 0 : index
      %c0_42 = arith.constant 0 : index
      %c0_43 = arith.constant 0 : index
      %66 = vector.load %arg5[%c0_41, %c0_42, %c0_43] : memref<1x16x512xbf16, #tpu.memory_space<vmem>>, vector<1x16x512xbf16>
      %67 = vector.shape_cast %66 : vector<1x16x512xbf16> to vector<16x512xbf16>
      %68 = vector.shape_cast %65 : vector<16x512xbf16> to vector<1x16x512xbf16>
      tpu.vector_store %arg5[%c0_41, %c0_42, %c0_43], %68 {strides = array<i32>} : memref<1x16x512xbf16, #tpu.memory_space<vmem>>, vector<1x16x512xbf16>,
    } else {
    }
    return
  }
  func.func @transform_0(%arg0: i32, %arg1: i32) -> (i32, i32, i32) {
    %c0_i32 = arith.constant 0 : i32
    %c0_i32_0 = arith.constant 0 : i32
    %c0_i32_1 = arith.constant 0 : i32
    return %arg0, %c0_i32, %c0_i32_0 : i32, i32, i32
  }
  func.func @transform_1(%arg0: i32, %arg1: i32) -> (i32, i32, i32) {
    %c0_i32 = arith.constant 0 : i32
    %c0_i32_0 = arith.constant 0 : i32
    return %arg0, %arg1, %c0_i32 : i32, i32, i32
  }
  func.func @transform_2(%arg0: i32, %arg1: i32) -> (i32, i32, i32) {
    %c0_i32 = arith.constant 0 : i32
    %c0_i32_0 = arith.constant 0 : i32
    %c0_i32_1 = arith.constant 0 : i32
    return %arg0, %c0_i32, %c0_i32_0 : i32, i32, i32
  }
  func.func @transform_3(%arg0: i32, %arg1: i32) -> (i32, i32, i32) {
    %c0_i32 = arith.constant 0 : i32
    %c0_i32_0 = arith.constant 0 : i32
    %c0_i32_1 = arith.constant 0 : i32
    return %arg0, %c0_i32, %c0_i32_0 : i32, i32, i32
  }
}

module attributes {stable_mosaic.version = 11 : i64} {
  func.func @_linear_res_kernel(%arg0: i32, %arg1: i32, %arg2: memref<32x512xbf16, #tpu.memory_space<vmem>>, %arg3: memref<512x512xbf16, #tpu.memory_space<vmem>>, %arg4: memref<1x512xf32, #tpu.memory_space<vmem>>, %arg5: memref<32x512xbf16, #tpu.memory_space<vmem>>, %arg6: memref<32x512xbf16, #tpu.memory_space<vmem>>) attributes {dimension_semantics = [#tpu.dimension_semantics<parallel>, #tpu.dimension_semantics<parallel>], iteration_bounds = array<i64: 1, 1>, scalar_prefetch = 0 : i64, scratch_operands = 0 : i64, tpu.core_type = #tpu.core_type<tc>, window_params = [{transform_indices = @transform_0, window_bounds = array<i64: 32, 512>}, {transform_indices = @transform_1, window_bounds = array<i64: 512, 512>}, {transform_indices = @transform_2, window_bounds = array<i64: 1, 512>}, {transform_indices = @transform_3, window_bounds = array<i64: 32, 512>}, {transform_indices = @transform_4, window_bounds = array<i64: 32, 512>}]} {
    %c0 = arith.constant 0 : index
    %c0_0 = arith.constant 0 : index
    %0 = vector.load %arg2[%c0, %c0_0] : memref<32x512xbf16, #tpu.memory_space<vmem>>, vector<32x512xbf16>
    %c0_1 = arith.constant 0 : index
    %c0_2 = arith.constant 0 : index
    %1 = vector.load %arg3[%c0_1, %c0_2] : memref<512x512xbf16, #tpu.memory_space<vmem>>, vector<512x512xbf16>
    %cst = arith.constant dense<0.000000e+00> : vector<32x512xf32>
    %2 = tpu.matmul %0, %1, %cst {dimension_numbers = #tpu.dot_dimension_numbers<[1], [0], [0], [1], [0, 0, 1, 1], [], []>} : vector<32x512xbf16>, vector<512x512xbf16>, vector<32x512xf32> -> vector<32x512xf32>
    %c0_3 = arith.constant 0 : index
    %c0_4 = arith.constant 0 : index
    %3 = vector.load %arg4[%c0_3, %c0_4] : memref<1x512xf32, #tpu.memory_space<vmem>>, vector<1x512xf32>
    %4 = vector.broadcast %3 : vector<1x512xf32> to vector<32x512xf32>
    %5 = arith.addf %2, %4 : vector<32x512xf32>
    %6 = arith.mulf %5, %5 : vector<32x512xf32>
    %7 = arith.mulf %5, %6 : vector<32x512xf32>
    %cst_5 = arith.constant 4.471500e-02 : f32
    %8 = vector.broadcast %cst_5 : f32 to vector<32x512xf32>
    %9 = arith.mulf %8, %7 : vector<32x512xf32>
    %10 = arith.addf %5, %9 : vector<32x512xf32>
    %cst_6 = arith.constant 0.797884583 : f32
    %11 = vector.broadcast %cst_6 : f32 to vector<32x512xf32>
    %12 = arith.mulf %11, %10 : vector<32x512xf32>
    %13 = math.tanh %12 : vector<32x512xf32>
    %cst_7 = arith.constant 1.000000e+00 : f32
    %14 = vector.broadcast %cst_7 : f32 to vector<32x512xf32>
    %15 = arith.addf %14, %13 : vector<32x512xf32>
    %cst_8 = arith.constant 5.000000e-01 : f32
    %16 = vector.broadcast %cst_8 : f32 to vector<32x512xf32>
    %17 = arith.mulf %16, %15 : vector<32x512xf32>
    %18 = arith.mulf %5, %17 : vector<32x512xf32>
    %c0_9 = arith.constant 0 : index
    %c0_10 = arith.constant 0 : index
    %19 = vector.load %arg5[%c0_9, %c0_10] : memref<32x512xbf16, #tpu.memory_space<vmem>>, vector<32x512xbf16>
    %20 = arith.extf %19 : vector<32x512xbf16> to vector<32x512xf32>
    %21 = arith.addf %18, %20 : vector<32x512xf32>
    %22 = arith.truncf %21 : vector<32x512xf32> to vector<32x512xbf16>
    %c0_11 = arith.constant 0 : index
    %c0_12 = arith.constant 0 : index
    %23 = vector.load %arg6[%c0_11, %c0_12] : memref<32x512xbf16, #tpu.memory_space<vmem>>, vector<32x512xbf16>
    tpu.vector_store %arg6[%c0_11, %c0_12], %22 {strides = array<i32>} : memref<32x512xbf16, #tpu.memory_space<vmem>>, vector<32x512xbf16>,
    return
  }
  func.func @transform_0(%arg0: i32, %arg1: i32) -> (i32, i32) {
    %c0_i32 = arith.constant 0 : i32
    %c0_i32_0 = arith.constant 0 : i32
    return %arg0, %c0_i32 : i32, i32
  }
  func.func @transform_1(%arg0: i32, %arg1: i32) -> (i32, i32) {
    %c0_i32 = arith.constant 0 : i32
    %c0_i32_0 = arith.constant 0 : i32
    return %c0_i32, %arg1 : i32, i32
  }
  func.func @transform_2(%arg0: i32, %arg1: i32) -> (i32, i32) {
    %c0_i32 = arith.constant 0 : i32
    %c0_i32_0 = arith.constant 0 : i32
    return %c0_i32, %arg1 : i32, i32
  }
  func.func @transform_3(%arg0: i32, %arg1: i32) -> (i32, i32) {
    %c0_i32 = arith.constant 0 : i32
    return %arg0, %arg1 : i32, i32
  }
  func.func @transform_4(%arg0: i32, %arg1: i32) -> (i32, i32) {
    %c0_i32 = arith.constant 0 : i32
    return %arg0, %arg1 : i32, i32
  }
}

module attributes {stable_mosaic.version = 11 : i64} {
  func.func @_linear_kernel(%arg0: i32, %arg1: i32, %arg2: memref<32x512xbf16, #tpu.memory_space<vmem>>, %arg3: memref<512x256xbf16, #tpu.memory_space<vmem>>, %arg4: memref<1x256xf32, #tpu.memory_space<vmem>>, %arg5: memref<32x256xf32, #tpu.memory_space<vmem>>) attributes {dimension_semantics = [#tpu.dimension_semantics<parallel>, #tpu.dimension_semantics<parallel>], iteration_bounds = array<i64: 1, 1>, scalar_prefetch = 0 : i64, scratch_operands = 0 : i64, tpu.core_type = #tpu.core_type<tc>, window_params = [{transform_indices = @transform_0, window_bounds = array<i64: 32, 512>}, {transform_indices = @transform_1, window_bounds = array<i64: 512, 256>}, {transform_indices = @transform_2, window_bounds = array<i64: 1, 256>}, {transform_indices = @transform_3, window_bounds = array<i64: 32, 256>}]} {
    %c0 = arith.constant 0 : index
    %c0_0 = arith.constant 0 : index
    %0 = vector.load %arg2[%c0, %c0_0] : memref<32x512xbf16, #tpu.memory_space<vmem>>, vector<32x512xbf16>
    %c0_1 = arith.constant 0 : index
    %c0_2 = arith.constant 0 : index
    %1 = vector.load %arg3[%c0_1, %c0_2] : memref<512x256xbf16, #tpu.memory_space<vmem>>, vector<512x256xbf16>
    %cst = arith.constant dense<0.000000e+00> : vector<32x256xf32>
    %2 = tpu.matmul %0, %1, %cst {dimension_numbers = #tpu.dot_dimension_numbers<[1], [0], [0], [1], [0, 0, 1, 1], [], []>} : vector<32x512xbf16>, vector<512x256xbf16>, vector<32x256xf32> -> vector<32x256xf32>
    %c0_3 = arith.constant 0 : index
    %c0_4 = arith.constant 0 : index
    %3 = vector.load %arg4[%c0_3, %c0_4] : memref<1x256xf32, #tpu.memory_space<vmem>>, vector<1x256xf32>
    %4 = vector.broadcast %3 : vector<1x256xf32> to vector<32x256xf32>
    %5 = arith.addf %2, %4 : vector<32x256xf32>
    %c0_5 = arith.constant 0 : index
    %c0_6 = arith.constant 0 : index
    %6 = vector.load %arg5[%c0_5, %c0_6] : memref<32x256xf32, #tpu.memory_space<vmem>>, vector<32x256xf32>
    tpu.vector_store %arg5[%c0_5, %c0_6], %5 {strides = array<i32>} : memref<32x256xf32, #tpu.memory_space<vmem>>, vector<32x256xf32>,
    return
  }
  func.func @transform_0(%arg0: i32, %arg1: i32) -> (i32, i32) {
    %c0_i32 = arith.constant 0 : i32
    %c0_i32_0 = arith.constant 0 : i32
    return %arg0, %c0_i32 : i32, i32
  }
  func.func @transform_1(%arg0: i32, %arg1: i32) -> (i32, i32) {
    %c0_i32 = arith.constant 0 : i32
    %c0_i32_0 = arith.constant 0 : i32
    return %c0_i32, %arg1 : i32, i32
  }
  func.func @transform_2(%arg0: i32, %arg1: i32) -> (i32, i32) {
    %c0_i32 = arith.constant 0 : i32
    %c0_i32_0 = arith.constant 0 : i32
    return %c0_i32, %arg1 : i32, i32
  }
  func.func @transform_3(%arg0: i32, %arg1: i32) -> (i32, i32) {
    %c0_i32 = arith.constant 0 : i32
    return %arg0, %arg1 : i32, i32
  }
}

</mosaic_0001>

<llo_original>
// kernel: custom_model_forward.11
$region0: #{custom_model_forward.11}
  #allocation0 [shape = 'u32[]', space=smem, size = 0x4, offset = 0x4, fixed_abs, tag = 'smem constant byte address 0x4 - core index']
  #allocation1 [shape = 'u32[144,128]{1,0:T(1,128)}', space=vmem, size = 0x12000, scoped, tag = 'internal scratch']
  %s0 = inlined_call_operand.vmem [shape: bf16[32,512], index: 0, kind: input, shape index: {}]
  %s1 = inlined_call_operand.vmem [shape: bf16[512,512], index: 1, kind: input, shape index: {}]
  %s2 = inlined_call_operand.vmem [shape: f32[1,512], index: 2, kind: input, shape index: {}]
  %s3 = inlined_call_operand.vmem [shape: bf16[32,512], index: 3, kind: output, shape index: {}]
  %s4 = sld [smem:[#allocation0]]
  $region22: #{custom_model_forward.11} parent=0
    _
  %s6 = ssub.s32 1, %s4
  %s7 = scalar_select 0, %s6, %s4
  // Predicated region
  $region2: #{custom_model_forward.11} parent=0 // pred_check
    _
  $region3: #{custom_model_forward.11} parent=0 // pred_check_branch
    %9 = sbr.rel (0) target = $region5
  $region4: #{custom_model_forward.11} parent=0 // pred_region
    _
  $region5: #{custom_model_forward.11} parent=0 // pred_fallthru
    _
  // Predicated region
  $region6: #{custom_model_forward.11} parent=0 // pred_check
    _
  $region7: #{custom_model_forward.11} parent=0 // pred_check_branch
    %11 = sbr.rel (0) target = $region9
  $region8: #{custom_model_forward.11} parent=0 // pred_region
    _
  $region9: #{custom_model_forward.11} parent=0 // pred_fallthru
    _
  // Predicated region
  $region10: #{custom_model_forward.11} parent=0 // pred_check
    _
  $region11: #{custom_model_forward.11} parent=0 // pred_check_branch
    %13 = sbr.rel (0) target = $region13
  $region12: #{custom_model_forward.11} parent=0 // pred_region
    _
  $region13: #{custom_model_forward.11} parent=0 // pred_fallthru
    _
  %v14 = vld [vmem:[%s0] sm:$0xff]
  %v15 = vld [vmem:[%s0 + $0x8] sm:$0xff]
  %v16 = vld [vmem:[%s0 + $0x10] sm:$0xff]
  %v17 = vld [vmem:[%s0 + $0x18] sm:$0xff]
  %v18 = vld [vmem:[%s0 + $0x20] sm:$0xff]
  %v19 = vld [vmem:[%s0 + $0x28] sm:$0xff]
  %v20 = vld [vmem:[%s0 + $0x30] sm:$0xff]
  %v21 = vld [vmem:[%s0 + $0x38] sm:$0xff]
  %v22 = vld [vmem:[%s1] sm:$0xff]
  %v23 = vld [vmem:[%s1 + $0x8] sm:$0xff]
  %v24 = vld [vmem:[%s1 + $0x10] sm:$0xff]
  %v25 = vld [vmem:[%s1 + $0x18] sm:$0xff]
  %v26 = vld [vmem:[%s1 + $0x20] sm:$0xff]
  %v27 = vld [vmem:[%s1 + $0x28] sm:$0xff]
  %v28 = vld [vmem:[%s1 + $0x30] sm:$0xff]
  %v29 = vld [vmem:[%s1 + $0x38] sm:$0xff]
  %v30 = vld [vmem:[%s1 + $0x40] sm:$0xff]
  %v31 = vld [vmem:[%s1 + $0x48] sm:$0xff]
  %v32 = vld [vmem:[%s1 + $0x50] sm:$0xff]
  %v33 = vld [vmem:[%s1 + $0x58] sm:$0xff]
  %v34 = vld [vmem:[%s1 + $0x60] sm:$0xff]
  %v35 = vld [vmem:[%s1 + $0x68] sm:$0xff]
  %v36 = vld [vmem:[%s1 + $0x70] sm:$0xff]
  %v37 = vld [vmem:[%s1 + $0x78] sm:$0xff]
  %v38 = vld [vmem:[%s1 + $0x80] sm:$0xff]
  %v39 = vld [vmem:[%s1 + $0x88] sm:$0xff]
  %v40 = vld [vmem:[%s1 + $0x90] sm:$0xff]
  %v41 = vld [vmem:[%s1 + $0x98] sm:$0xff]
  %v42 = vld [vmem:[%s1 + $0xa0] sm:$0xff]
  %v43 = vld [vmem:[%s1 + $0xa8] sm:$0xff]
  %v44 = vld [vmem:[%s1 + $0xb0] sm:$0xff]
  %v45 = vld [vmem:[%s1 + $0xb8] sm:$0xff]
  %v46 = vld [vmem:[%s1 + $0xc0] sm:$0xff]
  %v47 = vld [vmem:[%s1 + $0xc8] sm:$0xff]
  %v48 = vld [vmem:[%s1 + $0xd0] sm:$0xff]
  %v49 = vld [vmem:[%s1 + $0xd8] sm:$0xff]
  %v50 = vld [vmem:[%s1 + $0xe0] sm:$0xff]
  %v51 = vld [vmem:[%s1 + $0xe8] sm:$0xff]
  %v52 = vld [vmem:[%s1 + $0xf0] sm:$0xff]
  %v53 = vld [vmem:[%s1 + $0xf8] sm:$0xff]
  %v54 = vld [vmem:[%s1 + $0x100] sm:$0xff]
  %v55 = vld [vmem:[%s1 + $0x108] sm:$0xff]
  %v56 = vld [vmem:[%s1 + $0x110] sm:$0xff]
  %v57 = vld [vmem:[%s1 + $0x118] sm:$0xff]
  %v58 = vld [vmem:[%s1 + $0x120] sm:$0xff]
  %v59 = vld [vmem:[%s1 + $0x128] sm:$0xff]
  %v60 = vld [vmem:[%s1 + $0x130] sm:$0xff]
  %v61 = vld [vmem:[%s1 + $0x138] sm:$0xff]
  %v62 = vld [vmem:[%s1 + $0x140] sm:$0xff]
  %v63 = vld [vmem:[%s1 + $0x148] sm:$0xff]
  %v64 = vld [vmem:[%s1 + $0x150] sm:$0xff]
  %v65 = vld [vmem:[%s1 + $0x158] sm:$0xff]
  %v66 = vld [vmem:[%s1 + $0x160] sm:$0xff]
  %v67 = vld [vmem:[%s1 + $0x168] sm:$0xff]
  %v68 = vld [vmem:[%s1 + $0x170] sm:$0xff]
  %v69 = vld [vmem:[%s1 + $0x178] sm:$0xff]
  %v70 = vld [vmem:[%s1 + $0x180] sm:$0xff]
  %v71 = vld [vmem:[%s1 + $0x188] sm:$0xff]
  %v72 = vld [vmem:[%s1 + $0x190] sm:$0xff]
  %v73 = vld [vmem:[%s1 + $0x198] sm:$0xff]
  %v74 = vld [vmem:[%s1 + $0x1a0] sm:$0xff]
  %v75 = vld [vmem:[%s1 + $0x1a8] sm:$0xff]
  %v76 = vld [vmem:[%s1 + $0x1b0] sm:$0xff]
  %v77 = vld [vmem:[%s1 + $0x1b8] sm:$0xff]
  %v78 = vld [vmem:[%s1 + $0x1c0] sm:$0xff]
  %v79 = vld [vmem:[%s1 + $0x1c8] sm:$0xff]
  %v80 = vld [vmem:[%s1 + $0x1d0] sm:$0xff]
  %v81 = vld [vmem:[%s1 + $0x1d8] sm:$0xff]
  %v82 = vld [vmem:[%s1 + $0x1e0] sm:$0xff]
  %v83 = vld [vmem:[%s1 + $0x1e8] sm:$0xff]
  %v84 = vld [vmem:[%s1 + $0x1f0] sm:$0xff]
  %v85 = vld [vmem:[%s1 + $0x1f8] sm:$0xff]
  %v86 = vld [vmem:[%s1 + $0x200] sm:$0xff]
  %v87 = vld [vmem:[%s1 + $0x208] sm:$0xff]
  %v88 = vld [vmem:[%s1 + $0x210] sm:$0xff]
  %v89 = vld [vmem:[%s1 + $0x218] sm:$0xff]
  %v90 = vld [vmem:[%s1 + $0x220] sm:$0xff]
  %v91 = vld [vmem:[%s1 + $0x228] sm:$0xff]
  %v92 = vld [vmem:[%s1 + $0x230] sm:$0xff]
  %v93 = vld [vmem:[%s1 + $0x238] sm:$0xff]
  %v94 = vld [vmem:[%s1 + $0x240] sm:$0xff]
  %v95 = vld [vmem:[%s1 + $0x248] sm:$0xff]
  %v96 = vld [vmem:[%s1 + $0x250] sm:$0xff]
  %v97 = vld [vmem:[%s1 + $0x258] sm:$0xff]
  %v98 = vld [vmem:[%s1 + $0x260] sm:$0xff]
  %v99 = vld [vmem:[%s1 + $0x268] sm:$0xff]
  %v100 = vld [vmem:[%s1 + $0x270] sm:$0xff]
  %v101 = vld [vmem:[%s1 + $0x278] sm:$0xff]
  %v102 = vld [vmem:[%s1 + $0x280] sm:$0xff]
  %v103 = vld [vmem:[%s1 + $0x288] sm:$0xff]
  %v104 = vld [vmem:[%s1 + $0x290] sm:$0xff]
  %v105 = vld [vmem:[%s1 + $0x298] sm:$0xff]
  %v106 = vld [vmem:[%s1 + $0x2a0] sm:$0xff]
  %v107 = vld [vmem:[%s1 + $0x2a8] sm:$0xff]
  %v108 = vld [vmem:[%s1 + $0x2b0] sm:$0xff]
  %v109 = vld [vmem:[%s1 + $0x2b8] sm:$0xff]
  %v110 = vld [vmem:[%s1 + $0x2c0] sm:$0xff]
  %v111 = vld [vmem:[%s1 + $0x2c8] sm:$0xff]
  %v112 = vld [vmem:[%s1 + $0x2d0] sm:$0xff]
  %v113 = vld [vmem:[%s1 + $0x2d8] sm:$0xff]
  %v114 = vld [vmem:[%s1 + $0x2e0] sm:$0xff]
  %v115 = vld [vmem:[%s1 + $0x2e8] sm:$0xff]
  %v116 = vld [vmem:[%s1 + $0x2f0] sm:$0xff]
  %v117 = vld [vmem:[%s1 + $0x2f8] sm:$0xff]
  %v118 = vld [vmem:[%s1 + $0x300] sm:$0xff]
  %v119 = vld [vmem:[%s1 + $0x308] sm:$0xff]
  %v120 = vld [vmem:[%s1 + $0x310] sm:$0xff]
  %v121 = vld [vmem:[%s1 + $0x318] sm:$0xff]
  %v122 = vld [vmem:[%s1 + $0x320] sm:$0xff]
  %v123 = vld [vmem:[%s1 + $0x328] sm:$0xff]
  %v124 = vld [vmem:[%s1 + $0x330] sm:$0xff]
  %v125 = vld [vmem:[%s1 + $0x338] sm:$0xff]
  %v126 = vld [vmem:[%s1 + $0x340] sm:$0xff]
  %v127 = vld [vmem:[%s1 + $0x348] sm:$0xff]
  %v128 = vld [vmem:[%s1 + $0x350] sm:$0xff]
  %v129 = vld [vmem:[%s1 + $0x358] sm:$0xff]
  %v130 = vld [vmem:[%s1 + $0x360] sm:$0xff]
  %v131 = vld [vmem:[%s1 + $0x368] sm:$0xff]
  %v132 = vld [vmem:[%s1 + $0x370] sm:$0xff]
  %v133 = vld [vmem:[%s1 + $0x378] sm:$0xff]
  %v134 = vld [vmem:[%s1 + $0x380] sm:$0xff]
  %v135 = vld [vmem:[%s1 + $0x388] sm:$0xff]
  %v136 = vld [vmem:[%s1 + $0x390] sm:$0xff]
  %v137 = vld [vmem:[%s1 + $0x398] sm:$0xff]
  %v138 = vld [vmem:[%s1 + $0x3a0] sm:$0xff]
  %v139 = vld [vmem:[%s1 + $0x3a8] sm:$0xff]
  %v140 = vld [vmem:[%s1 + $0x3b0] sm:$0xff]
  %v141 = vld [vmem:[%s1 + $0x3b8] sm:$0xff]
  %v142 = vld [vmem:[%s1 + $0x3c0] sm:$0xff]
  %v143 = vld [vmem:[%s1 + $0x3c8] sm:$0xff]
  %v144 = vld [vmem:[%s1 + $0x3d0] sm:$0xff]
  %v145 = vld [vmem:[%s1 + $0x3d8] sm:$0xff]
  %v146 = vld [vmem:[%s1 + $0x3e0] sm:$0xff]
  %v147 = vld [vmem:[%s1 + $0x3e8] sm:$0xff]
  %v148 = vld [vmem:[%s1 + $0x3f0] sm:$0xff]
  %v149 = vld [vmem:[%s1 + $0x3f8] sm:$0xff]
  %v150 = vld [vmem:[%s2] sm:$0xf]
  %v152 = vlaneseq
  %v153 = vshrl.u32 %v152, 7
  %v154 = vsub.s32 0, %v153
  %v155 = vrot.slane %v150, %v154
  %v156 = vlaneseq
  %v157 = vshrl.u32 %v156, 7
  %v158 = vsub.s32 1, %v157
  %v159 = vrot.slane %v150, %v158
  %v160 = vlaneseq
  %v161 = vshrl.u32 %v160, 7
  %v162 = vsub.s32 2, %v161
  %v163 = vrot.slane %v150, %v162
  %v164 = vlaneseq
  %v165 = vshrl.u32 %v164, 7
  %v166 = vsub.s32 3, %v165
  %v167 = vrot.slane %v150, %v166
  %v180 = vunpack.c.l.b16 %v14
  %v181 = vunpack.c.h.b16 %v14
  %v182 = vunpack.c.l.b16 %v15
  %v183 = vunpack.c.h.b16 %v15
  %v184 = vunpack.c.l.b16 %v16
  %v185 = vunpack.c.h.b16 %v16
  %v186 = vunpack.c.l.b16 %v17
  %v187 = vunpack.c.h.b16 %v17
  %v188 = vunpack.c.l.b16 %v18
  %v189 = vunpack.c.h.b16 %v18
  %v190 = vunpack.c.l.b16 %v19
  %v191 = vunpack.c.h.b16 %v19
  %v192 = vunpack.c.l.b16 %v20
  %v193 = vunpack.c.h.b16 %v20
  %v194 = vunpack.c.l.b16 %v21
  %v195 = vunpack.c.h.b16 %v21
  %v196 = vpack.c.b16 %v184, %v180
  %v197 = vpack.c.b16 %v185, %v181
  %v198 = vpack.c.b16 %v186, %v182
  %v199 = vpack.c.b16 %v187, %v183
  %v200 = vpack.c.b16 %v192, %v188
  %v201 = vpack.c.b16 %v193, %v189
  %v202 = vpack.c.b16 %v194, %v190
  %v203 = vpack.c.b16 %v195, %v191
  %v340 = vunpack.c.l.b16 %v22
  %v341 = vunpack.c.h.b16 %v22
  %v342 = vunpack.c.l.b16 %v23
  %v343 = vunpack.c.h.b16 %v23
  %v344 = vunpack.c.l.b16 %v24
  %v345 = vunpack.c.h.b16 %v24
  %v346 = vunpack.c.l.b16 %v25
  %v347 = vunpack.c.h.b16 %v25
  %v348 = vunpack.c.l.b16 %v26
  %v349 = vunpack.c.h.b16 %v26
  %v350 = vunpack.c.l.b16 %v27
  %v351 = vunpack.c.h.b16 %v27
  %v352 = vunpack.c.l.b16 %v28
  %v353 = vunpack.c.h.b16 %v28
  %v354 = vunpack.c.l.b16 %v29
  %v355 = vunpack.c.h.b16 %v29
  %v356 = vunpack.c.l.b16 %v30
  %v357 = vunpack.c.h.b16 %v30
  %v358 = vunpack.c.l.b16 %v31
  %v359 = vunpack.c.h.b16 %v31
  %v360 = vunpack.c.l.b16 %v32
  %v361 = vunpack.c.h.b16 %v32
  %v362 = vunpack.c.l.b16 %v33
  %v363 = vunpack.c.h.b16 %v33
  %v364 = vunpack.c.l.b16 %v34
  %v365 = vunpack.c.h.b16 %v34
  %v366 = vunpack.c.l.b16 %v35
  %v367 = vunpack.c.h.b16 %v35
  %v368 = vunpack.c.l.b16 %v36
  %v369 = vunpack.c.h.b16 %v36
  %v370 = vunpack.c.l.b16 %v37
  %v371 = vunpack.c.h.b16 %v37
  %v372 = vunpack.c.l.b16 %v38
  %v373 = vunpack.c.h.b16 %v38
  %v374 = vunpack.c.l.b16 %v39
  %v375 = vunpack.c.h.b16 %v39
  %v376 = vunpack.c.l.b16 %v40
  %v377 = vunpack.c.h.b16 %v40
  %v378 = vunpack.c.l.b16 %v41
  %v379 = vunpack.c.h.b16 %v41
  %v380 = vunpack.c.l.b16 %v42
  %v381 = vunpack.c.h.b16 %v42
  %v382 = vunpack.c.l.b16 %v43
  %v383 = vunpack.c.h.b16 %v43
  %v384 = vunpack.c.l.b16 %v44
  %v385 = vunpack.c.h.b16 %v44
  %v386 = vunpack.c.l.b16 %v45
  %v387 = vunpack.c.h.b16 %v45
  %v388 = vunpack.c.l.b16 %v46
  %v389 = vunpack.c.h.b16 %v46
  %v390 = vunpack.c.l.b16 %v47
  %v391 = vunpack.c.h.b16 %v47
  %v392 = vunpack.c.l.b16 %v48
  %v393 = vunpack.c.h.b16 %v48
  %v394 = vunpack.c.l.b16 %v49
  %v395 = vunpack.c.h.b16 %v49
  %v396 = vunpack.c.l.b16 %v50
  %v397 = vunpack.c.h.b16 %v50
  %v398 = vunpack.c.l.b16 %v51
  %v399 = vunpack.c.h.b16 %v51
  %v400 = vunpack.c.l.b16 %v52
  %v401 = vunpack.c.h.b16 %v52
  %v402 = vunpack.c.l.b16 %v53
  %v403 = vunpack.c.h.b16 %v53
  %v404 = vunpack.c.l.b16 %v54
  %v405 = vunpack.c.h.b16 %v54
  %v406 = vunpack.c.l.b16 %v55
  %v407 = vunpack.c.h.b16 %v55
  %v408 = vunpack.c.l.b16 %v56
  %v409 = vunpack.c.h.b16 %v56
  %v410 = vunpack.c.l.b16 %v57
  %v411 = vunpack.c.h.b16 %v57
  %v412 = vunpack.c.l.b16 %v58
  %v413 = vunpack.c.h.b16 %v58
  %v414 = vunpack.c.l.b16 %v59
  %v415 = vunpack.c.h.b16 %v59
  %v416 = vunpack.c.l.b16 %v60
  %v417 = vunpack.c.h.b16 %v60
  %v418 = vunpack.c.l.b16 %v61
  %v419 = vunpack.c.h.b16 %v61
  %v420 = vunpack.c.l.b16 %v62
  %v421 = vunpack.c.h.b16 %v62
  %v422 = vunpack.c.l.b16 %v63
  %v423 = vunpack.c.h.b16 %v63
  %v424 = vunpack.c.l.b16 %v64
  %v425 = vunpack.c.h.b16 %v64
  %v426 = vunpack.c.l.b16 %v65
  %v427 = vunpack.c.h.b16 %v65
  %v428 = vunpack.c.l.b16 %v66
  %v429 = vunpack.c.h.b16 %v66
  %v430 = vunpack.c.l.b16 %v67
  %v431 = vunpack.c.h.b16 %v67
  %v432 = vunpack.c.l.b16 %v68
  %v433 = vunpack.c.h.b16 %v68
  %v434 = vunpack.c.l.b16 %v69
  %v435 = vunpack.c.h.b16 %v69
  %v436 = vunpack.c.l.b16 %v70
  %v437 = vunpack.c.h.b16 %v70
  %v438 = vunpack.c.l.b16 %v71
  %v439 = vunpack.c.h.b16 %v71
  %v440 = vunpack.c.l.b16 %v72
  %v441 = vunpack.c.h.b16 %v72
  %v442 = vunpack.c.l.b16 %v73
  %v443 = vunpack.c.h.b16 %v73
  %v444 = vunpack.c.l.b16 %v74
  %v445 = vunpack.c.h.b16 %v74
  %v446 = vunpack.c.l.b16 %v75
  %v447 = vunpack.c.h.b16 %v75
  %v448 = vunpack.c.l.b16 %v76
  %v449 = vunpack.c.h.b16 %v76
  %v450 = vunpack.c.l.b16 %v77
  %v451 = vunpack.c.h.b16 %v77
  %v452 = vunpack.c.l.b16 %v78
  %v453 = vunpack.c.h.b16 %v78
  %v454 = vunpack.c.l.b16 %v79
  %v455 = vunpack.c.h.b16 %v79
  %v456 = vunpack.c.l.b16 %v80
  %v457 = vunpack.c.h.b16 %v80
  %v458 = vunpack.c.l.b16 %v81
  %v459 = vunpack.c.h.b16 %v81
  %v460 = vunpack.c.l.b16 %v82
  %v461 = vunpack.c.h.b16 %v82
  %v462 = vunpack.c.l.b16 %v83
  %v463 = vunpack.c.h.b16 %v83
  %v464 = vunpack.c.l.b16 %v84
  %v465 = vunpack.c.h.b16 %v84
  %v466 = vunpack.c.l.b16 %v85
  %v467 = vunpack.c.h.b16 %v85
  %v468 = vunpack.c.l.b16 %v86
  %v469 = vunpack.c.h.b16 %v86
  %v470 = vunpack.c.l.b16 %v87
  %v471 = vunpack.c.h.b16 %v87
  %v472 = vunpack.c.l.b16 %v88
  %v473 = vunpack.c.h.b16 %v88
  %v474 = vunpack.c.l.b16 %v89
  %v475 = vunpack.c.h.b16 %v89
  %v476 = vunpack.c.l.b16 %v90
  %v477 = vunpack.c.h.b16 %v90
  %v478 = vunpack.c.l.b16 %v91
  %v479 = vunpack.c.h.b16 %v91
  %v480 = vunpack.c.l.b16 %v92
  %v481 = vunpack.c.h.b16 %v92
  %v482 = vunpack.c.l.b16 %v93
  %v483 = vunpack.c.h.b16 %v93
  %v484 = vunpack.c.l.b16 %v94
  %v485 = vunpack.c.h.b16 %v94
  %v486 = vunpack.c.l.b16 %v95
  %v487 = vunpack.c.h.b16 %v95
  %v488 = vunpack.c.l.b16 %v96
  %v489 = vunpack.c.h.b16 %v96
  %v490 = vunpack.c.l.b16 %v97
  %v491 = vunpack.c.h.b16 %v97
  %v492 = vunpack.c.l.b16 %v98
  %v493 = vunpack.c.h.b16 %v98
  %v494 = vunpack.c.l.b16 %v99
  %v495 = vunpack.c.h.b16 %v99
  %v496 = vunpack.c.l.b16 %v100
  %v497 = vunpack.c.h.b16 %v100
  %v498 = vunpack.c.l.b16 %v101
  %v499 = vunpack.c.h.b16 %v101
  %v500 = vunpack.c.l.b16 %v102
  %v501 = vunpack.c.h.b16 %v102
  %v502 = vunpack.c.l.b16 %v103
  %v503 = vunpack.c.h.b16 %v103
  %v504 = vunpack.c.l.b16 %v104
  %v505 = vunpack.c.h.b16 %v104
  %v506 = vunpack.c.l.b16 %v105
  %v507 = vunpack.c.h.b16 %v105
  %v508 = vunpack.c.l.b16 %v106
  %v509 = vunpack.c.h.b16 %v106
  %v510 = vunpack.c.l.b16 %v107
  %v511 = vunpack.c.h.b16 %v107
  %v512 = vunpack.c.l.b16 %v108
  %v513 = vunpack.c.h.b16 %v108
  %v514 = vunpack.c.l.b16 %v109
  %v515 = vunpack.c.h.b16 %v109
  %v516 = vunpack.c.l.b16 %v110
  %v517 = vunpack.c.h.b16 %v110
  %v518 = vunpack.c.l.b16 %v111
  %v519 = vunpack.c.h.b16 %v111
  %v520 = vunpack.c.l.b16 %v112
  %v521 = vunpack.c.h.b16 %v112
  %v522 = vunpack.c.l.b16 %v113
  %v523 = vunpack.c.h.b16 %v113
  %v524 = vunpack.c.l.b16 %v114
  %v525 = vunpack.c.h.b16 %v114
  %v526 = vunpack.c.l.b16 %v115
  %v527 = vunpack.c.h.b16 %v115
  %v528 = vunpack.c.l.b16 %v116
  %v529 = vunpack.c.h.b16 %v116
  %v530 = vunpack.c.l.b16 %v117
  %v531 = vunpack.c.h.b16 %v117
  %v532 = vunpack.c.l.b16 %v118
  %v533 = vunpack.c.h.b16 %v118
  %v534 = vunpack.c.l.b16 %v119
  %v535 = vunpack.c.h.b16 %v119
  %v536 = vunpack.c.l.b16 %v120
  %v537 = vunpack.c.h.b16 %v120
  %v538 = vunpack.c.l.b16 %v121
  %v539 = vunpack.c.h.b16 %v121
  %v540 = vunpack.c.l.b16 %v122
  %v541 = vunpack.c.h.b16 %v122
  %v542 = vunpack.c.l.b16 %v123
  %v543 = vunpack.c.h.b16 %v123
  %v544 = vunpack.c.l.b16 %v124
  %v545 = vunpack.c.h.b16 %v124
  %v546 = vunpack.c.l.b16 %v125
  %v547 = vunpack.c.h.b16 %v125
  %v548 = vunpack.c.l.b16 %v126
  %v549 = vunpack.c.h.b16 %v126
  %v550 = vunpack.c.l.b16 %v127
  %v551 = vunpack.c.h.b16 %v127
  %v552 = vunpack.c.l.b16 %v128
  %v553 = vunpack.c.h.b16 %v128
  %v554 = vunpack.c.l.b16 %v129
  %v555 = vunpack.c.h.b16 %v129
  %v556 = vunpack.c.l.b16 %v130
  %v557 = vunpack.c.h.b16 %v130
  %v558 = vunpack.c.l.b16 %v131
  %v559 = vunpack.c.h.b16 %v131
  %v560 = vunpack.c.l.b16 %v132
  %v561 = vunpack.c.h.b16 %v132
  %v562 = vunpack.c.l.b16 %v133
  %v563 = vunpack.c.h.b16 %v133
  %v564 = vunpack.c.l.b16 %v134
  %v565 = vunpack.c.h.b16 %v134
  %v566 = vunpack.c.l.b16 %v135
  %v567 = vunpack.c.h.b16 %v135
  %v568 = vunpack.c.l.b16 %v136
  %v569 = vunpack.c.h.b16 %v136
  %v570 = vunpack.c.l.b16 %v137
  %v571 = vunpack.c.h.b16 %v137
  %v572 = vunpack.c.l.b16 %v138
  %v573 = vunpack.c.h.b16 %v138
  %v574 = vunpack.c.l.b16 %v139
  %v575 = vunpack.c.h.b16 %v139
  %v576 = vunpack.c.l.b16 %v140
  %v577 = vunpack.c.h.b16 %v140
  %v578 = vunpack.c.l.b16 %v141
  %v579 = vunpack.c.h.b16 %v141
  %v580 = vunpack.c.l.b16 %v142
  %v581 = vunpack.c.h.b16 %v142
  %v582 = vunpack.c.l.b16 %v143
  %v583 = vunpack.c.h.b16 %v143
  %v584 = vunpack.c.l.b16 %v144
  %v585 = vunpack.c.h.b16 %v144
  %v586 = vunpack.c.l.b16 %v145
  %v587 = vunpack.c.h.b16 %v145
  %v588 = vunpack.c.l.b16 %v146
  %v589 = vunpack.c.h.b16 %v146
  %v590 = vunpack.c.l.b16 %v147
  %v591 = vunpack.c.h.b16 %v147
  %v592 = vunpack.c.l.b16 %v148
  %v593 = vunpack.c.h.b16 %v148
  %v594 = vunpack.c.l.b16 %v149
  %v595 = vunpack.c.h.b16 %v149
  %v596 = vpack.c.b16 %v344, %v340
  %v597 = vpack.c.b16 %v345, %v341
  %v598 = vpack.c.b16 %v346, %v342
  %v599 = vpack.c.b16 %v347, %v343
  %v600 = vpack.c.b16 %v352, %v348
  %v601 = vpack.c.b16 %v353, %v349
  %v602 = vpack.c.b16 %v354, %v350
  %v603 = vpack.c.b16 %v355, %v351
  %v604 = vpack.c.b16 %v360, %v356
  %v605 = vpack.c.b16 %v361, %v357
  %v606 = vpack.c.b16 %v362, %v358
  %v607 = vpack.c.b16 %v363, %v359
  %v608 = vpack.c.b16 %v368, %v364
  %v609 = vpack.c.b16 %v369, %v365
  %v610 = vpack.c.b16 %v370, %v366
  %v611 = vpack.c.b16 %v371, %v367
  %v612 = vpack.c.b16 %v376, %v372
  %v613 = vpack.c.b16 %v377, %v373
  %v614 = vpack.c.b16 %v378, %v374
  %v615 = vpack.c.b16 %v379, %v375
  %v616 = vpack.c.b16 %v384, %v380
  %v617 = vpack.c.b16 %v385, %v381
  %v618 = vpack.c.b16 %v386, %v382
  %v619 = vpack.c.b16 %v387, %v383
  %v620 = vpack.c.b16 %v392, %v388
  %v621 = vpack.c.b16 %v393, %v389
  %v622 = vpack.c.b16 %v394, %v390
  %v623 = vpack.c.b16 %v395, %v391
  %v624 = vpack.c.b16 %v400, %v396
  %v625 = vpack.c.b16 %v401, %v397
  %v626 = vpack.c.b16 %v402, %v398
  %v627 = vpack.c.b16 %v403, %v399
  %v628 = vpack.c.b16 %v408, %v404
  %v629 = vpack.c.b16 %v409, %v405
  %v630 = vpack.c.b16 %v410, %v406
  %v631 = vpack.c.b16 %v411, %v407
  %v632 = vpack.c.b16 %v416, %v412
  %v633 = vpack.c.b16 %v417, %v413
  %v634 = vpack.c.b16 %v418, %v414
  %v635 = vpack.c.b16 %v419, %v415
  %v636 = vpack.c.b16 %v424, %v420
  %v637 = vpack.c.b16 %v425, %v421
  %v638 = vpack.c.b16 %v426, %v422
  %v639 = vpack.c.b16 %v427, %v423
  %v640 = vpack.c.b16 %v432, %v428
  %v641 = vpack.c.b16 %v433, %v429
  %v642 = vpack.c.b16 %v434, %v430
  %v643 = vpack.c.b16 %v435, %v431
  %v644 = vpack.c.b16 %v440, %v436
  %v645 = vpack.c.b16 %v441, %v437
  %v646 = vpack.c.b16 %v442, %v438
  %v647 = vpack.c.b16 %v443, %v439
  %v648 = vpack.c.b16 %v448, %v444
  %v649 = vpack.c.b16 %v449, %v445
  %v650 = vpack.c.b16 %v450, %v446
  %v651 = vpack.c.b16 %v451, %v447
  %v652 = vpack.c.b16 %v456, %v452
  %v653 = vpack.c.b16 %v457, %v453
  %v654 = vpack.c.b16 %v458, %v454
  %v655 = vpack.c.b16 %v459, %v455
  %v656 = vpack.c.b16 %v464, %v460
  %v657 = vpack.c.b16 %v465, %v461
  %v658 = vpack.c.b16 %v466, %v462
  %v659 = vpack.c.b16 %v467, %v463
  %v660 = vpack.c.b16 %v472, %v468
  %v661 = vpack.c.b16 %v473, %v469
  %v662 = vpack.c.b16 %v474, %v470
  %v663 = vpack.c.b16 %v475, %v471
  %v664 = vpack.c.b16 %v480, %v476
  %v665 = vpack.c.b16 %v481, %v477
  %v666 = vpack.c.b16 %v482, %v478
  %v667 = vpack.c.b16 %v483, %v479
  %v668 = vpack.c.b16 %v488, %v484
  %v669 = vpack.c.b16 %v489, %v485
  %v670 = vpack.c.b16 %v490, %v486
  %v671 = vpack.c.b16 %v491, %v487
  %v672 = vpack.c.b16 %v496, %v492
  %v673 = vpack.c.b16 %v497, %v493
  %v674 = vpack.c.b16 %v498, %v494
  %v675 = vpack.c.b16 %v499, %v495
  %v676 = vpack.c.b16 %v504, %v500
  %v677 = vpack.c.b16 %v505, %v501
  %v678 = vpack.c.b16 %v506, %v502
  %v679 = vpack.c.b16 %v507, %v503
  %v680 = vpack.c.b16 %v512, %v508
  %v681 = vpack.c.b16 %v513, %v509
  %v682 = vpack.c.b16 %v514, %v510
  %v683 = vpack.c.b16 %v515, %v511
  %v684 = vpack.c.b16 %v520, %v516
  %v685 = vpack.c.b16 %v521, %v517
  %v686 = vpack.c.b16 %v522, %v518
  %v687 = vpack.c.b16 %v523, %v519
  %v688 = vpack.c.b16 %v528, %v524
  %v689 = vpack.c.b16 %v529, %v525
  %v690 = vpack.c.b16 %v530, %v526
  %v691 = vpack.c.b16 %v531, %v527
  %v692 = vpack.c.b16 %v536, %v532
  %v693 = vpack.c.b16 %v537, %v533
  %v694 = vpack.c.b16 %v538, %v534
  %v695 = vpack.c.b16 %v539, %v535
  %v696 = vpack.c.b16 %v544, %v540
  %v697 = vpack.c.b16 %v545, %v541
  %v698 = vpack.c.b16 %v546, %v542
  %v699 = vpack.c.b16 %v547, %v543
  %v700 = vpack.c.b16 %v552, %v548
  %v701 = vpack.c.b16 %v553, %v549
  %v702 = vpack.c.b16 %v554, %v550
  %v703 = vpack.c.b16 %v555, %v551
  %v704 = vpack.c.b16 %v560, %v556
  %v705 = vpack.c.b16 %v561, %v557
  %v706 = vpack.c.b16 %v562, %v558
  %v707 = vpack.c.b16 %v563, %v559
  %v708 = vpack.c.b16 %v568, %v564
  %v709 = vpack.c.b16 %v569, %v565
  %v710 = vpack.c.b16 %v570, %v566
  %v711 = vpack.c.b16 %v571, %v567
  %v712 = vpack.c.b16 %v576, %v572
  %v713 = vpack.c.b16 %v577, %v573
  %v714 = vpack.c.b16 %v578, %v574
  %v715 = vpack.c.b16 %v579, %v575
  %v716 = vpack.c.b16 %v584, %v580
  %v717 = vpack.c.b16 %v585, %v581
  %v718 = vpack.c.b16 %v586, %v582
  %v719 = vpack.c.b16 %v587, %v583
  %v720 = vpack.c.b16 %v592, %v588
  %v721 = vpack.c.b16 %v593, %v589
  %v722 = vpack.c.b16 %v594, %v590
  %v723 = vpack.c.b16 %v595, %v591
  %852 = vmatprep.subr.bf16.mxu0 %v625
  %853 = vmatpush1.bf16.msra.mxu0 %v624
  %854 = vmatprep.subr.bf16.mxu0 %v621
  %855 = vmatpush1.bf16.msra.mxu0 %v620
  %856 = vmatprep.subr.bf16.mxu0 %v617
  %857 = vmatpush1.bf16.msra.mxu0 %v616
  %858 = vmatprep.subr.bf16.mxu0 %v613
  %859 = vmatpush1.bf16.msra.mxu0 %v612
  %860 = vmatprep.subr.bf16.mxu0 %v609
  %861 = vmatpush1.bf16.msra.mxu0 %v608
  %862 = vmatprep.subr.bf16.mxu0 %v605
  %863 = vmatpush1.bf16.msra.mxu0 %v604
  %864 = vmatprep.subr.bf16.mxu0 %v601
  %865 = vmatpush1.bf16.msra.mxu0 %v600
  %866 = vmatprep.subr.bf16.mxu0 %v597
  %867 = vmatpush1.bf16.msra.mxu0 %v596
  %868 = vmatprep.subr.bf16.mxu0 %v657
  %869 = vmatpush2.bf16.msra.mxu0 %v656
  %870 = vmatprep.subr.bf16.mxu0 %v653
  %871 = vmatpush2.bf16.msra.mxu0 %v652
  %872 = vmatprep.subr.bf16.mxu0 %v649
  %873 = vmatpush2.bf16.msra.mxu0 %v648
  %874 = vmatprep.subr.bf16.mxu0 %v645
  %875 = vmatpush2.bf16.msra.mxu0 %v644
  %876 = vmatprep.subr.bf16.mxu0 %v641
  %877 = vmatpush2.bf16.msra.mxu0 %v640
  %878 = vmatprep.subr.bf16.mxu0 %v637
  %879 = vmatpush2.bf16.msra.mxu0 %v636
  %880 = vmatprep.subr.bf16.mxu0 %v633
  %881 = vmatpush2.bf16.msra.mxu0 %v632
  %882 = vmatprep.subr.bf16.mxu0 %v629
  %883 = vmatpush2.bf16.msra.mxu0 %v628
  %884 = vmatprep.mubr.bf16.mxu0 %v197
  %885 = vmatmul.mubr.bf16.gmra.mxu0 %v196
  %v886 = vpop.f32.mrf.mxu0
  %v887 = vadd.f32 %v155, %v886
  %v888 = vpop.f32.mrf.mxu0
  %v889 = vadd.f32 %v159, %v888
  %v890 = vpop.f32.mrf.mxu0
  %v891 = vadd.f32 %v155, %v890
  %v892 = vpop.f32.mrf.mxu0
  %v893 = vadd.f32 %v159, %v892
  %894 = vmatprep.mubr.bf16.mxu0 %v201
  %895 = vmatmul.mubr.bf16.gmra.mxu0 %v200
  %v896 = vpop.f32.mrf.mxu0
  %v897 = vadd.f32 %v155, %v896
  %v898 = vpop.f32.mrf.mxu0
  %v899 = vadd.f32 %v159, %v898
  %v900 = vpop.f32.mrf.mxu0
  %v901 = vadd.f32 %v155, %v900
  %v902 = vpop.f32.mrf.mxu0
  %v903 = vadd.f32 %v159, %v902
  %904 = vdwg.mxu0
  %905 = vmatprep.subr.bf16.mxu0 %v689
  %906 = vmatpush1.bf16.msra.mxu0 %v688
  %907 = vmatprep.subr.bf16.mxu0 %v685
  %908 = vmatpush1.bf16.msra.mxu0 %v684
  %909 = vmatprep.subr.bf16.mxu0 %v681
  %910 = vmatpush1.bf16.msra.mxu0 %v680
  %911 = vmatprep.subr.bf16.mxu0 %v677
  %912 = vmatpush1.bf16.msra.mxu0 %v676
  %913 = vmatprep.subr.bf16.mxu0 %v673
  %914 = vmatpush1.bf16.msra.mxu0 %v672
  %915 = vmatprep.subr.bf16.mxu0 %v669
  %916 = vmatpush1.bf16.msra.mxu0 %v668
  %917 = vmatprep.subr.bf16.mxu0 %v665
  %918 = vmatpush1.bf16.msra.mxu0 %v664
  %919 = vmatprep.subr.bf16.mxu0 %v661
  %920 = vmatpush1.bf16.msra.mxu0 %v660
  %921 = vmatprep.subr.bf16.mxu0 %v721
  %922 = vmatpush2.bf16.msra.mxu0 %v720
  %923 = vmatprep.subr.bf16.mxu0 %v717
  %924 = vmatpush2.bf16.msra.mxu0 %v716
  %925 = vmatprep.subr.bf16.mxu0 %v713
  %926 = vmatpush2.bf16.msra.mxu0 %v712
  %927 = vmatprep.subr.bf16.mxu0 %v709
  %928 = vmatpush2.bf16.msra.mxu0 %v708
  %929 = vmatprep.subr.bf16.mxu0 %v705
  %930 = vmatpush2.bf16.msra.mxu0 %v704
  %931 = vmatprep.subr.bf16.mxu0 %v701
  %932 = vmatpush2.bf16.msra.mxu0 %v700
  %933 = vmatprep.subr.bf16.mxu0 %v697
  %934 = vmatpush2.bf16.msra.mxu0 %v696
  %935 = vmatprep.subr.bf16.mxu0 %v693
  %936 = vmatpush2.bf16.msra.mxu0 %v692
  %937 = vmatprep.mubr.bf16.mxu0 %v199
  %938 = vmatmul.mubr.bf16.gmra.mxu0 %v198
  %v939 = vpop.f32.mrf.mxu0
  %v940 = vadd.f32 %v887, %v939
  %v941 = vpop.f32.mrf.mxu0
  %v942 = vadd.f32 %v889, %v941
  %v943 = vpop.f32.mrf.mxu0
  %v944 = vadd.f32 %v891, %v943
  %v945 = vpop.f32.mrf.mxu0
  %v946 = vadd.f32 %v893, %v945
  %947 = vmatprep.mubr.bf16.mxu0 %v203
  %948 = vmatmul.mubr.bf16.gmra.mxu0 %v202
  %v949 = vpop.f32.mrf.mxu0
  %v950 = vadd.f32 %v897, %v949
  %v951 = vpop.f32.mrf.mxu0
  %v952 = vadd.f32 %v899, %v951
  %v953 = vpop.f32.mrf.mxu0
  %v954 = vadd.f32 %v901, %v953
  %v955 = vpop.f32.mrf.mxu0
  %v956 = vadd.f32 %v903, %v955
  %957 = vdwg.mxu0
  %958 = vmatprep.subr.bf16.mxu0 %v627
  %959 = vmatpush1.bf16.msra.mxu0 %v626
  %960 = vmatprep.subr.bf16.mxu0 %v623
  %961 = vmatpush1.bf16.msra.mxu0 %v622
  %962 = vmatprep.subr.bf16.mxu0 %v619
  %963 = vmatpush1.bf16.msra.mxu0 %v618
  %964 = vmatprep.subr.bf16.mxu0 %v615
  %965 = vmatpush1.bf16.msra.mxu0 %v614
  %966 = vmatprep.subr.bf16.mxu0 %v611
  %967 = vmatpush1.bf16.msra.mxu0 %v610
  %968 = vmatprep.subr.bf16.mxu0 %v607
  %969 = vmatpush1.bf16.msra.mxu0 %v606
  %970 = vmatprep.subr.bf16.mxu0 %v603
  %971 = vmatpush1.bf16.msra.mxu0 %v602
  %972 = vmatprep.subr.bf16.mxu0 %v599
  %973 = vmatpush1.bf16.msra.mxu0 %v598
  %974 = vmatprep.subr.bf16.mxu0 %v659
  %975 = vmatpush2.bf16.msra.mxu0 %v658
  %976 = vmatprep.subr.bf16.mxu0 %v655
  %977 = vmatpush2.bf16.msra.mxu0 %v654
  %978 = vmatprep.subr.bf16.mxu0 %v651
  %979 = vmatpush2.bf16.msra.mxu0 %v650
  %980 = vmatprep.subr.bf16.mxu0 %v647
  %981 = vmatpush2.bf16.msra.mxu0 %v646
  %982 = vmatprep.subr.bf16.mxu0 %v643
  %983 = vmatpush2.bf16.msra.mxu0 %v642
  %984 = vmatprep.subr.bf16.mxu0 %v639
  %985 = vmatpush2.bf16.msra.mxu0 %v638
  %986 = vmatprep.subr.bf16.mxu0 %v635
  %987 = vmatpush2.bf16.msra.mxu0 %v634
  %988 = vmatprep.subr.bf16.mxu0 %v631
  %989 = vmatpush2.bf16.msra.mxu0 %v630
  %990 = vmatprep.mubr.bf16.mxu0 %v197
  %991 = vmatmul.mubr.bf16.gmra.mxu0 %v196
  %v992 = vpop.f32.mrf.mxu0
  %v993 = vadd.f32 %v163, %v992
  %v994 = vpop.f32.mrf.mxu0
  %v995 = vadd.f32 %v167, %v994
  %v996 = vpop.f32.mrf.mxu0
  %v997 = vadd.f32 %v163, %v996
  %v998 = vpop.f32.mrf.mxu0
  %v999 = vadd.f32 %v167, %v998
  %1000 = vmatprep.mubr.bf16.mxu0 %v201
  %1001 = vmatmul.mubr.bf16.gmra.mxu0 %v200
  %v1002 = vpop.f32.mrf.mxu0
  %v1003 = vadd.f32 %v163, %v1002
  %v1004 = vpop.f32.mrf.mxu0
  %v1005 = vadd.f32 %v167, %v1004
  %v1006 = vpop.f32.mrf.mxu0
  %v1007 = vadd.f32 %v163, %v1006
  %v1008 = vpop.f32.mrf.mxu0
  %v1009 = vadd.f32 %v167, %v1008
  %1010 = vdwg.mxu0
  %1011 = vmatprep.subr.bf16.mxu0 %v691
  %1012 = vmatpush1.bf16.msra.mxu0 %v690
  %1013 = vmatprep.subr.bf16.mxu0 %v687
  %1014 = vmatpush1.bf16.msra.mxu0 %v686
  %1015 = vmatprep.subr.bf16.mxu0 %v683
  %1016 = vmatpush1.bf16.msra.mxu0 %v682
  %1017 = vmatprep.subr.bf16.mxu0 %v679
  %1018 = vmatpush1.bf16.msra.mxu0 %v678
  %1019 = vmatprep.subr.bf16.mxu0 %v675
  %1020 = vmatpush1.bf16.msra.mxu0 %v674
  %1021 = vmatprep.subr.bf16.mxu0 %v671
  %1022 = vmatpush1.bf16.msra.mxu0 %v670
  %1023 = vmatprep.subr.bf16.mxu0 %v667
  %1024 = vmatpush1.bf16.msra.mxu0 %v666
  %1025 = vmatprep.subr.bf16.mxu0 %v663
  %1026 = vmatpush1.bf16.msra.mxu0 %v662
  %1027 = vmatprep.subr.bf16.mxu0 %v723
  %1028 = vmatpush2.bf16.msra.mxu0 %v722
  %1029 = vmatprep.subr.bf16.mxu0 %v719
  %1030 = vmatpush2.bf16.msra.mxu0 %v718
  %1031 = vmatprep.subr.bf16.mxu0 %v715
  %1032 = vmatpush2.bf16.msra.mxu0 %v714
  %1033 = vmatprep.subr.bf16.mxu0 %v711
  %1034 = vmatpush2.bf16.msra.mxu0 %v710
  %1035 = vmatprep.subr.bf16.mxu0 %v707
  %1036 = vmatpush2.bf16.msra.mxu0 %v706
  %1037 = vmatprep.subr.bf16.mxu0 %v703
  %1038 = vmatpush2.bf16.msra.mxu0 %v702
  %1039 = vmatprep.subr.bf16.mxu0 %v699
  %1040 = vmatpush2.bf16.msra.mxu0 %v698
  %1041 = vmatprep.subr.bf16.mxu0 %v695
  %1042 = vmatpush2.bf16.msra.mxu0 %v694
  %1043 = vmatprep.mubr.bf16.mxu0 %v199
  %1044 = vmatmul.mubr.bf16.gmra.mxu0 %v198
  %v1045 = vpop.f32.mrf.mxu0
  %v1046 = vadd.f32 %v993, %v1045
  %v1047 = vpop.f32.mrf.mxu0
  %v1048 = vadd.f32 %v995, %v1047
  %v1049 = vpop.f32.mrf.mxu0
  %v1050 = vadd.f32 %v997, %v1049
  %v1051 = vpop.f32.mrf.mxu0
  %v1052 = vadd.f32 %v999, %v1051
  %1053 = vmatprep.mubr.bf16.mxu0 %v203
  %1054 = vmatmul.mubr.bf16.gmra.mxu0 %v202
  %v1055 = vpop.f32.mrf.mxu0
  %v1056 = vadd.f32 %v1003, %v1055
  %v1057 = vpop.f32.mrf.mxu0
  %v1058 = vadd.f32 %v1005, %v1057
  %v1059 = vpop.f32.mrf.mxu0
  %v1060 = vadd.f32 %v1007, %v1059
  %v1061 = vpop.f32.mrf.mxu0
  %v1062 = vadd.f32 %v1009, %v1061
  %1063 = vdwg.mxu0
  %v1064 = vpack.c.bf16 %v944, %v940
  %v1065 = vpack.c.bf16 %v946, %v942
  %v1066 = vpack.c.bf16 %v1050, %v1046
  %v1067 = vpack.c.bf16 %v1052, %v1048
  %v1068 = vpack.c.bf16 %v954, %v950
  %v1069 = vpack.c.bf16 %v956, %v952
  %v1070 = vpack.c.bf16 %v1060, %v1056
  %v1071 = vpack.c.bf16 %v1062, %v1058
  %v1080 = vunpack.c.l.b16 %v1064
  %v1081 = vunpack.c.l.b16 %v1065
  %v1082 = vunpack.c.l.b16 %v1066
  %v1083 = vunpack.c.l.b16 %v1067
  %v1084 = vunpack.c.h.b16 %v1064
  %v1085 = vunpack.c.h.b16 %v1065
  %v1086 = vunpack.c.h.b16 %v1066
  %v1087 = vunpack.c.h.b16 %v1067
  %v1088 = vunpack.c.l.b16 %v1068
  %v1089 = vunpack.c.l.b16 %v1069
  %v1090 = vunpack.c.l.b16 %v1070
  %v1091 = vunpack.c.l.b16 %v1071
  %v1092 = vunpack.c.h.b16 %v1068
  %v1093 = vunpack.c.h.b16 %v1069
  %v1094 = vunpack.c.h.b16 %v1070
  %v1095 = vunpack.c.h.b16 %v1071
  %v1096 = vpack.c.b16 %v1081, %v1080
  %v1097 = vpack.c.b16 %v1083, %v1082
  %v1098 = vpack.c.b16 %v1085, %v1084
  %v1099 = vpack.c.b16 %v1087, %v1086
  %v1100 = vpack.c.b16 %v1089, %v1088
  %v1101 = vpack.c.b16 %v1091, %v1090
  %v1102 = vpack.c.b16 %v1093, %v1092
  %v1103 = vpack.c.b16 %v1095, %v1094
  %1112 = vst [vmem:[%s3] sm:$0xff] %v1096
  %1113 = vst [vmem:[%s3 + $0x8] sm:$0xff] %v1097
  %1114 = vst [vmem:[%s3 + $0x10] sm:$0xff] %v1098
  %1115 = vst [vmem:[%s3 + $0x18] sm:$0xff] %v1099
  %1116 = vst [vmem:[%s3 + $0x20] sm:$0xff] %v1100
  %1117 = vst [vmem:[%s3 + $0x28] sm:$0xff] %v1101
  %1118 = vst [vmem:[%s3 + $0x30] sm:$0xff] %v1102
  %1119 = vst [vmem:[%s3 + $0x38] sm:$0xff] %v1103
  // Predicated region
  $region14: #{custom_model_forward.11} parent=0 // pred_check
    _
  $region15: #{custom_model_forward.11} parent=0 // pred_check_branch
    %1121 = sbr.rel (0) target = $region17
  $region16: #{custom_model_forward.11} parent=0 // pred_region
    _
  $region17: #{custom_model_forward.11} parent=0 // pred_fallthru
    _
  // Predicated region
  $region18: #{custom_model_forward.11} parent=0 // pred_check
    _
  $region19: #{custom_model_forward.11} parent=0 // pred_check_branch
    %1123 = sbr.rel (0) target = $region21
  $region20: #{custom_model_forward.11} parent=0 // pred_region
    _
  $region21: #{custom_model_forward.11} parent=0 // pred_fallthru
    _

// kernel: custom_model_forward.8
$region0: #{custom_model_forward.8}
  #allocation0 [shape = 'u32[]', space=smem, size = 0x4, offset = 0x4, fixed_abs, tag = 'smem constant byte address 0x4 - core index']
  #allocation1 [shape = 'u32[144,128]{1,0:T(1,128)}', space=vmem, size = 0x12000, scoped, tag = 'internal scratch']
  %s0 = inlined_call_operand.vmem [shape: bf16[32,512], index: 0, kind: input, shape index: {}, may-alias: {0,3}]
  %s1 = inlined_call_operand.hbm [shape: bf16[512,512], index: 1, kind: input, shape index: {}]
  %s2 = inlined_call_operand.vmem [shape: f32[1,512], index: 2, kind: input, shape index: {}]
  %s3 = inlined_call_operand.vmem [shape: bf16[32,512], index: 3, kind: input, shape index: {}, may-alias: {0,3}]
  %s4 = inlined_call_operand.vmem [shape: bf16[32,512], index: 4, kind: output, shape index: {}]
  %s5 = sld [smem:[#allocation0]]
  $region30: #{custom_model_forward.8} parent=0
    _
  %s7 = ssub.s32 1, %s5
  %s8 = scalar_select 0, %s7, %s5
  $region1: #{custom_model_forward.8} parent=0
    #allocation2 [shape = 'u8[524288]{0}', space=vmem, size = 0x80000, scoped, tag = 'input window, operand 1, single buffered']
    #allocation3 [shape = 's32[1]{0}', space=sflag, size = 0x4, scoped, tag = 'scoped memory for custom_model_forward.8']
    %9 = vsyncpa [#allocation3], 0
    // Predicated region
    $region2: #{custom_model_forward.8} parent=1 // pred_check
      _
    $region3: #{custom_model_forward.8} parent=1 // pred_check_branch
      %11 = sbr.rel (0) target = $region5
    $region4: #{custom_model_forward.8} parent=1 // pred_region
      _
    $region5: #{custom_model_forward.8} parent=1 // pred_fallthru
      _
    // Predicated region
    $region6: #{custom_model_forward.8} parent=1 // pred_check
      _
    $region7: #{custom_model_forward.8} parent=1 // pred_check_branch
      %13 = sbr.rel (0) target = $region9
    $region8: #{custom_model_forward.8} parent=1 // pred_region
      %s15 = ssub.s32 16384, 16384
      %16 = vsyncadd [#allocation3], %s15
      %s17 = sshll.u32 [#allocation2], 4
      %s18 = int_to_ptr.vmem [resolvable:$true] %s17
      %23 = dma.hbm_to_vmem [thread:$0]  %s1, 16384, %s18, [#allocation3], 256, 256, 16
    $region9: #{custom_model_forward.8} parent=1 // pred_fallthru
      _
    // Predicated region
    $region10: #{custom_model_forward.8} parent=1 // pred_check
      _
    $region11: #{custom_model_forward.8} parent=1 // pred_check_branch
      %25 = sbr.rel (0) target = $region13
    $region12: #{custom_model_forward.8} parent=1 // pred_region
      _
    $region13: #{custom_model_forward.8} parent=1 // pred_fallthru
      _
    // Predicated region
    $region14: #{custom_model_forward.8} parent=1 // pred_check
      _
    $region15: #{custom_model_forward.8} parent=1 // pred_check_branch
      %27 = sbr.rel (0) target = $region17
    $region16: #{custom_model_forward.8} parent=1 // pred_region
      _
    $region17: #{custom_model_forward.8} parent=1 // pred_fallthru
      _
    // Predicated region
    $region18: #{custom_model_forward.8} parent=1 // pred_check
      _
    $region19: #{custom_model_forward.8} parent=1 // pred_check_branch
      %29 = sbr.rel (0) target = $region21
    $region20: #{custom_model_forward.8} parent=1 // pred_region
      %30 = dma.done [#allocation3], 16384
    $region21: #{custom_model_forward.8} parent=1 // pred_fallthru
      _
    %v31 = vld [vmem:[%s0] sm:$0xff]
    %v32 = vld [vmem:[%s0 + $0x8] sm:$0xff]
    %v33 = vld [vmem:[%s0 + $0x10] sm:$0xff]
    %v34 = vld [vmem:[%s0 + $0x18] sm:$0xff]
    %v35 = vld [vmem:[%s0 + $0x20] sm:$0xff]
    %v36 = vld [vmem:[%s0 + $0x28] sm:$0xff]
    %v37 = vld [vmem:[%s0 + $0x30] sm:$0xff]
    %v38 = vld [vmem:[%s0 + $0x38] sm:$0xff]
    %v39 = vld [vmem:[#allocation2] sm:$0xff]
    %v40 = vld [vmem:[#allocation2 + $0x8] sm:$0xff]
    %v41 = vld [vmem:[#allocation2 + $0x10] sm:$0xff]
    %v42 = vld [vmem:[#allocation2 + $0x18] sm:$0xff]
    %v43 = vld [vmem:[#allocation2 + $0x20] sm:$0xff]
    %v44 = vld [vmem:[#allocation2 + $0x28] sm:$0xff]
    %v45 = vld [vmem:[#allocation2 + $0x30] sm:$0xff]
    %v46 = vld [vmem:[#allocation2 + $0x38] sm:$0xff]
    %v47 = vld [vmem:[#allocation2 + $0x40] sm:$0xff]
    %v48 = vld [vmem:[#allocation2 + $0x48] sm:$0xff]
    %v49 = vld [vmem:[#allocation2 + $0x50] sm:$0xff]
    %v50 = vld [vmem:[#allocation2 + $0x58] sm:$0xff]
    %v51 = vld [vmem:[#allocation2 + $0x60] sm:$0xff]
    %v52 = vld [vmem:[#allocation2 + $0x68] sm:$0xff]
    %v53 = vld [vmem:[#allocation2 + $0x70] sm:$0xff]
    %v54 = vld [vmem:[#allocation2 + $0x78] sm:$0xff]
    %v55 = vld [vmem:[#allocation2 + $0x80] sm:$0xff]
    %v56 = vld [vmem:[#allocation2 + $0x88] sm:$0xff]
    %v57 = vld [vmem:[#allocation2 + $0x90] sm:$0xff]
    %v58 = vld [vmem:[#allocation2 + $0x98] sm:$0xff]
    %v59 = vld [vmem:[#allocation2 + $0xa0] sm:$0xff]
    %v60 = vld [vmem:[#allocation2 + $0xa8] sm:$0xff]
    %v61 = vld [vmem:[#allocation2 + $0xb0] sm:$0xff]
    %v62 = vld [vmem:[#allocation2 + $0xb8] sm:$0xff]
    %v63 = vld [vmem:[#allocation2 + $0xc0] sm:$0xff]
    %v64 = vld [vmem:[#allocation2 + $0xc8] sm:$0xff]
    %v65 = vld [vmem:[#allocation2 + $0xd0] sm:$0xff]
    %v66 = vld [vmem:[#allocation2 + $0xd8] sm:$0xff]
    %v67 = vld [vmem:[#allocation2 + $0xe0] sm:$0xff]
    %v68 = vld [vmem:[#allocation2 + $0xe8] sm:$0xff]
    %v69 = vld [vmem:[#allocation2 + $0xf0] sm:$0xff]
    %v70 = vld [vmem:[#allocation2 + $0xf8] sm:$0xff]
    %v71 = vld [vmem:[#allocation2 + $0x100] sm:$0xff]
    %v72 = vld [vmem:[#allocation2 + $0x108] sm:$0xff]
    %v73 = vld [vmem:[#allocation2 + $0x110] sm:$0xff]
    %v74 = vld [vmem:[#allocation2 + $0x118] sm:$0xff]
    %v75 = vld [vmem:[#allocation2 + $0x120] sm:$0xff]
    %v76 = vld [vmem:[#allocation2 + $0x128] sm:$0xff]
    %v77 = vld [vmem:[#allocation2 + $0x130] sm:$0xff]
    %v78 = vld [vmem:[#allocation2 + $0x138] sm:$0xff]
    %v79 = vld [vmem:[#allocation2 + $0x140] sm:$0xff]
    %v80 = vld [vmem:[#allocation2 + $0x148] sm:$0xff]
    %v81 = vld [vmem:[#allocation2 + $0x150] sm:$0xff]
    %v82 = vld [vmem:[#allocation2 + $0x158] sm:$0xff]
    %v83 = vld [vmem:[#allocation2 + $0x160] sm:$0xff]
    %v84 = vld [vmem:[#allocation2 + $0x168] sm:$0xff]
    %v85 = vld [vmem:[#allocation2 + $0x170] sm:$0xff]
    %v86 = vld [vmem:[#allocation2 + $0x178] sm:$0xff]
    %v87 = vld [vmem:[#allocation2 + $0x180] sm:$0xff]
    %v88 = vld [vmem:[#allocation2 + $0x188] sm:$0xff]
    %v89 = vld [vmem:[#allocation2 + $0x190] sm:$0xff]
    %v90 = vld [vmem:[#allocation2 + $0x198] sm:$0xff]
    %v91 = vld [vmem:[#allocation2 + $0x1a0] sm:$0xff]
    %v92 = vld [vmem:[#allocation2 + $0x1a8] sm:$0xff]
    %v93 = vld [vmem:[#allocation2 + $0x1b0] sm:$0xff]
    %v94 = vld [vmem:[#allocation2 + $0x1b8] sm:$0xff]
    %v95 = vld [vmem:[#allocation2 + $0x1c0] sm:$0xff]
    %v96 = vld [vmem:[#allocation2 + $0x1c8] sm:$0xff]
    %v97 = vld [vmem:[#allocation2 + $0x1d0] sm:$0xff]
    %v98 = vld [vmem:[#allocation2 + $0x1d8] sm:$0xff]
    %v99 = vld [vmem:[#allocation2 + $0x1e0] sm:$0xff]
    %v100 = vld [vmem:[#allocation2 + $0x1e8] sm:$0xff]
    %v101 = vld [vmem:[#allocation2 + $0x1f0] sm:$0xff]
    %v102 = vld [vmem:[#allocation2 + $0x1f8] sm:$0xff]
    %v103 = vld [vmem:[#allocation2 + $0x200] sm:$0xff]
    %v104 = vld [vmem:[#allocation2 + $0x208] sm:$0xff]
    %v105 = vld [vmem:[#allocation2 + $0x210] sm:$0xff]
    %v106 = vld [vmem:[#allocation2 + $0x218] sm:$0xff]
    %v107 = vld [vmem:[#allocation2 + $0x220] sm:$0xff]
    %v108 = vld [vmem:[#allocation2 + $0x228] sm:$0xff]
    %v109 = vld [vmem:[#allocation2 + $0x230] sm:$0xff]
    %v110 = vld [vmem:[#allocation2 + $0x238] sm:$0xff]
    %v111 = vld [vmem:[#allocation2 + $0x240] sm:$0xff]
    %v112 = vld [vmem:[#allocation2 + $0x248] sm:$0xff]
    %v113 = vld [vmem:[#allocation2 + $0x250] sm:$0xff]
    %v114 = vld [vmem:[#allocation2 + $0x258] sm:$0xff]
    %v115 = vld [vmem:[#allocation2 + $0x260] sm:$0xff]
    %v116 = vld [vmem:[#allocation2 + $0x268] sm:$0xff]
    %v117 = vld [vmem:[#allocation2 + $0x270] sm:$0xff]
    %v118 = vld [vmem:[#allocation2 + $0x278] sm:$0xff]
    %v119 = vld [vmem:[#allocation2 + $0x280] sm:$0xff]
    %v120 = vld [vmem:[#allocation2 + $0x288] sm:$0xff]
    %v121 = vld [vmem:[#allocation2 + $0x290] sm:$0xff]
    %v122 = vld [vmem:[#allocation2 + $0x298] sm:$0xff]
    %v123 = vld [vmem:[#allocation2 + $0x2a0] sm:$0xff]
    %v124 = vld [vmem:[#allocation2 + $0x2a8] sm:$0xff]
    %v125 = vld [vmem:[#allocation2 + $0x2b0] sm:$0xff]
    %v126 = vld [vmem:[#allocation2 + $0x2b8] sm:$0xff]
    %v127 = vld [vmem:[#allocation2 + $0x2c0] sm:$0xff]
    %v128 = vld [vmem:[#allocation2 + $0x2c8] sm:$0xff]
    %v129 = vld [vmem:[#allocation2 + $0x2d0] sm:$0xff]
    %v130 = vld [vmem:[#allocation2 + $0x2d8] sm:$0xff]
    %v131 = vld [vmem:[#allocation2 + $0x2e0] sm:$0xff]
    %v132 = vld [vmem:[#allocation2 + $0x2e8] sm:$0xff]
    %v133 = vld [vmem:[#allocation2 + $0x2f0] sm:$0xff]
    %v134 = vld [vmem:[#allocation2 + $0x2f8] sm:$0xff]
    %v135 = vld [vmem:[#allocation2 + $0x300] sm:$0xff]
    %v136 = vld [vmem:[#allocation2 + $0x308] sm:$0xff]
    %v137 = vld [vmem:[#allocation2 + $0x310] sm:$0xff]
    %v138 = vld [vmem:[#allocation2 + $0x318] sm:$0xff]
    %v139 = vld [vmem:[#allocation2 + $0x320] sm:$0xff]
    %v140 = vld [vmem:[#allocation2 + $0x328] sm:$0xff]
    %v141 = vld [vmem:[#allocation2 + $0x330] sm:$0xff]
    %v142 = vld [vmem:[#allocation2 + $0x338] sm:$0xff]
    %v143 = vld [vmem:[#allocation2 + $0x340] sm:$0xff]
    %v144 = vld [vmem:[#allocation2 + $0x348] sm:$0xff]
    %v145 = vld [vmem:[#allocation2 + $0x350] sm:$0xff]
    %v146 = vld [vmem:[#allocation2 + $0x358] sm:$0xff]
    %v147 = vld [vmem:[#allocation2 + $0x360] sm:$0xff]
    %v148 = vld [vmem:[#allocation2 + $0x368] sm:$0xff]
    %v149 = vld [vmem:[#allocation2 + $0x370] sm:$0xff]
    %v150 = vld [vmem:[#allocation2 + $0x378] sm:$0xff]
    %v151 = vld [vmem:[#allocation2 + $0x380] sm:$0xff]
    %v152 = vld [vmem:[#allocation2 + $0x388] sm:$0xff]
    %v153 = vld [vmem:[#allocation2 + $0x390] sm:$0xff]
    %v154 = vld [vmem:[#allocation2 + $0x398] sm:$0xff]
    %v155 = vld [vmem:[#allocation2 + $0x3a0] sm:$0xff]
    %v156 = vld [vmem:[#allocation2 + $0x3a8] sm:$0xff]
    %v157 = vld [vmem:[#allocation2 + $0x3b0] sm:$0xff]
    %v158 = vld [vmem:[#allocation2 + $0x3b8] sm:$0xff]
    %v159 = vld [vmem:[#allocation2 + $0x3c0] sm:$0xff]
    %v160 = vld [vmem:[#allocation2 + $0x3c8] sm:$0xff]
    %v161 = vld [vmem:[#allocation2 + $0x3d0] sm:$0xff]
    %v162 = vld [vmem:[#allocation2 + $0x3d8] sm:$0xff]
    %v163 = vld [vmem:[#allocation2 + $0x3e0] sm:$0xff]
    %v164 = vld [vmem:[#allocation2 + $0x3e8] sm:$0xff]
    %v165 = vld [vmem:[#allocation2 + $0x3f0] sm:$0xff]
    %v166 = vld [vmem:[#allocation2 + $0x3f8] sm:$0xff]
    %v167 = vld [vmem:[%s2] sm:$0xf]
    %v169 = vlaneseq
    %v170 = vshrl.u32 %v169, 7
    %v171 = vsub.s32 0, %v170
    %v172 = vrot.slane %v167, %v171
    %v173 = vlaneseq
    %v174 = vshrl.u32 %v173, 7
    %v175 = vsub.s32 1, %v174
    %v176 = vrot.slane %v167, %v175
    %v177 = vlaneseq
    %v178 = vshrl.u32 %v177, 7
    %v179 = vsub.s32 2, %v178
    %v180 = vrot.slane %v167, %v179
    %v181 = vlaneseq
    %v182 = vshrl.u32 %v181, 7
    %v183 = vsub.s32 3, %v182
    %v184 = vrot.slane %v167, %v183
    %v197 = vunpack.c.l.b16 %v31
    %v198 = vunpack.c.h.b16 %v31
    %v199 = vunpack.c.l.b16 %v32
    %v200 = vunpack.c.h.b16 %v32
    %v201 = vunpack.c.l.b16 %v33
    %v202 = vunpack.c.h.b16 %v33
    %v203 = vunpack.c.l.b16 %v34
    %v204 = vunpack.c.h.b16 %v34
    %v205 = vunpack.c.l.b16 %v35
    %v206 = vunpack.c.h.b16 %v35
    %v207 = vunpack.c.l.b16 %v36
    %v208 = vunpack.c.h.b16 %v36
    %v209 = vunpack.c.l.b16 %v37
    %v210 = vunpack.c.h.b16 %v37
    %v211 = vunpack.c.l.b16 %v38
    %v212 = vunpack.c.h.b16 %v38
    %v213 = vpack.c.b16 %v201, %v197
    %v214 = vpack.c.b16 %v202, %v198
    %v215 = vpack.c.b16 %v203, %v199
    %v216 = vpack.c.b16 %v204, %v200
    %v217 = vpack.c.b16 %v209, %v205
    %v218 = vpack.c.b16 %v210, %v206
    %v219 = vpack.c.b16 %v211, %v207
    %v220 = vpack.c.b16 %v212, %v208
    %v357 = vunpack.c.l.b16 %v39
    %v358 = vunpack.c.h.b16 %v39
    %v359 = vunpack.c.l.b16 %v40
    %v360 = vunpack.c.h.b16 %v40
    %v361 = vunpack.c.l.b16 %v41
    %v362 = vunpack.c.h.b16 %v41
    %v363 = vunpack.c.l.b16 %v42
    %v364 = vunpack.c.h.b16 %v42
    %v365 = vunpack.c.l.b16 %v43
    %v366 = vunpack.c.h.b16 %v43
    %v367 = vunpack.c.l.b16 %v44
    %v368 = vunpack.c.h.b16 %v44
    %v369 = vunpack.c.l.b16 %v45
    %v370 = vunpack.c.h.b16 %v45
    %v371 = vunpack.c.l.b16 %v46
    %v372 = vunpack.c.h.b16 %v46
    %v373 = vunpack.c.l.b16 %v47
    %v374 = vunpack.c.h.b16 %v47
    %v375 = vunpack.c.l.b16 %v48
    %v376 = vunpack.c.h.b16 %v48
    %v377 = vunpack.c.l.b16 %v49
    %v378 = vunpack.c.h.b16 %v49
    %v379 = vunpack.c.l.b16 %v50
    %v380 = vunpack.c.h.b16 %v50
    %v381 = vunpack.c.l.b16 %v51
    %v382 = vunpack.c.h.b16 %v51
    %v383 = vunpack.c.l.b16 %v52
    %v384 = vunpack.c.h.b16 %v52
    %v385 = vunpack.c.l.b16 %v53
    %v386 = vunpack.c.h.b16 %v53
    %v387 = vunpack.c.l.b16 %v54
    %v388 = vunpack.c.h.b16 %v54
    %v389 = vunpack.c.l.b16 %v55
    %v390 = vunpack.c.h.b16 %v55
    %v391 = vunpack.c.l.b16 %v56
    %v392 = vunpack.c.h.b16 %v56
    %v393 = vunpack.c.l.b16 %v57
    %v394 = vunpack.c.h.b16 %v57
    %v395 = vunpack.c.l.b16 %v58
    %v396 = vunpack.c.h.b16 %v58
    %v397 = vunpack.c.l.b16 %v59
    %v398 = vunpack.c.h.b16 %v59
    %v399 = vunpack.c.l.b16 %v60
    %v400 = vunpack.c.h.b16 %v60
    %v401 = vunpack.c.l.b16 %v61
    %v402 = vunpack.c.h.b16 %v61
    %v403 = vunpack.c.l.b16 %v62
    %v404 = vunpack.c.h.b16 %v62
    %v405 = vunpack.c.l.b16 %v63
    %v406 = vunpack.c.h.b16 %v63
    %v407 = vunpack.c.l.b16 %v64
    %v408 = vunpack.c.h.b16 %v64
    %v409 = vunpack.c.l.b16 %v65
    %v410 = vunpack.c.h.b16 %v65
    %v411 = vunpack.c.l.b16 %v66
    %v412 = vunpack.c.h.b16 %v66
    %v413 = vunpack.c.l.b16 %v67
    %v414 = vunpack.c.h.b16 %v67
    %v415 = vunpack.c.l.b16 %v68
    %v416 = vunpack.c.h.b16 %v68
    %v417 = vunpack.c.l.b16 %v69
    %v418 = vunpack.c.h.b16 %v69
    %v419 = vunpack.c.l.b16 %v70
    %v420 = vunpack.c.h.b16 %v70
    %v421 = vunpack.c.l.b16 %v71
    %v422 = vunpack.c.h.b16 %v71
    %v423 = vunpack.c.l.b16 %v72
    %v424 = vunpack.c.h.b16 %v72
    %v425 = vunpack.c.l.b16 %v73
    %v426 = vunpack.c.h.b16 %v73
    %v427 = vunpack.c.l.b16 %v74
    %v428 = vunpack.c.h.b16 %v74
    %v429 = vunpack.c.l.b16 %v75
    %v430 = vunpack.c.h.b16 %v75
    %v431 = vunpack.c.l.b16 %v76
    %v432 = vunpack.c.h.b16 %v76
    %v433 = vunpack.c.l.b16 %v77
    %v434 = vunpack.c.h.b16 %v77
    %v435 = vunpack.c.l.b16 %v78
    %v436 = vunpack.c.h.b16 %v78
    %v437 = vunpack.c.l.b16 %v79
    %v438 = vunpack.c.h.b16 %v79
    %v439 = vunpack.c.l.b16 %v80
    %v440 = vunpack.c.h.b16 %v80
    %v441 = vunpack.c.l.b16 %v81
    %v442 = vunpack.c.h.b16 %v81
    %v443 = vunpack.c.l.b16 %v82
    %v444 = vunpack.c.h.b16 %v82
    %v445 = vunpack.c.l.b16 %v83
    %v446 = vunpack.c.h.b16 %v83
    %v447 = vunpack.c.l.b16 %v84
    %v448 = vunpack.c.h.b16 %v84
    %v449 = vunpack.c.l.b16 %v85
    %v450 = vunpack.c.h.b16 %v85
    %v451 = vunpack.c.l.b16 %v86
    %v452 = vunpack.c.h.b16 %v86
    %v453 = vunpack.c.l.b16 %v87
    %v454 = vunpack.c.h.b16 %v87
    %v455 = vunpack.c.l.b16 %v88
    %v456 = vunpack.c.h.b16 %v88
    %v457 = vunpack.c.l.b16 %v89
    %v458 = vunpack.c.h.b16 %v89
    %v459 = vunpack.c.l.b16 %v90
    %v460 = vunpack.c.h.b16 %v90
    %v461 = vunpack.c.l.b16 %v91
    %v462 = vunpack.c.h.b16 %v91
    %v463 = vunpack.c.l.b16 %v92
    %v464 = vunpack.c.h.b16 %v92
    %v465 = vunpack.c.l.b16 %v93
    %v466 = vunpack.c.h.b16 %v93
    %v467 = vunpack.c.l.b16 %v94
    %v468 = vunpack.c.h.b16 %v94
    %v469 = vunpack.c.l.b16 %v95
    %v470 = vunpack.c.h.b16 %v95
    %v471 = vunpack.c.l.b16 %v96
    %v472 = vunpack.c.h.b16 %v96
    %v473 = vunpack.c.l.b16 %v97
    %v474 = vunpack.c.h.b16 %v97
    %v475 = vunpack.c.l.b16 %v98
    %v476 = vunpack.c.h.b16 %v98
    %v477 = vunpack.c.l.b16 %v99
    %v478 = vunpack.c.h.b16 %v99
    %v479 = vunpack.c.l.b16 %v100
    %v480 = vunpack.c.h.b16 %v100
    %v481 = vunpack.c.l.b16 %v101
    %v482 = vunpack.c.h.b16 %v101
    %v483 = vunpack.c.l.b16 %v102
    %v484 = vunpack.c.h.b16 %v102
    %v485 = vunpack.c.l.b16 %v103
    %v486 = vunpack.c.h.b16 %v103
    %v487 = vunpack.c.l.b16 %v104
    %v488 = vunpack.c.h.b16 %v104
    %v489 = vunpack.c.l.b16 %v105
    %v490 = vunpack.c.h.b16 %v105
    %v491 = vunpack.c.l.b16 %v106
    %v492 = vunpack.c.h.b16 %v106
    %v493 = vunpack.c.l.b16 %v107
    %v494 = vunpack.c.h.b16 %v107
    %v495 = vunpack.c.l.b16 %v108
    %v496 = vunpack.c.h.b16 %v108
    %v497 = vunpack.c.l.b16 %v109
    %v498 = vunpack.c.h.b16 %v109
    %v499 = vunpack.c.l.b16 %v110
    %v500 = vunpack.c.h.b16 %v110
    %v501 = vunpack.c.l.b16 %v111
    %v502 = vunpack.c.h.b16 %v111
    %v503 = vunpack.c.l.b16 %v112
    %v504 = vunpack.c.h.b16 %v112
    %v505 = vunpack.c.l.b16 %v113
    %v506 = vunpack.c.h.b16 %v113
    %v507 = vunpack.c.l.b16 %v114
    %v508 = vunpack.c.h.b16 %v114
    %v509 = vunpack.c.l.b16 %v115
    %v510 = vunpack.c.h.b16 %v115
    %v511 = vunpack.c.l.b16 %v116
    %v512 = vunpack.c.h.b16 %v116
    %v513 = vunpack.c.l.b16 %v117
    %v514 = vunpack.c.h.b16 %v117
    %v515 = vunpack.c.l.b16 %v118
    %v516 = vunpack.c.h.b16 %v118
    %v517 = vunpack.c.l.b16 %v119
    %v518 = vunpack.c.h.b16 %v119
    %v519 = vunpack.c.l.b16 %v120
    %v520 = vunpack.c.h.b16 %v120
    %v521 = vunpack.c.l.b16 %v121
    %v522 = vunpack.c.h.b16 %v121
    %v523 = vunpack.c.l.b16 %v122
    %v524 = vunpack.c.h.b16 %v122
    %v525 = vunpack.c.l.b16 %v123
    %v526 = vunpack.c.h.b16 %v123
    %v527 = vunpack.c.l.b16 %v124
    %v528 = vunpack.c.h.b16 %v124
    %v529 = vunpack.c.l.b16 %v125
    %v530 = vunpack.c.h.b16 %v125
    %v531 = vunpack.c.l.b16 %v126
    %v532 = vunpack.c.h.b16 %v126
    %v533 = vunpack.c.l.b16 %v127
    %v534 = vunpack.c.h.b16 %v127
    %v535 = vunpack.c.l.b16 %v128
    %v536 = vunpack.c.h.b16 %v128
    %v537 = vunpack.c.l.b16 %v129
    %v538 = vunpack.c.h.b16 %v129
    %v539 = vunpack.c.l.b16 %v130
    %v540 = vunpack.c.h.b16 %v130
    %v541 = vunpack.c.l.b16 %v131
    %v542 = vunpack.c.h.b16 %v131
    %v543 = vunpack.c.l.b16 %v132
    %v544 = vunpack.c.h.b16 %v132
    %v545 = vunpack.c.l.b16 %v133
    %v546 = vunpack.c.h.b16 %v133
    %v547 = vunpack.c.l.b16 %v134
    %v548 = vunpack.c.h.b16 %v134
    %v549 = vunpack.c.l.b16 %v135
    %v550 = vunpack.c.h.b16 %v135
    %v551 = vunpack.c.l.b16 %v136
    %v552 = vunpack.c.h.b16 %v136
    %v553 = vunpack.c.l.b16 %v137
    %v554 = vunpack.c.h.b16 %v137
    %v555 = vunpack.c.l.b16 %v138
    %v556 = vunpack.c.h.b16 %v138
    %v557 = vunpack.c.l.b16 %v139
    %v558 = vunpack.c.h.b16 %v139
    %v559 = vunpack.c.l.b16 %v140
    %v560 = vunpack.c.h.b16 %v140
    %v561 = vunpack.c.l.b16 %v141
    %v562 = vunpack.c.h.b16 %v141
    %v563 = vunpack.c.l.b16 %v142
    %v564 = vunpack.c.h.b16 %v142
    %v565 = vunpack.c.l.b16 %v143
    %v566 = vunpack.c.h.b16 %v143
    %v567 = vunpack.c.l.b16 %v144
    %v568 = vunpack.c.h.b16 %v144
    %v569 = vunpack.c.l.b16 %v145
    %v570 = vunpack.c.h.b16 %v145
    %v571 = vunpack.c.l.b16 %v146
    %v572 = vunpack.c.h.b16 %v146
    %v573 = vunpack.c.l.b16 %v147
    %v574 = vunpack.c.h.b16 %v147
    %v575 = vunpack.c.l.b16 %v148
    %v576 = vunpack.c.h.b16 %v148
    %v577 = vunpack.c.l.b16 %v149
    %v578 = vunpack.c.h.b16 %v149
    %v579 = vunpack.c.l.b16 %v150
    %v580 = vunpack.c.h.b16 %v150
    %v581 = vunpack.c.l.b16 %v151
    %v582 = vunpack.c.h.b16 %v151
    %v583 = vunpack.c.l.b16 %v152
    %v584 = vunpack.c.h.b16 %v152
    %v585 = vunpack.c.l.b16 %v153
    %v586 = vunpack.c.h.b16 %v153
    %v587 = vunpack.c.l.b16 %v154
    %v588 = vunpack.c.h.b16 %v154
    %v589 = vunpack.c.l.b16 %v155
    %v590 = vunpack.c.h.b16 %v155
    %v591 = vunpack.c.l.b16 %v156
    %v592 = vunpack.c.h.b16 %v156
    %v593 = vunpack.c.l.b16 %v157
    %v594 = vunpack.c.h.b16 %v157
    %v595 = vunpack.c.l.b16 %v158
    %v596 = vunpack.c.h.b16 %v158
    %v597 = vunpack.c.l.b16 %v159
    %v598 = vunpack.c.h.b16 %v159
    %v599 = vunpack.c.l.b16 %v160
    %v600 = vunpack.c.h.b16 %v160
    %v601 = vunpack.c.l.b16 %v161
    %v602 = vunpack.c.h.b16 %v161
    %v603 = vunpack.c.l.b16 %v162
    %v604 = vunpack.c.h.b16 %v162
    %v605 = vunpack.c.l.b16 %v163
    %v606 = vunpack.c.h.b16 %v163
    %v607 = vunpack.c.l.b16 %v164
    %v608 = vunpack.c.h.b16 %v164
    %v609 = vunpack.c.l.b16 %v165
    %v610 = vunpack.c.h.b16 %v165
    %v611 = vunpack.c.l.b16 %v166
    %v612 = vunpack.c.h.b16 %v166
    %v613 = vpack.c.b16 %v361, %v357
    %v614 = vpack.c.b16 %v362, %v358
    %v615 = vpack.c.b16 %v363, %v359
    %v616 = vpack.c.b16 %v364, %v360
    %v617 = vpack.c.b16 %v369, %v365
    %v618 = vpack.c.b16 %v370, %v366
    %v619 = vpack.c.b16 %v371, %v367
    %v620 = vpack.c.b16 %v372, %v368
    %v621 = vpack.c.b16 %v377, %v373
    %v622 = vpack.c.b16 %v378, %v374
    %v623 = vpack.c.b16 %v379, %v375
    %v624 = vpack.c.b16 %v380, %v376
    %v625 = vpack.c.b16 %v385, %v381
    %v626 = vpack.c.b16 %v386, %v382
    %v627 = vpack.c.b16 %v387, %v383
    %v628 = vpack.c.b16 %v388, %v384
    %v629 = vpack.c.b16 %v393, %v389
    %v630 = vpack.c.b16 %v394, %v390
    %v631 = vpack.c.b16 %v395, %v391
    %v632 = vpack.c.b16 %v396, %v392
    %v633 = vpack.c.b16 %v401, %v397
    %v634 = vpack.c.b16 %v402, %v398
    %v635 = vpack.c.b16 %v403, %v399
    %v636 = vpack.c.b16 %v404, %v400
    %v637 = vpack.c.b16 %v409, %v405
    %v638 = vpack.c.b16 %v410, %v406
    %v639 = vpack.c.b16 %v411, %v407
    %v640 = vpack.c.b16 %v412, %v408
    %v641 = vpack.c.b16 %v417, %v413
    %v642 = vpack.c.b16 %v418, %v414
    %v643 = vpack.c.b16 %v419, %v415
    %v644 = vpack.c.b16 %v420, %v416
    %v645 = vpack.c.b16 %v425, %v421
    %v646 = vpack.c.b16 %v426, %v422
    %v647 = vpack.c.b16 %v427, %v423
    %v648 = vpack.c.b16 %v428, %v424
    %v649 = vpack.c.b16 %v433, %v429
    %v650 = vpack.c.b16 %v434, %v430
    %v651 = vpack.c.b16 %v435, %v431
    %v652 = vpack.c.b16 %v436, %v432
    %v653 = vpack.c.b16 %v441, %v437
    %v654 = vpack.c.b16 %v442, %v438
    %v655 = vpack.c.b16 %v443, %v439
    %v656 = vpack.c.b16 %v444, %v440
    %v657 = vpack.c.b16 %v449, %v445
    %v658 = vpack.c.b16 %v450, %v446
    %v659 = vpack.c.b16 %v451, %v447
    %v660 = vpack.c.b16 %v452, %v448
    %v661 = vpack.c.b16 %v457, %v453
    %v662 = vpack.c.b16 %v458, %v454
    %v663 = vpack.c.b16 %v459, %v455
    %v664 = vpack.c.b16 %v460, %v456
    %v665 = vpack.c.b16 %v465, %v461
    %v666 = vpack.c.b16 %v466, %v462
    %v667 = vpack.c.b16 %v467, %v463
    %v668 = vpack.c.b16 %v468, %v464
    %v669 = vpack.c.b16 %v473, %v469
    %v670 = vpack.c.b16 %v474, %v470
    %v671 = vpack.c.b16 %v475, %v471
    %v672 = vpack.c.b16 %v476, %v472
    %v673 = vpack.c.b16 %v481, %v477
    %v674 = vpack.c.b16 %v482, %v478
    %v675 = vpack.c.b16 %v483, %v479
    %v676 = vpack.c.b16 %v484, %v480
    %v677 = vpack.c.b16 %v489, %v485
    %v678 = vpack.c.b16 %v490, %v486
    %v679 = vpack.c.b16 %v491, %v487
    %v680 = vpack.c.b16 %v492, %v488
    %v681 = vpack.c.b16 %v497, %v493
    %v682 = vpack.c.b16 %v498, %v494
    %v683 = vpack.c.b16 %v499, %v495
    %v684 = vpack.c.b16 %v500, %v496
    %v685 = vpack.c.b16 %v505, %v501
    %v686 = vpack.c.b16 %v506, %v502
    %v687 = vpack.c.b16 %v507, %v503
    %v688 = vpack.c.b16 %v508, %v504
    %v689 = vpack.c.b16 %v513, %v509
    %v690 = vpack.c.b16 %v514, %v510
    %v691 = vpack.c.b16 %v515, %v511
    %v692 = vpack.c.b16 %v516, %v512
    %v693 = vpack.c.b16 %v521, %v517
    %v694 = vpack.c.b16 %v522, %v518
    %v695 = vpack.c.b16 %v523, %v519
    %v696 = vpack.c.b16 %v524, %v520
    %v697 = vpack.c.b16 %v529, %v525
    %v698 = vpack.c.b16 %v530, %v526
    %v699 = vpack.c.b16 %v531, %v527
    %v700 = vpack.c.b16 %v532, %v528
    %v701 = vpack.c.b16 %v537, %v533
    %v702 = vpack.c.b16 %v538, %v534
    %v703 = vpack.c.b16 %v539, %v535
    %v704 = vpack.c.b16 %v540, %v536
    %v705 = vpack.c.b16 %v545, %v541
    %v706 = vpack.c.b16 %v546, %v542
    %v707 = vpack.c.b16 %v547, %v543
    %v708 = vpack.c.b16 %v548, %v544
    %v709 = vpack.c.b16 %v553, %v549
    %v710 = vpack.c.b16 %v554, %v550
    %v711 = vpack.c.b16 %v555, %v551
    %v712 = vpack.c.b16 %v556, %v552
    %v713 = vpack.c.b16 %v561, %v557
    %v714 = vpack.c.b16 %v562, %v558
    %v715 = vpack.c.b16 %v563, %v559
    %v716 = vpack.c.b16 %v564, %v560
    %v717 = vpack.c.b16 %v569, %v565
    %v718 = vpack.c.b16 %v570, %v566
    %v719 = vpack.c.b16 %v571, %v567
    %v720 = vpack.c.b16 %v572, %v568
    %v721 = vpack.c.b16 %v577, %v573
    %v722 = vpack.c.b16 %v578, %v574
    %v723 = vpack.c.b16 %v579, %v575
    %v724 = vpack.c.b16 %v580, %v576
    %v725 = vpack.c.b16 %v585, %v581
    %v726 = vpack.c.b16 %v586, %v582
    %v727 = vpack.c.b16 %v587, %v583
    %v728 = vpack.c.b16 %v588, %v584
    %v729 = vpack.c.b16 %v593, %v589
    %v730 = vpack.c.b16 %v594, %v590
    %v731 = vpack.c.b16 %v595, %v591
    %v732 = vpack.c.b16 %v596, %v592
    %v733 = vpack.c.b16 %v601, %v597
    %v734 = vpack.c.b16 %v602, %v598
    %v735 = vpack.c.b16 %v603, %v599
    %v736 = vpack.c.b16 %v604, %v600
    %v737 = vpack.c.b16 %v609, %v605
    %v738 = vpack.c.b16 %v610, %v606
    %v739 = vpack.c.b16 %v611, %v607
    %v740 = vpack.c.b16 %v612, %v608
    %869 = vmatprep.subr.bf16.mxu0 %v642
    %870 = vmatpush1.bf16.msra.mxu0 %v641
    %871 = vmatprep.subr.bf16.mxu0 %v638
    %872 = vmatpush1.bf16.msra.mxu0 %v637
    %873 = vmatprep.subr.bf16.mxu0 %v634
    %874 = vmatpush1.bf16.msra.mxu0 %v633
    %875 = vmatprep.subr.bf16.mxu0 %v630
    %876 = vmatpush1.bf16.msra.mxu0 %v629
    %877 = vmatprep.subr.bf16.mxu0 %v626
    %878 = vmatpush1.bf16.msra.mxu0 %v625
    %879 = vmatprep.subr.bf16.mxu0 %v622
    %880 = vmatpush1.bf16.msra.mxu0 %v621
    %881 = vmatprep.subr.bf16.mxu0 %v618
    %882 = vmatpush1.bf16.msra.mxu0 %v617
    %883 = vmatprep.subr.bf16.mxu0 %v614
    %884 = vmatpush1.bf16.msra.mxu0 %v613
    %885 = vmatprep.subr.bf16.mxu0 %v674
    %886 = vmatpush2.bf16.msra.mxu0 %v673
    %887 = vmatprep.subr.bf16.mxu0 %v670
    %888 = vmatpush2.bf16.msra.mxu0 %v669
    %889 = vmatprep.subr.bf16.mxu0 %v666
    %890 = vmatpush2.bf16.msra.mxu0 %v665
    %891 = vmatprep.subr.bf16.mxu0 %v662
    %892 = vmatpush2.bf16.msra.mxu0 %v661
    %893 = vmatprep.subr.bf16.mxu0 %v658
    %894 = vmatpush2.bf16.msra.mxu0 %v657
    %895 = vmatprep.subr.bf16.mxu0 %v654
    %896 = vmatpush2.bf16.msra.mxu0 %v653
    %897 = vmatprep.subr.bf16.mxu0 %v650
    %898 = vmatpush2.bf16.msra.mxu0 %v649
    %899 = vmatprep.subr.bf16.mxu0 %v646
    %900 = vmatpush2.bf16.msra.mxu0 %v645
    %901 = vmatprep.mubr.bf16.mxu0 %v214
    %902 = vmatmul.mubr.bf16.gmra.mxu0 %v213
    %v903 = vpop.f32.mrf.mxu0
    %v904 = vadd.f32 %v172, %v903
    %v905 = vpop.f32.mrf.mxu0
    %v906 = vadd.f32 %v176, %v905
    %v907 = vpop.f32.mrf.mxu0
    %v908 = vadd.f32 %v172, %v907
    %v909 = vpop.f32.mrf.mxu0
    %v910 = vadd.f32 %v176, %v909
    %911 = vmatprep.mubr.bf16.mxu0 %v218
    %912 = vmatmul.mubr.bf16.gmra.mxu0 %v217
    %v913 = vpop.f32.mrf.mxu0
    %v914 = vadd.f32 %v172, %v913
    %v915 = vpop.f32.mrf.mxu0
    %v916 = vadd.f32 %v176, %v915
    %v917 = vpop.f32.mrf.mxu0
    %v918 = vadd.f32 %v172, %v917
    %v919 = vpop.f32.mrf.mxu0
    %v920 = vadd.f32 %v176, %v919
    %921 = vdwg.mxu0
    %922 = vmatprep.subr.bf16.mxu0 %v706
    %923 = vmatpush1.bf16.msra.mxu0 %v705
    %924 = vmatprep.subr.bf16.mxu0 %v702
    %925 = vmatpush1.bf16.msra.mxu0 %v701
    %926 = vmatprep.subr.bf16.mxu0 %v698
    %927 = vmatpush1.bf16.msra.mxu0 %v697
    %928 = vmatprep.subr.bf16.mxu0 %v694
    %929 = vmatpush1.bf16.msra.mxu0 %v693
    %930 = vmatprep.subr.bf16.mxu0 %v690
    %931 = vmatpush1.bf16.msra.mxu0 %v689
    %932 = vmatprep.subr.bf16.mxu0 %v686
    %933 = vmatpush1.bf16.msra.mxu0 %v685
    %934 = vmatprep.subr.bf16.mxu0 %v682
    %935 = vmatpush1.bf16.msra.mxu0 %v681
    %936 = vmatprep.subr.bf16.mxu0 %v678
    %937 = vmatpush1.bf16.msra.mxu0 %v677
    %938 = vmatprep.subr.bf16.mxu0 %v738
    %939 = vmatpush2.bf16.msra.mxu0 %v737
    %940 = vmatprep.subr.bf16.mxu0 %v734
    %941 = vmatpush2.bf16.msra.mxu0 %v733
    %942 = vmatprep.subr.bf16.mxu0 %v730
    %943 = vmatpush2.bf16.msra.mxu0 %v729
    %944 = vmatprep.subr.bf16.mxu0 %v726
    %945 = vmatpush2.bf16.msra.mxu0 %v725
    %946 = vmatprep.subr.bf16.mxu0 %v722
    %947 = vmatpush2.bf16.msra.mxu0 %v721
    %948 = vmatprep.subr.bf16.mxu0 %v718
    %949 = vmatpush2.bf16.msra.mxu0 %v717
    %950 = vmatprep.subr.bf16.mxu0 %v714
    %951 = vmatpush2.bf16.msra.mxu0 %v713
    %952 = vmatprep.subr.bf16.mxu0 %v710
    %953 = vmatpush2.bf16.msra.mxu0 %v709
    %954 = vmatprep.mubr.bf16.mxu0 %v216
    %955 = vmatmul.mubr.bf16.gmra.mxu0 %v215
    %v956 = vpop.f32.mrf.mxu0
    %v957 = vadd.f32 %v904, %v956
    %v958 = vpop.f32.mrf.mxu0
    %v959 = vadd.f32 %v906, %v958
    %v960 = vpop.f32.mrf.mxu0
    %v961 = vadd.f32 %v908, %v960
    %v962 = vpop.f32.mrf.mxu0
    %v963 = vadd.f32 %v910, %v962
    %964 = vmatprep.mubr.bf16.mxu0 %v220
    %965 = vmatmul.mubr.bf16.gmra.mxu0 %v219
    %v966 = vpop.f32.mrf.mxu0
    %v967 = vadd.f32 %v914, %v966
    %v968 = vpop.f32.mrf.mxu0
    %v969 = vadd.f32 %v916, %v968
    %v970 = vpop.f32.mrf.mxu0
    %v971 = vadd.f32 %v918, %v970
    %v972 = vpop.f32.mrf.mxu0
    %v973 = vadd.f32 %v920, %v972
    %974 = vdwg.mxu0
    %975 = vmatprep.subr.bf16.mxu0 %v644
    %976 = vmatpush1.bf16.msra.mxu0 %v643
    %977 = vmatprep.subr.bf16.mxu0 %v640
    %978 = vmatpush1.bf16.msra.mxu0 %v639
    %979 = vmatprep.subr.bf16.mxu0 %v636
    %980 = vmatpush1.bf16.msra.mxu0 %v635
    %981 = vmatprep.subr.bf16.mxu0 %v632
    %982 = vmatpush1.bf16.msra.mxu0 %v631
    %983 = vmatprep.subr.bf16.mxu0 %v628
    %984 = vmatpush1.bf16.msra.mxu0 %v627
    %985 = vmatprep.subr.bf16.mxu0 %v624
    %986 = vmatpush1.bf16.msra.mxu0 %v623
    %987 = vmatprep.subr.bf16.mxu0 %v620
    %988 = vmatpush1.bf16.msra.mxu0 %v619
    %989 = vmatprep.subr.bf16.mxu0 %v616
    %990 = vmatpush1.bf16.msra.mxu0 %v615
    %991 = vmatprep.subr.bf16.mxu0 %v676
    %992 = vmatpush2.bf16.msra.mxu0 %v675
    %993 = vmatprep.subr.bf16.mxu0 %v672
    %994 = vmatpush2.bf16.msra.mxu0 %v671
    %995 = vmatprep.subr.bf16.mxu0 %v668
    %996 = vmatpush2.bf16.msra.mxu0 %v667
    %997 = vmatprep.subr.bf16.mxu0 %v664
    %998 = vmatpush2.bf16.msra.mxu0 %v663
    %999 = vmatprep.subr.bf16.mxu0 %v660
    %1000 = vmatpush2.bf16.msra.mxu0 %v659
    %1001 = vmatprep.subr.bf16.mxu0 %v656
    %1002 = vmatpush2.bf16.msra.mxu0 %v655
    %1003 = vmatprep.subr.bf16.mxu0 %v652
    %1004 = vmatpush2.bf16.msra.mxu0 %v651
    %1005 = vmatprep.subr.bf16.mxu0 %v648
    %1006 = vmatpush2.bf16.msra.mxu0 %v647
    %1007 = vmatprep.mubr.bf16.mxu0 %v214
    %1008 = vmatmul.mubr.bf16.gmra.mxu0 %v213
    %v1009 = vpop.f32.mrf.mxu0
    %v1010 = vadd.f32 %v180, %v1009
    %v1011 = vpop.f32.mrf.mxu0
    %v1012 = vadd.f32 %v184, %v1011
    %v1013 = vpop.f32.mrf.mxu0
    %v1014 = vadd.f32 %v180, %v1013
    %v1015 = vpop.f32.mrf.mxu0
    %v1016 = vadd.f32 %v184, %v1015
    %1017 = vmatprep.mubr.bf16.mxu0 %v218
    %1018 = vmatmul.mubr.bf16.gmra.mxu0 %v217
    %v1019 = vpop.f32.mrf.mxu0
    %v1020 = vadd.f32 %v180, %v1019
    %v1021 = vpop.f32.mrf.mxu0
    %v1022 = vadd.f32 %v184, %v1021
    %v1023 = vpop.f32.mrf.mxu0
    %v1024 = vadd.f32 %v180, %v1023
    %v1025 = vpop.f32.mrf.mxu0
    %v1026 = vadd.f32 %v184, %v1025
    %1027 = vdwg.mxu0
    %1028 = vmatprep.subr.bf16.mxu0 %v708
    %1029 = vmatpush1.bf16.msra.mxu0 %v707
    %1030 = vmatprep.subr.bf16.mxu0 %v704
    %1031 = vmatpush1.bf16.msra.mxu0 %v703
    %1032 = vmatprep.subr.bf16.mxu0 %v700
    %1033 = vmatpush1.bf16.msra.mxu0 %v699
    %1034 = vmatprep.subr.bf16.mxu0 %v696
    %1035 = vmatpush1.bf16.msra.mxu0 %v695
    %1036 = vmatprep.subr.bf16.mxu0 %v692
    %1037 = vmatpush1.bf16.msra.mxu0 %v691
    %1038 = vmatprep.subr.bf16.mxu0 %v688
    %1039 = vmatpush1.bf16.msra.mxu0 %v687
    %1040 = vmatprep.subr.bf16.mxu0 %v684
    %1041 = vmatpush1.bf16.msra.mxu0 %v683
    %1042 = vmatprep.subr.bf16.mxu0 %v680
    %1043 = vmatpush1.bf16.msra.mxu0 %v679
    %1044 = vmatprep.subr.bf16.mxu0 %v740
    %1045 = vmatpush2.bf16.msra.mxu0 %v739
    %1046 = vmatprep.subr.bf16.mxu0 %v736
    %1047 = vmatpush2.bf16.msra.mxu0 %v735
    %1048 = vmatprep.subr.bf16.mxu0 %v732
    %1049 = vmatpush2.bf16.msra.mxu0 %v731
    %1050 = vmatprep.subr.bf16.mxu0 %v728
    %1051 = vmatpush2.bf16.msra.mxu0 %v727
    %1052 = vmatprep.subr.bf16.mxu0 %v724
    %1053 = vmatpush2.bf16.msra.mxu0 %v723
    %1054 = vmatprep.subr.bf16.mxu0 %v720
    %1055 = vmatpush2.bf16.msra.mxu0 %v719
    %1056 = vmatprep.subr.bf16.mxu0 %v716
    %1057 = vmatpush2.bf16.msra.mxu0 %v715
    %1058 = vmatprep.subr.bf16.mxu0 %v712
    %1059 = vmatpush2.bf16.msra.mxu0 %v711
    %1060 = vmatprep.mubr.bf16.mxu0 %v216
    %1061 = vmatmul.mubr.bf16.gmra.mxu0 %v215
    %v1062 = vpop.f32.mrf.mxu0
    %v1063 = vadd.f32 %v1010, %v1062
    %v1064 = vpop.f32.mrf.mxu0
    %v1065 = vadd.f32 %v1012, %v1064
    %v1066 = vpop.f32.mrf.mxu0
    %v1067 = vadd.f32 %v1014, %v1066
    %v1068 = vpop.f32.mrf.mxu0
    %v1069 = vadd.f32 %v1016, %v1068
    %1070 = vmatprep.mubr.bf16.mxu0 %v220
    %1071 = vmatmul.mubr.bf16.gmra.mxu0 %v219
    %v1072 = vpop.f32.mrf.mxu0
    %v1073 = vadd.f32 %v1020, %v1072
    %v1074 = vpop.f32.mrf.mxu0
    %v1075 = vadd.f32 %v1022, %v1074
    %v1076 = vpop.f32.mrf.mxu0
    %v1077 = vadd.f32 %v1024, %v1076
    %v1078 = vpop.f32.mrf.mxu0
    %v1079 = vadd.f32 %v1026, %v1078
    %1080 = vdwg.mxu0
    %v1081 = vmul.f32 %v957, %v957
    %v1082 = vmul.f32 %v959, %v959
    %v1083 = vmul.f32 %v1063, %v1063
    %v1084 = vmul.f32 %v1065, %v1065
    %v1085 = vmul.f32 %v961, %v961
    %v1086 = vmul.f32 %v963, %v963
    %v1087 = vmul.f32 %v1067, %v1067
    %v1088 = vmul.f32 %v1069, %v1069
    %v1089 = vmul.f32 %v967, %v967
    %v1090 = vmul.f32 %v969, %v969
    %v1091 = vmul.f32 %v1073, %v1073
    %v1092 = vmul.f32 %v1075, %v1075
    %v1093 = vmul.f32 %v971, %v971
    %v1094 = vmul.f32 %v973, %v973
    %v1095 = vmul.f32 %v1077, %v1077
    %v1096 = vmul.f32 %v1079, %v1079
    %v1097 = vmul.f32 %v957, %v1081
    %v1098 = vmul.f32 %v959, %v1082
    %v1099 = vmul.f32 %v1063, %v1083
    %v1100 = vmul.f32 %v1065, %v1084
    %v1101 = vmul.f32 %v961, %v1085
    %v1102 = vmul.f32 %v963, %v1086
    %v1103 = vmul.f32 %v1067, %v1087
    %v1104 = vmul.f32 %v1069, %v1088
    %v1105 = vmul.f32 %v967, %v1089
    %v1106 = vmul.f32 %v969, %v1090
    %v1107 = vmul.f32 %v1073, %v1091
    %v1108 = vmul.f32 %v1075, %v1092
    %v1109 = vmul.f32 %v971, %v1093
    %v1110 = vmul.f32 %v973, %v1094
    %v1111 = vmul.f32 %v1077, %v1095
    %v1112 = vmul.f32 %v1079, %v1096
    %v1113 = vmul.f32 %v1097, 0.044715
    %v1114 = vmul.f32 %v1098, 0.044715
    %v1115 = vmul.f32 %v1099, 0.044715
    %v1116 = vmul.f32 %v1100, 0.044715
    %v1117 = vmul.f32 %v1101, 0.044715
    %v1118 = vmul.f32 %v1102, 0.044715
    %v1119 = vmul.f32 %v1103, 0.044715
    %v1120 = vmul.f32 %v1104, 0.044715
    %v1121 = vmul.f32 %v1105, 0.044715
    %v1122 = vmul.f32 %v1106, 0.044715
    %v1123 = vmul.f32 %v1107, 0.044715
    %v1124 = vmul.f32 %v1108, 0.044715
    %v1125 = vmul.f32 %v1109, 0.044715
    %v1126 = vmul.f32 %v1110, 0.044715
    %v1127 = vmul.f32 %v1111, 0.044715
    %v1128 = vmul.f32 %v1112, 0.044715
    %v1129 = vadd.f32 %v957, %v1113
    %v1130 = vadd.f32 %v959, %v1114
    %v1131 = vadd.f32 %v1063, %v1115
    %v1132 = vadd.f32 %v1065, %v1116
    %v1133 = vadd.f32 %v961, %v1117
    %v1134 = vadd.f32 %v963, %v1118
    %v1135 = vadd.f32 %v1067, %v1119
    %v1136 = vadd.f32 %v1069, %v1120
    %v1137 = vadd.f32 %v967, %v1121
    %v1138 = vadd.f32 %v969, %v1122
    %v1139 = vadd.f32 %v1073, %v1123
    %v1140 = vadd.f32 %v1075, %v1124
    %v1141 = vadd.f32 %v971, %v1125
    %v1142 = vadd.f32 %v973, %v1126
    %v1143 = vadd.f32 %v1077, %v1127
    %v1144 = vadd.f32 %v1079, %v1128
    %v1145 = vmul.f32 %v1129, 0.7978846
    %v1146 = vmul.f32 %v1130, 0.7978846
    %v1147 = vmul.f32 %v1131, 0.7978846
    %v1148 = vmul.f32 %v1132, 0.7978846
    %v1149 = vmul.f32 %v1133, 0.7978846
    %v1150 = vmul.f32 %v1134, 0.7978846
    %v1151 = vmul.f32 %v1135, 0.7978846
    %v1152 = vmul.f32 %v1136, 0.7978846
    %v1153 = vmul.f32 %v1137, 0.7978846
    %v1154 = vmul.f32 %v1138, 0.7978846
    %v1155 = vmul.f32 %v1139, 0.7978846
    %v1156 = vmul.f32 %v1140, 0.7978846
    %v1157 = vmul.f32 %v1141, 0.7978846
    %v1158 = vmul.f32 %v1142, 0.7978846
    %v1159 = vmul.f32 %v1143, 0.7978846
    %v1160 = vmul.f32 %v1144, 0.7978846
    %v1161 = vtanh.pop %v1145
    %v1162 = vtanh.pop %v1146
    %v1163 = vtanh.pop %v1147
    %v1164 = vtanh.pop %v1148
    %v1165 = vtanh.pop %v1149
    %v1166 = vtanh.pop %v1150
    %v1167 = vtanh.pop %v1151
    %v1168 = vtanh.pop %v1152
    %v1169 = vtanh.pop %v1153
    %v1170 = vtanh.pop %v1154
    %v1171 = vtanh.pop %v1155
    %v1172 = vtanh.pop %v1156
    %v1173 = vtanh.pop %v1157
    %v1174 = vtanh.pop %v1158
    %v1175 = vtanh.pop %v1159
    %v1176 = vtanh.pop %v1160
    %v1177 = vadd.f32 %v1161, 1.0
    %v1178 = vadd.f32 %v1162, 1.0
    %v1179 = vadd.f32 %v1163, 1.0
    %v1180 = vadd.f32 %v1164, 1.0
    %v1181 = vadd.f32 %v1165, 1.0
    %v1182 = vadd.f32 %v1166, 1.0
    %v1183 = vadd.f32 %v1167, 1.0
    %v1184 = vadd.f32 %v1168, 1.0
    %v1185 = vadd.f32 %v1169, 1.0
    %v1186 = vadd.f32 %v1170, 1.0
    %v1187 = vadd.f32 %v1171, 1.0
    %v1188 = vadd.f32 %v1172, 1.0
    %v1189 = vadd.f32 %v1173, 1.0
    %v1190 = vadd.f32 %v1174, 1.0
    %v1191 = vadd.f32 %v1175, 1.0
    %v1192 = vadd.f32 %v1176, 1.0
    %v1193 = vmul.f32 %v1177, 0.5
    %v1194 = vmul.f32 %v1178, 0.5
    %v1195 = vmul.f32 %v1179, 0.5
    %v1196 = vmul.f32 %v1180, 0.5
    %v1197 = vmul.f32 %v1181, 0.5
    %v1198 = vmul.f32 %v1182, 0.5
    %v1199 = vmul.f32 %v1183, 0.5
    %v1200 = vmul.f32 %v1184, 0.5
    %v1201 = vmul.f32 %v1185, 0.5
    %v1202 = vmul.f32 %v1186, 0.5
    %v1203 = vmul.f32 %v1187, 0.5
    %v1204 = vmul.f32 %v1188, 0.5
    %v1205 = vmul.f32 %v1189, 0.5
    %v1206 = vmul.f32 %v1190, 0.5
    %v1207 = vmul.f32 %v1191, 0.5
    %v1208 = vmul.f32 %v1192, 0.5
    %v1209 = vmul.f32 %v957, %v1193
    %v1210 = vmul.f32 %v959, %v1194
    %v1211 = vmul.f32 %v1063, %v1195
    %v1212 = vmul.f32 %v1065, %v1196
    %v1213 = vmul.f32 %v961, %v1197
    %v1214 = vmul.f32 %v963, %v1198
    %v1215 = vmul.f32 %v1067, %v1199
    %v1216 = vmul.f32 %v1069, %v1200
    %v1217 = vmul.f32 %v967, %v1201
    %v1218 = vmul.f32 %v969, %v1202
    %v1219 = vmul.f32 %v1073, %v1203
    %v1220 = vmul.f32 %v1075, %v1204
    %v1221 = vmul.f32 %v971, %v1205
    %v1222 = vmul.f32 %v973, %v1206
    %v1223 = vmul.f32 %v1077, %v1207
    %v1224 = vmul.f32 %v1079, %v1208
    %v1225 = vld [vmem:[%s3] sm:$0xff]
    %v1226 = vld [vmem:[%s3 + $0x8] sm:$0xff]
    %v1227 = vld [vmem:[%s3 + $0x10] sm:$0xff]
    %v1228 = vld [vmem:[%s3 + $0x18] sm:$0xff]
    %v1229 = vld [vmem:[%s3 + $0x20] sm:$0xff]
    %v1230 = vld [vmem:[%s3 + $0x28] sm:$0xff]
    %v1231 = vld [vmem:[%s3 + $0x30] sm:$0xff]
    %v1232 = vld [vmem:[%s3 + $0x38] sm:$0xff]
    %v1233 = vunpack.c.l.bf16 %v1225
    %v1234 = vunpack.c.h.bf16 %v1225
    %v1235 = vunpack.c.l.bf16 %v1226
    %v1236 = vunpack.c.h.bf16 %v1226
    %v1237 = vunpack.c.l.bf16 %v1227
    %v1238 = vunpack.c.h.bf16 %v1227
    %v1239 = vunpack.c.l.bf16 %v1228
    %v1240 = vunpack.c.h.bf16 %v1228
    %v1241 = vunpack.c.l.bf16 %v1229
    %v1242 = vunpack.c.h.bf16 %v1229
    %v1243 = vunpack.c.l.bf16 %v1230
    %v1244 = vunpack.c.h.bf16 %v1230
    %v1245 = vunpack.c.l.bf16 %v1231
    %v1246 = vunpack.c.h.bf16 %v1231
    %v1247 = vunpack.c.l.bf16 %v1232
    %v1248 = vunpack.c.h.bf16 %v1232
    %v1249 = vadd.f32 %v1209, %v1233
    %v1250 = vadd.f32 %v1210, %v1234
    %v1251 = vadd.f32 %v1211, %v1235
    %v1252 = vadd.f32 %v1212, %v1236
    %v1253 = vadd.f32 %v1213, %v1237
    %v1254 = vadd.f32 %v1214, %v1238
    %v1255 = vadd.f32 %v1215, %v1239
    %v1256 = vadd.f32 %v1216, %v1240
    %v1257 = vadd.f32 %v1217, %v1241
    %v1258 = vadd.f32 %v1218, %v1242
    %v1259 = vadd.f32 %v1219, %v1243
    %v1260 = vadd.f32 %v1220, %v1244
    %v1261 = vadd.f32 %v1221, %v1245
    %v1262 = vadd.f32 %v1222, %v1246
    %v1263 = vadd.f32 %v1223, %v1247
    %v1264 = vadd.f32 %v1224, %v1248
    %v1265 = vpack.c.bf16 %v1253, %v1249
    %v1266 = vpack.c.bf16 %v1254, %v1250
    %v1267 = vpack.c.bf16 %v1255, %v1251
    %v1268 = vpack.c.bf16 %v1256, %v1252
    %v1269 = vpack.c.bf16 %v1261, %v1257
    %v1270 = vpack.c.bf16 %v1262, %v1258
    %v1271 = vpack.c.bf16 %v1263, %v1259
    %v1272 = vpack.c.bf16 %v1264, %v1260
    %v1281 = vunpack.c.l.b16 %v1265
    %v1282 = vunpack.c.l.b16 %v1266
    %v1283 = vunpack.c.l.b16 %v1267
    %v1284 = vunpack.c.l.b16 %v1268
    %v1285 = vunpack.c.h.b16 %v1265
    %v1286 = vunpack.c.h.b16 %v1266
    %v1287 = vunpack.c.h.b16 %v1267
    %v1288 = vunpack.c.h.b16 %v1268
    %v1289 = vunpack.c.l.b16 %v1269
    %v1290 = vunpack.c.l.b16 %v1270
    %v1291 = vunpack.c.l.b16 %v1271
    %v1292 = vunpack.c.l.b16 %v1272
    %v1293 = vunpack.c.h.b16 %v1269
    %v1294 = vunpack.c.h.b16 %v1270
    %v1295 = vunpack.c.h.b16 %v1271
    %v1296 = vunpack.c.h.b16 %v1272
    %v1297 = vpack.c.b16 %v1282, %v1281
    %v1298 = vpack.c.b16 %v1284, %v1283
    %v1299 = vpack.c.b16 %v1286, %v1285
    %v1300 = vpack.c.b16 %v1288, %v1287
    %v1301 = vpack.c.b16 %v1290, %v1289
    %v1302 = vpack.c.b16 %v1292, %v1291
    %v1303 = vpack.c.b16 %v1294, %v1293
    %v1304 = vpack.c.b16 %v1296, %v1295
    %1313 = vst [vmem:[%s4] sm:$0xff] %v1297
    %1314 = vst [vmem:[%s4 + $0x8] sm:$0xff] %v1298
    %1315 = vst [vmem:[%s4 + $0x10] sm:$0xff] %v1299
    %1316 = vst [vmem:[%s4 + $0x18] sm:$0xff] %v1300
    %1317 = vst [vmem:[%s4 + $0x20] sm:$0xff] %v1301
    %1318 = vst [vmem:[%s4 + $0x28] sm:$0xff] %v1302
    %1319 = vst [vmem:[%s4 + $0x30] sm:$0xff] %v1303
    %1320 = vst [vmem:[%s4 + $0x38] sm:$0xff] %v1304
    // Predicated region
    $region22: #{custom_model_forward.8} parent=1 // pred_check
      _
    $region23: #{custom_model_forward.8} parent=1 // pred_check_branch
      %1322 = sbr.rel (0) target = $region25
    $region24: #{custom_model_forward.8} parent=1 // pred_region
      _
    $region25: #{custom_model_forward.8} parent=1 // pred_fallthru
      _
    // Predicated region
    $region26: #{custom_model_forward.8} parent=1 // pred_check
      _
    $region27: #{custom_model_forward.8} parent=1 // pred_check_branch
      %1324 = sbr.rel (0) target = $region29
    $region28: #{custom_model_forward.8} parent=1 // pred_region
      _
    $region29: #{custom_model_forward.8} parent=1 // pred_fallthru
      _
    %1325 = vsyncpa [#allocation3], 1

// kernel: custom_model_forward.9
$region0: #{custom_model_forward.9}
  #allocation0 [shape = 'u32[]', space=smem, size = 0x4, offset = 0x4, fixed_abs, tag = 'smem constant byte address 0x4 - core index']
  #allocation1 [shape = 'u32[144,128]{1,0:T(1,128)}', space=vmem, size = 0x12000, scoped, tag = 'internal scratch']
  %s0 = inlined_call_operand.vmem [shape: bf16[64,128], index: 0, kind: input, shape index: {}]
  %s1 = inlined_call_operand.vmem [shape: bf16[128,1024], index: 1, kind: input, shape index: {}]
  %s2 = inlined_call_operand.vmem [shape: f32[1,1024], index: 2, kind: input, shape index: {}]
  %s3 = inlined_call_operand.vmem [shape: bf16[64,1024], index: 3, kind: output, shape index: {}]
  %s4 = sld [smem:[#allocation0]]
  $region22: #{custom_model_forward.9} parent=0
    _
  %s6 = ssub.s32 1, %s4
  %s7 = scalar_select 0, %s6, %s4
  // Predicated region
  $region2: #{custom_model_forward.9} parent=0 // pred_check
    _
  $region3: #{custom_model_forward.9} parent=0 // pred_check_branch
    %9 = sbr.rel (0) target = $region5
  $region4: #{custom_model_forward.9} parent=0 // pred_region
    _
  $region5: #{custom_model_forward.9} parent=0 // pred_fallthru
    _
  // Predicated region
  $region6: #{custom_model_forward.9} parent=0 // pred_check
    _
  $region7: #{custom_model_forward.9} parent=0 // pred_check_branch
    %11 = sbr.rel (0) target = $region9
  $region8: #{custom_model_forward.9} parent=0 // pred_region
    _
  $region9: #{custom_model_forward.9} parent=0 // pred_fallthru
    _
  // Predicated region
  $region10: #{custom_model_forward.9} parent=0 // pred_check
    _
  $region11: #{custom_model_forward.9} parent=0 // pred_check_branch
    %13 = sbr.rel (0) target = $region13
  $region12: #{custom_model_forward.9} parent=0 // pred_region
    _
  $region13: #{custom_model_forward.9} parent=0 // pred_fallthru
    _
  %v15 = vld [vmem:[%s0] sm:$0xf]
  %v16 = vld [vmem:[%s0 + $0x4] sm:$0xf]
  %v17 = vld [vmem:[%s0 + $0x8] sm:$0xf]
  %v18 = vld [vmem:[%s0 + $0xc] sm:$0xf]
  %v19 = vld [vmem:[%s0 + $0x10] sm:$0xf]
  %v20 = vld [vmem:[%s0 + $0x14] sm:$0xf]
  %v21 = vld [vmem:[%s0 + $0x18] sm:$0xf]
  %v22 = vld [vmem:[%s0 + $0x1c] sm:$0xf]
  %v23 = vld [vmem:[%s1] sm:$0xff]
  %v24 = vld [vmem:[%s1 + $0x8] sm:$0xff]
  %v25 = vld [vmem:[%s1 + $0x10] sm:$0xff]
  %v26 = vld [vmem:[%s1 + $0x18] sm:$0xff]
  %v27 = vld [vmem:[%s1 + $0x20] sm:$0xff]
  %v28 = vld [vmem:[%s1 + $0x28] sm:$0xff]
  %v29 = vld [vmem:[%s1 + $0x30] sm:$0xff]
  %v30 = vld [vmem:[%s1 + $0x38] sm:$0xff]
  %v31 = vld [vmem:[%s1 + $0x40] sm:$0xff]
  %v32 = vld [vmem:[%s1 + $0x48] sm:$0xff]
  %v33 = vld [vmem:[%s1 + $0x50] sm:$0xff]
  %v34 = vld [vmem:[%s1 + $0x58] sm:$0xff]
  %v35 = vld [vmem:[%s1 + $0x60] sm:$0xff]
  %v36 = vld [vmem:[%s1 + $0x68] sm:$0xff]
  %v37 = vld [vmem:[%s1 + $0x70] sm:$0xff]
  %v38 = vld [vmem:[%s1 + $0x78] sm:$0xff]
  %v39 = vld [vmem:[%s1 + $0x80] sm:$0xff]
  %v40 = vld [vmem:[%s1 + $0x88] sm:$0xff]
  %v41 = vld [vmem:[%s1 + $0x90] sm:$0xff]
  %v42 = vld [vmem:[%s1 + $0x98] sm:$0xff]
  %v43 = vld [vmem:[%s1 + $0xa0] sm:$0xff]
  %v44 = vld [vmem:[%s1 + $0xa8] sm:$0xff]
  %v45 = vld [vmem:[%s1 + $0xb0] sm:$0xff]
  %v46 = vld [vmem:[%s1 + $0xb8] sm:$0xff]
  %v47 = vld [vmem:[%s1 + $0xc0] sm:$0xff]
  %v48 = vld [vmem:[%s1 + $0xc8] sm:$0xff]
  %v49 = vld [vmem:[%s1 + $0xd0] sm:$0xff]
  %v50 = vld [vmem:[%s1 + $0xd8] sm:$0xff]
  %v51 = vld [vmem:[%s1 + $0xe0] sm:$0xff]
  %v52 = vld [vmem:[%s1 + $0xe8] sm:$0xff]
  %v53 = vld [vmem:[%s1 + $0xf0] sm:$0xff]
  %v54 = vld [vmem:[%s1 + $0xf8] sm:$0xff]
  %v55 = vld [vmem:[%s1 + $0x100] sm:$0xff]
  %v56 = vld [vmem:[%s1 + $0x108] sm:$0xff]
  %v57 = vld [vmem:[%s1 + $0x110] sm:$0xff]
  %v58 = vld [vmem:[%s1 + $0x118] sm:$0xff]
  %v59 = vld [vmem:[%s1 + $0x120] sm:$0xff]
  %v60 = vld [vmem:[%s1 + $0x128] sm:$0xff]
  %v61 = vld [vmem:[%s1 + $0x130] sm:$0xff]
  %v62 = vld [vmem:[%s1 + $0x138] sm:$0xff]
  %v63 = vld [vmem:[%s1 + $0x140] sm:$0xff]
  %v64 = vld [vmem:[%s1 + $0x148] sm:$0xff]
  %v65 = vld [vmem:[%s1 + $0x150] sm:$0xff]
  %v66 = vld [vmem:[%s1 + $0x158] sm:$0xff]
  %v67 = vld [vmem:[%s1 + $0x160] sm:$0xff]
  %v68 = vld [vmem:[%s1 + $0x168] sm:$0xff]
  %v69 = vld [vmem:[%s1 + $0x170] sm:$0xff]
  %v70 = vld [vmem:[%s1 + $0x178] sm:$0xff]
  %v71 = vld [vmem:[%s1 + $0x180] sm:$0xff]
  %v72 = vld [vmem:[%s1 + $0x188] sm:$0xff]
  %v73 = vld [vmem:[%s1 + $0x190] sm:$0xff]
  %v74 = vld [vmem:[%s1 + $0x198] sm:$0xff]
  %v75 = vld [vmem:[%s1 + $0x1a0] sm:$0xff]
  %v76 = vld [vmem:[%s1 + $0x1a8] sm:$0xff]
  %v77 = vld [vmem:[%s1 + $0x1b0] sm:$0xff]
  %v78 = vld [vmem:[%s1 + $0x1b8] sm:$0xff]
  %v79 = vld [vmem:[%s1 + $0x1c0] sm:$0xff]
  %v80 = vld [vmem:[%s1 + $0x1c8] sm:$0xff]
  %v81 = vld [vmem:[%s1 + $0x1d0] sm:$0xff]
  %v82 = vld [vmem:[%s1 + $0x1d8] sm:$0xff]
  %v83 = vld [vmem:[%s1 + $0x1e0] sm:$0xff]
  %v84 = vld [vmem:[%s1 + $0x1e8] sm:$0xff]
  %v85 = vld [vmem:[%s1 + $0x1f0] sm:$0xff]
  %v86 = vld [vmem:[%s1 + $0x1f8] sm:$0xff]
  %v87 = vld [vmem:[%s2] sm:$0xff]
  %v89 = vlaneseq
  %v90 = vshrl.u32 %v89, 7
  %v91 = vsub.s32 0, %v90
  %v92 = vrot.slane %v87, %v91
  %v93 = vlaneseq
  %v94 = vshrl.u32 %v93, 7
  %v95 = vsub.s32 1, %v94
  %v96 = vrot.slane %v87, %v95
  %v97 = vlaneseq
  %v98 = vshrl.u32 %v97, 7
  %v99 = vsub.s32 2, %v98
  %v100 = vrot.slane %v87, %v99
  %v101 = vlaneseq
  %v102 = vshrl.u32 %v101, 7
  %v103 = vsub.s32 3, %v102
  %v104 = vrot.slane %v87, %v103
  %v105 = vlaneseq
  %v106 = vshrl.u32 %v105, 7
  %v107 = vsub.s32 4, %v106
  %v108 = vrot.slane %v87, %v107
  %v109 = vlaneseq
  %v110 = vshrl.u32 %v109, 7
  %v111 = vsub.s32 5, %v110
  %v112 = vrot.slane %v87, %v111
  %v113 = vlaneseq
  %v114 = vshrl.u32 %v113, 7
  %v115 = vsub.s32 6, %v114
  %v116 = vrot.slane %v87, %v115
  %v117 = vlaneseq
  %v118 = vshrl.u32 %v117, 7
  %v119 = vsub.s32 7, %v118
  %v120 = vrot.slane %v87, %v119
  %v137 = vunpack.c.l.b16 %v15
  %v138 = vunpack.c.l.b16 %v16
  %v139 = vunpack.c.l.b16 %v17
  %v140 = vunpack.c.l.b16 %v18
  %v141 = vunpack.c.l.b16 %v19
  %v142 = vunpack.c.l.b16 %v20
  %v143 = vunpack.c.l.b16 %v21
  %v144 = vunpack.c.l.b16 %v22
  %v145 = vpack.c.b16 %v138, %v137
  %v146 = vpack.c.b16 %v140, %v139
  %v147 = vpack.c.b16 %v142, %v141
  %v148 = vpack.c.b16 %v144, %v143
  %v217 = vunpack.c.l.b16 %v23
  %v218 = vunpack.c.h.b16 %v23
  %v219 = vunpack.c.l.b16 %v24
  %v220 = vunpack.c.h.b16 %v24
  %v221 = vunpack.c.l.b16 %v25
  %v222 = vunpack.c.h.b16 %v25
  %v223 = vunpack.c.l.b16 %v26
  %v224 = vunpack.c.h.b16 %v26
  %v225 = vunpack.c.l.b16 %v27
  %v226 = vunpack.c.h.b16 %v27
  %v227 = vunpack.c.l.b16 %v28
  %v228 = vunpack.c.h.b16 %v28
  %v229 = vunpack.c.l.b16 %v29
  %v230 = vunpack.c.h.b16 %v29
  %v231 = vunpack.c.l.b16 %v30
  %v232 = vunpack.c.h.b16 %v30
  %v233 = vunpack.c.l.b16 %v31
  %v234 = vunpack.c.h.b16 %v31
  %v235 = vunpack.c.l.b16 %v32
  %v236 = vunpack.c.h.b16 %v32
  %v237 = vunpack.c.l.b16 %v33
  %v238 = vunpack.c.h.b16 %v33
  %v239 = vunpack.c.l.b16 %v34
  %v240 = vunpack.c.h.b16 %v34
  %v241 = vunpack.c.l.b16 %v35
  %v242 = vunpack.c.h.b16 %v35
  %v243 = vunpack.c.l.b16 %v36
  %v244 = vunpack.c.h.b16 %v36
  %v245 = vunpack.c.l.b16 %v37
  %v246 = vunpack.c.h.b16 %v37
  %v247 = vunpack.c.l.b16 %v38
  %v248 = vunpack.c.h.b16 %v38
  %v249 = vunpack.c.l.b16 %v39
  %v250 = vunpack.c.h.b16 %v39
  %v251 = vunpack.c.l.b16 %v40
  %v252 = vunpack.c.h.b16 %v40
  %v253 = vunpack.c.l.b16 %v41
  %v254 = vunpack.c.h.b16 %v41
  %v255 = vunpack.c.l.b16 %v42
  %v256 = vunpack.c.h.b16 %v42
  %v257 = vunpack.c.l.b16 %v43
  %v258 = vunpack.c.h.b16 %v43
  %v259 = vunpack.c.l.b16 %v44
  %v260 = vunpack.c.h.b16 %v44
  %v261 = vunpack.c.l.b16 %v45
  %v262 = vunpack.c.h.b16 %v45
  %v263 = vunpack.c.l.b16 %v46
  %v264 = vunpack.c.h.b16 %v46
  %v265 = vunpack.c.l.b16 %v47
  %v266 = vunpack.c.h.b16 %v47
  %v267 = vunpack.c.l.b16 %v48
  %v268 = vunpack.c.h.b16 %v48
  %v269 = vunpack.c.l.b16 %v49
  %v270 = vunpack.c.h.b16 %v49
  %v271 = vunpack.c.l.b16 %v50
  %v272 = vunpack.c.h.b16 %v50
  %v273 = vunpack.c.l.b16 %v51
  %v274 = vunpack.c.h.b16 %v51
  %v275 = vunpack.c.l.b16 %v52
  %v276 = vunpack.c.h.b16 %v52
  %v277 = vunpack.c.l.b16 %v53
  %v278 = vunpack.c.h.b16 %v53
  %v279 = vunpack.c.l.b16 %v54
  %v280 = vunpack.c.h.b16 %v54
  %v281 = vunpack.c.l.b16 %v55
  %v282 = vunpack.c.h.b16 %v55
  %v283 = vunpack.c.l.b16 %v56
  %v284 = vunpack.c.h.b16 %v56
  %v285 = vunpack.c.l.b16 %v57
  %v286 = vunpack.c.h.b16 %v57
  %v287 = vunpack.c.l.b16 %v58
  %v288 = vunpack.c.h.b16 %v58
  %v289 = vunpack.c.l.b16 %v59
  %v290 = vunpack.c.h.b16 %v59
  %v291 = vunpack.c.l.b16 %v60
  %v292 = vunpack.c.h.b16 %v60
  %v293 = vunpack.c.l.b16 %v61
  %v294 = vunpack.c.h.b16 %v61
  %v295 = vunpack.c.l.b16 %v62
  %v296 = vunpack.c.h.b16 %v62
  %v297 = vunpack.c.l.b16 %v63
  %v298 = vunpack.c.h.b16 %v63
  %v299 = vunpack.c.l.b16 %v64
  %v300 = vunpack.c.h.b16 %v64
  %v301 = vunpack.c.l.b16 %v65
  %v302 = vunpack.c.h.b16 %v65
  %v303 = vunpack.c.l.b16 %v66
  %v304 = vunpack.c.h.b16 %v66
  %v305 = vunpack.c.l.b16 %v67
  %v306 = vunpack.c.h.b16 %v67
  %v307 = vunpack.c.l.b16 %v68
  %v308 = vunpack.c.h.b16 %v68
  %v309 = vunpack.c.l.b16 %v69
  %v310 = vunpack.c.h.b16 %v69
  %v311 = vunpack.c.l.b16 %v70
  %v312 = vunpack.c.h.b16 %v70
  %v313 = vunpack.c.l.b16 %v71
  %v314 = vunpack.c.h.b16 %v71
  %v315 = vunpack.c.l.b16 %v72
  %v316 = vunpack.c.h.b16 %v72
  %v317 = vunpack.c.l.b16 %v73
  %v318 = vunpack.c.h.b16 %v73
  %v319 = vunpack.c.l.b16 %v74
  %v320 = vunpack.c.h.b16 %v74
  %v321 = vunpack.c.l.b16 %v75
  %v322 = vunpack.c.h.b16 %v75
  %v323 = vunpack.c.l.b16 %v76
  %v324 = vunpack.c.h.b16 %v76
  %v325 = vunpack.c.l.b16 %v77
  %v326 = vunpack.c.h.b16 %v77
  %v327 = vunpack.c.l.b16 %v78
  %v328 = vunpack.c.h.b16 %v78
  %v329 = vunpack.c.l.b16 %v79
  %v330 = vunpack.c.h.b16 %v79
  %v331 = vunpack.c.l.b16 %v80
  %v332 = vunpack.c.h.b16 %v80
  %v333 = vunpack.c.l.b16 %v81
  %v334 = vunpack.c.h.b16 %v81
  %v335 = vunpack.c.l.b16 %v82
  %v336 = vunpack.c.h.b16 %v82
  %v337 = vunpack.c.l.b16 %v83
  %v338 = vunpack.c.h.b16 %v83
  %v339 = vunpack.c.l.b16 %v84
  %v340 = vunpack.c.h.b16 %v84
  %v341 = vunpack.c.l.b16 %v85
  %v342 = vunpack.c.h.b16 %v85
  %v343 = vunpack.c.l.b16 %v86
  %v344 = vunpack.c.h.b16 %v86
  %v345 = vpack.c.b16 %v225, %v217
  %v346 = vpack.c.b16 %v226, %v218
  %v347 = vpack.c.b16 %v227, %v219
  %v348 = vpack.c.b16 %v228, %v220
  %v349 = vpack.c.b16 %v229, %v221
  %v350 = vpack.c.b16 %v230, %v222
  %v351 = vpack.c.b16 %v231, %v223
  %v352 = vpack.c.b16 %v232, %v224
  %v353 = vpack.c.b16 %v241, %v233
  %v354 = vpack.c.b16 %v242, %v234
  %v355 = vpack.c.b16 %v243, %v235
  %v356 = vpack.c.b16 %v244, %v236
  %v357 = vpack.c.b16 %v245, %v237
  %v358 = vpack.c.b16 %v246, %v238
  %v359 = vpack.c.b16 %v247, %v239
  %v360 = vpack.c.b16 %v248, %v240
  %v361 = vpack.c.b16 %v257, %v249
  %v362 = vpack.c.b16 %v258, %v250
  %v363 = vpack.c.b16 %v259, %v251
  %v364 = vpack.c.b16 %v260, %v252
  %v365 = vpack.c.b16 %v261, %v253
  %v366 = vpack.c.b16 %v262, %v254
  %v367 = vpack.c.b16 %v263, %v255
  %v368 = vpack.c.b16 %v264, %v256
  %v369 = vpack.c.b16 %v273, %v265
  %v370 = vpack.c.b16 %v274, %v266
  %v371 = vpack.c.b16 %v275, %v267
  %v372 = vpack.c.b16 %v276, %v268
  %v373 = vpack.c.b16 %v277, %v269
  %v374 = vpack.c.b16 %v278, %v270
  %v375 = vpack.c.b16 %v279, %v271
  %v376 = vpack.c.b16 %v280, %v272
  %v377 = vpack.c.b16 %v289, %v281
  %v378 = vpack.c.b16 %v290, %v282
  %v379 = vpack.c.b16 %v291, %v283
  %v380 = vpack.c.b16 %v292, %v284
  %v381 = vpack.c.b16 %v293, %v285
  %v382 = vpack.c.b16 %v294, %v286
  %v383 = vpack.c.b16 %v295, %v287
  %v384 = vpack.c.b16 %v296, %v288
  %v385 = vpack.c.b16 %v305, %v297
  %v386 = vpack.c.b16 %v306, %v298
  %v387 = vpack.c.b16 %v307, %v299
  %v388 = vpack.c.b16 %v308, %v300
  %v389 = vpack.c.b16 %v309, %v301
  %v390 = vpack.c.b16 %v310, %v302
  %v391 = vpack.c.b16 %v311, %v303
  %v392 = vpack.c.b16 %v312, %v304
  %v393 = vpack.c.b16 %v321, %v313
  %v394 = vpack.c.b16 %v322, %v314
  %v395 = vpack.c.b16 %v323, %v315
  %v396 = vpack.c.b16 %v324, %v316
  %v397 = vpack.c.b16 %v325, %v317
  %v398 = vpack.c.b16 %v326, %v318
  %v399 = vpack.c.b16 %v327, %v319
  %v400 = vpack.c.b16 %v328, %v320
  %v401 = vpack.c.b16 %v337, %v329
  %v402 = vpack.c.b16 %v338, %v330
  %v403 = vpack.c.b16 %v339, %v331
  %v404 = vpack.c.b16 %v340, %v332
  %v405 = vpack.c.b16 %v341, %v333
  %v406 = vpack.c.b16 %v342, %v334
  %v407 = vpack.c.b16 %v343, %v335
  %v408 = vpack.c.b16 %v344, %v336
  %473 = vmatprep.subr.bf16.mxu0 %v402
  %474 = vmatpush1.bf16.msra.mxu0 %v401
  %475 = vmatprep.subr.bf16.mxu0 %v394
  %476 = vmatpush1.bf16.msra.mxu0 %v393
  %477 = vmatprep.subr.bf16.mxu0 %v386
  %478 = vmatpush1.bf16.msra.mxu0 %v385
  %479 = vmatprep.subr.bf16.mxu0 %v378
  %480 = vmatpush1.bf16.msra.mxu0 %v377
  %481 = vmatprep.subr.bf16.mxu0 %v370
  %482 = vmatpush1.bf16.msra.mxu0 %v369
  %483 = vmatprep.subr.bf16.mxu0 %v362
  %484 = vmatpush1.bf16.msra.mxu0 %v361
  %485 = vmatprep.subr.bf16.mxu0 %v354
  %486 = vmatpush1.bf16.msra.mxu0 %v353
  %487 = vmatprep.subr.bf16.mxu0 %v346
  %488 = vmatpush1.bf16.msra.mxu0 %v345
  %489 = vmatprep.subr.bf16.mxu0 0
  %490 = vmatpush2.bf16.msra.mxu0 0
  %491 = vmatprep.subr.bf16.mxu0 0
  %492 = vmatpush2.bf16.msra.mxu0 0
  %493 = vmatprep.subr.bf16.mxu0 0
  %494 = vmatpush2.bf16.msra.mxu0 0
  %495 = vmatprep.subr.bf16.mxu0 0
  %496 = vmatpush2.bf16.msra.mxu0 0
  %497 = vmatprep.subr.bf16.mxu0 0
  %498 = vmatpush2.bf16.msra.mxu0 0
  %499 = vmatprep.subr.bf16.mxu0 0
  %500 = vmatpush2.bf16.msra.mxu0 0
  %501 = vmatprep.subr.bf16.mxu0 0
  %502 = vmatpush2.bf16.msra.mxu0 0
  %503 = vmatprep.subr.bf16.mxu0 0
  %504 = vmatpush2.bf16.msra.mxu0 0
  %505 = vmatprep.mubr.bf16.mxu0 0
  %506 = vmatmul.mubr.bf16.gmra.mxu0 %v145
  %v507 = vpop.f32.mrf.mxu0
  %v508 = vadd.f32 %v92, %v507
  %v509 = vpop.f32.mrf.mxu0
  %v510 = vadd.f32 %v96, %v509
  %v511 = vpop.f32.mrf.mxu0
  %v512 = vadd.f32 %v92, %v511
  %v513 = vpop.f32.mrf.mxu0
  %v514 = vadd.f32 %v96, %v513
  %515 = vmatprep.mubr.bf16.mxu0 0
  %516 = vmatmul.mubr.bf16.gmra.mxu0 %v146
  %v517 = vpop.f32.mrf.mxu0
  %v518 = vadd.f32 %v92, %v517
  %v519 = vpop.f32.mrf.mxu0
  %v520 = vadd.f32 %v96, %v519
  %v521 = vpop.f32.mrf.mxu0
  %v522 = vadd.f32 %v92, %v521
  %v523 = vpop.f32.mrf.mxu0
  %v524 = vadd.f32 %v96, %v523
  %525 = vmatprep.mubr.bf16.mxu0 0
  %526 = vmatmul.mubr.bf16.gmra.mxu0 %v147
  %v527 = vpop.f32.mrf.mxu0
  %v528 = vadd.f32 %v92, %v527
  %v529 = vpop.f32.mrf.mxu0
  %v530 = vadd.f32 %v96, %v529
  %v531 = vpop.f32.mrf.mxu0
  %v532 = vadd.f32 %v92, %v531
  %v533 = vpop.f32.mrf.mxu0
  %v534 = vadd.f32 %v96, %v533
  %535 = vmatprep.mubr.bf16.mxu0 0
  %536 = vmatmul.mubr.bf16.gmra.mxu0 %v148
  %v537 = vpop.f32.mrf.mxu0
  %v538 = vadd.f32 %v92, %v537
  %v539 = vpop.f32.mrf.mxu0
  %v540 = vadd.f32 %v96, %v539
  %v541 = vpop.f32.mrf.mxu0
  %v542 = vadd.f32 %v92, %v541
  %v543 = vpop.f32.mrf.mxu0
  %v544 = vadd.f32 %v96, %v543
  %545 = vdwg.mxu0
  %546 = vmatprep.subr.bf16.mxu0 %v404
  %547 = vmatpush1.bf16.msra.mxu0 %v403
  %548 = vmatprep.subr.bf16.mxu0 %v396
  %549 = vmatpush1.bf16.msra.mxu0 %v395
  %550 = vmatprep.subr.bf16.mxu0 %v388
  %551 = vmatpush1.bf16.msra.mxu0 %v387
  %552 = vmatprep.subr.bf16.mxu0 %v380
  %553 = vmatpush1.bf16.msra.mxu0 %v379
  %554 = vmatprep.subr.bf16.mxu0 %v372
  %555 = vmatpush1.bf16.msra.mxu0 %v371
  %556 = vmatprep.subr.bf16.mxu0 %v364
  %557 = vmatpush1.bf16.msra.mxu0 %v363
  %558 = vmatprep.subr.bf16.mxu0 %v356
  %559 = vmatpush1.bf16.msra.mxu0 %v355
  %560 = vmatprep.subr.bf16.mxu0 %v348
  %561 = vmatpush1.bf16.msra.mxu0 %v347
  %562 = vmatprep.subr.bf16.mxu0 0
  %563 = vmatpush2.bf16.msra.mxu0 0
  %564 = vmatprep.subr.bf16.mxu0 0
  %565 = vmatpush2.bf16.msra.mxu0 0
  %566 = vmatprep.subr.bf16.mxu0 0
  %567 = vmatpush2.bf16.msra.mxu0 0
  %568 = vmatprep.subr.bf16.mxu0 0
  %569 = vmatpush2.bf16.msra.mxu0 0
  %570 = vmatprep.subr.bf16.mxu0 0
  %571 = vmatpush2.bf16.msra.mxu0 0
  %572 = vmatprep.subr.bf16.mxu0 0
  %573 = vmatpush2.bf16.msra.mxu0 0
  %574 = vmatprep.subr.bf16.mxu0 0
  %575 = vmatpush2.bf16.msra.mxu0 0
  %576 = vmatprep.subr.bf16.mxu0 0
  %577 = vmatpush2.bf16.msra.mxu0 0
  %578 = vmatprep.mubr.bf16.mxu0 0
  %579 = vmatmul.mubr.bf16.gmra.mxu0 %v145
  %v580 = vpop.f32.mrf.mxu0
  %v581 = vadd.f32 %v100, %v580
  %v582 = vpop.f32.mrf.mxu0
  %v583 = vadd.f32 %v104, %v582
  %v584 = vpop.f32.mrf.mxu0
  %v585 = vadd.f32 %v100, %v584
  %v586 = vpop.f32.mrf.mxu0
  %v587 = vadd.f32 %v104, %v586
  %588 = vmatprep.mubr.bf16.mxu0 0
  %589 = vmatmul.mubr.bf16.gmra.mxu0 %v146
  %v590 = vpop.f32.mrf.mxu0
  %v591 = vadd.f32 %v100, %v590
  %v592 = vpop.f32.mrf.mxu0
  %v593 = vadd.f32 %v104, %v592
  %v594 = vpop.f32.mrf.mxu0
  %v595 = vadd.f32 %v100, %v594
  %v596 = vpop.f32.mrf.mxu0
  %v597 = vadd.f32 %v104, %v596
  %598 = vmatprep.mubr.bf16.mxu0 0
  %599 = vmatmul.mubr.bf16.gmra.mxu0 %v147
  %v600 = vpop.f32.mrf.mxu0
  %v601 = vadd.f32 %v100, %v600
  %v602 = vpop.f32.mrf.mxu0
  %v603 = vadd.f32 %v104, %v602
  %v604 = vpop.f32.mrf.mxu0
  %v605 = vadd.f32 %v100, %v604
  %v606 = vpop.f32.mrf.mxu0
  %v607 = vadd.f32 %v104, %v606
  %608 = vmatprep.mubr.bf16.mxu0 0
  %609 = vmatmul.mubr.bf16.gmra.mxu0 %v148
  %v610 = vpop.f32.mrf.mxu0
  %v611 = vadd.f32 %v100, %v610
  %v612 = vpop.f32.mrf.mxu0
  %v613 = vadd.f32 %v104, %v612
  %v614 = vpop.f32.mrf.mxu0
  %v615 = vadd.f32 %v100, %v614
  %v616 = vpop.f32.mrf.mxu0
  %v617 = vadd.f32 %v104, %v616
  %618 = vdwg.mxu0
  %619 = vmatprep.subr.bf16.mxu0 %v406
  %620 = vmatpush1.bf16.msra.mxu0 %v405
  %621 = vmatprep.subr.bf16.mxu0 %v398
  %622 = vmatpush1.bf16.msra.mxu0 %v397
  %623 = vmatprep.subr.bf16.mxu0 %v390
  %624 = vmatpush1.bf16.msra.mxu0 %v389
  %625 = vmatprep.subr.bf16.mxu0 %v382
  %626 = vmatpush1.bf16.msra.mxu0 %v381
  %627 = vmatprep.subr.bf16.mxu0 %v374
  %628 = vmatpush1.bf16.msra.mxu0 %v373
  %629 = vmatprep.subr.bf16.mxu0 %v366
  %630 = vmatpush1.bf16.msra.mxu0 %v365
  %631 = vmatprep.subr.bf16.mxu0 %v358
  %632 = vmatpush1.bf16.msra.mxu0 %v357
  %633 = vmatprep.subr.bf16.mxu0 %v350
  %634 = vmatpush1.bf16.msra.mxu0 %v349
  %635 = vmatprep.subr.bf16.mxu0 0
  %636 = vmatpush2.bf16.msra.mxu0 0
  %637 = vmatprep.subr.bf16.mxu0 0
  %638 = vmatpush2.bf16.msra.mxu0 0
  %639 = vmatprep.subr.bf16.mxu0 0
  %640 = vmatpush2.bf16.msra.mxu0 0
  %641 = vmatprep.subr.bf16.mxu0 0
  %642 = vmatpush2.bf16.msra.mxu0 0
  %643 = vmatprep.subr.bf16.mxu0 0
  %644 = vmatpush2.bf16.msra.mxu0 0
  %645 = vmatprep.subr.bf16.mxu0 0
  %646 = vmatpush2.bf16.msra.mxu0 0
  %647 = vmatprep.subr.bf16.mxu0 0
  %648 = vmatpush2.bf16.msra.mxu0 0
  %649 = vmatprep.subr.bf16.mxu0 0
  %650 = vmatpush2.bf16.msra.mxu0 0
  %651 = vmatprep.mubr.bf16.mxu0 0
  %652 = vmatmul.mubr.bf16.gmra.mxu0 %v145
  %v653 = vpop.f32.mrf.mxu0
  %v654 = vadd.f32 %v108, %v653
  %v655 = vpop.f32.mrf.mxu0
  %v656 = vadd.f32 %v112, %v655
  %v657 = vpop.f32.mrf.mxu0
  %v658 = vadd.f32 %v108, %v657
  %v659 = vpop.f32.mrf.mxu0
  %v660 = vadd.f32 %v112, %v659
  %661 = vmatprep.mubr.bf16.mxu0 0
  %662 = vmatmul.mubr.bf16.gmra.mxu0 %v146
  %v663 = vpop.f32.mrf.mxu0
  %v664 = vadd.f32 %v108, %v663
  %v665 = vpop.f32.mrf.mxu0
  %v666 = vadd.f32 %v112, %v665
  %v667 = vpop.f32.mrf.mxu0
  %v668 = vadd.f32 %v108, %v667
  %v669 = vpop.f32.mrf.mxu0
  %v670 = vadd.f32 %v112, %v669
  %671 = vmatprep.mubr.bf16.mxu0 0
  %672 = vmatmul.mubr.bf16.gmra.mxu0 %v147
  %v673 = vpop.f32.mrf.mxu0
  %v674 = vadd.f32 %v108, %v673
  %v675 = vpop.f32.mrf.mxu0
  %v676 = vadd.f32 %v112, %v675
  %v677 = vpop.f32.mrf.mxu0
  %v678 = vadd.f32 %v108, %v677
  %v679 = vpop.f32.mrf.mxu0
  %v680 = vadd.f32 %v112, %v679
  %681 = vmatprep.mubr.bf16.mxu0 0
  %682 = vmatmul.mubr.bf16.gmra.mxu0 %v148
  %v683 = vpop.f32.mrf.mxu0
  %v684 = vadd.f32 %v108, %v683
  %v685 = vpop.f32.mrf.mxu0
  %v686 = vadd.f32 %v112, %v685
  %v687 = vpop.f32.mrf.mxu0
  %v688 = vadd.f32 %v108, %v687
  %v689 = vpop.f32.mrf.mxu0
  %v690 = vadd.f32 %v112, %v689
  %691 = vdwg.mxu0
  %692 = vmatprep.subr.bf16.mxu0 %v408
  %693 = vmatpush1.bf16.msra.mxu0 %v407
  %694 = vmatprep.subr.bf16.mxu0 %v400
  %695 = vmatpush1.bf16.msra.mxu0 %v399
  %696 = vmatprep.subr.bf16.mxu0 %v392
  %697 = vmatpush1.bf16.msra.mxu0 %v391
  %698 = vmatprep.subr.bf16.mxu0 %v384
  %699 = vmatpush1.bf16.msra.mxu0 %v383
  %700 = vmatprep.subr.bf16.mxu0 %v376
  %701 = vmatpush1.bf16.msra.mxu0 %v375
  %702 = vmatprep.subr.bf16.mxu0 %v368
  %703 = vmatpush1.bf16.msra.mxu0 %v367
  %704 = vmatprep.subr.bf16.mxu0 %v360
  %705 = vmatpush1.bf16.msra.mxu0 %v359
  %706 = vmatprep.subr.bf16.mxu0 %v352
  %707 = vmatpush1.bf16.msra.mxu0 %v351
  %708 = vmatprep.subr.bf16.mxu0 0
  %709 = vmatpush2.bf16.msra.mxu0 0
  %710 = vmatprep.subr.bf16.mxu0 0
  %711 = vmatpush2.bf16.msra.mxu0 0
  %712 = vmatprep.subr.bf16.mxu0 0
  %713 = vmatpush2.bf16.msra.mxu0 0
  %714 = vmatprep.subr.bf16.mxu0 0
  %715 = vmatpush2.bf16.msra.mxu0 0
  %716 = vmatprep.subr.bf16.mxu0 0
  %717 = vmatpush2.bf16.msra.mxu0 0
  %718 = vmatprep.subr.bf16.mxu0 0
  %719 = vmatpush2.bf16.msra.mxu0 0
  %720 = vmatprep.subr.bf16.mxu0 0
  %721 = vmatpush2.bf16.msra.mxu0 0
  %722 = vmatprep.subr.bf16.mxu0 0
  %723 = vmatpush2.bf16.msra.mxu0 0
  %724 = vmatprep.mubr.bf16.mxu0 0
  %725 = vmatmul.mubr.bf16.gmra.mxu0 %v145
  %v726 = vpop.f32.mrf.mxu0
  %v727 = vadd.f32 %v116, %v726
  %v728 = vpop.f32.mrf.mxu0
  %v729 = vadd.f32 %v120, %v728
  %v730 = vpop.f32.mrf.mxu0
  %v731 = vadd.f32 %v116, %v730
  %v732 = vpop.f32.mrf.mxu0
  %v733 = vadd.f32 %v120, %v732
  %734 = vmatprep.mubr.bf16.mxu0 0
  %735 = vmatmul.mubr.bf16.gmra.mxu0 %v146
  %v736 = vpop.f32.mrf.mxu0
  %v737 = vadd.f32 %v116, %v736
  %v738 = vpop.f32.mrf.mxu0
  %v739 = vadd.f32 %v120, %v738
  %v740 = vpop.f32.mrf.mxu0
  %v741 = vadd.f32 %v116, %v740
  %v742 = vpop.f32.mrf.mxu0
  %v743 = vadd.f32 %v120, %v742
  %744 = vmatprep.mubr.bf16.mxu0 0
  %745 = vmatmul.mubr.bf16.gmra.mxu0 %v147
  %v746 = vpop.f32.mrf.mxu0
  %v747 = vadd.f32 %v116, %v746
  %v748 = vpop.f32.mrf.mxu0
  %v749 = vadd.f32 %v120, %v748
  %v750 = vpop.f32.mrf.mxu0
  %v751 = vadd.f32 %v116, %v750
  %v752 = vpop.f32.mrf.mxu0
  %v753 = vadd.f32 %v120, %v752
  %754 = vmatprep.mubr.bf16.mxu0 0
  %755 = vmatmul.mubr.bf16.gmra.mxu0 %v148
  %v756 = vpop.f32.mrf.mxu0
  %v757 = vadd.f32 %v116, %v756
  %v758 = vpop.f32.mrf.mxu0
  %v759 = vadd.f32 %v120, %v758
  %v760 = vpop.f32.mrf.mxu0
  %v761 = vadd.f32 %v116, %v760
  %v762 = vpop.f32.mrf.mxu0
  %v763 = vadd.f32 %v120, %v762
  %764 = vdwg.mxu0
  %v765 = vmul.f32 %v508, %v508
  %v766 = vmul.f32 %v510, %v510
  %v767 = vmul.f32 %v581, %v581
  %v768 = vmul.f32 %v583, %v583
  %v769 = vmul.f32 %v654, %v654
  %v770 = vmul.f32 %v656, %v656
  %v771 = vmul.f32 %v727, %v727
  %v772 = vmul.f32 %v729, %v729
  %v773 = vmul.f32 %v512, %v512
  %v774 = vmul.f32 %v514, %v514
  %v775 = vmul.f32 %v585, %v585
  %v776 = vmul.f32 %v587, %v587
  %v777 = vmul.f32 %v658, %v658
  %v778 = vmul.f32 %v660, %v660
  %v779 = vmul.f32 %v731, %v731
  %v780 = vmul.f32 %v733, %v733
  %v781 = vmul.f32 %v518, %v518
  %v782 = vmul.f32 %v520, %v520
  %v783 = vmul.f32 %v591, %v591
  %v784 = vmul.f32 %v593, %v593
  %v785 = vmul.f32 %v664, %v664
  %v786 = vmul.f32 %v666, %v666
  %v787 = vmul.f32 %v737, %v737
  %v788 = vmul.f32 %v739, %v739
  %v789 = vmul.f32 %v522, %v522
  %v790 = vmul.f32 %v524, %v524
  %v791 = vmul.f32 %v595, %v595
  %v792 = vmul.f32 %v597, %v597
  %v793 = vmul.f32 %v668, %v668
  %v794 = vmul.f32 %v670, %v670
  %v795 = vmul.f32 %v741, %v741
  %v796 = vmul.f32 %v743, %v743
  %v797 = vmul.f32 %v528, %v528
  %v798 = vmul.f32 %v530, %v530
  %v799 = vmul.f32 %v601, %v601
  %v800 = vmul.f32 %v603, %v603
  %v801 = vmul.f32 %v674, %v674
  %v802 = vmul.f32 %v676, %v676
  %v803 = vmul.f32 %v747, %v747
  %v804 = vmul.f32 %v749, %v749
  %v805 = vmul.f32 %v532, %v532
  %v806 = vmul.f32 %v534, %v534
  %v807 = vmul.f32 %v605, %v605
  %v808 = vmul.f32 %v607, %v607
  %v809 = vmul.f32 %v678, %v678
  %v810 = vmul.f32 %v680, %v680
  %v811 = vmul.f32 %v751, %v751
  %v812 = vmul.f32 %v753, %v753
  %v813 = vmul.f32 %v538, %v538
  %v814 = vmul.f32 %v540, %v540
  %v815 = vmul.f32 %v611, %v611
  %v816 = vmul.f32 %v613, %v613
  %v817 = vmul.f32 %v684, %v684
  %v818 = vmul.f32 %v686, %v686
  %v819 = vmul.f32 %v757, %v757
  %v820 = vmul.f32 %v759, %v759
  %v821 = vmul.f32 %v542, %v542
  %v822 = vmul.f32 %v544, %v544
  %v823 = vmul.f32 %v615, %v615
  %v824 = vmul.f32 %v617, %v617
  %v825 = vmul.f32 %v688, %v688
  %v826 = vmul.f32 %v690, %v690
  %v827 = vmul.f32 %v761, %v761
  %v828 = vmul.f32 %v763, %v763
  %v829 = vmul.f32 %v508, %v765
  %v830 = vmul.f32 %v510, %v766
  %v831 = vmul.f32 %v581, %v767
  %v832 = vmul.f32 %v583, %v768
  %v833 = vmul.f32 %v654, %v769
  %v834 = vmul.f32 %v656, %v770
  %v835 = vmul.f32 %v727, %v771
  %v836 = vmul.f32 %v729, %v772
  %v837 = vmul.f32 %v512, %v773
  %v838 = vmul.f32 %v514, %v774
  %v839 = vmul.f32 %v585, %v775
  %v840 = vmul.f32 %v587, %v776
  %v841 = vmul.f32 %v658, %v777
  %v842 = vmul.f32 %v660, %v778
  %v843 = vmul.f32 %v731, %v779
  %v844 = vmul.f32 %v733, %v780
  %v845 = vmul.f32 %v518, %v781
  %v846 = vmul.f32 %v520, %v782
  %v847 = vmul.f32 %v591, %v783
  %v848 = vmul.f32 %v593, %v784
  %v849 = vmul.f32 %v664, %v785
  %v850 = vmul.f32 %v666, %v786
  %v851 = vmul.f32 %v737, %v787
  %v852 = vmul.f32 %v739, %v788
  %v853 = vmul.f32 %v522, %v789
  %v854 = vmul.f32 %v524, %v790
  %v855 = vmul.f32 %v595, %v791
  %v856 = vmul.f32 %v597, %v792
  %v857 = vmul.f32 %v668, %v793
  %v858 = vmul.f32 %v670, %v794
  %v859 = vmul.f32 %v741, %v795
  %v860 = vmul.f32 %v743, %v796
  %v861 = vmul.f32 %v528, %v797
  %v862 = vmul.f32 %v530, %v798
  %v863 = vmul.f32 %v601, %v799
  %v864 = vmul.f32 %v603, %v800
  %v865 = vmul.f32 %v674, %v801
  %v866 = vmul.f32 %v676, %v802
  %v867 = vmul.f32 %v747, %v803
  %v868 = vmul.f32 %v749, %v804
  %v869 = vmul.f32 %v532, %v805
  %v870 = vmul.f32 %v534, %v806
  %v871 = vmul.f32 %v605, %v807
  %v872 = vmul.f32 %v607, %v808
  %v873 = vmul.f32 %v678, %v809
  %v874 = vmul.f32 %v680, %v810
  %v875 = vmul.f32 %v751, %v811
  %v876 = vmul.f32 %v753, %v812
  %v877 = vmul.f32 %v538, %v813
  %v878 = vmul.f32 %v540, %v814
  %v879 = vmul.f32 %v611, %v815
  %v880 = vmul.f32 %v613, %v816
  %v881 = vmul.f32 %v684, %v817
  %v882 = vmul.f32 %v686, %v818
  %v883 = vmul.f32 %v757, %v819
  %v884 = vmul.f32 %v759, %v820
  %v885 = vmul.f32 %v542, %v821
  %v886 = vmul.f32 %v544, %v822
  %v887 = vmul.f32 %v615, %v823
  %v888 = vmul.f32 %v617, %v824
  %v889 = vmul.f32 %v688, %v825
  %v890 = vmul.f32 %v690, %v826
  %v891 = vmul.f32 %v761, %v827
  %v892 = vmul.f32 %v763, %v828
  %v893 = vmul.f32 %v829, 0.044715
  %v894 = vmul.f32 %v830, 0.044715
  %v895 = vmul.f32 %v831, 0.044715
  %v896 = vmul.f32 %v832, 0.044715
  %v897 = vmul.f32 %v833, 0.044715
  %v898 = vmul.f32 %v834, 0.044715
  %v899 = vmul.f32 %v835, 0.044715
  %v900 = vmul.f32 %v836, 0.044715
  %v901 = vmul.f32 %v837, 0.044715
  %v902 = vmul.f32 %v838, 0.044715
  %v903 = vmul.f32 %v839, 0.044715
  %v904 = vmul.f32 %v840, 0.044715
  %v905 = vmul.f32 %v841, 0.044715
  %v906 = vmul.f32 %v842, 0.044715
  %v907 = vmul.f32 %v843, 0.044715
  %v908 = vmul.f32 %v844, 0.044715
  %v909 = vmul.f32 %v845, 0.044715
  %v910 = vmul.f32 %v846, 0.044715
  %v911 = vmul.f32 %v847, 0.044715
  %v912 = vmul.f32 %v848, 0.044715
  %v913 = vmul.f32 %v849, 0.044715
  %v914 = vmul.f32 %v850, 0.044715
  %v915 = vmul.f32 %v851, 0.044715
  %v916 = vmul.f32 %v852, 0.044715
  %v917 = vmul.f32 %v853, 0.044715
  %v918 = vmul.f32 %v854, 0.044715
  %v919 = vmul.f32 %v855, 0.044715
  %v920 = vmul.f32 %v856, 0.044715
  %v921 = vmul.f32 %v857, 0.044715
  %v922 = vmul.f32 %v858, 0.044715
  %v923 = vmul.f32 %v859, 0.044715
  %v924 = vmul.f32 %v860, 0.044715
  %v925 = vmul.f32 %v861, 0.044715
  %v926 = vmul.f32 %v862, 0.044715
  %v927 = vmul.f32 %v863, 0.044715
  %v928 = vmul.f32 %v864, 0.044715
  %v929 = vmul.f32 %v865, 0.044715
  %v930 = vmul.f32 %v866, 0.044715
  %v931 = vmul.f32 %v867, 0.044715
  %v932 = vmul.f32 %v868, 0.044715
  %v933 = vmul.f32 %v869, 0.044715
  %v934 = vmul.f32 %v870, 0.044715
  %v935 = vmul.f32 %v871, 0.044715
  %v936 = vmul.f32 %v872, 0.044715
  %v937 = vmul.f32 %v873, 0.044715
  %v938 = vmul.f32 %v874, 0.044715
  %v939 = vmul.f32 %v875, 0.044715
  %v940 = vmul.f32 %v876, 0.044715
  %v941 = vmul.f32 %v877, 0.044715
  %v942 = vmul.f32 %v878, 0.044715
  %v943 = vmul.f32 %v879, 0.044715
  %v944 = vmul.f32 %v880, 0.044715
  %v945 = vmul.f32 %v881, 0.044715
  %v946 = vmul.f32 %v882, 0.044715
  %v947 = vmul.f32 %v883, 0.044715
  %v948 = vmul.f32 %v884, 0.044715
  %v949 = vmul.f32 %v885, 0.044715
  %v950 = vmul.f32 %v886, 0.044715
  %v951 = vmul.f32 %v887, 0.044715
  %v952 = vmul.f32 %v888, 0.044715
  %v953 = vmul.f32 %v889, 0.044715
  %v954 = vmul.f32 %v890, 0.044715
  %v955 = vmul.f32 %v891, 0.044715
  %v956 = vmul.f32 %v892, 0.044715
  %v957 = vadd.f32 %v508, %v893
  %v958 = vadd.f32 %v510, %v894
  %v959 = vadd.f32 %v581, %v895
  %v960 = vadd.f32 %v583, %v896
  %v961 = vadd.f32 %v654, %v897
  %v962 = vadd.f32 %v656, %v898
  %v963 = vadd.f32 %v727, %v899
  %v964 = vadd.f32 %v729, %v900
  %v965 = vadd.f32 %v512, %v901
  %v966 = vadd.f32 %v514, %v902
  %v967 = vadd.f32 %v585, %v903
  %v968 = vadd.f32 %v587, %v904
  %v969 = vadd.f32 %v658, %v905
  %v970 = vadd.f32 %v660, %v906
  %v971 = vadd.f32 %v731, %v907
  %v972 = vadd.f32 %v733, %v908
  %v973 = vadd.f32 %v518, %v909
  %v974 = vadd.f32 %v520, %v910
  %v975 = vadd.f32 %v591, %v911
  %v976 = vadd.f32 %v593, %v912
  %v977 = vadd.f32 %v664, %v913
  %v978 = vadd.f32 %v666, %v914
  %v979 = vadd.f32 %v737, %v915
  %v980 = vadd.f32 %v739, %v916
  %v981 = vadd.f32 %v522, %v917
  %v982 = vadd.f32 %v524, %v918
  %v983 = vadd.f32 %v595, %v919
  %v984 = vadd.f32 %v597, %v920
  %v985 = vadd.f32 %v668, %v921
  %v986 = vadd.f32 %v670, %v922
  %v987 = vadd.f32 %v741, %v923
  %v988 = vadd.f32 %v743, %v924
  %v989 = vadd.f32 %v528, %v925
  %v990 = vadd.f32 %v530, %v926
  %v991 = vadd.f32 %v601, %v927
  %v992 = vadd.f32 %v603, %v928
  %v993 = vadd.f32 %v674, %v929
  %v994 = vadd.f32 %v676, %v930
  %v995 = vadd.f32 %v747, %v931
  %v996 = vadd.f32 %v749, %v932
  %v997 = vadd.f32 %v532, %v933
  %v998 = vadd.f32 %v534, %v934
  %v999 = vadd.f32 %v605, %v935
  %v1000 = vadd.f32 %v607, %v936
  %v1001 = vadd.f32 %v678, %v937
  %v1002 = vadd.f32 %v680, %v938
  %v1003 = vadd.f32 %v751, %v939
  %v1004 = vadd.f32 %v753, %v940
  %v1005 = vadd.f32 %v538, %v941
  %v1006 = vadd.f32 %v540, %v942
  %v1007 = vadd.f32 %v611, %v943
  %v1008 = vadd.f32 %v613, %v944
  %v1009 = vadd.f32 %v684, %v945
  %v1010 = vadd.f32 %v686, %v946
  %v1011 = vadd.f32 %v757, %v947
  %v1012 = vadd.f32 %v759, %v948
  %v1013 = vadd.f32 %v542, %v949
  %v1014 = vadd.f32 %v544, %v950
  %v1015 = vadd.f32 %v615, %v951
  %v1016 = vadd.f32 %v617, %v952
  %v1017 = vadd.f32 %v688, %v953
  %v1018 = vadd.f32 %v690, %v954
  %v1019 = vadd.f32 %v761, %v955
  %v1020 = vadd.f32 %v763, %v956
  %v1021 = vmul.f32 %v957, 0.7978846
  %v1022 = vmul.f32 %v958, 0.7978846
  %v1023 = vmul.f32 %v959, 0.7978846
  %v1024 = vmul.f32 %v960, 0.7978846
  %v1025 = vmul.f32 %v961, 0.7978846
  %v1026 = vmul.f32 %v962, 0.7978846
  %v1027 = vmul.f32 %v963, 0.7978846
  %v1028 = vmul.f32 %v964, 0.7978846
  %v1029 = vmul.f32 %v965, 0.7978846
  %v1030 = vmul.f32 %v966, 0.7978846
  %v1031 = vmul.f32 %v967, 0.7978846
  %v1032 = vmul.f32 %v968, 0.7978846
  %v1033 = vmul.f32 %v969, 0.7978846
  %v1034 = vmul.f32 %v970, 0.7978846
  %v1035 = vmul.f32 %v971, 0.7978846
  %v1036 = vmul.f32 %v972, 0.7978846
  %v1037 = vmul.f32 %v973, 0.7978846
  %v1038 = vmul.f32 %v974, 0.7978846
  %v1039 = vmul.f32 %v975, 0.7978846
  %v1040 = vmul.f32 %v976, 0.7978846
  %v1041 = vmul.f32 %v977, 0.7978846
  %v1042 = vmul.f32 %v978, 0.7978846
  %v1043 = vmul.f32 %v979, 0.7978846
  %v1044 = vmul.f32 %v980, 0.7978846
  %v1045 = vmul.f32 %v981, 0.7978846
  %v1046 = vmul.f32 %v982, 0.7978846
  %v1047 = vmul.f32 %v983, 0.7978846
  %v1048 = vmul.f32 %v984, 0.7978846
  %v1049 = vmul.f32 %v985, 0.7978846
  %v1050 = vmul.f32 %v986, 0.7978846
  %v1051 = vmul.f32 %v987, 0.7978846
  %v1052 = vmul.f32 %v988, 0.7978846
  %v1053 = vmul.f32 %v989, 0.7978846
  %v1054 = vmul.f32 %v990, 0.7978846
  %v1055 = vmul.f32 %v991, 0.7978846
  %v1056 = vmul.f32 %v992, 0.7978846
  %v1057 = vmul.f32 %v993, 0.7978846
  %v1058 = vmul.f32 %v994, 0.7978846
  %v1059 = vmul.f32 %v995, 0.7978846
  %v1060 = vmul.f32 %v996, 0.7978846
  %v1061 = vmul.f32 %v997, 0.7978846
  %v1062 = vmul.f32 %v998, 0.7978846
  %v1063 = vmul.f32 %v999, 0.7978846
  %v1064 = vmul.f32 %v1000, 0.7978846
  %v1065 = vmul.f32 %v1001, 0.7978846
  %v1066 = vmul.f32 %v1002, 0.7978846
  %v1067 = vmul.f32 %v1003, 0.7978846
  %v1068 = vmul.f32 %v1004, 0.7978846
  %v1069 = vmul.f32 %v1005, 0.7978846
  %v1070 = vmul.f32 %v1006, 0.7978846
  %v1071 = vmul.f32 %v1007, 0.7978846
  %v1072 = vmul.f32 %v1008, 0.7978846
  %v1073 = vmul.f32 %v1009, 0.7978846
  %v1074 = vmul.f32 %v1010, 0.7978846
  %v1075 = vmul.f32 %v1011, 0.7978846
  %v1076 = vmul.f32 %v1012, 0.7978846
  %v1077 = vmul.f32 %v1013, 0.7978846
  %v1078 = vmul.f32 %v1014, 0.7978846
  %v1079 = vmul.f32 %v1015, 0.7978846
  %v1080 = vmul.f32 %v1016, 0.7978846
  %v1081 = vmul.f32 %v1017, 0.7978846
  %v1082 = vmul.f32 %v1018, 0.7978846
  %v1083 = vmul.f32 %v1019, 0.7978846
  %v1084 = vmul.f32 %v1020, 0.7978846
  %v1085 = vtanh.pop %v1021
  %v1086 = vtanh.pop %v1022
  %v1087 = vtanh.pop %v1023
  %v1088 = vtanh.pop %v1024
  %v1089 = vtanh.pop %v1025
  %v1090 = vtanh.pop %v1026
  %v1091 = vtanh.pop %v1027
  %v1092 = vtanh.pop %v1028
  %v1093 = vtanh.pop %v1029
  %v1094 = vtanh.pop %v1030
  %v1095 = vtanh.pop %v1031
  %v1096 = vtanh.pop %v1032
  %v1097 = vtanh.pop %v1033
  %v1098 = vtanh.pop %v1034
  %v1099 = vtanh.pop %v1035
  %v1100 = vtanh.pop %v1036
  %v1101 = vtanh.pop %v1037
  %v1102 = vtanh.pop %v1038
  %v1103 = vtanh.pop %v1039
  %v1104 = vtanh.pop %v1040
  %v1105 = vtanh.pop %v1041
  %v1106 = vtanh.pop %v1042
  %v1107 = vtanh.pop %v1043
  %v1108 = vtanh.pop %v1044
  %v1109 = vtanh.pop %v1045
  %v1110 = vtanh.pop %v1046
  %v1111 = vtanh.pop %v1047
  %v1112 = vtanh.pop %v1048
  %v1113 = vtanh.pop %v1049
  %v1114 = vtanh.pop %v1050
  %v1115 = vtanh.pop %v1051
  %v1116 = vtanh.pop %v1052
  %v1117 = vtanh.pop %v1053
  %v1118 = vtanh.pop %v1054
  %v1119 = vtanh.pop %v1055
  %v1120 = vtanh.pop %v1056
  %v1121 = vtanh.pop %v1057
  %v1122 = vtanh.pop %v1058
  %v1123 = vtanh.pop %v1059
  %v1124 = vtanh.pop %v1060
  %v1125 = vtanh.pop %v1061
  %v1126 = vtanh.pop %v1062
  %v1127 = vtanh.pop %v1063
  %v1128 = vtanh.pop %v1064
  %v1129 = vtanh.pop %v1065
  %v1130 = vtanh.pop %v1066
  %v1131 = vtanh.pop %v1067
  %v1132 = vtanh.pop %v1068
  %v1133 = vtanh.pop %v1069
  %v1134 = vtanh.pop %v1070
  %v1135 = vtanh.pop %v1071
  %v1136 = vtanh.pop %v1072
  %v1137 = vtanh.pop %v1073
  %v1138 = vtanh.pop %v1074
  %v1139 = vtanh.pop %v1075
  %v1140 = vtanh.pop %v1076
  %v1141 = vtanh.pop %v1077
  %v1142 = vtanh.pop %v1078
  %v1143 = vtanh.pop %v1079
  %v1144 = vtanh.pop %v1080
  %v1145 = vtanh.pop %v1081
  %v1146 = vtanh.pop %v1082
  %v1147 = vtanh.pop %v1083
  %v1148 = vtanh.pop %v1084
  %v1149 = vadd.f32 %v1085, 1.0
  %v1150 = vadd.f32 %v1086, 1.0
  %v1151 = vadd.f32 %v1087, 1.0
  %v1152 = vadd.f32 %v1088, 1.0
  %v1153 = vadd.f32 %v1089, 1.0
  %v1154 = vadd.f32 %v1090, 1.0
  %v1155 = vadd.f32 %v1091, 1.0
  %v1156 = vadd.f32 %v1092, 1.0
  %v1157 = vadd.f32 %v1093, 1.0
  %v1158 = vadd.f32 %v1094, 1.0
  %v1159 = vadd.f32 %v1095, 1.0
  %v1160 = vadd.f32 %v1096, 1.0
  %v1161 = vadd.f32 %v1097, 1.0
  %v1162 = vadd.f32 %v1098, 1.0
  %v1163 = vadd.f32 %v1099, 1.0
  %v1164 = vadd.f32 %v1100, 1.0
  %v1165 = vadd.f32 %v1101, 1.0
  %v1166 = vadd.f32 %v1102, 1.0
  %v1167 = vadd.f32 %v1103, 1.0
  %v1168 = vadd.f32 %v1104, 1.0
  %v1169 = vadd.f32 %v1105, 1.0
  %v1170 = vadd.f32 %v1106, 1.0
  %v1171 = vadd.f32 %v1107, 1.0
  %v1172 = vadd.f32 %v1108, 1.0
  %v1173 = vadd.f32 %v1109, 1.0
  %v1174 = vadd.f32 %v1110, 1.0
  %v1175 = vadd.f32 %v1111, 1.0
  %v1176 = vadd.f32 %v1112, 1.0
  %v1177 = vadd.f32 %v1113, 1.0
  %v1178 = vadd.f32 %v1114, 1.0
  %v1179 = vadd.f32 %v1115, 1.0
  %v1180 = vadd.f32 %v1116, 1.0
  %v1181 = vadd.f32 %v1117, 1.0
  %v1182 = vadd.f32 %v1118, 1.0
  %v1183 = vadd.f32 %v1119, 1.0
  %v1184 = vadd.f32 %v1120, 1.0
  %v1185 = vadd.f32 %v1121, 1.0
  %v1186 = vadd.f32 %v1122, 1.0
  %v1187 = vadd.f32 %v1123, 1.0
  %v1188 = vadd.f32 %v1124, 1.0
  %v1189 = vadd.f32 %v1125, 1.0
  %v1190 = vadd.f32 %v1126, 1.0
  %v1191 = vadd.f32 %v1127, 1.0
  %v1192 = vadd.f32 %v1128, 1.0
  %v1193 = vadd.f32 %v1129, 1.0
  %v1194 = vadd.f32 %v1130, 1.0
  %v1195 = vadd.f32 %v1131, 1.0
  %v1196 = vadd.f32 %v1132, 1.0
  %v1197 = vadd.f32 %v1133, 1.0
  %v1198 = vadd.f32 %v1134, 1.0
  %v1199 = vadd.f32 %v1135, 1.0
  %v1200 = vadd.f32 %v1136, 1.0
  %v1201 = vadd.f32 %v1137, 1.0
  %v1202 = vadd.f32 %v1138, 1.0
  %v1203 = vadd.f32 %v1139, 1.0
  %v1204 = vadd.f32 %v1140, 1.0
  %v1205 = vadd.f32 %v1141, 1.0
  %v1206 = vadd.f32 %v1142, 1.0
  %v1207 = vadd.f32 %v1143, 1.0
  %v1208 = vadd.f32 %v1144, 1.0
  %v1209 = vadd.f32 %v1145, 1.0
  %v1210 = vadd.f32 %v1146, 1.0
  %v1211 = vadd.f32 %v1147, 1.0
  %v1212 = vadd.f32 %v1148, 1.0
  %v1213 = vmul.f32 %v1149, 0.5
  %v1214 = vmul.f32 %v1150, 0.5
  %v1215 = vmul.f32 %v1151, 0.5
  %v1216 = vmul.f32 %v1152, 0.5
  %v1217 = vmul.f32 %v1153, 0.5
  %v1218 = vmul.f32 %v1154, 0.5
  %v1219 = vmul.f32 %v1155, 0.5
  %v1220 = vmul.f32 %v1156, 0.5
  %v1221 = vmul.f32 %v1157, 0.5
  %v1222 = vmul.f32 %v1158, 0.5
  %v1223 = vmul.f32 %v1159, 0.5
  %v1224 = vmul.f32 %v1160, 0.5
  %v1225 = vmul.f32 %v1161, 0.5
  %v1226 = vmul.f32 %v1162, 0.5
  %v1227 = vmul.f32 %v1163, 0.5
  %v1228 = vmul.f32 %v1164, 0.5
  %v1229 = vmul.f32 %v1165, 0.5
  %v1230 = vmul.f32 %v1166, 0.5
  %v1231 = vmul.f32 %v1167, 0.5
  %v1232 = vmul.f32 %v1168, 0.5
  %v1233 = vmul.f32 %v1169, 0.5
  %v1234 = vmul.f32 %v1170, 0.5
  %v1235 = vmul.f32 %v1171, 0.5
  %v1236 = vmul.f32 %v1172, 0.5
  %v1237 = vmul.f32 %v1173, 0.5
  %v1238 = vmul.f32 %v1174, 0.5
  %v1239 = vmul.f32 %v1175, 0.5
  %v1240 = vmul.f32 %v1176, 0.5
  %v1241 = vmul.f32 %v1177, 0.5
  %v1242 = vmul.f32 %v1178, 0.5
  %v1243 = vmul.f32 %v1179, 0.5
  %v1244 = vmul.f32 %v1180, 0.5
  %v1245 = vmul.f32 %v1181, 0.5
  %v1246 = vmul.f32 %v1182, 0.5
  %v1247 = vmul.f32 %v1183, 0.5
  %v1248 = vmul.f32 %v1184, 0.5
  %v1249 = vmul.f32 %v1185, 0.5
  %v1250 = vmul.f32 %v1186, 0.5
  %v1251 = vmul.f32 %v1187, 0.5
  %v1252 = vmul.f32 %v1188, 0.5
  %v1253 = vmul.f32 %v1189, 0.5
  %v1254 = vmul.f32 %v1190, 0.5
  %v1255 = vmul.f32 %v1191, 0.5
  %v1256 = vmul.f32 %v1192, 0.5
  %v1257 = vmul.f32 %v1193, 0.5
  %v1258 = vmul.f32 %v1194, 0.5
  %v1259 = vmul.f32 %v1195, 0.5
  %v1260 = vmul.f32 %v1196, 0.5
  %v1261 = vmul.f32 %v1197, 0.5
  %v1262 = vmul.f32 %v1198, 0.5
  %v1263 = vmul.f32 %v1199, 0.5
  %v1264 = vmul.f32 %v1200, 0.5
  %v1265 = vmul.f32 %v1201, 0.5
  %v1266 = vmul.f32 %v1202, 0.5
  %v1267 = vmul.f32 %v1203, 0.5
  %v1268 = vmul.f32 %v1204, 0.5
  %v1269 = vmul.f32 %v1205, 0.5
  %v1270 = vmul.f32 %v1206, 0.5
  %v1271 = vmul.f32 %v1207, 0.5
  %v1272 = vmul.f32 %v1208, 0.5
  %v1273 = vmul.f32 %v1209, 0.5
  %v1274 = vmul.f32 %v1210, 0.5
  %v1275 = vmul.f32 %v1211, 0.5
  %v1276 = vmul.f32 %v1212, 0.5
  %v1277 = vmul.f32 %v508, %v1213
  %v1278 = vmul.f32 %v510, %v1214
  %v1279 = vmul.f32 %v581, %v1215
  %v1280 = vmul.f32 %v583, %v1216
  %v1281 = vmul.f32 %v654, %v1217
  %v1282 = vmul.f32 %v656, %v1218
  %v1283 = vmul.f32 %v727, %v1219
  %v1284 = vmul.f32 %v729, %v1220
  %v1285 = vmul.f32 %v512, %v1221
  %v1286 = vmul.f32 %v514, %v1222
  %v1287 = vmul.f32 %v585, %v1223
  %v1288 = vmul.f32 %v587, %v1224
  %v1289 = vmul.f32 %v658, %v1225
  %v1290 = vmul.f32 %v660, %v1226
  %v1291 = vmul.f32 %v731, %v1227
  %v1292 = vmul.f32 %v733, %v1228
  %v1293 = vmul.f32 %v518, %v1229
  %v1294 = vmul.f32 %v520, %v1230
  %v1295 = vmul.f32 %v591, %v1231
  %v1296 = vmul.f32 %v593, %v1232
  %v1297 = vmul.f32 %v664, %v1233
  %v1298 = vmul.f32 %v666, %v1234
  %v1299 = vmul.f32 %v737, %v1235
  %v1300 = vmul.f32 %v739, %v1236
  %v1301 = vmul.f32 %v522, %v1237
  %v1302 = vmul.f32 %v524, %v1238
  %v1303 = vmul.f32 %v595, %v1239
  %v1304 = vmul.f32 %v597, %v1240
  %v1305 = vmul.f32 %v668, %v1241
  %v1306 = vmul.f32 %v670, %v1242
  %v1307 = vmul.f32 %v741, %v1243
  %v1308 = vmul.f32 %v743, %v1244
  %v1309 = vmul.f32 %v528, %v1245
  %v1310 = vmul.f32 %v530, %v1246
  %v1311 = vmul.f32 %v601, %v1247
  %v1312 = vmul.f32 %v603, %v1248
  %v1313 = vmul.f32 %v674, %v1249
  %v1314 = vmul.f32 %v676, %v1250
  %v1315 = vmul.f32 %v747, %v1251
  %v1316 = vmul.f32 %v749, %v1252
  %v1317 = vmul.f32 %v532, %v1253
  %v1318 = vmul.f32 %v534, %v1254
  %v1319 = vmul.f32 %v605, %v1255
  %v1320 = vmul.f32 %v607, %v1256
  %v1321 = vmul.f32 %v678, %v1257
  %v1322 = vmul.f32 %v680, %v1258
  %v1323 = vmul.f32 %v751, %v1259
  %v1324 = vmul.f32 %v753, %v1260
  %v1325 = vmul.f32 %v538, %v1261
  %v1326 = vmul.f32 %v540, %v1262
  %v1327 = vmul.f32 %v611, %v1263
  %v1328 = vmul.f32 %v613, %v1264
  %v1329 = vmul.f32 %v684, %v1265
  %v1330 = vmul.f32 %v686, %v1266
  %v1331 = vmul.f32 %v757, %v1267
  %v1332 = vmul.f32 %v759, %v1268
  %v1333 = vmul.f32 %v542, %v1269
  %v1334 = vmul.f32 %v544, %v1270
  %v1335 = vmul.f32 %v615, %v1271
  %v1336 = vmul.f32 %v617, %v1272
  %v1337 = vmul.f32 %v688, %v1273
  %v1338 = vmul.f32 %v690, %v1274
  %v1339 = vmul.f32 %v761, %v1275
  %v1340 = vmul.f32 %v763, %v1276
  %v1341 = vpack.c.bf16 %v1285, %v1277
  %v1342 = vpack.c.bf16 %v1286, %v1278
  %v1343 = vpack.c.bf16 %v1287, %v1279
  %v1344 = vpack.c.bf16 %v1288, %v1280
  %v1345 = vpack.c.bf16 %v1289, %v1281
  %v1346 = vpack.c.bf16 %v1290, %v1282
  %v1347 = vpack.c.bf16 %v1291, %v1283
  %v1348 = vpack.c.bf16 %v1292, %v1284
  %v1349 = vpack.c.bf16 %v1301, %v1293
  %v1350 = vpack.c.bf16 %v1302, %v1294
  %v1351 = vpack.c.bf16 %v1303, %v1295
  %v1352 = vpack.c.bf16 %v1304, %v1296
  %v1353 = vpack.c.bf16 %v1305, %v1297
  %v1354 = vpack.c.bf16 %v1306, %v1298
  %v1355 = vpack.c.bf16 %v1307, %v1299
  %v1356 = vpack.c.bf16 %v1308, %v1300
  %v1357 = vpack.c.bf16 %v1317, %v1309
  %v1358 = vpack.c.bf16 %v1318, %v1310
  %v1359 = vpack.c.bf16 %v1319, %v1311
  %v1360 = vpack.c.bf16 %v1320, %v1312
  %v1361 = vpack.c.bf16 %v1321, %v1313
  %v1362 = vpack.c.bf16 %v1322, %v1314
  %v1363 = vpack.c.bf16 %v1323, %v1315
  %v1364 = vpack.c.bf16 %v1324, %v1316
  %v1365 = vpack.c.bf16 %v1333, %v1325
  %v1366 = vpack.c.bf16 %v1334, %v1326
  %v1367 = vpack.c.bf16 %v1335, %v1327
  %v1368 = vpack.c.bf16 %v1336, %v1328
  %v1369 = vpack.c.bf16 %v1337, %v1329
  %v1370 = vpack.c.bf16 %v1338, %v1330
  %v1371 = vpack.c.bf16 %v1339, %v1331
  %v1372 = vpack.c.bf16 %v1340, %v1332
  %v1405 = vunpack.c.l.b16 %v1341
  %v1406 = vunpack.c.l.b16 %v1342
  %v1407 = vunpack.c.l.b16 %v1343
  %v1408 = vunpack.c.l.b16 %v1344
  %v1409 = vunpack.c.l.b16 %v1345
  %v1410 = vunpack.c.l.b16 %v1346
  %v1411 = vunpack.c.l.b16 %v1347
  %v1412 = vunpack.c.l.b16 %v1348
  %v1413 = vunpack.c.h.b16 %v1341
  %v1414 = vunpack.c.h.b16 %v1342
  %v1415 = vunpack.c.h.b16 %v1343
  %v1416 = vunpack.c.h.b16 %v1344
  %v1417 = vunpack.c.h.b16 %v1345
  %v1418 = vunpack.c.h.b16 %v1346
  %v1419 = vunpack.c.h.b16 %v1347
  %v1420 = vunpack.c.h.b16 %v1348
  %v1421 = vunpack.c.l.b16 %v1349
  %v1422 = vunpack.c.l.b16 %v1350
  %v1423 = vunpack.c.l.b16 %v1351
  %v1424 = vunpack.c.l.b16 %v1352
  %v1425 = vunpack.c.l.b16 %v1353
  %v1426 = vunpack.c.l.b16 %v1354
  %v1427 = vunpack.c.l.b16 %v1355
  %v1428 = vunpack.c.l.b16 %v1356
  %v1429 = vunpack.c.h.b16 %v1349
  %v1430 = vunpack.c.h.b16 %v1350
  %v1431 = vunpack.c.h.b16 %v1351
  %v1432 = vunpack.c.h.b16 %v1352
  %v1433 = vunpack.c.h.b16 %v1353
  %v1434 = vunpack.c.h.b16 %v1354
  %v1435 = vunpack.c.h.b16 %v1355
  %v1436 = vunpack.c.h.b16 %v1356
  %v1437 = vunpack.c.l.b16 %v1357
  %v1438 = vunpack.c.l.b16 %v1358
  %v1439 = vunpack.c.l.b16 %v1359
  %v1440 = vunpack.c.l.b16 %v1360
  %v1441 = vunpack.c.l.b16 %v1361
  %v1442 = vunpack.c.l.b16 %v1362
  %v1443 = vunpack.c.l.b16 %v1363
  %v1444 = vunpack.c.l.b16 %v1364
  %v1445 = vunpack.c.h.b16 %v1357
  %v1446 = vunpack.c.h.b16 %v1358
  %v1447 = vunpack.c.h.b16 %v1359
  %v1448 = vunpack.c.h.b16 %v1360
  %v1449 = vunpack.c.h.b16 %v1361
  %v1450 = vunpack.c.h.b16 %v1362
  %v1451 = vunpack.c.h.b16 %v1363
  %v1452 = vunpack.c.h.b16 %v1364
  %v1453 = vunpack.c.l.b16 %v1365
  %v1454 = vunpack.c.l.b16 %v1366
  %v1455 = vunpack.c.l.b16 %v1367
  %v1456 = vunpack.c.l.b16 %v1368
  %v1457 = vunpack.c.l.b16 %v1369
  %v1458 = vunpack.c.l.b16 %v1370
  %v1459 = vunpack.c.l.b16 %v1371
  %v1460 = vunpack.c.l.b16 %v1372
  %v1461 = vunpack.c.h.b16 %v1365
  %v1462 = vunpack.c.h.b16 %v1366
  %v1463 = vunpack.c.h.b16 %v1367
  %v1464 = vunpack.c.h.b16 %v1368
  %v1465 = vunpack.c.h.b16 %v1369
  %v1466 = vunpack.c.h.b16 %v1370
  %v1467 = vunpack.c.h.b16 %v1371
  %v1468 = vunpack.c.h.b16 %v1372
  %v1469 = vpack.c.b16 %v1406, %v1405
  %v1470 = vpack.c.b16 %v1408, %v1407
  %v1471 = vpack.c.b16 %v1410, %v1409
  %v1472 = vpack.c.b16 %v1412, %v1411
  %v1473 = vpack.c.b16 %v1414, %v1413
  %v1474 = vpack.c.b16 %v1416, %v1415
  %v1475 = vpack.c.b16 %v1418, %v1417
  %v1476 = vpack.c.b16 %v1420, %v1419
  %v1477 = vpack.c.b16 %v1422, %v1421
  %v1478 = vpack.c.b16 %v1424, %v1423
  %v1479 = vpack.c.b16 %v1426, %v1425
  %v1480 = vpack.c.b16 %v1428, %v1427
  %v1481 = vpack.c.b16 %v1430, %v1429
  %v1482 = vpack.c.b16 %v1432, %v1431
  %v1483 = vpack.c.b16 %v1434, %v1433
  %v1484 = vpack.c.b16 %v1436, %v1435
  %v1485 = vpack.c.b16 %v1438, %v1437
  %v1486 = vpack.c.b16 %v1440, %v1439
  %v1487 = vpack.c.b16 %v1442, %v1441
  %v1488 = vpack.c.b16 %v1444, %v1443
  %v1489 = vpack.c.b16 %v1446, %v1445
  %v1490 = vpack.c.b16 %v1448, %v1447
  %v1491 = vpack.c.b16 %v1450, %v1449
  %v1492 = vpack.c.b16 %v1452, %v1451
  %v1493 = vpack.c.b16 %v1454, %v1453
  %v1494 = vpack.c.b16 %v1456, %v1455
  %v1495 = vpack.c.b16 %v1458, %v1457
  %v1496 = vpack.c.b16 %v1460, %v1459
  %v1497 = vpack.c.b16 %v1462, %v1461
  %v1498 = vpack.c.b16 %v1464, %v1463
  %v1499 = vpack.c.b16 %v1466, %v1465
  %v1500 = vpack.c.b16 %v1468, %v1467
  %1533 = vst [vmem:[%s3] sm:$0xff] %v1469
  %1534 = vst [vmem:[%s3 + $0x8] sm:$0xff] %v1470
  %1535 = vst [vmem:[%s3 + $0x10] sm:$0xff] %v1471
  %1536 = vst [vmem:[%s3 + $0x18] sm:$0xff] %v1472
  %1537 = vst [vmem:[%s3 + $0x20] sm:$0xff] %v1473
  %1538 = vst [vmem:[%s3 + $0x28] sm:$0xff] %v1474
  %1539 = vst [vmem:[%s3 + $0x30] sm:$0xff] %v1475
  %1540 = vst [vmem:[%s3 + $0x38] sm:$0xff] %v1476
  %1541 = vst [vmem:[%s3 + $0x40] sm:$0xff] %v1477
  %1542 = vst [vmem:[%s3 + $0x48] sm:$0xff] %v1478
  %1543 = vst [vmem:[%s3 + $0x50] sm:$0xff] %v1479
  %1544 = vst [vmem:[%s3 + $0x58] sm:$0xff] %v1480
  %1545 = vst [vmem:[%s3 + $0x60] sm:$0xff] %v1481
  %1546 = vst [vmem:[%s3 + $0x68] sm:$0xff] %v1482
  %1547 = vst [vmem:[%s3 + $0x70] sm:$0xff] %v1483
  %1548 = vst [vmem:[%s3 + $0x78] sm:$0xff] %v1484
  %1549 = vst [vmem:[%s3 + $0x80] sm:$0xff] %v1485
  %1550 = vst [vmem:[%s3 + $0x88] sm:$0xff] %v1486
  %1551 = vst [vmem:[%s3 + $0x90] sm:$0xff] %v1487
  %1552 = vst [vmem:[%s3 + $0x98] sm:$0xff] %v1488
  %1553 = vst [vmem:[%s3 + $0xa0] sm:$0xff] %v1489
  %1554 = vst [vmem:[%s3 + $0xa8] sm:$0xff] %v1490
  %1555 = vst [vmem:[%s3 + $0xb0] sm:$0xff] %v1491
  %1556 = vst [vmem:[%s3 + $0xb8] sm:$0xff] %v1492
  %1557 = vst [vmem:[%s3 + $0xc0] sm:$0xff] %v1493
  %1558 = vst [vmem:[%s3 + $0xc8] sm:$0xff] %v1494
  %1559 = vst [vmem:[%s3 + $0xd0] sm:$0xff] %v1495
  %1560 = vst [vmem:[%s3 + $0xd8] sm:$0xff] %v1496
  %1561 = vst [vmem:[%s3 + $0xe0] sm:$0xff] %v1497
  %1562 = vst [vmem:[%s3 + $0xe8] sm:$0xff] %v1498
  %1563 = vst [vmem:[%s3 + $0xf0] sm:$0xff] %v1499
  %1564 = vst [vmem:[%s3 + $0xf8] sm:$0xff] %v1500
  // Predicated region
  $region14: #{custom_model_forward.9} parent=0 // pred_check
    _
  $region15: #{custom_model_forward.9} parent=0 // pred_check_branch
    %1566 = sbr.rel (0) target = $region17
  $region16: #{custom_model_forward.9} parent=0 // pred_region
    _
  $region17: #{custom_model_forward.9} parent=0 // pred_fallthru
    _
  // Predicated region
  $region18: #{custom_model_forward.9} parent=0 // pred_check
    _
  $region19: #{custom_model_forward.9} parent=0 // pred_check_branch
    %1568 = sbr.rel (0) target = $region21
  $region20: #{custom_model_forward.9} parent=0 // pred_region
    _
  $region21: #{custom_model_forward.9} parent=0 // pred_fallthru
    _

// kernel: custom_model_forward.10
$region0: #{custom_model_forward.10}
  #allocation0 [shape = 'u32[]', space=smem, size = 0x4, offset = 0x4, fixed_abs, tag = 'smem constant byte address 0x4 - core index']
  #allocation1 [shape = 'u32[144,128]{1,0:T(1,128)}', space=vmem, size = 0x12000, scoped, tag = 'internal scratch']
  %s0 = inlined_call_operand.vmem [shape: bf16[64,1024], index: 0, kind: input, shape index: {}]
  %s1 = inlined_call_operand.vmem [shape: bf16[1024,512], index: 1, kind: input, shape index: {}]
  %s2 = inlined_call_operand.vmem [shape: f32[1,512], index: 2, kind: input, shape index: {}]
  %s3 = inlined_call_operand.vmem [shape: bf16[64,512], index: 3, kind: output, shape index: {}]
  %s4 = sld [smem:[#allocation0]]
  $region22: #{custom_model_forward.10} parent=0
    _
  %s6 = ssub.s32 1, %s4
  %s7 = scalar_select 0, %s6, %s4
  // Predicated region
  $region2: #{custom_model_forward.10} parent=0 // pred_check
    _
  $region3: #{custom_model_forward.10} parent=0 // pred_check_branch
    %9 = sbr.rel (0) target = $region5
  $region4: #{custom_model_forward.10} parent=0 // pred_region
    _
  $region5: #{custom_model_forward.10} parent=0 // pred_fallthru
    _
  // Predicated region
  $region6: #{custom_model_forward.10} parent=0 // pred_check
    _
  $region7: #{custom_model_forward.10} parent=0 // pred_check_branch
    %11 = sbr.rel (0) target = $region9
  $region8: #{custom_model_forward.10} parent=0 // pred_region
    _
  $region9: #{custom_model_forward.10} parent=0 // pred_fallthru
    _
  // Predicated region
  $region10: #{custom_model_forward.10} parent=0 // pred_check
    _
  $region11: #{custom_model_forward.10} parent=0 // pred_check_branch
    %13 = sbr.rel (0) target = $region13
  $region12: #{custom_model_forward.10} parent=0 // pred_region
    _
  $region13: #{custom_model_forward.10} parent=0 // pred_fallthru
    _
  %v14 = vld [vmem:[%s0] sm:$0xff]
  %v15 = vld [vmem:[%s0 + $0x8] sm:$0xff]
  %v16 = vld [vmem:[%s0 + $0x10] sm:$0xff]
  %v17 = vld [vmem:[%s0 + $0x18] sm:$0xff]
  %v18 = vld [vmem:[%s0 + $0x20] sm:$0xff]
  %v19 = vld [vmem:[%s0 + $0x28] sm:$0xff]
  %v20 = vld [vmem:[%s0 + $0x30] sm:$0xff]
  %v21 = vld [vmem:[%s0 + $0x38] sm:$0xff]
  %v22 = vld [vmem:[%s0 + $0x40] sm:$0xff]
  %v23 = vld [vmem:[%s0 + $0x48] sm:$0xff]
  %v24 = vld [vmem:[%s0 + $0x50] sm:$0xff]
  %v25 = vld [vmem:[%s0 + $0x58] sm:$0xff]
  %v26 = vld [vmem:[%s0 + $0x60] sm:$0xff]
  %v27 = vld [vmem:[%s0 + $0x68] sm:$0xff]
  %v28 = vld [vmem:[%s0 + $0x70] sm:$0xff]
  %v29 = vld [vmem:[%s0 + $0x78] sm:$0xff]
  %v30 = vld [vmem:[%s0 + $0x80] sm:$0xff]
  %v31 = vld [vmem:[%s0 + $0x88] sm:$0xff]
  %v32 = vld [vmem:[%s0 + $0x90] sm:$0xff]
  %v33 = vld [vmem:[%s0 + $0x98] sm:$0xff]
  %v34 = vld [vmem:[%s0 + $0xa0] sm:$0xff]
  %v35 = vld [vmem:[%s0 + $0xa8] sm:$0xff]
  %v36 = vld [vmem:[%s0 + $0xb0] sm:$0xff]
  %v37 = vld [vmem:[%s0 + $0xb8] sm:$0xff]
  %v38 = vld [vmem:[%s0 + $0xc0] sm:$0xff]
  %v39 = vld [vmem:[%s0 + $0xc8] sm:$0xff]
  %v40 = vld [vmem:[%s0 + $0xd0] sm:$0xff]
  %v41 = vld [vmem:[%s0 + $0xd8] sm:$0xff]
  %v42 = vld [vmem:[%s0 + $0xe0] sm:$0xff]
  %v43 = vld [vmem:[%s0 + $0xe8] sm:$0xff]
  %v44 = vld [vmem:[%s0 + $0xf0] sm:$0xff]
  %v45 = vld [vmem:[%s0 + $0xf8] sm:$0xff]
  %v46 = vld [vmem:[%s1] sm:$0xff]
  %v47 = vld [vmem:[%s1 + $0x8] sm:$0xff]
  %v48 = vld [vmem:[%s1 + $0x10] sm:$0xff]
  %v49 = vld [vmem:[%s1 + $0x18] sm:$0xff]
  %v50 = vld [vmem:[%s1 + $0x20] sm:$0xff]
  %v51 = vld [vmem:[%s1 + $0x28] sm:$0xff]
  %v52 = vld [vmem:[%s1 + $0x30] sm:$0xff]
  %v53 = vld [vmem:[%s1 + $0x38] sm:$0xff]
  %v54 = vld [vmem:[%s1 + $0x40] sm:$0xff]
  %v55 = vld [vmem:[%s1 + $0x48] sm:$0xff]
  %v56 = vld [vmem:[%s1 + $0x50] sm:$0xff]
  %v57 = vld [vmem:[%s1 + $0x58] sm:$0xff]
  %v58 = vld [vmem:[%s1 + $0x60] sm:$0xff]
  %v59 = vld [vmem:[%s1 + $0x68] sm:$0xff]
  %v60 = vld [vmem:[%s1 + $0x70] sm:$0xff]
  %v61 = vld [vmem:[%s1 + $0x78] sm:$0xff]
  %v62 = vld [vmem:[%s1 + $0x80] sm:$0xff]
  %v63 = vld [vmem:[%s1 + $0x88] sm:$0xff]
  %v64 = vld [vmem:[%s1 + $0x90] sm:$0xff]
  %v65 = vld [vmem:[%s1 + $0x98] sm:$0xff]
  %v66 = vld [vmem:[%s1 + $0xa0] sm:$0xff]
  %v67 = vld [vmem:[%s1 + $0xa8] sm:$0xff]
  %v68 = vld [vmem:[%s1 + $0xb0] sm:$0xff]
  %v69 = vld [vmem:[%s1 + $0xb8] sm:$0xff]
  %v70 = vld [vmem:[%s1 + $0xc0] sm:$0xff]
  %v71 = vld [vmem:[%s1 + $0xc8] sm:$0xff]
  %v72 = vld [vmem:[%s1 + $0xd0] sm:$0xff]
  %v73 = vld [vmem:[%s1 + $0xd8] sm:$0xff]
  %v74 = vld [vmem:[%s1 + $0xe0] sm:$0xff]
  %v75 = vld [vmem:[%s1 + $0xe8] sm:$0xff]
  %v76 = vld [vmem:[%s1 + $0xf0] sm:$0xff]
  %v77 = vld [vmem:[%s1 + $0xf8] sm:$0xff]
  %v78 = vld [vmem:[%s1 + $0x100] sm:$0xff]
  %v79 = vld [vmem:[%s1 + $0x108] sm:$0xff]
  %v80 = vld [vmem:[%s1 + $0x110] sm:$0xff]
  %v81 = vld [vmem:[%s1 + $0x118] sm:$0xff]
  %v82 = vld [vmem:[%s1 + $0x120] sm:$0xff]
  %v83 = vld [vmem:[%s1 + $0x128] sm:$0xff]
  %v84 = vld [vmem:[%s1 + $0x130] sm:$0xff]
  %v85 = vld [vmem:[%s1 + $0x138] sm:$0xff]
  %v86 = vld [vmem:[%s1 + $0x140] sm:$0xff]
  %v87 = vld [vmem:[%s1 + $0x148] sm:$0xff]
  %v88 = vld [vmem:[%s1 + $0x150] sm:$0xff]
  %v89 = vld [vmem:[%s1 + $0x158] sm:$0xff]
  %v90 = vld [vmem:[%s1 + $0x160] sm:$0xff]
  %v91 = vld [vmem:[%s1 + $0x168] sm:$0xff]
  %v92 = vld [vmem:[%s1 + $0x170] sm:$0xff]
  %v93 = vld [vmem:[%s1 + $0x178] sm:$0xff]
  %v94 = vld [vmem:[%s1 + $0x180] sm:$0xff]
  %v95 = vld [vmem:[%s1 + $0x188] sm:$0xff]
  %v96 = vld [vmem:[%s1 + $0x190] sm:$0xff]
  %v97 = vld [vmem:[%s1 + $0x198] sm:$0xff]
  %v98 = vld [vmem:[%s1 + $0x1a0] sm:$0xff]
  %v99 = vld [vmem:[%s1 + $0x1a8] sm:$0xff]
  %v100 = vld [vmem:[%s1 + $0x1b0] sm:$0xff]
  %v101 = vld [vmem:[%s1 + $0x1b8] sm:$0xff]
  %v102 = vld [vmem:[%s1 + $0x1c0] sm:$0xff]
  %v103 = vld [vmem:[%s1 + $0x1c8] sm:$0xff]
  %v104 = vld [vmem:[%s1 + $0x1d0] sm:$0xff]
  %v105 = vld [vmem:[%s1 + $0x1d8] sm:$0xff]
  %v106 = vld [vmem:[%s1 + $0x1e0] sm:$0xff]
  %v107 = vld [vmem:[%s1 + $0x1e8] sm:$0xff]
  %v108 = vld [vmem:[%s1 + $0x1f0] sm:$0xff]
  %v109 = vld [vmem:[%s1 + $0x1f8] sm:$0xff]
  %v110 = vld [vmem:[%s1 + $0x200] sm:$0xff]
  %v111 = vld [vmem:[%s1 + $0x208] sm:$0xff]
  %v112 = vld [vmem:[%s1 + $0x210] sm:$0xff]
  %v113 = vld [vmem:[%s1 + $0x218] sm:$0xff]
  %v114 = vld [vmem:[%s1 + $0x220] sm:$0xff]
  %v115 = vld [vmem:[%s1 + $0x228] sm:$0xff]
  %v116 = vld [vmem:[%s1 + $0x230] sm:$0xff]
  %v117 = vld [vmem:[%s1 + $0x238] sm:$0xff]
  %v118 = vld [vmem:[%s1 + $0x240] sm:$0xff]
  %v119 = vld [vmem:[%s1 + $0x248] sm:$0xff]
  %v120 = vld [vmem:[%s1 + $0x250] sm:$0xff]
  %v121 = vld [vmem:[%s1 + $0x258] sm:$0xff]
  %v122 = vld [vmem:[%s1 + $0x260] sm:$0xff]
  %v123 = vld [vmem:[%s1 + $0x268] sm:$0xff]
  %v124 = vld [vmem:[%s1 + $0x270] sm:$0xff]
  %v125 = vld [vmem:[%s1 + $0x278] sm:$0xff]
  %v126 = vld [vmem:[%s1 + $0x280] sm:$0xff]
  %v127 = vld [vmem:[%s1 + $0x288] sm:$0xff]
  %v128 = vld [vmem:[%s1 + $0x290] sm:$0xff]
  %v129 = vld [vmem:[%s1 + $0x298] sm:$0xff]
  %v130 = vld [vmem:[%s1 + $0x2a0] sm:$0xff]
  %v131 = vld [vmem:[%s1 + $0x2a8] sm:$0xff]
  %v132 = vld [vmem:[%s1 + $0x2b0] sm:$0xff]
  %v133 = vld [vmem:[%s1 + $0x2b8] sm:$0xff]
  %v134 = vld [vmem:[%s1 + $0x2c0] sm:$0xff]
  %v135 = vld [vmem:[%s1 + $0x2c8] sm:$0xff]
  %v136 = vld [vmem:[%s1 + $0x2d0] sm:$0xff]
  %v137 = vld [vmem:[%s1 + $0x2d8] sm:$0xff]
  %v138 = vld [vmem:[%s1 + $0x2e0] sm:$0xff]
  %v139 = vld [vmem:[%s1 + $0x2e8] sm:$0xff]
  %v140 = vld [vmem:[%s1 + $0x2f0] sm:$0xff]
  %v141 = vld [vmem:[%s1 + $0x2f8] sm:$0xff]
  %v142 = vld [vmem:[%s1 + $0x300] sm:$0xff]
  %v143 = vld [vmem:[%s1 + $0x308] sm:$0xff]
  %v144 = vld [vmem:[%s1 + $0x310] sm:$0xff]
  %v145 = vld [vmem:[%s1 + $0x318] sm:$0xff]
  %v146 = vld [vmem:[%s1 + $0x320] sm:$0xff]
  %v147 = vld [vmem:[%s1 + $0x328] sm:$0xff]
  %v148 = vld [vmem:[%s1 + $0x330] sm:$0xff]
  %v149 = vld [vmem:[%s1 + $0x338] sm:$0xff]
  %v150 = vld [vmem:[%s1 + $0x340] sm:$0xff]
  %v151 = vld [vmem:[%s1 + $0x348] sm:$0xff]
  %v152 = vld [vmem:[%s1 + $0x350] sm:$0xff]
  %v153 = vld [vmem:[%s1 + $0x358] sm:$0xff]
  %v154 = vld [vmem:[%s1 + $0x360] sm:$0xff]
  %v155 = vld [vmem:[%s1 + $0x368] sm:$0xff]
  %v156 = vld [vmem:[%s1 + $0x370] sm:$0xff]
  %v157 = vld [vmem:[%s1 + $0x378] sm:$0xff]
  %v158 = vld [vmem:[%s1 + $0x380] sm:$0xff]
  %v159 = vld [vmem:[%s1 + $0x388] sm:$0xff]
  %v160 = vld [vmem:[%s1 + $0x390] sm:$0xff]
  %v161 = vld [vmem:[%s1 + $0x398] sm:$0xff]
  %v162 = vld [vmem:[%s1 + $0x3a0] sm:$0xff]
  %v163 = vld [vmem:[%s1 + $0x3a8] sm:$0xff]
  %v164 = vld [vmem:[%s1 + $0x3b0] sm:$0xff]
  %v165 = vld [vmem:[%s1 + $0x3b8] sm:$0xff]
  %v166 = vld [vmem:[%s1 + $0x3c0] sm:$0xff]
  %v167 = vld [vmem:[%s1 + $0x3c8] sm:$0xff]
  %v168 = vld [vmem:[%s1 + $0x3d0] sm:$0xff]
  %v169 = vld [vmem:[%s1 + $0x3d8] sm:$0xff]
  %v170 = vld [vmem:[%s1 + $0x3e0] sm:$0xff]
  %v171 = vld [vmem:[%s1 + $0x3e8] sm:$0xff]
  %v172 = vld [vmem:[%s1 + $0x3f0] sm:$0xff]
  %v173 = vld [vmem:[%s1 + $0x3f8] sm:$0xff]
  %v174 = vld [vmem:[%s1 + $0x400] sm:$0xff]
  %v175 = vld [vmem:[%s1 + $0x408] sm:$0xff]
  %v176 = vld [vmem:[%s1 + $0x410] sm:$0xff]
  %v177 = vld [vmem:[%s1 + $0x418] sm:$0xff]
  %v178 = vld [vmem:[%s1 + $0x420] sm:$0xff]
  %v179 = vld [vmem:[%s1 + $0x428] sm:$0xff]
  %v180 = vld [vmem:[%s1 + $0x430] sm:$0xff]
  %v181 = vld [vmem:[%s1 + $0x438] sm:$0xff]
  %v182 = vld [vmem:[%s1 + $0x440] sm:$0xff]
  %v183 = vld [vmem:[%s1 + $0x448] sm:$0xff]
  %v184 = vld [vmem:[%s1 + $0x450] sm:$0xff]
  %v185 = vld [vmem:[%s1 + $0x458] sm:$0xff]
  %v186 = vld [vmem:[%s1 + $0x460] sm:$0xff]
  %v187 = vld [vmem:[%s1 + $0x468] sm:$0xff]
  %v188 = vld [vmem:[%s1 + $0x470] sm:$0xff]
  %v189 = vld [vmem:[%s1 + $0x478] sm:$0xff]
  %v190 = vld [vmem:[%s1 + $0x480] sm:$0xff]
  %v191 = vld [vmem:[%s1 + $0x488] sm:$0xff]
  %v192 = vld [vmem:[%s1 + $0x490] sm:$0xff]
  %v193 = vld [vmem:[%s1 + $0x498] sm:$0xff]
  %v194 = vld [vmem:[%s1 + $0x4a0] sm:$0xff]
  %v195 = vld [vmem:[%s1 + $0x4a8] sm:$0xff]
  %v196 = vld [vmem:[%s1 + $0x4b0] sm:$0xff]
  %v197 = vld [vmem:[%s1 + $0x4b8] sm:$0xff]
  %v198 = vld [vmem:[%s1 + $0x4c0] sm:$0xff]
  %v199 = vld [vmem:[%s1 + $0x4c8] sm:$0xff]
  %v200 = vld [vmem:[%s1 + $0x4d0] sm:$0xff]
  %v201 = vld [vmem:[%s1 + $0x4d8] sm:$0xff]
  %v202 = vld [vmem:[%s1 + $0x4e0] sm:$0xff]
  %v203 = vld [vmem:[%s1 + $0x4e8] sm:$0xff]
  %v204 = vld [vmem:[%s1 + $0x4f0] sm:$0xff]
  %v205 = vld [vmem:[%s1 + $0x4f8] sm:$0xff]
  %v206 = vld [vmem:[%s1 + $0x500] sm:$0xff]
  %v207 = vld [vmem:[%s1 + $0x508] sm:$0xff]
  %v208 = vld [vmem:[%s1 + $0x510] sm:$0xff]
  %v209 = vld [vmem:[%s1 + $0x518] sm:$0xff]
  %v210 = vld [vmem:[%s1 + $0x520] sm:$0xff]
  %v211 = vld [vmem:[%s1 + $0x528] sm:$0xff]
  %v212 = vld [vmem:[%s1 + $0x530] sm:$0xff]
  %v213 = vld [vmem:[%s1 + $0x538] sm:$0xff]
  %v214 = vld [vmem:[%s1 + $0x540] sm:$0xff]
  %v215 = vld [vmem:[%s1 + $0x548] sm:$0xff]
  %v216 = vld [vmem:[%s1 + $0x550] sm:$0xff]
  %v217 = vld [vmem:[%s1 + $0x558] sm:$0xff]
  %v218 = vld [vmem:[%s1 + $0x560] sm:$0xff]
  %v219 = vld [vmem:[%s1 + $0x568] sm:$0xff]
  %v220 = vld [vmem:[%s1 + $0x570] sm:$0xff]
  %v221 = vld [vmem:[%s1 + $0x578] sm:$0xff]
  %v222 = vld [vmem:[%s1 + $0x580] sm:$0xff]
  %v223 = vld [vmem:[%s1 + $0x588] sm:$0xff]
  %v224 = vld [vmem:[%s1 + $0x590] sm:$0xff]
  %v225 = vld [vmem:[%s1 + $0x598] sm:$0xff]
  %v226 = vld [vmem:[%s1 + $0x5a0] sm:$0xff]
  %v227 = vld [vmem:[%s1 + $0x5a8] sm:$0xff]
  %v228 = vld [vmem:[%s1 + $0x5b0] sm:$0xff]
  %v229 = vld [vmem:[%s1 + $0x5b8] sm:$0xff]
  %v230 = vld [vmem:[%s1 + $0x5c0] sm:$0xff]
  %v231 = vld [vmem:[%s1 + $0x5c8] sm:$0xff]
  %v232 = vld [vmem:[%s1 + $0x5d0] sm:$0xff]
  %v233 = vld [vmem:[%s1 + $0x5d8] sm:$0xff]
  %v234 = vld [vmem:[%s1 + $0x5e0] sm:$0xff]
  %v235 = vld [vmem:[%s1 + $0x5e8] sm:$0xff]
  %v236 = vld [vmem:[%s1 + $0x5f0] sm:$0xff]
  %v237 = vld [vmem:[%s1 + $0x5f8] sm:$0xff]
  %v238 = vld [vmem:[%s1 + $0x600] sm:$0xff]
  %v239 = vld [vmem:[%s1 + $0x608] sm:$0xff]
  %v240 = vld [vmem:[%s1 + $0x610] sm:$0xff]
  %v241 = vld [vmem:[%s1 + $0x618] sm:$0xff]
  %v242 = vld [vmem:[%s1 + $0x620] sm:$0xff]
  %v243 = vld [vmem:[%s1 + $0x628] sm:$0xff]
  %v244 = vld [vmem:[%s1 + $0x630] sm:$0xff]
  %v245 = vld [vmem:[%s1 + $0x638] sm:$0xff]
  %v246 = vld [vmem:[%s1 + $0x640] sm:$0xff]
  %v247 = vld [vmem:[%s1 + $0x648] sm:$0xff]
  %v248 = vld [vmem:[%s1 + $0x650] sm:$0xff]
  %v249 = vld [vmem:[%s1 + $0x658] sm:$0xff]
  %v250 = vld [vmem:[%s1 + $0x660] sm:$0xff]
  %v251 = vld [vmem:[%s1 + $0x668] sm:$0xff]
  %v252 = vld [vmem:[%s1 + $0x670] sm:$0xff]
  %v253 = vld [vmem:[%s1 + $0x678] sm:$0xff]
  %v254 = vld [vmem:[%s1 + $0x680] sm:$0xff]
  %v255 = vld [vmem:[%s1 + $0x688] sm:$0xff]
  %v256 = vld [vmem:[%s1 + $0x690] sm:$0xff]
  %v257 = vld [vmem:[%s1 + $0x698] sm:$0xff]
  %v258 = vld [vmem:[%s1 + $0x6a0] sm:$0xff]
  %v259 = vld [vmem:[%s1 + $0x6a8] sm:$0xff]
  %v260 = vld [vmem:[%s1 + $0x6b0] sm:$0xff]
  %v261 = vld [vmem:[%s1 + $0x6b8] sm:$0xff]
  %v262 = vld [vmem:[%s1 + $0x6c0] sm:$0xff]
  %v263 = vld [vmem:[%s1 + $0x6c8] sm:$0xff]
  %v264 = vld [vmem:[%s1 + $0x6d0] sm:$0xff]
  %v265 = vld [vmem:[%s1 + $0x6d8] sm:$0xff]
  %v266 = vld [vmem:[%s1 + $0x6e0] sm:$0xff]
  %v267 = vld [vmem:[%s1 + $0x6e8] sm:$0xff]
  %v268 = vld [vmem:[%s1 + $0x6f0] sm:$0xff]
  %v269 = vld [vmem:[%s1 + $0x6f8] sm:$0xff]
  %v270 = vld [vmem:[%s1 + $0x700] sm:$0xff]
  %v271 = vld [vmem:[%s1 + $0x708] sm:$0xff]
  %v272 = vld [vmem:[%s1 + $0x710] sm:$0xff]
  %v273 = vld [vmem:[%s1 + $0x718] sm:$0xff]
  %v274 = vld [vmem:[%s1 + $0x720] sm:$0xff]
  %v275 = vld [vmem:[%s1 + $0x728] sm:$0xff]
  %v276 = vld [vmem:[%s1 + $0x730] sm:$0xff]
  %v277 = vld [vmem:[%s1 + $0x738] sm:$0xff]
  %v278 = vld [vmem:[%s1 + $0x740] sm:$0xff]
  %v279 = vld [vmem:[%s1 + $0x748] sm:$0xff]
  %v280 = vld [vmem:[%s1 + $0x750] sm:$0xff]
  %v281 = vld [vmem:[%s1 + $0x758] sm:$0xff]
  %v282 = vld [vmem:[%s1 + $0x760] sm:$0xff]
  %v283 = vld [vmem:[%s1 + $0x768] sm:$0xff]
  %v284 = vld [vmem:[%s1 + $0x770] sm:$0xff]
  %v285 = vld [vmem:[%s1 + $0x778] sm:$0xff]
  %v286 = vld [vmem:[%s1 + $0x780] sm:$0xff]
  %v287 = vld [vmem:[%s1 + $0x788] sm:$0xff]
  %v288 = vld [vmem:[%s1 + $0x790] sm:$0xff]
  %v289 = vld [vmem:[%s1 + $0x798] sm:$0xff]
  %v290 = vld [vmem:[%s1 + $0x7a0] sm:$0xff]
  %v291 = vld [vmem:[%s1 + $0x7a8] sm:$0xff]
  %v292 = vld [vmem:[%s1 + $0x7b0] sm:$0xff]
  %v293 = vld [vmem:[%s1 + $0x7b8] sm:$0xff]
  %v294 = vld [vmem:[%s1 + $0x7c0] sm:$0xff]
  %v295 = vld [vmem:[%s1 + $0x7c8] sm:$0xff]
  %v296 = vld [vmem:[%s1 + $0x7d0] sm:$0xff]
  %v297 = vld [vmem:[%s1 + $0x7d8] sm:$0xff]
  %v298 = vld [vmem:[%s1 + $0x7e0] sm:$0xff]
  %v299 = vld [vmem:[%s1 + $0x7e8] sm:$0xff]
  %v300 = vld [vmem:[%s1 + $0x7f0] sm:$0xff]
  %v301 = vld [vmem:[%s1 + $0x7f8] sm:$0xff]
  %v302 = vld [vmem:[%s2] sm:$0xf]
  %v304 = vlaneseq
  %v305 = vshrl.u32 %v304, 7
  %v306 = vsub.s32 0, %v305
  %v307 = vrot.slane %v302, %v306
  %v308 = vlaneseq
  %v309 = vshrl.u32 %v308, 7
  %v310 = vsub.s32 1, %v309
  %v311 = vrot.slane %v302, %v310
  %v312 = vlaneseq
  %v313 = vshrl.u32 %v312, 7
  %v314 = vsub.s32 2, %v313
  %v315 = vrot.slane %v302, %v314
  %v316 = vlaneseq
  %v317 = vshrl.u32 %v316, 7
  %v318 = vsub.s32 3, %v317
  %v319 = vrot.slane %v302, %v318
  %v356 = vunpack.c.l.b16 %v14
  %v357 = vunpack.c.h.b16 %v14
  %v358 = vunpack.c.l.b16 %v15
  %v359 = vunpack.c.h.b16 %v15
  %v360 = vunpack.c.l.b16 %v16
  %v361 = vunpack.c.h.b16 %v16
  %v362 = vunpack.c.l.b16 %v17
  %v363 = vunpack.c.h.b16 %v17
  %v364 = vunpack.c.l.b16 %v18
  %v365 = vunpack.c.h.b16 %v18
  %v366 = vunpack.c.l.b16 %v19
  %v367 = vunpack.c.h.b16 %v19
  %v368 = vunpack.c.l.b16 %v20
  %v369 = vunpack.c.h.b16 %v20
  %v370 = vunpack.c.l.b16 %v21
  %v371 = vunpack.c.h.b16 %v21
  %v372 = vunpack.c.l.b16 %v22
  %v373 = vunpack.c.h.b16 %v22
  %v374 = vunpack.c.l.b16 %v23
  %v375 = vunpack.c.h.b16 %v23
  %v376 = vunpack.c.l.b16 %v24
  %v377 = vunpack.c.h.b16 %v24
  %v378 = vunpack.c.l.b16 %v25
  %v379 = vunpack.c.h.b16 %v25
  %v380 = vunpack.c.l.b16 %v26
  %v381 = vunpack.c.h.b16 %v26
  %v382 = vunpack.c.l.b16 %v27
  %v383 = vunpack.c.h.b16 %v27
  %v384 = vunpack.c.l.b16 %v28
  %v385 = vunpack.c.h.b16 %v28
  %v386 = vunpack.c.l.b16 %v29
  %v387 = vunpack.c.h.b16 %v29
  %v388 = vunpack.c.l.b16 %v30
  %v389 = vunpack.c.h.b16 %v30
  %v390 = vunpack.c.l.b16 %v31
  %v391 = vunpack.c.h.b16 %v31
  %v392 = vunpack.c.l.b16 %v32
  %v393 = vunpack.c.h.b16 %v32
  %v394 = vunpack.c.l.b16 %v33
  %v395 = vunpack.c.h.b16 %v33
  %v396 = vunpack.c.l.b16 %v34
  %v397 = vunpack.c.h.b16 %v34
  %v398 = vunpack.c.l.b16 %v35
  %v399 = vunpack.c.h.b16 %v35
  %v400 = vunpack.c.l.b16 %v36
  %v401 = vunpack.c.h.b16 %v36
  %v402 = vunpack.c.l.b16 %v37
  %v403 = vunpack.c.h.b16 %v37
  %v404 = vunpack.c.l.b16 %v38
  %v405 = vunpack.c.h.b16 %v38
  %v406 = vunpack.c.l.b16 %v39
  %v407 = vunpack.c.h.b16 %v39
  %v408 = vunpack.c.l.b16 %v40
  %v409 = vunpack.c.h.b16 %v40
  %v410 = vunpack.c.l.b16 %v41
  %v411 = vunpack.c.h.b16 %v41
  %v412 = vunpack.c.l.b16 %v42
  %v413 = vunpack.c.h.b16 %v42
  %v414 = vunpack.c.l.b16 %v43
  %v415 = vunpack.c.h.b16 %v43
  %v416 = vunpack.c.l.b16 %v44
  %v417 = vunpack.c.h.b16 %v44
  %v418 = vunpack.c.l.b16 %v45
  %v419 = vunpack.c.h.b16 %v45
  %v420 = vpack.c.b16 %v364, %v356
  %v421 = vpack.c.b16 %v365, %v357
  %v422 = vpack.c.b16 %v366, %v358
  %v423 = vpack.c.b16 %v367, %v359
  %v424 = vpack.c.b16 %v368, %v360
  %v425 = vpack.c.b16 %v369, %v361
  %v426 = vpack.c.b16 %v370, %v362
  %v427 = vpack.c.b16 %v371, %v363
  %v428 = vpack.c.b16 %v380, %v372
  %v429 = vpack.c.b16 %v381, %v373
  %v430 = vpack.c.b16 %v382, %v374
  %v431 = vpack.c.b16 %v383, %v375
  %v432 = vpack.c.b16 %v384, %v376
  %v433 = vpack.c.b16 %v385, %v377
  %v434 = vpack.c.b16 %v386, %v378
  %v435 = vpack.c.b16 %v387, %v379
  %v436 = vpack.c.b16 %v396, %v388
  %v437 = vpack.c.b16 %v397, %v389
  %v438 = vpack.c.b16 %v398, %v390
  %v439 = vpack.c.b16 %v399, %v391
  %v440 = vpack.c.b16 %v400, %v392
  %v441 = vpack.c.b16 %v401, %v393
  %v442 = vpack.c.b16 %v402, %v394
  %v443 = vpack.c.b16 %v403, %v395
  %v444 = vpack.c.b16 %v412, %v404
  %v445 = vpack.c.b16 %v413, %v405
  %v446 = vpack.c.b16 %v414, %v406
  %v447 = vpack.c.b16 %v415, %v407
  %v448 = vpack.c.b16 %v416, %v408
  %v449 = vpack.c.b16 %v417, %v409
  %v450 = vpack.c.b16 %v418, %v410
  %v451 = vpack.c.b16 %v419, %v411
  %v740 = vunpack.c.l.b16 %v46
  %v741 = vunpack.c.h.b16 %v46
  %v742 = vunpack.c.l.b16 %v47
  %v743 = vunpack.c.h.b16 %v47
  %v744 = vunpack.c.l.b16 %v48
  %v745 = vunpack.c.h.b16 %v48
  %v746 = vunpack.c.l.b16 %v49
  %v747 = vunpack.c.h.b16 %v49
  %v748 = vunpack.c.l.b16 %v50
  %v749 = vunpack.c.h.b16 %v50
  %v750 = vunpack.c.l.b16 %v51
  %v751 = vunpack.c.h.b16 %v51
  %v752 = vunpack.c.l.b16 %v52
  %v753 = vunpack.c.h.b16 %v52
  %v754 = vunpack.c.l.b16 %v53
  %v755 = vunpack.c.h.b16 %v53
  %v756 = vunpack.c.l.b16 %v54
  %v757 = vunpack.c.h.b16 %v54
  %v758 = vunpack.c.l.b16 %v55
  %v759 = vunpack.c.h.b16 %v55
  %v760 = vunpack.c.l.b16 %v56
  %v761 = vunpack.c.h.b16 %v56
  %v762 = vunpack.c.l.b16 %v57
  %v763 = vunpack.c.h.b16 %v57
  %v764 = vunpack.c.l.b16 %v58
  %v765 = vunpack.c.h.b16 %v58
  %v766 = vunpack.c.l.b16 %v59
  %v767 = vunpack.c.h.b16 %v59
  %v768 = vunpack.c.l.b16 %v60
  %v769 = vunpack.c.h.b16 %v60
  %v770 = vunpack.c.l.b16 %v61
  %v771 = vunpack.c.h.b16 %v61
  %v772 = vunpack.c.l.b16 %v62
  %v773 = vunpack.c.h.b16 %v62
  %v774 = vunpack.c.l.b16 %v63
  %v775 = vunpack.c.h.b16 %v63
  %v776 = vunpack.c.l.b16 %v64
  %v777 = vunpack.c.h.b16 %v64
  %v778 = vunpack.c.l.b16 %v65
  %v779 = vunpack.c.h.b16 %v65
  %v780 = vunpack.c.l.b16 %v66
  %v781 = vunpack.c.h.b16 %v66
  %v782 = vunpack.c.l.b16 %v67
  %v783 = vunpack.c.h.b16 %v67
  %v784 = vunpack.c.l.b16 %v68
  %v785 = vunpack.c.h.b16 %v68
  %v786 = vunpack.c.l.b16 %v69
  %v787 = vunpack.c.h.b16 %v69
  %v788 = vunpack.c.l.b16 %v70
  %v789 = vunpack.c.h.b16 %v70
  %v790 = vunpack.c.l.b16 %v71
  %v791 = vunpack.c.h.b16 %v71
  %v792 = vunpack.c.l.b16 %v72
  %v793 = vunpack.c.h.b16 %v72
  %v794 = vunpack.c.l.b16 %v73
  %v795 = vunpack.c.h.b16 %v73
  %v796 = vunpack.c.l.b16 %v74
  %v797 = vunpack.c.h.b16 %v74
  %v798 = vunpack.c.l.b16 %v75
  %v799 = vunpack.c.h.b16 %v75
  %v800 = vunpack.c.l.b16 %v76
  %v801 = vunpack.c.h.b16 %v76
  %v802 = vunpack.c.l.b16 %v77
  %v803 = vunpack.c.h.b16 %v77
  %v804 = vunpack.c.l.b16 %v78
  %v805 = vunpack.c.h.b16 %v78
  %v806 = vunpack.c.l.b16 %v79
  %v807 = vunpack.c.h.b16 %v79
  %v808 = vunpack.c.l.b16 %v80
  %v809 = vunpack.c.h.b16 %v80
  %v810 = vunpack.c.l.b16 %v81
  %v811 = vunpack.c.h.b16 %v81
  %v812 = vunpack.c.l.b16 %v82
  %v813 = vunpack.c.h.b16 %v82
  %v814 = vunpack.c.l.b16 %v83
  %v815 = vunpack.c.h.b16 %v83
  %v816 = vunpack.c.l.b16 %v84
  %v817 = vunpack.c.h.b16 %v84
  %v818 = vunpack.c.l.b16 %v85
  %v819 = vunpack.c.h.b16 %v85
  %v820 = vunpack.c.l.b16 %v86
  %v821 = vunpack.c.h.b16 %v86
  %v822 = vunpack.c.l.b16 %v87
  %v823 = vunpack.c.h.b16 %v87
  %v824 = vunpack.c.l.b16 %v88
  %v825 = vunpack.c.h.b16 %v88
  %v826 = vunpack.c.l.b16 %v89
  %v827 = vunpack.c.h.b16 %v89
  %v828 = vunpack.c.l.b16 %v90
  %v829 = vunpack.c.h.b16 %v90
  %v830 = vunpack.c.l.b16 %v91
  %v831 = vunpack.c.h.b16 %v91
  %v832 = vunpack.c.l.b16 %v92
  %v833 = vunpack.c.h.b16 %v92
  %v834 = vunpack.c.l.b16 %v93
  %v835 = vunpack.c.h.b16 %v93
  %v836 = vunpack.c.l.b16 %v94
  %v837 = vunpack.c.h.b16 %v94
  %v838 = vunpack.c.l.b16 %v95
  %v839 = vunpack.c.h.b16 %v95
  %v840 = vunpack.c.l.b16 %v96
  %v841 = vunpack.c.h.b16 %v96
  %v842 = vunpack.c.l.b16 %v97
  %v843 = vunpack.c.h.b16 %v97
  %v844 = vunpack.c.l.b16 %v98
  %v845 = vunpack.c.h.b16 %v98
  %v846 = vunpack.c.l.b16 %v99
  %v847 = vunpack.c.h.b16 %v99
  %v848 = vunpack.c.l.b16 %v100
  %v849 = vunpack.c.h.b16 %v100
  %v850 = vunpack.c.l.b16 %v101
  %v851 = vunpack.c.h.b16 %v101
  %v852 = vunpack.c.l.b16 %v102
  %v853 = vunpack.c.h.b16 %v102
  %v854 = vunpack.c.l.b16 %v103
  %v855 = vunpack.c.h.b16 %v103
  %v856 = vunpack.c.l.b16 %v104
  %v857 = vunpack.c.h.b16 %v104
  %v858 = vunpack.c.l.b16 %v105
  %v859 = vunpack.c.h.b16 %v105
  %v860 = vunpack.c.l.b16 %v106
  %v861 = vunpack.c.h.b16 %v106
  %v862 = vunpack.c.l.b16 %v107
  %v863 = vunpack.c.h.b16 %v107
  %v864 = vunpack.c.l.b16 %v108
  %v865 = vunpack.c.h.b16 %v108
  %v866 = vunpack.c.l.b16 %v109
  %v867 = vunpack.c.h.b16 %v109
  %v868 = vunpack.c.l.b16 %v110
  %v869 = vunpack.c.h.b16 %v110
  %v870 = vunpack.c.l.b16 %v111
  %v871 = vunpack.c.h.b16 %v111
  %v872 = vunpack.c.l.b16 %v112
  %v873 = vunpack.c.h.b16 %v112
  %v874 = vunpack.c.l.b16 %v113
  %v875 = vunpack.c.h.b16 %v113
  %v876 = vunpack.c.l.b16 %v114
  %v877 = vunpack.c.h.b16 %v114
  %v878 = vunpack.c.l.b16 %v115
  %v879 = vunpack.c.h.b16 %v115
  %v880 = vunpack.c.l.b16 %v116
  %v881 = vunpack.c.h.b16 %v116
  %v882 = vunpack.c.l.b16 %v117
  %v883 = vunpack.c.h.b16 %v117
  %v884 = vunpack.c.l.b16 %v118
  %v885 = vunpack.c.h.b16 %v118
  %v886 = vunpack.c.l.b16 %v119
  %v887 = vunpack.c.h.b16 %v119
  %v888 = vunpack.c.l.b16 %v120
  %v889 = vunpack.c.h.b16 %v120
  %v890 = vunpack.c.l.b16 %v121
  %v891 = vunpack.c.h.b16 %v121
  %v892 = vunpack.c.l.b16 %v122
  %v893 = vunpack.c.h.b16 %v122
  %v894 = vunpack.c.l.b16 %v123
  %v895 = vunpack.c.h.b16 %v123
  %v896 = vunpack.c.l.b16 %v124
  %v897 = vunpack.c.h.b16 %v124
  %v898 = vunpack.c.l.b16 %v125
  %v899 = vunpack.c.h.b16 %v125
  %v900 = vunpack.c.l.b16 %v126
  %v901 = vunpack.c.h.b16 %v126
  %v902 = vunpack.c.l.b16 %v127
  %v903 = vunpack.c.h.b16 %v127
  %v904 = vunpack.c.l.b16 %v128
  %v905 = vunpack.c.h.b16 %v128
  %v906 = vunpack.c.l.b16 %v129
  %v907 = vunpack.c.h.b16 %v129
  %v908 = vunpack.c.l.b16 %v130
  %v909 = vunpack.c.h.b16 %v130
  %v910 = vunpack.c.l.b16 %v131
  %v911 = vunpack.c.h.b16 %v131
  %v912 = vunpack.c.l.b16 %v132
  %v913 = vunpack.c.h.b16 %v132
  %v914 = vunpack.c.l.b16 %v133
  %v915 = vunpack.c.h.b16 %v133
  %v916 = vunpack.c.l.b16 %v134
  %v917 = vunpack.c.h.b16 %v134
  %v918 = vunpack.c.l.b16 %v135
  %v919 = vunpack.c.h.b16 %v135
  %v920 = vunpack.c.l.b16 %v136
  %v921 = vunpack.c.h.b16 %v136
  %v922 = vunpack.c.l.b16 %v137
  %v923 = vunpack.c.h.b16 %v137
  %v924 = vunpack.c.l.b16 %v138
  %v925 = vunpack.c.h.b16 %v138
  %v926 = vunpack.c.l.b16 %v139
  %v927 = vunpack.c.h.b16 %v139
  %v928 = vunpack.c.l.b16 %v140
  %v929 = vunpack.c.h.b16 %v140
  %v930 = vunpack.c.l.b16 %v141
  %v931 = vunpack.c.h.b16 %v141
  %v932 = vunpack.c.l.b16 %v142
  %v933 = vunpack.c.h.b16 %v142
  %v934 = vunpack.c.l.b16 %v143
  %v935 = vunpack.c.h.b16 %v143
  %v936 = vunpack.c.l.b16 %v144
  %v937 = vunpack.c.h.b16 %v144
  %v938 = vunpack.c.l.b16 %v145
  %v939 = vunpack.c.h.b16 %v145
  %v940 = vunpack.c.l.b16 %v146
  %v941 = vunpack.c.h.b16 %v146
  %v942 = vunpack.c.l.b16 %v147
  %v943 = vunpack.c.h.b16 %v147
  %v944 = vunpack.c.l.b16 %v148
  %v945 = vunpack.c.h.b16 %v148
  %v946 = vunpack.c.l.b16 %v149
  %v947 = vunpack.c.h.b16 %v149
  %v948 = vunpack.c.l.b16 %v150
  %v949 = vunpack.c.h.b16 %v150
  %v950 = vunpack.c.l.b16 %v151
  %v951 = vunpack.c.h.b16 %v151
  %v952 = vunpack.c.l.b16 %v152
  %v953 = vunpack.c.h.b16 %v152
  %v954 = vunpack.c.l.b16 %v153
  %v955 = vunpack.c.h.b16 %v153
  %v956 = vunpack.c.l.b16 %v154
  %v957 = vunpack.c.h.b16 %v154
  %v958 = vunpack.c.l.b16 %v155
  %v959 = vunpack.c.h.b16 %v155
  %v960 = vunpack.c.l.b16 %v156
  %v961 = vunpack.c.h.b16 %v156
  %v962 = vunpack.c.l.b16 %v157
  %v963 = vunpack.c.h.b16 %v157
  %v964 = vunpack.c.l.b16 %v158
  %v965 = vunpack.c.h.b16 %v158
  %v966 = vunpack.c.l.b16 %v159
  %v967 = vunpack.c.h.b16 %v159
  %v968 = vunpack.c.l.b16 %v160
  %v969 = vunpack.c.h.b16 %v160
  %v970 = vunpack.c.l.b16 %v161
  %v971 = vunpack.c.h.b16 %v161
  %v972 = vunpack.c.l.b16 %v162
  %v973 = vunpack.c.h.b16 %v162
  %v974 = vunpack.c.l.b16 %v163
  %v975 = vunpack.c.h.b16 %v163
  %v976 = vunpack.c.l.b16 %v164
  %v977 = vunpack.c.h.b16 %v164
  %v978 = vunpack.c.l.b16 %v165
  %v979 = vunpack.c.h.b16 %v165
  %v980 = vunpack.c.l.b16 %v166
  %v981 = vunpack.c.h.b16 %v166
  %v982 = vunpack.c.l.b16 %v167
  %v983 = vunpack.c.h.b16 %v167
  %v984 = vunpack.c.l.b16 %v168
  %v985 = vunpack.c.h.b16 %v168
  %v986 = vunpack.c.l.b16 %v169
  %v987 = vunpack.c.h.b16 %v169
  %v988 = vunpack.c.l.b16 %v170
  %v989 = vunpack.c.h.b16 %v170
  %v990 = vunpack.c.l.b16 %v171
  %v991 = vunpack.c.h.b16 %v171
  %v992 = vunpack.c.l.b16 %v172
  %v993 = vunpack.c.h.b16 %v172
  %v994 = vunpack.c.l.b16 %v173
  %v995 = vunpack.c.h.b16 %v173
  %v996 = vunpack.c.l.b16 %v174
  %v997 = vunpack.c.h.b16 %v174
  %v998 = vunpack.c.l.b16 %v175
  %v999 = vunpack.c.h.b16 %v175
  %v1000 = vunpack.c.l.b16 %v176
  %v1001 = vunpack.c.h.b16 %v176
  %v1002 = vunpack.c.l.b16 %v177
  %v1003 = vunpack.c.h.b16 %v177
  %v1004 = vunpack.c.l.b16 %v178
  %v1005 = vunpack.c.h.b16 %v178
  %v1006 = vunpack.c.l.b16 %v179
  %v1007 = vunpack.c.h.b16 %v179
  %v1008 = vunpack.c.l.b16 %v180
  %v1009 = vunpack.c.h.b16 %v180
  %v1010 = vunpack.c.l.b16 %v181
  %v1011 = vunpack.c.h.b16 %v181
  %v1012 = vunpack.c.l.b16 %v182
  %v1013 = vunpack.c.h.b16 %v182
  %v1014 = vunpack.c.l.b16 %v183
  %v1015 = vunpack.c.h.b16 %v183
  %v1016 = vunpack.c.l.b16 %v184
  %v1017 = vunpack.c.h.b16 %v184
  %v1018 = vunpack.c.l.b16 %v185
  %v1019 = vunpack.c.h.b16 %v185
  %v1020 = vunpack.c.l.b16 %v186
  %v1021 = vunpack.c.h.b16 %v186
  %v1022 = vunpack.c.l.b16 %v187
  %v1023 = vunpack.c.h.b16 %v187
  %v1024 = vunpack.c.l.b16 %v188
  %v1025 = vunpack.c.h.b16 %v188
  %v1026 = vunpack.c.l.b16 %v189
  %v1027 = vunpack.c.h.b16 %v189
  %v1028 = vunpack.c.l.b16 %v190
  %v1029 = vunpack.c.h.b16 %v190
  %v1030 = vunpack.c.l.b16 %v191
  %v1031 = vunpack.c.h.b16 %v191
  %v1032 = vunpack.c.l.b16 %v192
  %v1033 = vunpack.c.h.b16 %v192
  %v1034 = vunpack.c.l.b16 %v193
  %v1035 = vunpack.c.h.b16 %v193
  %v1036 = vunpack.c.l.b16 %v194
  %v1037 = vunpack.c.h.b16 %v194
  %v1038 = vunpack.c.l.b16 %v195
  %v1039 = vunpack.c.h.b16 %v195
  %v1040 = vunpack.c.l.b16 %v196
  %v1041 = vunpack.c.h.b16 %v196
  %v1042 = vunpack.c.l.b16 %v197
  %v1043 = vunpack.c.h.b16 %v197
  %v1044 = vunpack.c.l.b16 %v198
  %v1045 = vunpack.c.h.b16 %v198
  %v1046 = vunpack.c.l.b16 %v199
  %v1047 = vunpack.c.h.b16 %v199
  %v1048 = vunpack.c.l.b16 %v200
  %v1049 = vunpack.c.h.b16 %v200
  %v1050 = vunpack.c.l.b16 %v201
  %v1051 = vunpack.c.h.b16 %v201
  %v1052 = vunpack.c.l.b16 %v202
  %v1053 = vunpack.c.h.b16 %v202
  %v1054 = vunpack.c.l.b16 %v203
  %v1055 = vunpack.c.h.b16 %v203
  %v1056 = vunpack.c.l.b16 %v204
  %v1057 = vunpack.c.h.b16 %v204
  %v1058 = vunpack.c.l.b16 %v205
  %v1059 = vunpack.c.h.b16 %v205
  %v1060 = vunpack.c.l.b16 %v206
  %v1061 = vunpack.c.h.b16 %v206
  %v1062 = vunpack.c.l.b16 %v207
  %v1063 = vunpack.c.h.b16 %v207
  %v1064 = vunpack.c.l.b16 %v208
  %v1065 = vunpack.c.h.b16 %v208
  %v1066 = vunpack.c.l.b16 %v209
  %v1067 = vunpack.c.h.b16 %v209
  %v1068 = vunpack.c.l.b16 %v210
  %v1069 = vunpack.c.h.b16 %v210
  %v1070 = vunpack.c.l.b16 %v211
  %v1071 = vunpack.c.h.b16 %v211
  %v1072 = vunpack.c.l.b16 %v212
  %v1073 = vunpack.c.h.b16 %v212
  %v1074 = vunpack.c.l.b16 %v213
  %v1075 = vunpack.c.h.b16 %v213
  %v1076 = vunpack.c.l.b16 %v214
  %v1077 = vunpack.c.h.b16 %v214
  %v1078 = vunpack.c.l.b16 %v215
  %v1079 = vunpack.c.h.b16 %v215
  %v1080 = vunpack.c.l.b16 %v216
  %v1081 = vunpack.c.h.b16 %v216
  %v1082 = vunpack.c.l.b16 %v217
  %v1083 = vunpack.c.h.b16 %v217
  %v1084 = vunpack.c.l.b16 %v218
  %v1085 = vunpack.c.h.b16 %v218
  %v1086 = vunpack.c.l.b16 %v219
  %v1087 = vunpack.c.h.b16 %v219
  %v1088 = vunpack.c.l.b16 %v220
  %v1089 = vunpack.c.h.b16 %v220
  %v1090 = vunpack.c.l.b16 %v221
  %v1091 = vunpack.c.h.b16 %v221
  %v1092 = vunpack.c.l.b16 %v222
  %v1093 = vunpack.c.h.b16 %v222
  %v1094 = vunpack.c.l.b16 %v223
  %v1095 = vunpack.c.h.b16 %v223
  %v1096 = vunpack.c.l.b16 %v224
  %v1097 = vunpack.c.h.b16 %v224
  %v1098 = vunpack.c.l.b16 %v225
  %v1099 = vunpack.c.h.b16 %v225
  %v1100 = vunpack.c.l.b16 %v226
  %v1101 = vunpack.c.h.b16 %v226
  %v1102 = vunpack.c.l.b16 %v227
  %v1103 = vunpack.c.h.b16 %v227
  %v1104 = vunpack.c.l.b16 %v228
  %v1105 = vunpack.c.h.b16 %v228
  %v1106 = vunpack.c.l.b16 %v229
  %v1107 = vunpack.c.h.b16 %v229
  %v1108 = vunpack.c.l.b16 %v230
  %v1109 = vunpack.c.h.b16 %v230
  %v1110 = vunpack.c.l.b16 %v231
  %v1111 = vunpack.c.h.b16 %v231
  %v1112 = vunpack.c.l.b16 %v232
  %v1113 = vunpack.c.h.b16 %v232
  %v1114 = vunpack.c.l.b16 %v233
  %v1115 = vunpack.c.h.b16 %v233
  %v1116 = vunpack.c.l.b16 %v234
  %v1117 = vunpack.c.h.b16 %v234
  %v1118 = vunpack.c.l.b16 %v235
  %v1119 = vunpack.c.h.b16 %v235
  %v1120 = vunpack.c.l.b16 %v236
  %v1121 = vunpack.c.h.b16 %v236
  %v1122 = vunpack.c.l.b16 %v237
  %v1123 = vunpack.c.h.b16 %v237
  %v1124 = vunpack.c.l.b16 %v238
  %v1125 = vunpack.c.h.b16 %v238
  %v1126 = vunpack.c.l.b16 %v239
  %v1127 = vunpack.c.h.b16 %v239
  %v1128 = vunpack.c.l.b16 %v240
  %v1129 = vunpack.c.h.b16 %v240
  %v1130 = vunpack.c.l.b16 %v241
  %v1131 = vunpack.c.h.b16 %v241
  %v1132 = vunpack.c.l.b16 %v242
  %v1133 = vunpack.c.h.b16 %v242
  %v1134 = vunpack.c.l.b16 %v243
  %v1135 = vunpack.c.h.b16 %v243
  %v1136 = vunpack.c.l.b16 %v244
  %v1137 = vunpack.c.h.b16 %v244
  %v1138 = vunpack.c.l.b16 %v245
  %v1139 = vunpack.c.h.b16 %v245
  %v1140 = vunpack.c.l.b16 %v246
  %v1141 = vunpack.c.h.b16 %v246
  %v1142 = vunpack.c.l.b16 %v247
  %v1143 = vunpack.c.h.b16 %v247
  %v1144 = vunpack.c.l.b16 %v248
  %v1145 = vunpack.c.h.b16 %v248
  %v1146 = vunpack.c.l.b16 %v249
  %v1147 = vunpack.c.h.b16 %v249
  %v1148 = vunpack.c.l.b16 %v250
  %v1149 = vunpack.c.h.b16 %v250
  %v1150 = vunpack.c.l.b16 %v251
  %v1151 = vunpack.c.h.b16 %v251
  %v1152 = vunpack.c.l.b16 %v252
  %v1153 = vunpack.c.h.b16 %v252
  %v1154 = vunpack.c.l.b16 %v253
  %v1155 = vunpack.c.h.b16 %v253
  %v1156 = vunpack.c.l.b16 %v254
  %v1157 = vunpack.c.h.b16 %v254
  %v1158 = vunpack.c.l.b16 %v255
  %v1159 = vunpack.c.h.b16 %v255
  %v1160 = vunpack.c.l.b16 %v256
  %v1161 = vunpack.c.h.b16 %v256
  %v1162 = vunpack.c.l.b16 %v257
  %v1163 = vunpack.c.h.b16 %v257
  %v1164 = vunpack.c.l.b16 %v258
  %v1165 = vunpack.c.h.b16 %v258
  %v1166 = vunpack.c.l.b16 %v259
  %v1167 = vunpack.c.h.b16 %v259
  %v1168 = vunpack.c.l.b16 %v260
  %v1169 = vunpack.c.h.b16 %v260
  %v1170 = vunpack.c.l.b16 %v261
  %v1171 = vunpack.c.h.b16 %v261
  %v1172 = vunpack.c.l.b16 %v262
  %v1173 = vunpack.c.h.b16 %v262
  %v1174 = vunpack.c.l.b16 %v263
  %v1175 = vunpack.c.h.b16 %v263
  %v1176 = vunpack.c.l.b16 %v264
  %v1177 = vunpack.c.h.b16 %v264
  %v1178 = vunpack.c.l.b16 %v265
  %v1179 = vunpack.c.h.b16 %v265
  %v1180 = vunpack.c.l.b16 %v266
  %v1181 = vunpack.c.h.b16 %v266
  %v1182 = vunpack.c.l.b16 %v267
  %v1183 = vunpack.c.h.b16 %v267
  %v1184 = vunpack.c.l.b16 %v268
  %v1185 = vunpack.c.h.b16 %v268
  %v1186 = vunpack.c.l.b16 %v269
  %v1187 = vunpack.c.h.b16 %v269
  %v1188 = vunpack.c.l.b16 %v270
  %v1189 = vunpack.c.h.b16 %v270
  %v1190 = vunpack.c.l.b16 %v271
  %v1191 = vunpack.c.h.b16 %v271
  %v1192 = vunpack.c.l.b16 %v272
  %v1193 = vunpack.c.h.b16 %v272
  %v1194 = vunpack.c.l.b16 %v273
  %v1195 = vunpack.c.h.b16 %v273
  %v1196 = vunpack.c.l.b16 %v274
  %v1197 = vunpack.c.h.b16 %v274
  %v1198 = vunpack.c.l.b16 %v275
  %v1199 = vunpack.c.h.b16 %v275
  %v1200 = vunpack.c.l.b16 %v276
  %v1201 = vunpack.c.h.b16 %v276
  %v1202 = vunpack.c.l.b16 %v277
  %v1203 = vunpack.c.h.b16 %v277
  %v1204 = vunpack.c.l.b16 %v278
  %v1205 = vunpack.c.h.b16 %v278
  %v1206 = vunpack.c.l.b16 %v279
  %v1207 = vunpack.c.h.b16 %v279
  %v1208 = vunpack.c.l.b16 %v280
  %v1209 = vunpack.c.h.b16 %v280
  %v1210 = vunpack.c.l.b16 %v281
  %v1211 = vunpack.c.h.b16 %v281
  %v1212 = vunpack.c.l.b16 %v282
  %v1213 = vunpack.c.h.b16 %v282
  %v1214 = vunpack.c.l.b16 %v283
  %v1215 = vunpack.c.h.b16 %v283
  %v1216 = vunpack.c.l.b16 %v284
  %v1217 = vunpack.c.h.b16 %v284
  %v1218 = vunpack.c.l.b16 %v285
  %v1219 = vunpack.c.h.b16 %v285
  %v1220 = vunpack.c.l.b16 %v286
  %v1221 = vunpack.c.h.b16 %v286
  %v1222 = vunpack.c.l.b16 %v287
  %v1223 = vunpack.c.h.b16 %v287
  %v1224 = vunpack.c.l.b16 %v288
  %v1225 = vunpack.c.h.b16 %v288
  %v1226 = vunpack.c.l.b16 %v289
  %v1227 = vunpack.c.h.b16 %v289
  %v1228 = vunpack.c.l.b16 %v290
  %v1229 = vunpack.c.h.b16 %v290
  %v1230 = vunpack.c.l.b16 %v291
  %v1231 = vunpack.c.h.b16 %v291
  %v1232 = vunpack.c.l.b16 %v292
  %v1233 = vunpack.c.h.b16 %v292
  %v1234 = vunpack.c.l.b16 %v293
  %v1235 = vunpack.c.h.b16 %v293
  %v1236 = vunpack.c.l.b16 %v294
  %v1237 = vunpack.c.h.b16 %v294
  %v1238 = vunpack.c.l.b16 %v295
  %v1239 = vunpack.c.h.b16 %v295
  %v1240 = vunpack.c.l.b16 %v296
  %v1241 = vunpack.c.h.b16 %v296
  %v1242 = vunpack.c.l.b16 %v297
  %v1243 = vunpack.c.h.b16 %v297
  %v1244 = vunpack.c.l.b16 %v298
  %v1245 = vunpack.c.h.b16 %v298
  %v1246 = vunpack.c.l.b16 %v299
  %v1247 = vunpack.c.h.b16 %v299
  %v1248 = vunpack.c.l.b16 %v300
  %v1249 = vunpack.c.h.b16 %v300
  %v1250 = vunpack.c.l.b16 %v301
  %v1251 = vunpack.c.h.b16 %v301
  %v1252 = vpack.c.b16 %v744, %v740
  %v1253 = vpack.c.b16 %v745, %v741
  %v1254 = vpack.c.b16 %v746, %v742
  %v1255 = vpack.c.b16 %v747, %v743
  %v1256 = vpack.c.b16 %v752, %v748
  %v1257 = vpack.c.b16 %v753, %v749
  %v1258 = vpack.c.b16 %v754, %v750
  %v1259 = vpack.c.b16 %v755, %v751
  %v1260 = vpack.c.b16 %v760, %v756
  %v1261 = vpack.c.b16 %v761, %v757
  %v1262 = vpack.c.b16 %v762, %v758
  %v1263 = vpack.c.b16 %v763, %v759
  %v1264 = vpack.c.b16 %v768, %v764
  %v1265 = vpack.c.b16 %v769, %v765
  %v1266 = vpack.c.b16 %v770, %v766
  %v1267 = vpack.c.b16 %v771, %v767
  %v1268 = vpack.c.b16 %v776, %v772
  %v1269 = vpack.c.b16 %v777, %v773
  %v1270 = vpack.c.b16 %v778, %v774
  %v1271 = vpack.c.b16 %v779, %v775
  %v1272 = vpack.c.b16 %v784, %v780
  %v1273 = vpack.c.b16 %v785, %v781
  %v1274 = vpack.c.b16 %v786, %v782
  %v1275 = vpack.c.b16 %v787, %v783
  %v1276 = vpack.c.b16 %v792, %v788
  %v1277 = vpack.c.b16 %v793, %v789
  %v1278 = vpack.c.b16 %v794, %v790
  %v1279 = vpack.c.b16 %v795, %v791
  %v1280 = vpack.c.b16 %v800, %v796
  %v1281 = vpack.c.b16 %v801, %v797
  %v1282 = vpack.c.b16 %v802, %v798
  %v1283 = vpack.c.b16 %v803, %v799
  %v1284 = vpack.c.b16 %v808, %v804
  %v1285 = vpack.c.b16 %v809, %v805
  %v1286 = vpack.c.b16 %v810, %v806
  %v1287 = vpack.c.b16 %v811, %v807
  %v1288 = vpack.c.b16 %v816, %v812
  %v1289 = vpack.c.b16 %v817, %v813
  %v1290 = vpack.c.b16 %v818, %v814
  %v1291 = vpack.c.b16 %v819, %v815
  %v1292 = vpack.c.b16 %v824, %v820
  %v1293 = vpack.c.b16 %v825, %v821
  %v1294 = vpack.c.b16 %v826, %v822
  %v1295 = vpack.c.b16 %v827, %v823
  %v1296 = vpack.c.b16 %v832, %v828
  %v1297 = vpack.c.b16 %v833, %v829
  %v1298 = vpack.c.b16 %v834, %v830
  %v1299 = vpack.c.b16 %v835, %v831
  %v1300 = vpack.c.b16 %v840, %v836
  %v1301 = vpack.c.b16 %v841, %v837
  %v1302 = vpack.c.b16 %v842, %v838
  %v1303 = vpack.c.b16 %v843, %v839
  %v1304 = vpack.c.b16 %v848, %v844
  %v1305 = vpack.c.b16 %v849, %v845
  %v1306 = vpack.c.b16 %v850, %v846
  %v1307 = vpack.c.b16 %v851, %v847
  %v1308 = vpack.c.b16 %v856, %v852
  %v1309 = vpack.c.b16 %v857, %v853
  %v1310 = vpack.c.b16 %v858, %v854
  %v1311 = vpack.c.b16 %v859, %v855
  %v1312 = vpack.c.b16 %v864, %v860
  %v1313 = vpack.c.b16 %v865, %v861
  %v1314 = vpack.c.b16 %v866, %v862
  %v1315 = vpack.c.b16 %v867, %v863
  %v1316 = vpack.c.b16 %v872, %v868
  %v1317 = vpack.c.b16 %v873, %v869
  %v1318 = vpack.c.b16 %v874, %v870
  %v1319 = vpack.c.b16 %v875, %v871
  %v1320 = vpack.c.b16 %v880, %v876
  %v1321 = vpack.c.b16 %v881, %v877
  %v1322 = vpack.c.b16 %v882, %v878
  %v1323 = vpack.c.b16 %v883, %v879
  %v1324 = vpack.c.b16 %v888, %v884
  %v1325 = vpack.c.b16 %v889, %v885
  %v1326 = vpack.c.b16 %v890, %v886
  %v1327 = vpack.c.b16 %v891, %v887
  %v1328 = vpack.c.b16 %v896, %v892
  %v1329 = vpack.c.b16 %v897, %v893
  %v1330 = vpack.c.b16 %v898, %v894
  %v1331 = vpack.c.b16 %v899, %v895
  %v1332 = vpack.c.b16 %v904, %v900
  %v1333 = vpack.c.b16 %v905, %v901
  %v1334 = vpack.c.b16 %v906, %v902
  %v1335 = vpack.c.b16 %v907, %v903
  %v1336 = vpack.c.b16 %v912, %v908
  %v1337 = vpack.c.b16 %v913, %v909
  %v1338 = vpack.c.b16 %v914, %v910
  %v1339 = vpack.c.b16 %v915, %v911
  %v1340 = vpack.c.b16 %v920, %v916
  %v1341 = vpack.c.b16 %v921, %v917
  %v1342 = vpack.c.b16 %v922, %v918
  %v1343 = vpack.c.b16 %v923, %v919
  %v1344 = vpack.c.b16 %v928, %v924
  %v1345 = vpack.c.b16 %v929, %v925
  %v1346 = vpack.c.b16 %v930, %v926
  %v1347 = vpack.c.b16 %v931, %v927
  %v1348 = vpack.c.b16 %v936, %v932
  %v1349 = vpack.c.b16 %v937, %v933
  %v1350 = vpack.c.b16 %v938, %v934
  %v1351 = vpack.c.b16 %v939, %v935
  %v1352 = vpack.c.b16 %v944, %v940
  %v1353 = vpack.c.b16 %v945, %v941
  %v1354 = vpack.c.b16 %v946, %v942
  %v1355 = vpack.c.b16 %v947, %v943
  %v1356 = vpack.c.b16 %v952, %v948
  %v1357 = vpack.c.b16 %v953, %v949
  %v1358 = vpack.c.b16 %v954, %v950
  %v1359 = vpack.c.b16 %v955, %v951
  %v1360 = vpack.c.b16 %v960, %v956
  %v1361 = vpack.c.b16 %v961, %v957
  %v1362 = vpack.c.b16 %v962, %v958
  %v1363 = vpack.c.b16 %v963, %v959
  %v1364 = vpack.c.b16 %v968, %v964
  %v1365 = vpack.c.b16 %v969, %v965
  %v1366 = vpack.c.b16 %v970, %v966
  %v1367 = vpack.c.b16 %v971, %v967
  %v1368 = vpack.c.b16 %v976, %v972
  %v1369 = vpack.c.b16 %v977, %v973
  %v1370 = vpack.c.b16 %v978, %v974
  %v1371 = vpack.c.b16 %v979, %v975
  %v1372 = vpack.c.b16 %v984, %v980
  %v1373 = vpack.c.b16 %v985, %v981
  %v1374 = vpack.c.b16 %v986, %v982
  %v1375 = vpack.c.b16 %v987, %v983
  %v1376 = vpack.c.b16 %v992, %v988
  %v1377 = vpack.c.b16 %v993, %v989
  %v1378 = vpack.c.b16 %v994, %v990
  %v1379 = vpack.c.b16 %v995, %v991
  %v1380 = vpack.c.b16 %v1000, %v996
  %v1381 = vpack.c.b16 %v1001, %v997
  %v1382 = vpack.c.b16 %v1002, %v998
  %v1383 = vpack.c.b16 %v1003, %v999
  %v1384 = vpack.c.b16 %v1008, %v1004
  %v1385 = vpack.c.b16 %v1009, %v1005
  %v1386 = vpack.c.b16 %v1010, %v1006
  %v1387 = vpack.c.b16 %v1011, %v1007
  %v1388 = vpack.c.b16 %v1016, %v1012
  %v1389 = vpack.c.b16 %v1017, %v1013
  %v1390 = vpack.c.b16 %v1018, %v1014
  %v1391 = vpack.c.b16 %v1019, %v1015
  %v1392 = vpack.c.b16 %v1024, %v1020
  %v1393 = vpack.c.b16 %v1025, %v1021
  %v1394 = vpack.c.b16 %v1026, %v1022
  %v1395 = vpack.c.b16 %v1027, %v1023
  %v1396 = vpack.c.b16 %v1032, %v1028
  %v1397 = vpack.c.b16 %v1033, %v1029
  %v1398 = vpack.c.b16 %v1034, %v1030
  %v1399 = vpack.c.b16 %v1035, %v1031
  %v1400 = vpack.c.b16 %v1040, %v1036
  %v1401 = vpack.c.b16 %v1041, %v1037
  %v1402 = vpack.c.b16 %v1042, %v1038
  %v1403 = vpack.c.b16 %v1043, %v1039
  %v1404 = vpack.c.b16 %v1048, %v1044
  %v1405 = vpack.c.b16 %v1049, %v1045
  %v1406 = vpack.c.b16 %v1050, %v1046
  %v1407 = vpack.c.b16 %v1051, %v1047
  %v1408 = vpack.c.b16 %v1056, %v1052
  %v1409 = vpack.c.b16 %v1057, %v1053
  %v1410 = vpack.c.b16 %v1058, %v1054
  %v1411 = vpack.c.b16 %v1059, %v1055
  %v1412 = vpack.c.b16 %v1064, %v1060
  %v1413 = vpack.c.b16 %v1065, %v1061
  %v1414 = vpack.c.b16 %v1066, %v1062
  %v1415 = vpack.c.b16 %v1067, %v1063
  %v1416 = vpack.c.b16 %v1072, %v1068
  %v1417 = vpack.c.b16 %v1073, %v1069
  %v1418 = vpack.c.b16 %v1074, %v1070
  %v1419 = vpack.c.b16 %v1075, %v1071
  %v1420 = vpack.c.b16 %v1080, %v1076
  %v1421 = vpack.c.b16 %v1081, %v1077
  %v1422 = vpack.c.b16 %v1082, %v1078
  %v1423 = vpack.c.b16 %v1083, %v1079
  %v1424 = vpack.c.b16 %v1088, %v1084
  %v1425 = vpack.c.b16 %v1089, %v1085
  %v1426 = vpack.c.b16 %v1090, %v1086
  %v1427 = vpack.c.b16 %v1091, %v1087
  %v1428 = vpack.c.b16 %v1096, %v1092
  %v1429 = vpack.c.b16 %v1097, %v1093
  %v1430 = vpack.c.b16 %v1098, %v1094
  %v1431 = vpack.c.b16 %v1099, %v1095
  %v1432 = vpack.c.b16 %v1104, %v1100
  %v1433 = vpack.c.b16 %v1105, %v1101
  %v1434 = vpack.c.b16 %v1106, %v1102
  %v1435 = vpack.c.b16 %v1107, %v1103
  %v1436 = vpack.c.b16 %v1112, %v1108
  %v1437 = vpack.c.b16 %v1113, %v1109
  %v1438 = vpack.c.b16 %v1114, %v1110
  %v1439 = vpack.c.b16 %v1115, %v1111
  %v1440 = vpack.c.b16 %v1120, %v1116
  %v1441 = vpack.c.b16 %v1121, %v1117
  %v1442 = vpack.c.b16 %v1122, %v1118
  %v1443 = vpack.c.b16 %v1123, %v1119
  %v1444 = vpack.c.b16 %v1128, %v1124
  %v1445 = vpack.c.b16 %v1129, %v1125
  %v1446 = vpack.c.b16 %v1130, %v1126
  %v1447 = vpack.c.b16 %v1131, %v1127
  %v1448 = vpack.c.b16 %v1136, %v1132
  %v1449 = vpack.c.b16 %v1137, %v1133
  %v1450 = vpack.c.b16 %v1138, %v1134
  %v1451 = vpack.c.b16 %v1139, %v1135
  %v1452 = vpack.c.b16 %v1144, %v1140
  %v1453 = vpack.c.b16 %v1145, %v1141
  %v1454 = vpack.c.b16 %v1146, %v1142
  %v1455 = vpack.c.b16 %v1147, %v1143
  %v1456 = vpack.c.b16 %v1152, %v1148
  %v1457 = vpack.c.b16 %v1153, %v1149
  %v1458 = vpack.c.b16 %v1154, %v1150
  %v1459 = vpack.c.b16 %v1155, %v1151
  %v1460 = vpack.c.b16 %v1160, %v1156
  %v1461 = vpack.c.b16 %v1161, %v1157
  %v1462 = vpack.c.b16 %v1162, %v1158
  %v1463 = vpack.c.b16 %v1163, %v1159
  %v1464 = vpack.c.b16 %v1168, %v1164
  %v1465 = vpack.c.b16 %v1169, %v1165
  %v1466 = vpack.c.b16 %v1170, %v1166
  %v1467 = vpack.c.b16 %v1171, %v1167
  %v1468 = vpack.c.b16 %v1176, %v1172
  %v1469 = vpack.c.b16 %v1177, %v1173
  %v1470 = vpack.c.b16 %v1178, %v1174
  %v1471 = vpack.c.b16 %v1179, %v1175
  %v1472 = vpack.c.b16 %v1184, %v1180
  %v1473 = vpack.c.b16 %v1185, %v1181
  %v1474 = vpack.c.b16 %v1186, %v1182
  %v1475 = vpack.c.b16 %v1187, %v1183
  %v1476 = vpack.c.b16 %v1192, %v1188
  %v1477 = vpack.c.b16 %v1193, %v1189
  %v1478 = vpack.c.b16 %v1194, %v1190
  %v1479 = vpack.c.b16 %v1195, %v1191
  %v1480 = vpack.c.b16 %v1200, %v1196
  %v1481 = vpack.c.b16 %v1201, %v1197
  %v1482 = vpack.c.b16 %v1202, %v1198
  %v1483 = vpack.c.b16 %v1203, %v1199
  %v1484 = vpack.c.b16 %v1208, %v1204
  %v1485 = vpack.c.b16 %v1209, %v1205
  %v1486 = vpack.c.b16 %v1210, %v1206
  %v1487 = vpack.c.b16 %v1211, %v1207
  %v1488 = vpack.c.b16 %v1216, %v1212
  %v1489 = vpack.c.b16 %v1217, %v1213
  %v1490 = vpack.c.b16 %v1218, %v1214
  %v1491 = vpack.c.b16 %v1219, %v1215
  %v1492 = vpack.c.b16 %v1224, %v1220
  %v1493 = vpack.c.b16 %v1225, %v1221
  %v1494 = vpack.c.b16 %v1226, %v1222
  %v1495 = vpack.c.b16 %v1227, %v1223
  %v1496 = vpack.c.b16 %v1232, %v1228
  %v1497 = vpack.c.b16 %v1233, %v1229
  %v1498 = vpack.c.b16 %v1234, %v1230
  %v1499 = vpack.c.b16 %v1235, %v1231
  %v1500 = vpack.c.b16 %v1240, %v1236
  %v1501 = vpack.c.b16 %v1241, %v1237
  %v1502 = vpack.c.b16 %v1242, %v1238
  %v1503 = vpack.c.b16 %v1243, %v1239
  %v1504 = vpack.c.b16 %v1248, %v1244
  %v1505 = vpack.c.b16 %v1249, %v1245
  %v1506 = vpack.c.b16 %v1250, %v1246
  %v1507 = vpack.c.b16 %v1251, %v1247
  %1764 = vmatprep.subr.bf16.mxu0 %v1281
  %1765 = vmatpush1.bf16.msra.mxu0 %v1280
  %1766 = vmatprep.subr.bf16.mxu0 %v1277
  %1767 = vmatpush1.bf16.msra.mxu0 %v1276
  %1768 = vmatprep.subr.bf16.mxu0 %v1273
  %1769 = vmatpush1.bf16.msra.mxu0 %v1272
  %1770 = vmatprep.subr.bf16.mxu0 %v1269
  %1771 = vmatpush1.bf16.msra.mxu0 %v1268
  %1772 = vmatprep.subr.bf16.mxu0 %v1265
  %1773 = vmatpush1.bf16.msra.mxu0 %v1264
  %1774 = vmatprep.subr.bf16.mxu0 %v1261
  %1775 = vmatpush1.bf16.msra.mxu0 %v1260
  %1776 = vmatprep.subr.bf16.mxu0 %v1257
  %1777 = vmatpush1.bf16.msra.mxu0 %v1256
  %1778 = vmatprep.subr.bf16.mxu0 %v1253
  %1779 = vmatpush1.bf16.msra.mxu0 %v1252
  %1780 = vmatprep.subr.bf16.mxu0 %v1313
  %1781 = vmatpush2.bf16.msra.mxu0 %v1312
  %1782 = vmatprep.subr.bf16.mxu0 %v1309
  %1783 = vmatpush2.bf16.msra.mxu0 %v1308
  %1784 = vmatprep.subr.bf16.mxu0 %v1305
  %1785 = vmatpush2.bf16.msra.mxu0 %v1304
  %1786 = vmatprep.subr.bf16.mxu0 %v1301
  %1787 = vmatpush2.bf16.msra.mxu0 %v1300
  %1788 = vmatprep.subr.bf16.mxu0 %v1297
  %1789 = vmatpush2.bf16.msra.mxu0 %v1296
  %1790 = vmatprep.subr.bf16.mxu0 %v1293
  %1791 = vmatpush2.bf16.msra.mxu0 %v1292
  %1792 = vmatprep.subr.bf16.mxu0 %v1289
  %1793 = vmatpush2.bf16.msra.mxu0 %v1288
  %1794 = vmatprep.subr.bf16.mxu0 %v1285
  %1795 = vmatpush2.bf16.msra.mxu0 %v1284
  %1796 = vmatprep.mubr.bf16.mxu0 %v421
  %1797 = vmatmul.mubr.bf16.gmra.mxu0 %v420
  %v1798 = vpop.f32.mrf.mxu0
  %v1799 = vadd.f32 %v307, %v1798
  %v1800 = vpop.f32.mrf.mxu0
  %v1801 = vadd.f32 %v311, %v1800
  %v1802 = vpop.f32.mrf.mxu0
  %v1803 = vadd.f32 %v307, %v1802
  %v1804 = vpop.f32.mrf.mxu0
  %v1805 = vadd.f32 %v311, %v1804
  %1806 = vmatprep.mubr.bf16.mxu0 %v429
  %1807 = vmatmul.mubr.bf16.gmra.mxu0 %v428
  %v1808 = vpop.f32.mrf.mxu0
  %v1809 = vadd.f32 %v307, %v1808
  %v1810 = vpop.f32.mrf.mxu0
  %v1811 = vadd.f32 %v311, %v1810
  %v1812 = vpop.f32.mrf.mxu0
  %v1813 = vadd.f32 %v307, %v1812
  %v1814 = vpop.f32.mrf.mxu0
  %v1815 = vadd.f32 %v311, %v1814
  %1816 = vmatprep.mubr.bf16.mxu0 %v437
  %1817 = vmatmul.mubr.bf16.gmra.mxu0 %v436
  %v1818 = vpop.f32.mrf.mxu0
  %v1819 = vadd.f32 %v307, %v1818
  %v1820 = vpop.f32.mrf.mxu0
  %v1821 = vadd.f32 %v311, %v1820
  %v1822 = vpop.f32.mrf.mxu0
  %v1823 = vadd.f32 %v307, %v1822
  %v1824 = vpop.f32.mrf.mxu0
  %v1825 = vadd.f32 %v311, %v1824
  %1826 = vmatprep.mubr.bf16.mxu0 %v445
  %1827 = vmatmul.mubr.bf16.gmra.mxu0 %v444
  %v1828 = vpop.f32.mrf.mxu0
  %v1829 = vadd.f32 %v307, %v1828
  %v1830 = vpop.f32.mrf.mxu0
  %v1831 = vadd.f32 %v311, %v1830
  %v1832 = vpop.f32.mrf.mxu0
  %v1833 = vadd.f32 %v307, %v1832
  %v1834 = vpop.f32.mrf.mxu0
  %v1835 = vadd.f32 %v311, %v1834
  %1836 = vdwg.mxu0
  %1837 = vmatprep.subr.bf16.mxu0 %v1345
  %1838 = vmatpush1.bf16.msra.mxu0 %v1344
  %1839 = vmatprep.subr.bf16.mxu0 %v1341
  %1840 = vmatpush1.bf16.msra.mxu0 %v1340
  %1841 = vmatprep.subr.bf16.mxu0 %v1337
  %1842 = vmatpush1.bf16.msra.mxu0 %v1336
  %1843 = vmatprep.subr.bf16.mxu0 %v1333
  %1844 = vmatpush1.bf16.msra.mxu0 %v1332
  %1845 = vmatprep.subr.bf16.mxu0 %v1329
  %1846 = vmatpush1.bf16.msra.mxu0 %v1328
  %1847 = vmatprep.subr.bf16.mxu0 %v1325
  %1848 = vmatpush1.bf16.msra.mxu0 %v1324
  %1849 = vmatprep.subr.bf16.mxu0 %v1321
  %1850 = vmatpush1.bf16.msra.mxu0 %v1320
  %1851 = vmatprep.subr.bf16.mxu0 %v1317
  %1852 = vmatpush1.bf16.msra.mxu0 %v1316
  %1853 = vmatprep.subr.bf16.mxu0 %v1377
  %1854 = vmatpush2.bf16.msra.mxu0 %v1376
  %1855 = vmatprep.subr.bf16.mxu0 %v1373
  %1856 = vmatpush2.bf16.msra.mxu0 %v1372
  %1857 = vmatprep.subr.bf16.mxu0 %v1369
  %1858 = vmatpush2.bf16.msra.mxu0 %v1368
  %1859 = vmatprep.subr.bf16.mxu0 %v1365
  %1860 = vmatpush2.bf16.msra.mxu0 %v1364
  %1861 = vmatprep.subr.bf16.mxu0 %v1361
  %1862 = vmatpush2.bf16.msra.mxu0 %v1360
  %1863 = vmatprep.subr.bf16.mxu0 %v1357
  %1864 = vmatpush2.bf16.msra.mxu0 %v1356
  %1865 = vmatprep.subr.bf16.mxu0 %v1353
  %1866 = vmatpush2.bf16.msra.mxu0 %v1352
  %1867 = vmatprep.subr.bf16.mxu0 %v1349
  %1868 = vmatpush2.bf16.msra.mxu0 %v1348
  %1869 = vmatprep.mubr.bf16.mxu0 %v423
  %1870 = vmatmul.mubr.bf16.gmra.mxu0 %v422
  %v1871 = vpop.f32.mrf.mxu0
  %v1872 = vadd.f32 %v1799, %v1871
  %v1873 = vpop.f32.mrf.mxu0
  %v1874 = vadd.f32 %v1801, %v1873
  %v1875 = vpop.f32.mrf.mxu0
  %v1876 = vadd.f32 %v1803, %v1875
  %v1877 = vpop.f32.mrf.mxu0
  %v1878 = vadd.f32 %v1805, %v1877
  %1879 = vmatprep.mubr.bf16.mxu0 %v431
  %1880 = vmatmul.mubr.bf16.gmra.mxu0 %v430
  %v1881 = vpop.f32.mrf.mxu0
  %v1882 = vadd.f32 %v1809, %v1881
  %v1883 = vpop.f32.mrf.mxu0
  %v1884 = vadd.f32 %v1811, %v1883
  %v1885 = vpop.f32.mrf.mxu0
  %v1886 = vadd.f32 %v1813, %v1885
  %v1887 = vpop.f32.mrf.mxu0
  %v1888 = vadd.f32 %v1815, %v1887
  %1889 = vmatprep.mubr.bf16.mxu0 %v439
  %1890 = vmatmul.mubr.bf16.gmra.mxu0 %v438
  %v1891 = vpop.f32.mrf.mxu0
  %v1892 = vadd.f32 %v1819, %v1891
  %v1893 = vpop.f32.mrf.mxu0
  %v1894 = vadd.f32 %v1821, %v1893
  %v1895 = vpop.f32.mrf.mxu0
  %v1896 = vadd.f32 %v1823, %v1895
  %v1897 = vpop.f32.mrf.mxu0
  %v1898 = vadd.f32 %v1825, %v1897
  %1899 = vmatprep.mubr.bf16.mxu0 %v447
  %1900 = vmatmul.mubr.bf16.gmra.mxu0 %v446
  %v1901 = vpop.f32.mrf.mxu0
  %v1902 = vadd.f32 %v1829, %v1901
  %v1903 = vpop.f32.mrf.mxu0
  %v1904 = vadd.f32 %v1831, %v1903
  %v1905 = vpop.f32.mrf.mxu0
  %v1906 = vadd.f32 %v1833, %v1905
  %v1907 = vpop.f32.mrf.mxu0
  %v1908 = vadd.f32 %v1835, %v1907
  %1909 = vdwg.mxu0
  %1910 = vmatprep.subr.bf16.mxu0 %v1409
  %1911 = vmatpush1.bf16.msra.mxu0 %v1408
  %1912 = vmatprep.subr.bf16.mxu0 %v1405
  %1913 = vmatpush1.bf16.msra.mxu0 %v1404
  %1914 = vmatprep.subr.bf16.mxu0 %v1401
  %1915 = vmatpush1.bf16.msra.mxu0 %v1400
  %1916 = vmatprep.subr.bf16.mxu0 %v1397
  %1917 = vmatpush1.bf16.msra.mxu0 %v1396
  %1918 = vmatprep.subr.bf16.mxu0 %v1393
  %1919 = vmatpush1.bf16.msra.mxu0 %v1392
  %1920 = vmatprep.subr.bf16.mxu0 %v1389
  %1921 = vmatpush1.bf16.msra.mxu0 %v1388
  %1922 = vmatprep.subr.bf16.mxu0 %v1385
  %1923 = vmatpush1.bf16.msra.mxu0 %v1384
  %1924 = vmatprep.subr.bf16.mxu0 %v1381
  %1925 = vmatpush1.bf16.msra.mxu0 %v1380
  %1926 = vmatprep.subr.bf16.mxu0 %v1441
  %1927 = vmatpush2.bf16.msra.mxu0 %v1440
  %1928 = vmatprep.subr.bf16.mxu0 %v1437
  %1929 = vmatpush2.bf16.msra.mxu0 %v1436
  %1930 = vmatprep.subr.bf16.mxu0 %v1433
  %1931 = vmatpush2.bf16.msra.mxu0 %v1432
  %1932 = vmatprep.subr.bf16.mxu0 %v1429
  %1933 = vmatpush2.bf16.msra.mxu0 %v1428
  %1934 = vmatprep.subr.bf16.mxu0 %v1425
  %1935 = vmatpush2.bf16.msra.mxu0 %v1424
  %1936 = vmatprep.subr.bf16.mxu0 %v1421
  %1937 = vmatpush2.bf16.msra.mxu0 %v1420
  %1938 = vmatprep.subr.bf16.mxu0 %v1417
  %1939 = vmatpush2.bf16.msra.mxu0 %v1416
  %1940 = vmatprep.subr.bf16.mxu0 %v1413
  %1941 = vmatpush2.bf16.msra.mxu0 %v1412
  %1942 = vmatprep.mubr.bf16.mxu0 %v425
  %1943 = vmatmul.mubr.bf16.gmra.mxu0 %v424
  %v1944 = vpop.f32.mrf.mxu0
  %v1945 = vadd.f32 %v1872, %v1944
  %v1946 = vpop.f32.mrf.mxu0
  %v1947 = vadd.f32 %v1874, %v1946
  %v1948 = vpop.f32.mrf.mxu0
  %v1949 = vadd.f32 %v1876, %v1948
  %v1950 = vpop.f32.mrf.mxu0
  %v1951 = vadd.f32 %v1878, %v1950
  %1952 = vmatprep.mubr.bf16.mxu0 %v433
  %1953 = vmatmul.mubr.bf16.gmra.mxu0 %v432
  %v1954 = vpop.f32.mrf.mxu0
  %v1955 = vadd.f32 %v1882, %v1954
  %v1956 = vpop.f32.mrf.mxu0
  %v1957 = vadd.f32 %v1884, %v1956
  %v1958 = vpop.f32.mrf.mxu0
  %v1959 = vadd.f32 %v1886, %v1958
  %v1960 = vpop.f32.mrf.mxu0
  %v1961 = vadd.f32 %v1888, %v1960
  %1962 = vmatprep.mubr.bf16.mxu0 %v441
  %1963 = vmatmul.mubr.bf16.gmra.mxu0 %v440
  %v1964 = vpop.f32.mrf.mxu0
  %v1965 = vadd.f32 %v1892, %v1964
  %v1966 = vpop.f32.mrf.mxu0
  %v1967 = vadd.f32 %v1894, %v1966
  %v1968 = vpop.f32.mrf.mxu0
  %v1969 = vadd.f32 %v1896, %v1968
  %v1970 = vpop.f32.mrf.mxu0
  %v1971 = vadd.f32 %v1898, %v1970
  %1972 = vmatprep.mubr.bf16.mxu0 %v449
  %1973 = vmatmul.mubr.bf16.gmra.mxu0 %v448
  %v1974 = vpop.f32.mrf.mxu0
  %v1975 = vadd.f32 %v1902, %v1974
  %v1976 = vpop.f32.mrf.mxu0
  %v1977 = vadd.f32 %v1904, %v1976
  %v1978 = vpop.f32.mrf.mxu0
  %v1979 = vadd.f32 %v1906, %v1978
  %v1980 = vpop.f32.mrf.mxu0
  %v1981 = vadd.f32 %v1908, %v1980
  %1982 = vdwg.mxu0
  %1983 = vmatprep.subr.bf16.mxu0 %v1473
  %1984 = vmatpush1.bf16.msra.mxu0 %v1472
  %1985 = vmatprep.subr.bf16.mxu0 %v1469
  %1986 = vmatpush1.bf16.msra.mxu0 %v1468
  %1987 = vmatprep.subr.bf16.mxu0 %v1465
  %1988 = vmatpush1.bf16.msra.mxu0 %v1464
  %1989 = vmatprep.subr.bf16.mxu0 %v1461
  %1990 = vmatpush1.bf16.msra.mxu0 %v1460
  %1991 = vmatprep.subr.bf16.mxu0 %v1457
  %1992 = vmatpush1.bf16.msra.mxu0 %v1456
  %1993 = vmatprep.subr.bf16.mxu0 %v1453
  %1994 = vmatpush1.bf16.msra.mxu0 %v1452
  %1995 = vmatprep.subr.bf16.mxu0 %v1449
  %1996 = vmatpush1.bf16.msra.mxu0 %v1448
  %1997 = vmatprep.subr.bf16.mxu0 %v1445
  %1998 = vmatpush1.bf16.msra.mxu0 %v1444
  %1999 = vmatprep.subr.bf16.mxu0 %v1505
  %2000 = vmatpush2.bf16.msra.mxu0 %v1504
  %2001 = vmatprep.subr.bf16.mxu0 %v1501
  %2002 = vmatpush2.bf16.msra.mxu0 %v1500
  %2003 = vmatprep.subr.bf16.mxu0 %v1497
  %2004 = vmatpush2.bf16.msra.mxu0 %v1496
  %2005 = vmatprep.subr.bf16.mxu0 %v1493
  %2006 = vmatpush2.bf16.msra.mxu0 %v1492
  %2007 = vmatprep.subr.bf16.mxu0 %v1489
  %2008 = vmatpush2.bf16.msra.mxu0 %v1488
  %2009 = vmatprep.subr.bf16.mxu0 %v1485
  %2010 = vmatpush2.bf16.msra.mxu0 %v1484
  %2011 = vmatprep.subr.bf16.mxu0 %v1481
  %2012 = vmatpush2.bf16.msra.mxu0 %v1480
  %2013 = vmatprep.subr.bf16.mxu0 %v1477
  %2014 = vmatpush2.bf16.msra.mxu0 %v1476
  %2015 = vmatprep.mubr.bf16.mxu0 %v427
  %2016 = vmatmul.mubr.bf16.gmra.mxu0 %v426
  %v2017 = vpop.f32.mrf.mxu0
  %v2018 = vadd.f32 %v1945, %v2017
  %v2019 = vpop.f32.mrf.mxu0
  %v2020 = vadd.f32 %v1947, %v2019
  %v2021 = vpop.f32.mrf.mxu0
  %v2022 = vadd.f32 %v1949, %v2021
  %v2023 = vpop.f32.mrf.mxu0
  %v2024 = vadd.f32 %v1951, %v2023
  %2025 = vmatprep.mubr.bf16.mxu0 %v435
  %2026 = vmatmul.mubr.bf16.gmra.mxu0 %v434
  %v2027 = vpop.f32.mrf.mxu0
  %v2028 = vadd.f32 %v1955, %v2027
  %v2029 = vpop.f32.mrf.mxu0
  %v2030 = vadd.f32 %v1957, %v2029
  %v2031 = vpop.f32.mrf.mxu0
  %v2032 = vadd.f32 %v1959, %v2031
  %v2033 = vpop.f32.mrf.mxu0
  %v2034 = vadd.f32 %v1961, %v2033
  %2035 = vmatprep.mubr.bf16.mxu0 %v443
  %2036 = vmatmul.mubr.bf16.gmra.mxu0 %v442
  %v2037 = vpop.f32.mrf.mxu0
  %v2038 = vadd.f32 %v1965, %v2037
  %v2039 = vpop.f32.mrf.mxu0
  %v2040 = vadd.f32 %v1967, %v2039
  %v2041 = vpop.f32.mrf.mxu0
  %v2042 = vadd.f32 %v1969, %v2041
  %v2043 = vpop.f32.mrf.mxu0
  %v2044 = vadd.f32 %v1971, %v2043
  %2045 = vmatprep.mubr.bf16.mxu0 %v451
  %2046 = vmatmul.mubr.bf16.gmra.mxu0 %v450
  %v2047 = vpop.f32.mrf.mxu0
  %v2048 = vadd.f32 %v1975, %v2047
  %v2049 = vpop.f32.mrf.mxu0
  %v2050 = vadd.f32 %v1977, %v2049
  %v2051 = vpop.f32.mrf.mxu0
  %v2052 = vadd.f32 %v1979, %v2051
  %v2053 = vpop.f32.mrf.mxu0
  %v2054 = vadd.f32 %v1981, %v2053
  %2055 = vdwg.mxu0
  %2056 = vmatprep.subr.bf16.mxu0 %v1283
  %2057 = vmatpush1.bf16.msra.mxu0 %v1282
  %2058 = vmatprep.subr.bf16.mxu0 %v1279
  %2059 = vmatpush1.bf16.msra.mxu0 %v1278
  %2060 = vmatprep.subr.bf16.mxu0 %v1275
  %2061 = vmatpush1.bf16.msra.mxu0 %v1274
  %2062 = vmatprep.subr.bf16.mxu0 %v1271
  %2063 = vmatpush1.bf16.msra.mxu0 %v1270
  %2064 = vmatprep.subr.bf16.mxu0 %v1267
  %2065 = vmatpush1.bf16.msra.mxu0 %v1266
  %2066 = vmatprep.subr.bf16.mxu0 %v1263
  %2067 = vmatpush1.bf16.msra.mxu0 %v1262
  %2068 = vmatprep.subr.bf16.mxu0 %v1259
  %2069 = vmatpush1.bf16.msra.mxu0 %v1258
  %2070 = vmatprep.subr.bf16.mxu0 %v1255
  %2071 = vmatpush1.bf16.msra.mxu0 %v1254
  %2072 = vmatprep.subr.bf16.mxu0 %v1315
  %2073 = vmatpush2.bf16.msra.mxu0 %v1314
  %2074 = vmatprep.subr.bf16.mxu0 %v1311
  %2075 = vmatpush2.bf16.msra.mxu0 %v1310
  %2076 = vmatprep.subr.bf16.mxu0 %v1307
  %2077 = vmatpush2.bf16.msra.mxu0 %v1306
  %2078 = vmatprep.subr.bf16.mxu0 %v1303
  %2079 = vmatpush2.bf16.msra.mxu0 %v1302
  %2080 = vmatprep.subr.bf16.mxu0 %v1299
  %2081 = vmatpush2.bf16.msra.mxu0 %v1298
  %2082 = vmatprep.subr.bf16.mxu0 %v1295
  %2083 = vmatpush2.bf16.msra.mxu0 %v1294
  %2084 = vmatprep.subr.bf16.mxu0 %v1291
  %2085 = vmatpush2.bf16.msra.mxu0 %v1290
  %2086 = vmatprep.subr.bf16.mxu0 %v1287
  %2087 = vmatpush2.bf16.msra.mxu0 %v1286
  %2088 = vmatprep.mubr.bf16.mxu0 %v421
  %2089 = vmatmul.mubr.bf16.gmra.mxu0 %v420
  %v2090 = vpop.f32.mrf.mxu0
  %v2091 = vadd.f32 %v315, %v2090
  %v2092 = vpop.f32.mrf.mxu0
  %v2093 = vadd.f32 %v319, %v2092
  %v2094 = vpop.f32.mrf.mxu0
  %v2095 = vadd.f32 %v315, %v2094
  %v2096 = vpop.f32.mrf.mxu0
  %v2097 = vadd.f32 %v319, %v2096
  %2098 = vmatprep.mubr.bf16.mxu0 %v429
  %2099 = vmatmul.mubr.bf16.gmra.mxu0 %v428
  %v2100 = vpop.f32.mrf.mxu0
  %v2101 = vadd.f32 %v315, %v2100
  %v2102 = vpop.f32.mrf.mxu0
  %v2103 = vadd.f32 %v319, %v2102
  %v2104 = vpop.f32.mrf.mxu0
  %v2105 = vadd.f32 %v315, %v2104
  %v2106 = vpop.f32.mrf.mxu0
  %v2107 = vadd.f32 %v319, %v2106
  %2108 = vmatprep.mubr.bf16.mxu0 %v437
  %2109 = vmatmul.mubr.bf16.gmra.mxu0 %v436
  %v2110 = vpop.f32.mrf.mxu0
  %v2111 = vadd.f32 %v315, %v2110
  %v2112 = vpop.f32.mrf.mxu0
  %v2113 = vadd.f32 %v319, %v2112
  %v2114 = vpop.f32.mrf.mxu0
  %v2115 = vadd.f32 %v315, %v2114
  %v2116 = vpop.f32.mrf.mxu0
  %v2117 = vadd.f32 %v319, %v2116
  %2118 = vmatprep.mubr.bf16.mxu0 %v445
  %2119 = vmatmul.mubr.bf16.gmra.mxu0 %v444
  %v2120 = vpop.f32.mrf.mxu0
  %v2121 = vadd.f32 %v315, %v2120
  %v2122 = vpop.f32.mrf.mxu0
  %v2123 = vadd.f32 %v319, %v2122
  %v2124 = vpop.f32.mrf.mxu0
  %v2125 = vadd.f32 %v315, %v2124
  %v2126 = vpop.f32.mrf.mxu0
  %v2127 = vadd.f32 %v319, %v2126
  %2128 = vdwg.mxu0
  %2129 = vmatprep.subr.bf16.mxu0 %v1347
  %2130 = vmatpush1.bf16.msra.mxu0 %v1346
  %2131 = vmatprep.subr.bf16.mxu0 %v1343
  %2132 = vmatpush1.bf16.msra.mxu0 %v1342
  %2133 = vmatprep.subr.bf16.mxu0 %v1339
  %2134 = vmatpush1.bf16.msra.mxu0 %v1338
  %2135 = vmatprep.subr.bf16.mxu0 %v1335
  %2136 = vmatpush1.bf16.msra.mxu0 %v1334
  %2137 = vmatprep.subr.bf16.mxu0 %v1331
  %2138 = vmatpush1.bf16.msra.mxu0 %v1330
  %2139 = vmatprep.subr.bf16.mxu0 %v1327
  %2140 = vmatpush1.bf16.msra.mxu0 %v1326
  %2141 = vmatprep.subr.bf16.mxu0 %v1323
  %2142 = vmatpush1.bf16.msra.mxu0 %v1322
  %2143 = vmatprep.subr.bf16.mxu0 %v1319
  %2144 = vmatpush1.bf16.msra.mxu0 %v1318
  %2145 = vmatprep.subr.bf16.mxu0 %v1379
  %2146 = vmatpush2.bf16.msra.mxu0 %v1378
  %2147 = vmatprep.subr.bf16.mxu0 %v1375
  %2148 = vmatpush2.bf16.msra.mxu0 %v1374
  %2149 = vmatprep.subr.bf16.mxu0 %v1371
  %2150 = vmatpush2.bf16.msra.mxu0 %v1370
  %2151 = vmatprep.subr.bf16.mxu0 %v1367
  %2152 = vmatpush2.bf16.msra.mxu0 %v1366
  %2153 = vmatprep.subr.bf16.mxu0 %v1363
  %2154 = vmatpush2.bf16.msra.mxu0 %v1362
  %2155 = vmatprep.subr.bf16.mxu0 %v1359
  %2156 = vmatpush2.bf16.msra.mxu0 %v1358
  %2157 = vmatprep.subr.bf16.mxu0 %v1355
  %2158 = vmatpush2.bf16.msra.mxu0 %v1354
  %2159 = vmatprep.subr.bf16.mxu0 %v1351
  %2160 = vmatpush2.bf16.msra.mxu0 %v1350
  %2161 = vmatprep.mubr.bf16.mxu0 %v423
  %2162 = vmatmul.mubr.bf16.gmra.mxu0 %v422
  %v2163 = vpop.f32.mrf.mxu0
  %v2164 = vadd.f32 %v2091, %v2163
  %v2165 = vpop.f32.mrf.mxu0
  %v2166 = vadd.f32 %v2093, %v2165
  %v2167 = vpop.f32.mrf.mxu0
  %v2168 = vadd.f32 %v2095, %v2167
  %v2169 = vpop.f32.mrf.mxu0
  %v2170 = vadd.f32 %v2097, %v2169
  %2171 = vmatprep.mubr.bf16.mxu0 %v431
  %2172 = vmatmul.mubr.bf16.gmra.mxu0 %v430
  %v2173 = vpop.f32.mrf.mxu0
  %v2174 = vadd.f32 %v2101, %v2173
  %v2175 = vpop.f32.mrf.mxu0
  %v2176 = vadd.f32 %v2103, %v2175
  %v2177 = vpop.f32.mrf.mxu0
  %v2178 = vadd.f32 %v2105, %v2177
  %v2179 = vpop.f32.mrf.mxu0
  %v2180 = vadd.f32 %v2107, %v2179
  %2181 = vmatprep.mubr.bf16.mxu0 %v439
  %2182 = vmatmul.mubr.bf16.gmra.mxu0 %v438
  %v2183 = vpop.f32.mrf.mxu0
  %v2184 = vadd.f32 %v2111, %v2183
  %v2185 = vpop.f32.mrf.mxu0
  %v2186 = vadd.f32 %v2113, %v2185
  %v2187 = vpop.f32.mrf.mxu0
  %v2188 = vadd.f32 %v2115, %v2187
  %v2189 = vpop.f32.mrf.mxu0
  %v2190 = vadd.f32 %v2117, %v2189
  %2191 = vmatprep.mubr.bf16.mxu0 %v447
  %2192 = vmatmul.mubr.bf16.gmra.mxu0 %v446
  %v2193 = vpop.f32.mrf.mxu0
  %v2194 = vadd.f32 %v2121, %v2193
  %v2195 = vpop.f32.mrf.mxu0
  %v2196 = vadd.f32 %v2123, %v2195
  %v2197 = vpop.f32.mrf.mxu0
  %v2198 = vadd.f32 %v2125, %v2197
  %v2199 = vpop.f32.mrf.mxu0
  %v2200 = vadd.f32 %v2127, %v2199
  %2201 = vdwg.mxu0
  %2202 = vmatprep.subr.bf16.mxu0 %v1411
  %2203 = vmatpush1.bf16.msra.mxu0 %v1410
  %2204 = vmatprep.subr.bf16.mxu0 %v1407
  %2205 = vmatpush1.bf16.msra.mxu0 %v1406
  %2206 = vmatprep.subr.bf16.mxu0 %v1403
  %2207 = vmatpush1.bf16.msra.mxu0 %v1402
  %2208 = vmatprep.subr.bf16.mxu0 %v1399
  %2209 = vmatpush1.bf16.msra.mxu0 %v1398
  %2210 = vmatprep.subr.bf16.mxu0 %v1395
  %2211 = vmatpush1.bf16.msra.mxu0 %v1394
  %2212 = vmatprep.subr.bf16.mxu0 %v1391
  %2213 = vmatpush1.bf16.msra.mxu0 %v1390
  %2214 = vmatprep.subr.bf16.mxu0 %v1387
  %2215 = vmatpush1.bf16.msra.mxu0 %v1386
  %2216 = vmatprep.subr.bf16.mxu0 %v1383
  %2217 = vmatpush1.bf16.msra.mxu0 %v1382
  %2218 = vmatprep.subr.bf16.mxu0 %v1443
  %2219 = vmatpush2.bf16.msra.mxu0 %v1442
  %2220 = vmatprep.subr.bf16.mxu0 %v1439
  %2221 = vmatpush2.bf16.msra.mxu0 %v1438
  %2222 = vmatprep.subr.bf16.mxu0 %v1435
  %2223 = vmatpush2.bf16.msra.mxu0 %v1434
  %2224 = vmatprep.subr.bf16.mxu0 %v1431
  %2225 = vmatpush2.bf16.msra.mxu0 %v1430
  %2226 = vmatprep.subr.bf16.mxu0 %v1427
  %2227 = vmatpush2.bf16.msra.mxu0 %v1426
  %2228 = vmatprep.subr.bf16.mxu0 %v1423
  %2229 = vmatpush2.bf16.msra.mxu0 %v1422
  %2230 = vmatprep.subr.bf16.mxu0 %v1419
  %2231 = vmatpush2.bf16.msra.mxu0 %v1418
  %2232 = vmatprep.subr.bf16.mxu0 %v1415
  %2233 = vmatpush2.bf16.msra.mxu0 %v1414
  %2234 = vmatprep.mubr.bf16.mxu0 %v425
  %2235 = vmatmul.mubr.bf16.gmra.mxu0 %v424
  %v2236 = vpop.f32.mrf.mxu0
  %v2237 = vadd.f32 %v2164, %v2236
  %v2238 = vpop.f32.mrf.mxu0
  %v2239 = vadd.f32 %v2166, %v2238
  %v2240 = vpop.f32.mrf.mxu0
  %v2241 = vadd.f32 %v2168, %v2240
  %v2242 = vpop.f32.mrf.mxu0
  %v2243 = vadd.f32 %v2170, %v2242
  %2244 = vmatprep.mubr.bf16.mxu0 %v433
  %2245 = vmatmul.mubr.bf16.gmra.mxu0 %v432
  %v2246 = vpop.f32.mrf.mxu0
  %v2247 = vadd.f32 %v2174, %v2246
  %v2248 = vpop.f32.mrf.mxu0
  %v2249 = vadd.f32 %v2176, %v2248
  %v2250 = vpop.f32.mrf.mxu0
  %v2251 = vadd.f32 %v2178, %v2250
  %v2252 = vpop.f32.mrf.mxu0
  %v2253 = vadd.f32 %v2180, %v2252
  %2254 = vmatprep.mubr.bf16.mxu0 %v441
  %2255 = vmatmul.mubr.bf16.gmra.mxu0 %v440
  %v2256 = vpop.f32.mrf.mxu0
  %v2257 = vadd.f32 %v2184, %v2256
  %v2258 = vpop.f32.mrf.mxu0
  %v2259 = vadd.f32 %v2186, %v2258
  %v2260 = vpop.f32.mrf.mxu0
  %v2261 = vadd.f32 %v2188, %v2260
  %v2262 = vpop.f32.mrf.mxu0
  %v2263 = vadd.f32 %v2190, %v2262
  %2264 = vmatprep.mubr.bf16.mxu0 %v449
  %2265 = vmatmul.mubr.bf16.gmra.mxu0 %v448
  %v2266 = vpop.f32.mrf.mxu0
  %v2267 = vadd.f32 %v2194, %v2266
  %v2268 = vpop.f32.mrf.mxu0
  %v2269 = vadd.f32 %v2196, %v2268
  %v2270 = vpop.f32.mrf.mxu0
  %v2271 = vadd.f32 %v2198, %v2270
  %v2272 = vpop.f32.mrf.mxu0
  %v2273 = vadd.f32 %v2200, %v2272
  %2274 = vdwg.mxu0
  %2275 = vmatprep.subr.bf16.mxu0 %v1475
  %2276 = vmatpush1.bf16.msra.mxu0 %v1474
  %2277 = vmatprep.subr.bf16.mxu0 %v1471
  %2278 = vmatpush1.bf16.msra.mxu0 %v1470
  %2279 = vmatprep.subr.bf16.mxu0 %v1467
  %2280 = vmatpush1.bf16.msra.mxu0 %v1466
  %2281 = vmatprep.subr.bf16.mxu0 %v1463
  %2282 = vmatpush1.bf16.msra.mxu0 %v1462
  %2283 = vmatprep.subr.bf16.mxu0 %v1459
  %2284 = vmatpush1.bf16.msra.mxu0 %v1458
  %2285 = vmatprep.subr.bf16.mxu0 %v1455
  %2286 = vmatpush1.bf16.msra.mxu0 %v1454
  %2287 = vmatprep.subr.bf16.mxu0 %v1451
  %2288 = vmatpush1.bf16.msra.mxu0 %v1450
  %2289 = vmatprep.subr.bf16.mxu0 %v1447
  %2290 = vmatpush1.bf16.msra.mxu0 %v1446
  %2291 = vmatprep.subr.bf16.mxu0 %v1507
  %2292 = vmatpush2.bf16.msra.mxu0 %v1506
  %2293 = vmatprep.subr.bf16.mxu0 %v1503
  %2294 = vmatpush2.bf16.msra.mxu0 %v1502
  %2295 = vmatprep.subr.bf16.mxu0 %v1499
  %2296 = vmatpush2.bf16.msra.mxu0 %v1498
  %2297 = vmatprep.subr.bf16.mxu0 %v1495
  %2298 = vmatpush2.bf16.msra.mxu0 %v1494
  %2299 = vmatprep.subr.bf16.mxu0 %v1491
  %2300 = vmatpush2.bf16.msra.mxu0 %v1490
  %2301 = vmatprep.subr.bf16.mxu0 %v1487
  %2302 = vmatpush2.bf16.msra.mxu0 %v1486
  %2303 = vmatprep.subr.bf16.mxu0 %v1483
  %2304 = vmatpush2.bf16.msra.mxu0 %v1482
  %2305 = vmatprep.subr.bf16.mxu0 %v1479
  %2306 = vmatpush2.bf16.msra.mxu0 %v1478
  %2307 = vmatprep.mubr.bf16.mxu0 %v427
  %2308 = vmatmul.mubr.bf16.gmra.mxu0 %v426
  %v2309 = vpop.f32.mrf.mxu0
  %v2310 = vadd.f32 %v2237, %v2309
  %v2311 = vpop.f32.mrf.mxu0
  %v2312 = vadd.f32 %v2239, %v2311
  %v2313 = vpop.f32.mrf.mxu0
  %v2314 = vadd.f32 %v2241, %v2313
  %v2315 = vpop.f32.mrf.mxu0
  %v2316 = vadd.f32 %v2243, %v2315
  %2317 = vmatprep.mubr.bf16.mxu0 %v435
  %2318 = vmatmul.mubr.bf16.gmra.mxu0 %v434
  %v2319 = vpop.f32.mrf.mxu0
  %v2320 = vadd.f32 %v2247, %v2319
  %v2321 = vpop.f32.mrf.mxu0
  %v2322 = vadd.f32 %v2249, %v2321
  %v2323 = vpop.f32.mrf.mxu0
  %v2324 = vadd.f32 %v2251, %v2323
  %v2325 = vpop.f32.mrf.mxu0
  %v2326 = vadd.f32 %v2253, %v2325
  %2327 = vmatprep.mubr.bf16.mxu0 %v443
  %2328 = vmatmul.mubr.bf16.gmra.mxu0 %v442
  %v2329 = vpop.f32.mrf.mxu0
  %v2330 = vadd.f32 %v2257, %v2329
  %v2331 = vpop.f32.mrf.mxu0
  %v2332 = vadd.f32 %v2259, %v2331
  %v2333 = vpop.f32.mrf.mxu0
  %v2334 = vadd.f32 %v2261, %v2333
  %v2335 = vpop.f32.mrf.mxu0
  %v2336 = vadd.f32 %v2263, %v2335
  %2337 = vmatprep.mubr.bf16.mxu0 %v451
  %2338 = vmatmul.mubr.bf16.gmra.mxu0 %v450
  %v2339 = vpop.f32.mrf.mxu0
  %v2340 = vadd.f32 %v2267, %v2339
  %v2341 = vpop.f32.mrf.mxu0
  %v2342 = vadd.f32 %v2269, %v2341
  %v2343 = vpop.f32.mrf.mxu0
  %v2344 = vadd.f32 %v2271, %v2343
  %v2345 = vpop.f32.mrf.mxu0
  %v2346 = vadd.f32 %v2273, %v2345
  %2347 = vdwg.mxu0
  %v2348 = vpack.c.bf16 %v2022, %v2018
  %v2349 = vpack.c.bf16 %v2024, %v2020
  %v2350 = vpack.c.bf16 %v2314, %v2310
  %v2351 = vpack.c.bf16 %v2316, %v2312
  %v2352 = vpack.c.bf16 %v2032, %v2028
  %v2353 = vpack.c.bf16 %v2034, %v2030
  %v2354 = vpack.c.bf16 %v2324, %v2320
  %v2355 = vpack.c.bf16 %v2326, %v2322
  %v2356 = vpack.c.bf16 %v2042, %v2038
  %v2357 = vpack.c.bf16 %v2044, %v2040
  %v2358 = vpack.c.bf16 %v2334, %v2330
  %v2359 = vpack.c.bf16 %v2336, %v2332
  %v2360 = vpack.c.bf16 %v2052, %v2048
  %v2361 = vpack.c.bf16 %v2054, %v2050
  %v2362 = vpack.c.bf16 %v2344, %v2340
  %v2363 = vpack.c.bf16 %v2346, %v2342
  %v2380 = vunpack.c.l.b16 %v2348
  %v2381 = vunpack.c.l.b16 %v2349
  %v2382 = vunpack.c.l.b16 %v2350
  %v2383 = vunpack.c.l.b16 %v2351
  %v2384 = vunpack.c.h.b16 %v2348
  %v2385 = vunpack.c.h.b16 %v2349
  %v2386 = vunpack.c.h.b16 %v2350
  %v2387 = vunpack.c.h.b16 %v2351
  %v2388 = vunpack.c.l.b16 %v2352
  %v2389 = vunpack.c.l.b16 %v2353
  %v2390 = vunpack.c.l.b16 %v2354
  %v2391 = vunpack.c.l.b16 %v2355
  %v2392 = vunpack.c.h.b16 %v2352
  %v2393 = vunpack.c.h.b16 %v2353
  %v2394 = vunpack.c.h.b16 %v2354
  %v2395 = vunpack.c.h.b16 %v2355
  %v2396 = vunpack.c.l.b16 %v2356
  %v2397 = vunpack.c.l.b16 %v2357
  %v2398 = vunpack.c.l.b16 %v2358
  %v2399 = vunpack.c.l.b16 %v2359
  %v2400 = vunpack.c.h.b16 %v2356
  %v2401 = vunpack.c.h.b16 %v2357
  %v2402 = vunpack.c.h.b16 %v2358
  %v2403 = vunpack.c.h.b16 %v2359
  %v2404 = vunpack.c.l.b16 %v2360
  %v2405 = vunpack.c.l.b16 %v2361
  %v2406 = vunpack.c.l.b16 %v2362
  %v2407 = vunpack.c.l.b16 %v2363
  %v2408 = vunpack.c.h.b16 %v2360
  %v2409 = vunpack.c.h.b16 %v2361
  %v2410 = vunpack.c.h.b16 %v2362
  %v2411 = vunpack.c.h.b16 %v2363
  %v2412 = vpack.c.b16 %v2381, %v2380
  %v2413 = vpack.c.b16 %v2383, %v2382
  %v2414 = vpack.c.b16 %v2385, %v2384
  %v2415 = vpack.c.b16 %v2387, %v2386
  %v2416 = vpack.c.b16 %v2389, %v2388
  %v2417 = vpack.c.b16 %v2391, %v2390
  %v2418 = vpack.c.b16 %v2393, %v2392
  %v2419 = vpack.c.b16 %v2395, %v2394
  %v2420 = vpack.c.b16 %v2397, %v2396
  %v2421 = vpack.c.b16 %v2399, %v2398
  %v2422 = vpack.c.b16 %v2401, %v2400
  %v2423 = vpack.c.b16 %v2403, %v2402
  %v2424 = vpack.c.b16 %v2405, %v2404
  %v2425 = vpack.c.b16 %v2407, %v2406
  %v2426 = vpack.c.b16 %v2409, %v2408
  %v2427 = vpack.c.b16 %v2411, %v2410
  %2444 = vst [vmem:[%s3] sm:$0xff] %v2412
  %2445 = vst [vmem:[%s3 + $0x8] sm:$0xff] %v2413
  %2446 = vst [vmem:[%s3 + $0x10] sm:$0xff] %v2414
  %2447 = vst [vmem:[%s3 + $0x18] sm:$0xff] %v2415
  %2448 = vst [vmem:[%s3 + $0x20] sm:$0xff] %v2416
  %2449 = vst [vmem:[%s3 + $0x28] sm:$0xff] %v2417
  %2450 = vst [vmem:[%s3 + $0x30] sm:$0xff] %v2418
  %2451 = vst [vmem:[%s3 + $0x38] sm:$0xff] %v2419
  %2452 = vst [vmem:[%s3 + $0x40] sm:$0xff] %v2420
  %2453 = vst [vmem:[%s3 + $0x48] sm:$0xff] %v2421
  %2454 = vst [vmem:[%s3 + $0x50] sm:$0xff] %v2422
  %2455 = vst [vmem:[%s3 + $0x58] sm:$0xff] %v2423
  %2456 = vst [vmem:[%s3 + $0x60] sm:$0xff] %v2424
  %2457 = vst [vmem:[%s3 + $0x68] sm:$0xff] %v2425
  %2458 = vst [vmem:[%s3 + $0x70] sm:$0xff] %v2426
  %2459 = vst [vmem:[%s3 + $0x78] sm:$0xff] %v2427
  // Predicated region
  $region14: #{custom_model_forward.10} parent=0 // pred_check
    _
  $region15: #{custom_model_forward.10} parent=0 // pred_check_branch
    %2461 = sbr.rel (0) target = $region17
  $region16: #{custom_model_forward.10} parent=0 // pred_region
    _
  $region17: #{custom_model_forward.10} parent=0 // pred_fallthru
    _
  // Predicated region
  $region18: #{custom_model_forward.10} parent=0 // pred_check
    _
  $region19: #{custom_model_forward.10} parent=0 // pred_check_branch
    %2463 = sbr.rel (0) target = $region21
  $region20: #{custom_model_forward.10} parent=0 // pred_region
    _
  $region21: #{custom_model_forward.10} parent=0 // pred_fallthru
    _

// kernel: custom_model_forward.13
$region0: #{custom_model_forward.13}
  #allocation0 [shape = 'u32[]', space=smem, size = 0x4, offset = 0x4, fixed_abs, tag = 'smem constant byte address 0x4 - core index']
  #allocation1 [shape = 'u32[144,128]{1,0:T(1,128)}', space=vmem, size = 0x12000, scoped, tag = 'internal scratch']
  #allocation2 [shape = 'f32[1,16,1]{2,1,0:T(8,128)}', space=vmem, size = 0x2000, scoped, tag = 'scratch operand']
  #allocation3 [shape = 'f32[1,16,1]{2,1,0:T(8,128)}', space=vmem, size = 0x2000, scoped, tag = 'scratch operand']
  #allocation4 [shape = 'f32[1,16,512]{2,1,0:T(8,128)}', space=vmem, size = 0x8000, scoped, tag = 'scratch operand']
  %s0 = inlined_call_operand.vmem [shape: bf16[2,16,512], index: 0, kind: input, shape index: {}]
  %s1 = inlined_call_operand.vmem [shape: bf16[2,48,1024], index: 1, kind: input, shape index: {}]
  %s2 = inlined_call_operand.vmem [shape: bf16[2,16,512], index: 2, kind: input, shape index: {}]
  %s3 = inlined_call_operand.vmem [shape: bf16[2,16,512], index: 3, kind: output, shape index: {}]
  %s4 = sld [smem:[#allocation0]]
  $region53: #{custom_model_forward.13} parent=0
    _
  %s6 = ssub.s32 1, %s4
  %s7 = scalar_select 0, %s6, %s4
  loop: start=0, step=1, limit=4
  $region2: #{custom_model_forward.13} parent=0 // loop_pre_header
    _
  $region3: #{custom_model_forward.13} parent=0 // loop_header
    %s9 = sphi 0, %s13
    %p10 = scmp.ge.s32.totalorder %s9, 4
    %s16 = sphi 0, %s28
    %s17 = sphi 0, %s24
    %s18 = sphi 0, %s16
    %s19 = sphi 0, %s17
    %s20 = sphi 0, %s18
    %s21 = sphi 0, %s19
    %s31 = sphi 0, %s33
    %s34 = sphi 0, %s31
    %s35 = sphi 0, %s34
    %s51 = sphi 0, %s35
    %s59 = sphi 0, %s61
    %s62 = sphi 0, %s59
    %s63 = sphi 0, %s62
    %s79 = sphi 0, %s63
    %s85 = sphi 0, %s87
    %s88 = sphi 0, %s85
    %s89 = sphi 0, %s88
    %s105 = sphi 0, %s89
    %s111 = sphi 0, %s113
    %s114 = sphi 0, %s111
    %s115 = sphi 0, %s114
    %s131 = sphi 0, %s115
  $region4: #{custom_model_forward.13} parent=0 // loop_header_branch
    %12 = sbr.rel (%p10) target = $region8
  $region5: #{custom_model_forward.13} parent=0 // loop_body
    %s14 = ssub.s32 %s9, 1
    %s15 = ssub.s32 %s9, 2
    %s22 = sadd.s32 1, %s17
    %p23 = scmp.ge.s32.totalorder %s22, 1
    %s24 = scalar_select %p23, 0, %s22
    %s25 = sadd.s32 1, %s16
    %s26 = scalar_select %p23, %s25, %s16
    %p27 = scmp.ge.s32.totalorder %s26, 2
    %s28 = scalar_select %p27, 0, %s26
    %s29 = ssub.s32 %s16, %s28
    %p30 = scmp.eq.s32.totalorder %s29, 0
    %s32 = sadd.s32 %s31, 1
    %s33 = scalar_select %p30, %s31, %s32
    %p36 = pneg %p30
    %p37 = scmp.eq.s32.totalorder %s9, 1
    %p38 = por %p36, %p37
    %p39 = scmp.ne.s32.totalorder %s31, %s34
    %p40 = scmp.eq.s32.totalorder %s9, 0
    %p41 = por %p39, %p40
    %p42 = scmp.ne.s32.totalorder %s31, %s34
    %p43 = scmp.eq.s32.totalorder %s14, 1
    %p44 = por %p42, %p43
    %p45 = scmp.ne.s32.totalorder %s34, %s35
    %p46 = scmp.eq.s32.totalorder %s14, 0
    %p47 = por %p45, %p46
    %p48 = scmp.ne.s32.totalorder %s34, %s35
    %p49 = scmp.eq.s32.totalorder %s15, 1
    %p50 = por %p48, %p49
    %p52 = scmp.ne.s32.totalorder %s35, %s51
    %p53 = scmp.eq.s32.totalorder %s15, 0
    %p54 = por %p52, %p53
    %s55 = ssub.s32 %s16, %s28
    %s56 = ssub.s32 %s17, %s24
    %s57 = sor.u32 %s55, %s56
    %p58 = scmp.eq.s32.totalorder %s57, 0
    %s60 = sadd.s32 %s59, 1
    %s61 = scalar_select %p58, %s59, %s60
    %p64 = pneg %p58
    %p65 = scmp.eq.s32.totalorder %s9, 1
    %p66 = por %p64, %p65
    %p67 = scmp.ne.s32.totalorder %s59, %s62
    %p68 = scmp.eq.s32.totalorder %s9, 0
    %p69 = por %p67, %p68
    %p70 = scmp.ne.s32.totalorder %s59, %s62
    %p71 = scmp.eq.s32.totalorder %s14, 1
    %p72 = por %p70, %p71
    %p73 = scmp.ne.s32.totalorder %s62, %s63
    %p74 = scmp.eq.s32.totalorder %s14, 0
    %p75 = por %p73, %p74
    %p76 = scmp.ne.s32.totalorder %s62, %s63
    %p77 = scmp.eq.s32.totalorder %s15, 1
    %p78 = por %p76, %p77
    %p80 = scmp.ne.s32.totalorder %s63, %s79
    %p81 = scmp.eq.s32.totalorder %s15, 0
    %p82 = por %p80, %p81
    %s83 = ssub.s32 %s16, %s28
    %p84 = scmp.eq.s32.totalorder %s83, 0
    %s86 = sadd.s32 %s85, 1
    %s87 = scalar_select %p84, %s85, %s86
    %p90 = pneg %p84
    %p91 = scmp.eq.s32.totalorder %s9, 1
    %p92 = por %p90, %p91
    %p93 = scmp.ne.s32.totalorder %s85, %s88
    %p94 = scmp.eq.s32.totalorder %s9, 0
    %p95 = por %p93, %p94
    %p96 = scmp.ne.s32.totalorder %s85, %s88
    %p97 = scmp.eq.s32.totalorder %s14, 1
    %p98 = por %p96, %p97
    %p99 = scmp.ne.s32.totalorder %s88, %s89
    %p100 = scmp.eq.s32.totalorder %s14, 0
    %p101 = por %p99, %p100
    %p102 = scmp.ne.s32.totalorder %s88, %s89
    %p103 = scmp.eq.s32.totalorder %s15, 1
    %p104 = por %p102, %p103
    %p106 = scmp.ne.s32.totalorder %s89, %s105
    %p107 = scmp.eq.s32.totalorder %s15, 0
    %p108 = por %p106, %p107
    %s109 = ssub.s32 %s16, %s28
    %p110 = scmp.eq.s32.totalorder %s109, 0
    %s112 = sadd.s32 %s111, 1
    %s113 = scalar_select %p110, %s111, %s112
    %p116 = pneg %p110
    %p117 = scmp.eq.s32.totalorder %s9, 1
    %p118 = por %p116, %p117
    %p119 = scmp.ne.s32.totalorder %s111, %s114
    %p120 = scmp.eq.s32.totalorder %s9, 0
    %p121 = por %p119, %p120
    %p122 = scmp.ne.s32.totalorder %s111, %s114
    %p123 = scmp.eq.s32.totalorder %s14, 1
    %p124 = por %p122, %p123
    %p125 = scmp.ne.s32.totalorder %s114, %s115
    %p126 = scmp.eq.s32.totalorder %s14, 0
    %p127 = por %p125, %p126
    %p128 = scmp.ne.s32.totalorder %s114, %s115
    %p129 = scmp.eq.s32.totalorder %s15, 1
    %p130 = por %p128, %p129
    %p132 = scmp.ne.s32.totalorder %s115, %s131
    %p133 = scmp.eq.s32.totalorder %s15, 0
    %p134 = por %p132, %p133
    %p135 = scmp.le.s32.totalorder 1, %s9
    %p136 = scmp.lt.s32.totalorder %s9, 3
    %p137 = pnand %p135, %p136
    %p138 = pneg %p137
    // Predicated region
    $region9: #{custom_model_forward.13} parent=5 // pred_check
      _
    $region10: #{custom_model_forward.13} parent=5 // pred_check_branch
      %140 = sbr.rel (%p137) target = $region12
    $region11: #{custom_model_forward.13} parent=5 // pred_region
      %s141 = ssub.s32 %s9, 1
    $region12: #{custom_model_forward.13} parent=5 // pred_fallthru
      _
    %p142 = scmp.lt.s32.totalorder %s9, 2
    // Predicated region
    $region13: #{custom_model_forward.13} parent=5 // pred_check
      %p143 = pneg %p142
    $region14: #{custom_model_forward.13} parent=5 // pred_check_branch
      %145 = sbr.rel (%p143) target = $region16
    $region15: #{custom_model_forward.13} parent=5 // pred_region
      // Predicated region
      $region17: #{custom_model_forward.13} parent=15 // pred_check
        %p146 = pneg %p41
      $region18: #{custom_model_forward.13} parent=15 // pred_check_branch
        %148 = sbr.rel (%p146) target = $region20
      $region19: #{custom_model_forward.13} parent=15 // pred_region
        %p149 = scmp.lt.s32.totalorder %s16, 1
        %s150 = scalar_select %p149, %s16, 1
        %s151 = smul.addr %s150, 8
        %s152 = smul.addr %s151, 4
        %s153 = scalar_lea.vmem %s0, %s152
      $region20: #{custom_model_forward.13} parent=15 // pred_fallthru
        _
      // Predicated region
      $region21: #{custom_model_forward.13} parent=15 // pred_check
        %p154 = pneg %p69
      $region22: #{custom_model_forward.13} parent=15 // pred_check_branch
        %156 = sbr.rel (%p154) target = $region24
      $region23: #{custom_model_forward.13} parent=15 // pred_region
        %s157 = smul.u32 6, %s17
        %p158 = scmp.lt.s32.totalorder %s16, 1
        %s159 = scalar_select %p158, %s16, 1
        %p160 = scmp.lt.s32.totalorder %s157, 5
        %s161 = scalar_select %p160, %s157, 5
        %s162 = smul.addr %s161, 8
        %s163 = smul.addr %s159, 48
        %s164 = sadd.s32 %s162, %s163
        %s165 = smul.addr %s164, 4
        %s166 = scalar_lea.vmem %s1, %s165
        %s167 = smul.u32 6, %s17
      $region24: #{custom_model_forward.13} parent=15 // pred_fallthru
        _
      // Predicated region
      $region25: #{custom_model_forward.13} parent=15 // pred_check
        %p168 = pneg %p95
      $region26: #{custom_model_forward.13} parent=15 // pred_check_branch
        %170 = sbr.rel (%p168) target = $region28
      $region27: #{custom_model_forward.13} parent=15 // pred_region
        %p171 = scmp.lt.s32.totalorder %s16, 1
        %s172 = scalar_select %p171, %s16, 1
        %s173 = smul.addr %s172, 8
        %s174 = smul.addr %s173, 4
        %s175 = scalar_lea.vmem %s2, %s174
      $region28: #{custom_model_forward.13} parent=15 // pred_fallthru
        _
    $region16: #{custom_model_forward.13} parent=5 // pred_fallthru
      _
    %p176 = scmp.le.s32.totalorder 1, %s9
    %p177 = scmp.lt.s32.totalorder %s9, 3
    %p178 = pnand %p176, %p177
    %p179 = pneg %p178
    // Predicated region
    $region29: #{custom_model_forward.13} parent=5 // pred_check
      _
    $region30: #{custom_model_forward.13} parent=5 // pred_check_branch
      %181 = sbr.rel (%p178) target = $region32
    $region31: #{custom_model_forward.13} parent=5 // pred_region
      %s182 = ssub.s32 %s9, 1
      %p183 = scmp.lt.s32.totalorder %s18, 1
      %s184 = scalar_select %p183, %s18, 1
      %s185 = smul.addr %s184, 8
      %s186 = smul.addr %s185, 4
      %s187 = scalar_lea.vmem %s0, %s186
      %p188 = pneg %p47
      %p189 = pneg %p44
      %s190 = smul.u32 6, %s19
      %p191 = scmp.lt.s32.totalorder %s18, 1
      %s192 = scalar_select %p191, %s18, 1
      %p193 = scmp.lt.s32.totalorder %s190, 5
      %s194 = scalar_select %p193, %s190, 5
      %s195 = smul.addr %s194, 8
      %s196 = smul.addr %s192, 48
      %s197 = sadd.s32 %s195, %s196
      %s198 = smul.addr %s197, 4
      %s199 = scalar_lea.vmem %s1, %s198
      %p200 = pneg %p75
      %p201 = pneg %p72
      %p202 = scmp.lt.s32.totalorder %s18, 1
      %s203 = scalar_select %p202, %s18, 1
      %s204 = smul.addr %s203, 8
      %s205 = smul.addr %s204, 4
      %s206 = scalar_lea.vmem %s2, %s205
      %p207 = pneg %p101
      %p208 = pneg %p98
      %p209 = pneg %p127
      %p210 = pneg %p124
      %p211 = scmp.lt.s32.totalorder %s18, 1
      %s212 = scalar_select %p211, %s18, 1
      %s213 = smul.addr %s212, 8
      %s214 = smul.addr %s213, 4
      %s215 = scalar_lea.vmem %s3, %s214
      %p216 = scmp.lt.s32.totalorder %s18, 1
      %s217 = scalar_select %p216, %s18, 1
      %s218 = smul.addr %s217, 8
      %s219 = smul.addr %s218, 4
      %s220 = scalar_lea.vmem %s0, %s219
      %s221 = smul.u32 6, %s19
      %p222 = scmp.lt.s32.totalorder %s18, 1
      %s223 = scalar_select %p222, %s18, 1
      %p224 = scmp.lt.s32.totalorder %s221, 5
      %s225 = scalar_select %p224, %s221, 5
      %s226 = smul.addr %s225, 8
      %s227 = smul.addr %s223, 48
      %s228 = sadd.s32 %s226, %s227
      %s229 = smul.addr %s228, 4
      %s230 = scalar_lea.vmem %s1, %s229
      %s231 = smul.u32 6, %s19
      %p232 = scmp.lt.s32.totalorder %s18, 1
      %s233 = scalar_select %p232, %s18, 1
      %s234 = smul.addr %s233, 8
      %s235 = smul.addr %s234, 4
      %s236 = scalar_lea.vmem %s2, %s235
      %p237 = scmp.lt.s32.totalorder %s18, 1
      %s238 = scalar_select %p237, %s18, 1
      %s239 = smul.addr %s238, 8
      %s240 = smul.addr %s239, 4
      %s241 = scalar_lea.vmem %s3, %s240
      %p243 = scmp.eq.s32.totalorder %s19, 0
      // Predicated region
      $region33: #{custom_model_forward.13} parent=31 // pred_check
        %p244 = pneg %p243
      $region34: #{custom_model_forward.13} parent=31 // pred_check_branch
        %246 = sbr.rel (%p244) target = $region36
      $region35: #{custom_model_forward.13} parent=31 // pred_region
        %vm247 = vcmask 7168
        %248 = vst.msk [vmem:[#allocation2] sm:$0xff] %vm247, -inf
        %249 = vst.msk [vmem:[#allocation2 + $0x8] sm:$0xff] %vm247, -inf
        %250 = vst.msk [vmem:[#allocation3] sm:$0xff] %vm247, 0.0
        %251 = vst.msk [vmem:[#allocation3 + $0x8] sm:$0xff] %vm247, 0.0
        %252 = vst [vmem:[#allocation4] sm:$0xff] 0.0
        %253 = vst [vmem:[#allocation4 + $0x8] sm:$0xff] 0.0
        %254 = vst [vmem:[#allocation4 + $0x10] sm:$0xff] 0.0
        %255 = vst [vmem:[#allocation4 + $0x18] sm:$0xff] 0.0
        %256 = vst [vmem:[#allocation4 + $0x20] sm:$0xff] 0.0
        %257 = vst [vmem:[#allocation4 + $0x28] sm:$0xff] 0.0
        %258 = vst [vmem:[#allocation4 + $0x30] sm:$0xff] 0.0
        %259 = vst [vmem:[#allocation4 + $0x38] sm:$0xff] 0.0
      $region36: #{custom_model_forward.13} parent=31 // pred_fallthru
        _
      %v260 = vld [vmem:[%s220] sm:$0xff]
      %v261 = vld [vmem:[%s220 + $0x8] sm:$0xff]
      %v262 = vld [vmem:[%s220 + $0x10] sm:$0xff]
      %v263 = vld [vmem:[%s220 + $0x18] sm:$0xff]
      %v264 = vld [vmem:[%s230] sm:$0xff]
      %v265 = vld [vmem:[%s230 + $0x8] sm:$0xff]
      %v266 = vld [vmem:[%s230 + $0x10] sm:$0xff]
      %v267 = vld [vmem:[%s230 + $0x18] sm:$0xff]
      %v268 = vld [vmem:[%s230 + $0x20] sm:$0xff]
      %v269 = vld [vmem:[%s230 + $0x28] sm:$0xff]
      %v270 = vld [vmem:[%s230 + $0x30] sm:$0xff]
      %v271 = vld [vmem:[%s230 + $0x38] sm:$0xff]
      %v272 = vld [vmem:[%s230 + $0x40] sm:$0xff]
      %v273 = vld [vmem:[%s230 + $0x48] sm:$0xff]
      %v274 = vld [vmem:[%s230 + $0x50] sm:$0xff]
      %v275 = vld [vmem:[%s230 + $0x58] sm:$0xff]
      %v276 = vld [vmem:[%s230 + $0x60] sm:$0xff]
      %v277 = vld [vmem:[%s230 + $0x68] sm:$0xff]
      %v278 = vld [vmem:[%s230 + $0x70] sm:$0xff]
      %v279 = vld [vmem:[%s230 + $0x78] sm:$0xff]
      %v280 = vld [vmem:[%s230 + $0x80] sm:$0xff]
      %v281 = vld [vmem:[%s230 + $0x88] sm:$0xff]
      %v282 = vld [vmem:[%s230 + $0x90] sm:$0xff]
      %v283 = vld [vmem:[%s230 + $0x98] sm:$0xff]
      %v284 = vld [vmem:[%s230 + $0xa0] sm:$0xff]
      %v285 = vld [vmem:[%s230 + $0xa8] sm:$0xff]
      %v286 = vld [vmem:[%s230 + $0xb0] sm:$0xff]
      %v287 = vld [vmem:[%s230 + $0xb8] sm:$0xff]
      %v292 = vunpack.c.l.b16 %v260
      %v293 = vunpack.c.h.b16 %v260
      %v294 = vunpack.c.l.b16 %v261
      %v295 = vunpack.c.h.b16 %v261
      %v296 = vunpack.c.l.b16 %v262
      %v297 = vunpack.c.h.b16 %v262
      %v298 = vunpack.c.l.b16 %v263
      %v299 = vunpack.c.h.b16 %v263
      %v300 = vpack.c.b16 %v296, %v292
      %v301 = vpack.c.b16 %v297, %v293
      %v302 = vpack.c.b16 %v298, %v294
      %v303 = vpack.c.b16 %v299, %v295
      %v320 = vunpack.c.l.b16 %v264
      %v321 = vunpack.c.h.b16 %v264
      %v322 = vunpack.c.l.b16 %v265
      %v323 = vunpack.c.h.b16 %v265
      %v324 = vunpack.c.l.b16 %v268
      %v325 = vunpack.c.h.b16 %v268
      %v326 = vunpack.c.l.b16 %v269
      %v327 = vunpack.c.h.b16 %v269
      %v328 = vunpack.c.l.b16 %v272
      %v329 = vunpack.c.h.b16 %v272
      %v330 = vunpack.c.l.b16 %v273
      %v331 = vunpack.c.h.b16 %v273
      %v332 = vunpack.c.l.b16 %v276
      %v333 = vunpack.c.h.b16 %v276
      %v334 = vunpack.c.l.b16 %v277
      %v335 = vunpack.c.h.b16 %v277
      %v336 = vunpack.c.l.b16 %v280
      %v337 = vunpack.c.h.b16 %v280
      %v338 = vunpack.c.l.b16 %v281
      %v339 = vunpack.c.h.b16 %v281
      %v340 = vunpack.c.l.b16 %v284
      %v341 = vunpack.c.h.b16 %v284
      %v342 = vunpack.c.l.b16 %v285
      %v343 = vunpack.c.h.b16 %v285
      %v344 = vpack.c.b16 %v324, %v320
      %v345 = vpack.c.b16 %v325, %v321
      %v346 = vpack.c.b16 %v326, %v322
      %v347 = vpack.c.b16 %v327, %v323
      %v348 = vpack.c.b16 %v332, %v328
      %v349 = vpack.c.b16 %v333, %v329
      %v350 = vpack.c.b16 %v334, %v330
      %v351 = vpack.c.b16 %v335, %v331
      %v352 = vpack.c.b16 %v340, %v336
      %v353 = vpack.c.b16 %v341, %v337
      %v354 = vpack.c.b16 %v342, %v338
      %v355 = vpack.c.b16 %v343, %v339
      %368 = vmatprep.subr.bf16.mxu0 0
      %369 = vmatpush1.bf16.xpose.msra.mxu0 0
      %370 = vmatprep.subr.bf16.mxu0 0
      %371 = vmatpush1.bf16.xpose.msra.mxu0 0
      %372 = vmatprep.subr.bf16.mxu0 0
      %373 = vmatpush1.bf16.xpose.msra.mxu0 0
      %374 = vmatprep.subr.bf16.mxu0 0
      %375 = vmatpush1.bf16.xpose.msra.mxu0 0
      %376 = vmatprep.subr.bf16.mxu0 0
      %377 = vmatpush1.bf16.xpose.msra.mxu0 0
      %378 = vmatprep.subr.bf16.mxu0 %v353
      %379 = vmatpush1.bf16.xpose.msra.mxu0 %v352
      %380 = vmatprep.subr.bf16.mxu0 %v349
      %381 = vmatpush1.bf16.xpose.msra.mxu0 %v348
      %382 = vmatprep.subr.bf16.mxu0 %v345
      %383 = vmatpush1.bf16.xpose.msra.mxu0 %v344
      %384 = vmatprep.subr.bf16.mxu0 0
      %385 = vmatpush2.bf16.xpose.msra.mxu0 0
      %386 = vmatprep.subr.bf16.mxu0 0
      %387 = vmatpush2.bf16.xpose.msra.mxu0 0
      %388 = vmatprep.subr.bf16.mxu0 0
      %389 = vmatpush2.bf16.xpose.msra.mxu0 0
      %390 = vmatprep.subr.bf16.mxu0 0
      %391 = vmatpush2.bf16.xpose.msra.mxu0 0
      %392 = vmatprep.subr.bf16.mxu0 0
      %393 = vmatpush2.bf16.xpose.msra.mxu0 0
      %394 = vmatprep.subr.bf16.mxu0 0
      %395 = vmatpush2.bf16.xpose.msra.mxu0 0
      %396 = vmatprep.subr.bf16.mxu0 0
      %397 = vmatpush2.bf16.xpose.msra.mxu0 0
      %398 = vmatprep.subr.bf16.mxu0 0
      %399 = vmatpush2.bf16.xpose.msra.mxu0 0
      %400 = vmatprep.mubr.bf16.mxu0 %v301
      %401 = vmatmul.mubr.bf16.gmra.mxu0 %v300
      %v402 = vpop.f32.mrf.mxu0
      %v403 = vadd.f32 0.0, %v402
      %v404 = vpop.f32.mrf.mxu0
      %v405 = vpop.f32.mrf.mxu0
      %v406 = vadd.f32 0.0, %v405
      %v407 = vpop.f32.mrf.mxu0
      %408 = vdwg.mxu0
      %409 = vmatprep.subr.bf16.mxu0 0
      %410 = vmatpush1.bf16.xpose.msra.mxu0 0
      %411 = vmatprep.subr.bf16.mxu0 0
      %412 = vmatpush1.bf16.xpose.msra.mxu0 0
      %413 = vmatprep.subr.bf16.mxu0 0
      %414 = vmatpush1.bf16.xpose.msra.mxu0 0
      %415 = vmatprep.subr.bf16.mxu0 0
      %416 = vmatpush1.bf16.xpose.msra.mxu0 0
      %417 = vmatprep.subr.bf16.mxu0 0
      %418 = vmatpush1.bf16.xpose.msra.mxu0 0
      %419 = vmatprep.subr.bf16.mxu0 %v355
      %420 = vmatpush1.bf16.xpose.msra.mxu0 %v354
      %421 = vmatprep.subr.bf16.mxu0 %v351
      %422 = vmatpush1.bf16.xpose.msra.mxu0 %v350
      %423 = vmatprep.subr.bf16.mxu0 %v347
      %424 = vmatpush1.bf16.xpose.msra.mxu0 %v346
      %425 = vmatprep.subr.bf16.mxu0 0
      %426 = vmatpush2.bf16.xpose.msra.mxu0 0
      %427 = vmatprep.subr.bf16.mxu0 0
      %428 = vmatpush2.bf16.xpose.msra.mxu0 0
      %429 = vmatprep.subr.bf16.mxu0 0
      %430 = vmatpush2.bf16.xpose.msra.mxu0 0
      %431 = vmatprep.subr.bf16.mxu0 0
      %432 = vmatpush2.bf16.xpose.msra.mxu0 0
      %433 = vmatprep.subr.bf16.mxu0 0
      %434 = vmatpush2.bf16.xpose.msra.mxu0 0
      %435 = vmatprep.subr.bf16.mxu0 0
      %436 = vmatpush2.bf16.xpose.msra.mxu0 0
      %437 = vmatprep.subr.bf16.mxu0 0
      %438 = vmatpush2.bf16.xpose.msra.mxu0 0
      %439 = vmatprep.subr.bf16.mxu0 0
      %440 = vmatpush2.bf16.xpose.msra.mxu0 0
      %441 = vmatprep.mubr.bf16.mxu0 %v303
      %442 = vmatmul.mubr.bf16.gmra.mxu0 %v302
      %v443 = vpop.f32.mrf.mxu0
      %v444 = vadd.f32 %v403, %v443
      %v445 = vpop.f32.mrf.mxu0
      %v446 = vpop.f32.mrf.mxu0
      %v447 = vadd.f32 %v406, %v446
      %v448 = vpop.f32.mrf.mxu0
      %449 = vdwg.mxu0
      %v450 = vmul.f32 %v444, 0.044194173
      %v451 = vmul.f32 %v447, 0.044194173
      %s452 = smul.u32 %s19, 48
      %v453 = vlaneseq
      %v454 = vand.u32 %v453, 127
      %v455 = vstv %s452
      %v456 = vadd.s32 %v455, %v454
      %vm457 = vcmp.lt.s32.totalorder %v456, 48
      %v458 = vsel %vm457, %v450, -inf
      %v459 = vsel %vm457, %v451, -inf
      %v460 = vld [vmem:[#allocation2] sm:$0xff]
      %v461 = vld [vmem:[#allocation2 + $0x8] sm:$0xff]
      %vm462 = vcmask 392192
      %v463 = vsel %vm462, %v458, -inf
      %464 = vmax.xlane.f32.xlu0 %v463
      %v465 = vpop.xlane.xlu0 %464
      %v466 = vsel %vm462, %v459, -inf
      %467 = vmax.xlane.f32.xlu0 %v466
      %v468 = vpop.xlane.xlu0 %467
      %v469 = vmax.f32 %v460, %v465
      %v470 = vmax.f32 %v461, %v468
      %v471 = vsub.f32 %v460, %v469
      %v472 = vsub.f32 %v461, %v470
      %v473 = vmul.f32 %v471, 1.442695
      %v474 = vpow.pop %v473
      %v475 = vmul.f32 %v472, 1.442695
      %v476 = vpow.pop %v475
      %478 = vset.pattern.permute.xlu0 0
      %479 = vperm.xlu0 %478, %v469
      %v480 = vpop.permute.xlu0 %479
      %483 = vset.pattern.permute.xlu0 0
      %484 = vperm.xlu0 %483, %v470
      %v485 = vpop.permute.xlu0 %484
      %v487 = vsub.f32 %v458, %v480
      %v488 = vsub.f32 %v459, %v485
      %v489 = vmul.f32 %v487, 1.442695
      %v490 = vpow.pop %v489
      %v491 = vmul.f32 %v488, 1.442695
      %v492 = vpow.pop %v491
      %v493 = vld [vmem:[#allocation3] sm:$0xff]
      %v494 = vld [vmem:[#allocation3 + $0x8] sm:$0xff]
      %v495 = vmul.f32 %v474, %v493
      %v496 = vmul.f32 %v476, %v494
      %v497 = vsel %vm462, %v490, 0.0
      %498 = vadd.xlane.f32.xlu0 %v497
      %v499 = vpop.xlane.xlu0 %498
      %v500 = vsel %vm462, %v492, 0.0
      %501 = vadd.xlane.f32.xlu0 %v500
      %v502 = vpop.xlane.xlu0 %501
      %v503 = vadd.f32 %v495, %v499
      %v504 = vadd.f32 %v496, %v502
      %vm505 = vcmask 7168
      %506 = vst.msk [vmem:[#allocation3] sm:$0xff] %vm505, %v503
      %507 = vst.msk [vmem:[#allocation3 + $0x8] sm:$0xff] %vm505, %v504
      %v508 = vld [vmem:[#allocation4] sm:$0xff]
      %v509 = vld [vmem:[#allocation4 + $0x8] sm:$0xff]
      %v510 = vld [vmem:[#allocation4 + $0x10] sm:$0xff]
      %v511 = vld [vmem:[#allocation4 + $0x18] sm:$0xff]
      %v512 = vld [vmem:[#allocation4 + $0x20] sm:$0xff]
      %v513 = vld [vmem:[#allocation4 + $0x28] sm:$0xff]
      %v514 = vld [vmem:[#allocation4 + $0x30] sm:$0xff]
      %v515 = vld [vmem:[#allocation4 + $0x38] sm:$0xff]
      %517 = vset.pattern.permute.xlu0 0
      %518 = vperm.xlu0 %517, %v474
      %v519 = vpop.permute.xlu0 %518
      %522 = vset.pattern.permute.xlu0 0
      %523 = vperm.xlu0 %522, %v476
      %v524 = vpop.permute.xlu0 %523
      %v526 = vmul.f32 %v519, %v508
      %v527 = vmul.f32 %v519, %v509
      %v528 = vmul.f32 %v519, %v510
      %v529 = vmul.f32 %v519, %v511
      %v530 = vmul.f32 %v524, %v512
      %v531 = vmul.f32 %v524, %v513
      %v532 = vmul.f32 %v524, %v514
      %v533 = vmul.f32 %v524, %v515
      %v534 = vpack.c.bf16 %v492, %v490
      %v547 = vunpack.c.l.b16 %v266
      %v548 = vunpack.c.h.b16 %v266
      %v549 = vunpack.c.l.b16 %v267
      %v550 = vunpack.c.h.b16 %v267
      %v551 = vunpack.c.l.b16 %v270
      %v552 = vunpack.c.h.b16 %v270
      %v553 = vunpack.c.l.b16 %v271
      %v554 = vunpack.c.h.b16 %v271
      %v555 = vunpack.c.l.b16 %v274
      %v556 = vunpack.c.h.b16 %v274
      %v557 = vunpack.c.l.b16 %v275
      %v558 = vunpack.c.h.b16 %v275
      %v559 = vunpack.c.l.b16 %v278
      %v560 = vunpack.c.h.b16 %v278
      %v561 = vunpack.c.l.b16 %v279
      %v562 = vunpack.c.h.b16 %v279
      %v563 = vunpack.c.l.b16 %v282
      %v564 = vunpack.c.h.b16 %v282
      %v565 = vunpack.c.l.b16 %v283
      %v566 = vunpack.c.h.b16 %v283
      %v567 = vunpack.c.l.b16 %v286
      %v568 = vunpack.c.h.b16 %v286
      %v569 = vunpack.c.l.b16 %v287
      %v570 = vunpack.c.h.b16 %v287
      %v571 = vpack.c.b16 %v551, %v547
      %v572 = vpack.c.b16 %v552, %v548
      %v573 = vpack.c.b16 %v553, %v549
      %v574 = vpack.c.b16 %v554, %v550
      %v575 = vpack.c.b16 %v559, %v555
      %v576 = vpack.c.b16 %v560, %v556
      %v577 = vpack.c.b16 %v561, %v557
      %v578 = vpack.c.b16 %v562, %v558
      %v579 = vpack.c.b16 %v567, %v563
      %v580 = vpack.c.b16 %v568, %v564
      %v581 = vpack.c.b16 %v569, %v565
      %v582 = vpack.c.b16 %v570, %v566
      %v596 = vsel %vm462, %v534, 0
      %598 = vmatprep.subr.bf16.mxu0 0
      %599 = vmatpush1.bf16.msra.mxu0 0
      %600 = vmatprep.subr.bf16.mxu0 0
      %601 = vmatpush1.bf16.msra.mxu0 0
      %602 = vmatprep.subr.bf16.mxu0 0
      %603 = vmatpush1.bf16.msra.mxu0 0
      %604 = vmatprep.subr.bf16.mxu0 0
      %605 = vmatpush1.bf16.msra.mxu0 0
      %606 = vmatprep.subr.bf16.mxu0 0
      %607 = vmatpush1.bf16.msra.mxu0 0
      %608 = vmatprep.subr.bf16.mxu0 %v580
      %609 = vmatpush1.bf16.msra.mxu0 %v579
      %610 = vmatprep.subr.bf16.mxu0 %v576
      %611 = vmatpush1.bf16.msra.mxu0 %v575
      %612 = vmatprep.subr.bf16.mxu0 %v572
      %613 = vmatpush1.bf16.msra.mxu0 %v571
      %614 = vmatprep.subr.bf16.mxu0 0
      %615 = vmatpush2.bf16.msra.mxu0 0
      %616 = vmatprep.subr.bf16.mxu0 0
      %617 = vmatpush2.bf16.msra.mxu0 0
      %618 = vmatprep.subr.bf16.mxu0 0
      %619 = vmatpush2.bf16.msra.mxu0 0
      %620 = vmatprep.subr.bf16.mxu0 0
      %621 = vmatpush2.bf16.msra.mxu0 0
      %622 = vmatprep.subr.bf16.mxu0 0
      %623 = vmatpush2.bf16.msra.mxu0 0
      %624 = vmatprep.subr.bf16.mxu0 0
      %625 = vmatpush2.bf16.msra.mxu0 0
      %626 = vmatprep.subr.bf16.mxu0 0
      %627 = vmatpush2.bf16.msra.mxu0 0
      %628 = vmatprep.subr.bf16.mxu0 0
      %629 = vmatpush2.bf16.msra.mxu0 0
      %630 = vmatprep.mubr.bf16.mxu0 0
      %631 = vmatmul.mubr.bf16.gmra.mxu0 %v596
      %v632 = vpop.f32.mrf.mxu0
      %v633 = vadd.f32 0.0, %v632
      %v634 = vpop.f32.mrf.mxu0
      %v635 = vadd.f32 0.0, %v634
      %v636 = vpop.f32.mrf.mxu0
      %v637 = vadd.f32 0.0, %v636
      %v638 = vpop.f32.mrf.mxu0
      %v639 = vadd.f32 0.0, %v638
      %640 = vdwg.mxu0
      %641 = vmatprep.subr.bf16.mxu0 0
      %642 = vmatpush1.bf16.msra.mxu0 0
      %643 = vmatprep.subr.bf16.mxu0 0
      %644 = vmatpush1.bf16.msra.mxu0 0
      %645 = vmatprep.subr.bf16.mxu0 0
      %646 = vmatpush1.bf16.msra.mxu0 0
      %647 = vmatprep.subr.bf16.mxu0 0
      %648 = vmatpush1.bf16.msra.mxu0 0
      %649 = vmatprep.subr.bf16.mxu0 0
      %650 = vmatpush1.bf16.msra.mxu0 0
      %651 = vmatprep.subr.bf16.mxu0 %v582
      %652 = vmatpush1.bf16.msra.mxu0 %v581
      %653 = vmatprep.subr.bf16.mxu0 %v578
      %654 = vmatpush1.bf16.msra.mxu0 %v577
      %655 = vmatprep.subr.bf16.mxu0 %v574
      %656 = vmatpush1.bf16.msra.mxu0 %v573
      %657 = vmatprep.subr.bf16.mxu0 0
      %658 = vmatpush2.bf16.msra.mxu0 0
      %659 = vmatprep.subr.bf16.mxu0 0
      %660 = vmatpush2.bf16.msra.mxu0 0
      %661 = vmatprep.subr.bf16.mxu0 0
      %662 = vmatpush2.bf16.msra.mxu0 0
      %663 = vmatprep.subr.bf16.mxu0 0
      %664 = vmatpush2.bf16.msra.mxu0 0
      %665 = vmatprep.subr.bf16.mxu0 0
      %666 = vmatpush2.bf16.msra.mxu0 0
      %667 = vmatprep.subr.bf16.mxu0 0
      %668 = vmatpush2.bf16.msra.mxu0 0
      %669 = vmatprep.subr.bf16.mxu0 0
      %670 = vmatpush2.bf16.msra.mxu0 0
      %671 = vmatprep.subr.bf16.mxu0 0
      %672 = vmatpush2.bf16.msra.mxu0 0
      %673 = vmatprep.mubr.bf16.mxu0 0
      %674 = vmatmul.mubr.bf16.gmra.mxu0 %v596
      %v675 = vpop.f32.mrf.mxu0
      %v676 = vadd.f32 0.0, %v675
      %v677 = vpop.f32.mrf.mxu0
      %v678 = vadd.f32 0.0, %v677
      %v679 = vpop.f32.mrf.mxu0
      %v680 = vadd.f32 0.0, %v679
      %v681 = vpop.f32.mrf.mxu0
      %v682 = vadd.f32 0.0, %v681
      %683 = vdwg.mxu0
      %v684 = vadd.f32 %v526, %v633
      %v685 = vadd.f32 %v527, %v635
      %v686 = vadd.f32 %v528, %v676
      %v687 = vadd.f32 %v529, %v678
      %v688 = vadd.f32 %v530, %v637
      %v689 = vadd.f32 %v531, %v639
      %v690 = vadd.f32 %v532, %v680
      %v691 = vadd.f32 %v533, %v682
      %692 = vst [vmem:[#allocation4] sm:$0xff] %v684
      %693 = vst [vmem:[#allocation4 + $0x8] sm:$0xff] %v685
      %694 = vst [vmem:[#allocation4 + $0x10] sm:$0xff] %v686
      %695 = vst [vmem:[#allocation4 + $0x18] sm:$0xff] %v687
      %696 = vst [vmem:[#allocation4 + $0x20] sm:$0xff] %v688
      %697 = vst [vmem:[#allocation4 + $0x28] sm:$0xff] %v689
      %698 = vst [vmem:[#allocation4 + $0x30] sm:$0xff] %v690
      %699 = vst [vmem:[#allocation4 + $0x38] sm:$0xff] %v691
      %700 = vst.msk [vmem:[#allocation2] sm:$0xff] %vm505, %v469
      %701 = vst.msk [vmem:[#allocation2 + $0x8] sm:$0xff] %vm505, %v470
      // Predicated region
      $region37: #{custom_model_forward.13} parent=31 // pred_check
        %p702 = pneg %p243
      $region38: #{custom_model_forward.13} parent=31 // pred_check_branch
        %704 = sbr.rel (%p702) target = $region40
      $region39: #{custom_model_forward.13} parent=31 // pred_region
        %v705 = vld [vmem:[#allocation4] sm:$0xff]
        %v706 = vld [vmem:[#allocation4 + $0x8] sm:$0xff]
        %v707 = vld [vmem:[#allocation4 + $0x10] sm:$0xff]
        %v708 = vld [vmem:[#allocation4 + $0x18] sm:$0xff]
        %v709 = vld [vmem:[#allocation4 + $0x20] sm:$0xff]
        %v710 = vld [vmem:[#allocation4 + $0x28] sm:$0xff]
        %v711 = vld [vmem:[#allocation4 + $0x30] sm:$0xff]
        %v712 = vld [vmem:[#allocation4 + $0x38] sm:$0xff]
        %v713 = vld [vmem:[#allocation3] sm:$0xff]
        %v714 = vld [vmem:[#allocation3 + $0x8] sm:$0xff]
        %716 = vset.pattern.permute.xlu0 0
        %717 = vperm.xlu0 %716, %v713
        %v718 = vpop.permute.xlu0 %717
        %721 = vset.pattern.permute.xlu0 0
        %722 = vperm.xlu0 %721, %v714
        %v723 = vpop.permute.xlu0 %722
        %v725 = vrcp.pop %v718
        %v726 = vmul.f32 %v705, %v725
        %v727 = vmul.f32 %v706, %v725
        %v728 = vmul.f32 %v707, %v725
        %v729 = vmul.f32 %v708, %v725
        %v730 = vrcp.pop %v723
        %v731 = vmul.f32 %v709, %v730
        %v732 = vmul.f32 %v710, %v730
        %v733 = vmul.f32 %v711, %v730
        %v734 = vmul.f32 %v712, %v730
        %v735 = vld [vmem:[%s236] sm:$0xff]
        %v736 = vld [vmem:[%s236 + $0x8] sm:$0xff]
        %v737 = vld [vmem:[%s236 + $0x10] sm:$0xff]
        %v738 = vld [vmem:[%s236 + $0x18] sm:$0xff]
        %v739 = vunpack.c.l.bf16 %v735
        %v740 = vunpack.c.h.bf16 %v735
        %v741 = vunpack.c.l.bf16 %v736
        %v742 = vunpack.c.h.bf16 %v736
        %v743 = vunpack.c.l.bf16 %v737
        %v744 = vunpack.c.h.bf16 %v737
        %v745 = vunpack.c.l.bf16 %v738
        %v746 = vunpack.c.h.bf16 %v738
        %v747 = vadd.f32 %v726, %v739
        %v748 = vadd.f32 %v727, %v740
        %v749 = vadd.f32 %v728, %v741
        %v750 = vadd.f32 %v729, %v742
        %v751 = vadd.f32 %v731, %v743
        %v752 = vadd.f32 %v732, %v744
        %v753 = vadd.f32 %v733, %v745
        %v754 = vadd.f32 %v734, %v746
        %v755 = vpack.c.bf16 %v751, %v747
        %v756 = vpack.c.bf16 %v752, %v748
        %v757 = vpack.c.bf16 %v753, %v749
        %v758 = vpack.c.bf16 %v754, %v750
        %v763 = vunpack.c.l.b16 %v755
        %v764 = vunpack.c.l.b16 %v756
        %v765 = vunpack.c.l.b16 %v757
        %v766 = vunpack.c.l.b16 %v758
        %v767 = vunpack.c.h.b16 %v755
        %v768 = vunpack.c.h.b16 %v756
        %v769 = vunpack.c.h.b16 %v757
        %v770 = vunpack.c.h.b16 %v758
        %v771 = vpack.c.b16 %v764, %v763
        %v772 = vpack.c.b16 %v766, %v765
        %v773 = vpack.c.b16 %v768, %v767
        %v774 = vpack.c.b16 %v770, %v769
        %779 = vst [vmem:[%s241] sm:$0xff] %v771
        %780 = vst [vmem:[%s241 + $0x8] sm:$0xff] %v772
        %781 = vst [vmem:[%s241 + $0x10] sm:$0xff] %v773
        %782 = vst [vmem:[%s241 + $0x18] sm:$0xff] %v774
      $region40: #{custom_model_forward.13} parent=31 // pred_fallthru
        _
      %p783 = scmp.lt.s32.totalorder %s18, 1
      %s784 = scalar_select %p783, %s18, 1
      %s785 = smul.addr %s784, 8
      %s786 = smul.addr %s785, 4
      %s787 = scalar_lea.vmem %s3, %s786
      // Predicated region
      $region41: #{custom_model_forward.13} parent=31 // pred_check
        %p788 = pneg %p124
      $region42: #{custom_model_forward.13} parent=31 // pred_check_branch
        %790 = sbr.rel (%p788) target = $region44
      $region43: #{custom_model_forward.13} parent=31 // pred_region
        _
      $region44: #{custom_model_forward.13} parent=31 // pred_fallthru
        _
    $region32: #{custom_model_forward.13} parent=5 // pred_fallthru
      _
    %p791 = scmp.le.s32.totalorder 2, %s9
    // Predicated region
    $region45: #{custom_model_forward.13} parent=5 // pred_check
      %p792 = pneg %p791
    $region46: #{custom_model_forward.13} parent=5 // pred_check_branch
      %794 = sbr.rel (%p792) target = $region48
    $region47: #{custom_model_forward.13} parent=5 // pred_region
      %s795 = ssub.s32 %s9, 2
      // Predicated region
      $region49: #{custom_model_forward.13} parent=47 // pred_check
        %p796 = pneg %p130
      $region50: #{custom_model_forward.13} parent=47 // pred_check_branch
        %798 = sbr.rel (%p796) target = $region52
      $region51: #{custom_model_forward.13} parent=47 // pred_region
        %p799 = scmp.lt.s32.totalorder %s20, 1
        %s800 = scalar_select %p799, %s20, 1
        %s801 = smul.addr %s800, 8
        %s802 = smul.addr %s801, 4
        %s803 = scalar_lea.vmem %s3, %s802
      $region52: #{custom_model_forward.13} parent=47 // pred_fallthru
        _
    $region48: #{custom_model_forward.13} parent=5 // pred_fallthru
      _
  $region6: #{custom_model_forward.13} parent=0 // loop_footer
    %s13 = sadd.s32 1, %s9
  $region7: #{custom_model_forward.13} parent=0 // loop_footer_branch
    %8 = sbr.rel target = $region3
  $region8: #{custom_model_forward.13} parent=0 // loop_exit
    _

// kernel: custom_model_forward.12
$region0: #{custom_model_forward.12}
  #allocation0 [shape = 'u32[]', space=smem, size = 0x4, offset = 0x4, fixed_abs, tag = 'smem constant byte address 0x4 - core index']
  #allocation1 [shape = 'u32[144,128]{1,0:T(1,128)}', space=vmem, size = 0x12000, scoped, tag = 'internal scratch']
  %s0 = inlined_call_operand.vmem [shape: bf16[96,512], index: 0, kind: input, shape index: {}]
  %s1 = inlined_call_operand.vmem [shape: bf16[512,1024], index: 1, kind: input, shape index: {}]
  %s2 = inlined_call_operand.vmem [shape: f32[1,1024], index: 2, kind: input, shape index: {}]
  %s3 = inlined_call_operand.vmem [shape: bf16[96,1024], index: 3, kind: output, shape index: {}]
  %s4 = sld [smem:[#allocation0]]
  $region22: #{custom_model_forward.12} parent=0
    _
  %s6 = ssub.s32 1, %s4
  %s7 = scalar_select 0, %s6, %s4
  // Predicated region
  $region2: #{custom_model_forward.12} parent=0 // pred_check
    _
  $region3: #{custom_model_forward.12} parent=0 // pred_check_branch
    %9 = sbr.rel (0) target = $region5
  $region4: #{custom_model_forward.12} parent=0 // pred_region
    _
  $region5: #{custom_model_forward.12} parent=0 // pred_fallthru
    _
  // Predicated region
  $region6: #{custom_model_forward.12} parent=0 // pred_check
    _
  $region7: #{custom_model_forward.12} parent=0 // pred_check_branch
    %11 = sbr.rel (0) target = $region9
  $region8: #{custom_model_forward.12} parent=0 // pred_region
    _
  $region9: #{custom_model_forward.12} parent=0 // pred_fallthru
    _
  // Predicated region
  $region10: #{custom_model_forward.12} parent=0 // pred_check
    _
  $region11: #{custom_model_forward.12} parent=0 // pred_check_branch
    %13 = sbr.rel (0) target = $region13
  $region12: #{custom_model_forward.12} parent=0 // pred_region
    _
  $region13: #{custom_model_forward.12} parent=0 // pred_fallthru
    _
  %v14 = vld [vmem:[%s0] sm:$0xff]
  %v15 = vld [vmem:[%s0 + $0x8] sm:$0xff]
  %v16 = vld [vmem:[%s0 + $0x10] sm:$0xff]
  %v17 = vld [vmem:[%s0 + $0x18] sm:$0xff]
  %v18 = vld [vmem:[%s0 + $0x20] sm:$0xff]
  %v19 = vld [vmem:[%s0 + $0x28] sm:$0xff]
  %v20 = vld [vmem:[%s0 + $0x30] sm:$0xff]
  %v21 = vld [vmem:[%s0 + $0x38] sm:$0xff]
  %v22 = vld [vmem:[%s0 + $0x40] sm:$0xff]
  %v23 = vld [vmem:[%s0 + $0x48] sm:$0xff]
  %v24 = vld [vmem:[%s0 + $0x50] sm:$0xff]
  %v25 = vld [vmem:[%s0 + $0x58] sm:$0xff]
  %v26 = vld [vmem:[%s0 + $0x60] sm:$0xff]
  %v27 = vld [vmem:[%s0 + $0x68] sm:$0xff]
  %v28 = vld [vmem:[%s0 + $0x70] sm:$0xff]
  %v29 = vld [vmem:[%s0 + $0x78] sm:$0xff]
  %v30 = vld [vmem:[%s0 + $0x80] sm:$0xff]
  %v31 = vld [vmem:[%s0 + $0x88] sm:$0xff]
  %v32 = vld [vmem:[%s0 + $0x90] sm:$0xff]
  %v33 = vld [vmem:[%s0 + $0x98] sm:$0xff]
  %v34 = vld [vmem:[%s0 + $0xa0] sm:$0xff]
  %v35 = vld [vmem:[%s0 + $0xa8] sm:$0xff]
  %v36 = vld [vmem:[%s0 + $0xb0] sm:$0xff]
  %v37 = vld [vmem:[%s0 + $0xb8] sm:$0xff]
  %v38 = vld [vmem:[%s1] sm:$0xff]
  %v39 = vld [vmem:[%s1 + $0x8] sm:$0xff]
  %v40 = vld [vmem:[%s1 + $0x10] sm:$0xff]
  %v41 = vld [vmem:[%s1 + $0x18] sm:$0xff]
  %v42 = vld [vmem:[%s1 + $0x20] sm:$0xff]
  %v43 = vld [vmem:[%s1 + $0x28] sm:$0xff]
  %v44 = vld [vmem:[%s1 + $0x30] sm:$0xff]
  %v45 = vld [vmem:[%s1 + $0x38] sm:$0xff]
  %v46 = vld [vmem:[%s1 + $0x40] sm:$0xff]
  %v47 = vld [vmem:[%s1 + $0x48] sm:$0xff]
  %v48 = vld [vmem:[%s1 + $0x50] sm:$0xff]
  %v49 = vld [vmem:[%s1 + $0x58] sm:$0xff]
  %v50 = vld [vmem:[%s1 + $0x60] sm:$0xff]
  %v51 = vld [vmem:[%s1 + $0x68] sm:$0xff]
  %v52 = vld [vmem:[%s1 + $0x70] sm:$0xff]
  %v53 = vld [vmem:[%s1 + $0x78] sm:$0xff]
  %v54 = vld [vmem:[%s1 + $0x80] sm:$0xff]
  %v55 = vld [vmem:[%s1 + $0x88] sm:$0xff]
  %v56 = vld [vmem:[%s1 + $0x90] sm:$0xff]
  %v57 = vld [vmem:[%s1 + $0x98] sm:$0xff]
  %v58 = vld [vmem:[%s1 + $0xa0] sm:$0xff]
  %v59 = vld [vmem:[%s1 + $0xa8] sm:$0xff]
  %v60 = vld [vmem:[%s1 + $0xb0] sm:$0xff]
  %v61 = vld [vmem:[%s1 + $0xb8] sm:$0xff]
  %v62 = vld [vmem:[%s1 + $0xc0] sm:$0xff]
  %v63 = vld [vmem:[%s1 + $0xc8] sm:$0xff]
  %v64 = vld [vmem:[%s1 + $0xd0] sm:$0xff]
  %v65 = vld [vmem:[%s1 + $0xd8] sm:$0xff]
  %v66 = vld [vmem:[%s1 + $0xe0] sm:$0xff]
  %v67 = vld [vmem:[%s1 + $0xe8] sm:$0xff]
  %v68 = vld [vmem:[%s1 + $0xf0] sm:$0xff]
  %v69 = vld [vmem:[%s1 + $0xf8] sm:$0xff]
  %v70 = vld [vmem:[%s1 + $0x100] sm:$0xff]
  %v71 = vld [vmem:[%s1 + $0x108] sm:$0xff]
  %v72 = vld [vmem:[%s1 + $0x110] sm:$0xff]
  %v73 = vld [vmem:[%s1 + $0x118] sm:$0xff]
  %v74 = vld [vmem:[%s1 + $0x120] sm:$0xff]
  %v75 = vld [vmem:[%s1 + $0x128] sm:$0xff]
  %v76 = vld [vmem:[%s1 + $0x130] sm:$0xff]
  %v77 = vld [vmem:[%s1 + $0x138] sm:$0xff]
  %v78 = vld [vmem:[%s1 + $0x140] sm:$0xff]
  %v79 = vld [vmem:[%s1 + $0x148] sm:$0xff]
  %v80 = vld [vmem:[%s1 + $0x150] sm:$0xff]
  %v81 = vld [vmem:[%s1 + $0x158] sm:$0xff]
  %v82 = vld [vmem:[%s1 + $0x160] sm:$0xff]
  %v83 = vld [vmem:[%s1 + $0x168] sm:$0xff]
  %v84 = vld [vmem:[%s1 + $0x170] sm:$0xff]
  %v85 = vld [vmem:[%s1 + $0x178] sm:$0xff]
  %v86 = vld [vmem:[%s1 + $0x180] sm:$0xff]
  %v87 = vld [vmem:[%s1 + $0x188] sm:$0xff]
  %v88 = vld [vmem:[%s1 + $0x190] sm:$0xff]
  %v89 = vld [vmem:[%s1 + $0x198] sm:$0xff]
  %v90 = vld [vmem:[%s1 + $0x1a0] sm:$0xff]
  %v91 = vld [vmem:[%s1 + $0x1a8] sm:$0xff]
  %v92 = vld [vmem:[%s1 + $0x1b0] sm:$0xff]
  %v93 = vld [vmem:[%s1 + $0x1b8] sm:$0xff]
  %v94 = vld [vmem:[%s1 + $0x1c0] sm:$0xff]
  %v95 = vld [vmem:[%s1 + $0x1c8] sm:$0xff]
  %v96 = vld [vmem:[%s1 + $0x1d0] sm:$0xff]
  %v97 = vld [vmem:[%s1 + $0x1d8] sm:$0xff]
  %v98 = vld [vmem:[%s1 + $0x1e0] sm:$0xff]
  %v99 = vld [vmem:[%s1 + $0x1e8] sm:$0xff]
  %v100 = vld [vmem:[%s1 + $0x1f0] sm:$0xff]
  %v101 = vld [vmem:[%s1 + $0x1f8] sm:$0xff]
  %v102 = vld [vmem:[%s1 + $0x200] sm:$0xff]
  %v103 = vld [vmem:[%s1 + $0x208] sm:$0xff]
  %v104 = vld [vmem:[%s1 + $0x210] sm:$0xff]
  %v105 = vld [vmem:[%s1 + $0x218] sm:$0xff]
  %v106 = vld [vmem:[%s1 + $0x220] sm:$0xff]
  %v107 = vld [vmem:[%s1 + $0x228] sm:$0xff]
  %v108 = vld [vmem:[%s1 + $0x230] sm:$0xff]
  %v109 = vld [vmem:[%s1 + $0x238] sm:$0xff]
  %v110 = vld [vmem:[%s1 + $0x240] sm:$0xff]
  %v111 = vld [vmem:[%s1 + $0x248] sm:$0xff]
  %v112 = vld [vmem:[%s1 + $0x250] sm:$0xff]
  %v113 = vld [vmem:[%s1 + $0x258] sm:$0xff]
  %v114 = vld [vmem:[%s1 + $0x260] sm:$0xff]
  %v115 = vld [vmem:[%s1 + $0x268] sm:$0xff]
  %v116 = vld [vmem:[%s1 + $0x270] sm:$0xff]
  %v117 = vld [vmem:[%s1 + $0x278] sm:$0xff]
  %v118 = vld [vmem:[%s1 + $0x280] sm:$0xff]
  %v119 = vld [vmem:[%s1 + $0x288] sm:$0xff]
  %v120 = vld [vmem:[%s1 + $0x290] sm:$0xff]
  %v121 = vld [vmem:[%s1 + $0x298] sm:$0xff]
  %v122 = vld [vmem:[%s1 + $0x2a0] sm:$0xff]
  %v123 = vld [vmem:[%s1 + $0x2a8] sm:$0xff]
  %v124 = vld [vmem:[%s1 + $0x2b0] sm:$0xff]
  %v125 = vld [vmem:[%s1 + $0x2b8] sm:$0xff]
  %v126 = vld [vmem:[%s1 + $0x2c0] sm:$0xff]
  %v127 = vld [vmem:[%s1 + $0x2c8] sm:$0xff]
  %v128 = vld [vmem:[%s1 + $0x2d0] sm:$0xff]
  %v129 = vld [vmem:[%s1 + $0x2d8] sm:$0xff]
  %v130 = vld [vmem:[%s1 + $0x2e0] sm:$0xff]
  %v131 = vld [vmem:[%s1 + $0x2e8] sm:$0xff]
  %v132 = vld [vmem:[%s1 + $0x2f0] sm:$0xff]
  %v133 = vld [vmem:[%s1 + $0x2f8] sm:$0xff]
  %v134 = vld [vmem:[%s1 + $0x300] sm:$0xff]
  %v135 = vld [vmem:[%s1 + $0x308] sm:$0xff]
  %v136 = vld [vmem:[%s1 + $0x310] sm:$0xff]
  %v137 = vld [vmem:[%s1 + $0x318] sm:$0xff]
  %v138 = vld [vmem:[%s1 + $0x320] sm:$0xff]
  %v139 = vld [vmem:[%s1 + $0x328] sm:$0xff]
  %v140 = vld [vmem:[%s1 + $0x330] sm:$0xff]
  %v141 = vld [vmem:[%s1 + $0x338] sm:$0xff]
  %v142 = vld [vmem:[%s1 + $0x340] sm:$0xff]
  %v143 = vld [vmem:[%s1 + $0x348] sm:$0xff]
  %v144 = vld [vmem:[%s1 + $0x350] sm:$0xff]
  %v145 = vld [vmem:[%s1 + $0x358] sm:$0xff]
  %v146 = vld [vmem:[%s1 + $0x360] sm:$0xff]
  %v147 = vld [vmem:[%s1 + $0x368] sm:$0xff]
  %v148 = vld [vmem:[%s1 + $0x370] sm:$0xff]
  %v149 = vld [vmem:[%s1 + $0x378] sm:$0xff]
  %v150 = vld [vmem:[%s1 + $0x380] sm:$0xff]
  %v151 = vld [vmem:[%s1 + $0x388] sm:$0xff]
  %v152 = vld [vmem:[%s1 + $0x390] sm:$0xff]
  %v153 = vld [vmem:[%s1 + $0x398] sm:$0xff]
  %v154 = vld [vmem:[%s1 + $0x3a0] sm:$0xff]
  %v155 = vld [vmem:[%s1 + $0x3a8] sm:$0xff]
  %v156 = vld [vmem:[%s1 + $0x3b0] sm:$0xff]
  %v157 = vld [vmem:[%s1 + $0x3b8] sm:$0xff]
  %v158 = vld [vmem:[%s1 + $0x3c0] sm:$0xff]
  %v159 = vld [vmem:[%s1 + $0x3c8] sm:$0xff]
  %v160 = vld [vmem:[%s1 + $0x3d0] sm:$0xff]
  %v161 = vld [vmem:[%s1 + $0x3d8] sm:$0xff]
  %v162 = vld [vmem:[%s1 + $0x3e0] sm:$0xff]
  %v163 = vld [vmem:[%s1 + $0x3e8] sm:$0xff]
  %v164 = vld [vmem:[%s1 + $0x3f0] sm:$0xff]
  %v165 = vld [vmem:[%s1 + $0x3f8] sm:$0xff]
  %v166 = vld [vmem:[%s1 + $0x400] sm:$0xff]
  %v167 = vld [vmem:[%s1 + $0x408] sm:$0xff]
  %v168 = vld [vmem:[%s1 + $0x410] sm:$0xff]
  %v169 = vld [vmem:[%s1 + $0x418] sm:$0xff]
  %v170 = vld [vmem:[%s1 + $0x420] sm:$0xff]
  %v171 = vld [vmem:[%s1 + $0x428] sm:$0xff]
  %v172 = vld [vmem:[%s1 + $0x430] sm:$0xff]
  %v173 = vld [vmem:[%s1 + $0x438] sm:$0xff]
  %v174 = vld [vmem:[%s1 + $0x440] sm:$0xff]
  %v175 = vld [vmem:[%s1 + $0x448] sm:$0xff]
  %v176 = vld [vmem:[%s1 + $0x450] sm:$0xff]
  %v177 = vld [vmem:[%s1 + $0x458] sm:$0xff]
  %v178 = vld [vmem:[%s1 + $0x460] sm:$0xff]
  %v179 = vld [vmem:[%s1 + $0x468] sm:$0xff]
  %v180 = vld [vmem:[%s1 + $0x470] sm:$0xff]
  %v181 = vld [vmem:[%s1 + $0x478] sm:$0xff]
  %v182 = vld [vmem:[%s1 + $0x480] sm:$0xff]
  %v183 = vld [vmem:[%s1 + $0x488] sm:$0xff]
  %v184 = vld [vmem:[%s1 + $0x490] sm:$0xff]
  %v185 = vld [vmem:[%s1 + $0x498] sm:$0xff]
  %v186 = vld [vmem:[%s1 + $0x4a0] sm:$0xff]
  %v187 = vld [vmem:[%s1 + $0x4a8] sm:$0xff]
  %v188 = vld [vmem:[%s1 + $0x4b0] sm:$0xff]
  %v189 = vld [vmem:[%s1 + $0x4b8] sm:$0xff]
  %v190 = vld [vmem:[%s1 + $0x4c0] sm:$0xff]
  %v191 = vld [vmem:[%s1 + $0x4c8] sm:$0xff]
  %v192 = vld [vmem:[%s1 + $0x4d0] sm:$0xff]
  %v193 = vld [vmem:[%s1 + $0x4d8] sm:$0xff]
  %v194 = vld [vmem:[%s1 + $0x4e0] sm:$0xff]
  %v195 = vld [vmem:[%s1 + $0x4e8] sm:$0xff]
  %v196 = vld [vmem:[%s1 + $0x4f0] sm:$0xff]
  %v197 = vld [vmem:[%s1 + $0x4f8] sm:$0xff]
  %v198 = vld [vmem:[%s1 + $0x500] sm:$0xff]
  %v199 = vld [vmem:[%s1 + $0x508] sm:$0xff]
  %v200 = vld [vmem:[%s1 + $0x510] sm:$0xff]
  %v201 = vld [vmem:[%s1 + $0x518] sm:$0xff]
  %v202 = vld [vmem:[%s1 + $0x520] sm:$0xff]
  %v203 = vld [vmem:[%s1 + $0x528] sm:$0xff]
  %v204 = vld [vmem:[%s1 + $0x530] sm:$0xff]
  %v205 = vld [vmem:[%s1 + $0x538] sm:$0xff]
  %v206 = vld [vmem:[%s1 + $0x540] sm:$0xff]
  %v207 = vld [vmem:[%s1 + $0x548] sm:$0xff]
  %v208 = vld [vmem:[%s1 + $0x550] sm:$0xff]
  %v209 = vld [vmem:[%s1 + $0x558] sm:$0xff]
  %v210 = vld [vmem:[%s1 + $0x560] sm:$0xff]
  %v211 = vld [vmem:[%s1 + $0x568] sm:$0xff]
  %v212 = vld [vmem:[%s1 + $0x570] sm:$0xff]
  %v213 = vld [vmem:[%s1 + $0x578] sm:$0xff]
  %v214 = vld [vmem:[%s1 + $0x580] sm:$0xff]
  %v215 = vld [vmem:[%s1 + $0x588] sm:$0xff]
  %v216 = vld [vmem:[%s1 + $0x590] sm:$0xff]
  %v217 = vld [vmem:[%s1 + $0x598] sm:$0xff]
  %v218 = vld [vmem:[%s1 + $0x5a0] sm:$0xff]
  %v219 = vld [vmem:[%s1 + $0x5a8] sm:$0xff]
  %v220 = vld [vmem:[%s1 + $0x5b0] sm:$0xff]
  %v221 = vld [vmem:[%s1 + $0x5b8] sm:$0xff]
  %v222 = vld [vmem:[%s1 + $0x5c0] sm:$0xff]
  %v223 = vld [vmem:[%s1 + $0x5c8] sm:$0xff]
  %v224 = vld [vmem:[%s1 + $0x5d0] sm:$0xff]
  %v225 = vld [vmem:[%s1 + $0x5d8] sm:$0xff]
  %v226 = vld [vmem:[%s1 + $0x5e0] sm:$0xff]
  %v227 = vld [vmem:[%s1 + $0x5e8] sm:$0xff]
  %v228 = vld [vmem:[%s1 + $0x5f0] sm:$0xff]
  %v229 = vld [vmem:[%s1 + $0x5f8] sm:$0xff]
  %v230 = vld [vmem:[%s1 + $0x600] sm:$0xff]
  %v231 = vld [vmem:[%s1 + $0x608] sm:$0xff]
  %v232 = vld [vmem:[%s1 + $0x610] sm:$0xff]
  %v233 = vld [vmem:[%s1 + $0x618] sm:$0xff]
  %v234 = vld [vmem:[%s1 + $0x620] sm:$0xff]
  %v235 = vld [vmem:[%s1 + $0x628] sm:$0xff]
  %v236 = vld [vmem:[%s1 + $0x630] sm:$0xff]
  %v237 = vld [vmem:[%s1 + $0x638] sm:$0xff]
  %v238 = vld [vmem:[%s1 + $0x640] sm:$0xff]
  %v239 = vld [vmem:[%s1 + $0x648] sm:$0xff]
  %v240 = vld [vmem:[%s1 + $0x650] sm:$0xff]
  %v241 = vld [vmem:[%s1 + $0x658] sm:$0xff]
  %v242 = vld [vmem:[%s1 + $0x660] sm:$0xff]
  %v243 = vld [vmem:[%s1 + $0x668] sm:$0xff]
  %v244 = vld [vmem:[%s1 + $0x670] sm:$0xff]
  %v245 = vld [vmem:[%s1 + $0x678] sm:$0xff]
  %v246 = vld [vmem:[%s1 + $0x680] sm:$0xff]
  %v247 = vld [vmem:[%s1 + $0x688] sm:$0xff]
  %v248 = vld [vmem:[%s1 + $0x690] sm:$0xff]
  %v249 = vld [vmem:[%s1 + $0x698] sm:$0xff]
  %v250 = vld [vmem:[%s1 + $0x6a0] sm:$0xff]
  %v251 = vld [vmem:[%s1 + $0x6a8] sm:$0xff]
  %v252 = vld [vmem:[%s1 + $0x6b0] sm:$0xff]
  %v253 = vld [vmem:[%s1 + $0x6b8] sm:$0xff]
  %v254 = vld [vmem:[%s1 + $0x6c0] sm:$0xff]
  %v255 = vld [vmem:[%s1 + $0x6c8] sm:$0xff]
  %v256 = vld [vmem:[%s1 + $0x6d0] sm:$0xff]
  %v257 = vld [vmem:[%s1 + $0x6d8] sm:$0xff]
  %v258 = vld [vmem:[%s1 + $0x6e0] sm:$0xff]
  %v259 = vld [vmem:[%s1 + $0x6e8] sm:$0xff]
  %v260 = vld [vmem:[%s1 + $0x6f0] sm:$0xff]
  %v261 = vld [vmem:[%s1 + $0x6f8] sm:$0xff]
  %v262 = vld [vmem:[%s1 + $0x700] sm:$0xff]
  %v263 = vld [vmem:[%s1 + $0x708] sm:$0xff]
  %v264 = vld [vmem:[%s1 + $0x710] sm:$0xff]
  %v265 = vld [vmem:[%s1 + $0x718] sm:$0xff]
  %v266 = vld [vmem:[%s1 + $0x720] sm:$0xff]
  %v267 = vld [vmem:[%s1 + $0x728] sm:$0xff]
  %v268 = vld [vmem:[%s1 + $0x730] sm:$0xff]
  %v269 = vld [vmem:[%s1 + $0x738] sm:$0xff]
  %v270 = vld [vmem:[%s1 + $0x740] sm:$0xff]
  %v271 = vld [vmem:[%s1 + $0x748] sm:$0xff]
  %v272 = vld [vmem:[%s1 + $0x750] sm:$0xff]
  %v273 = vld [vmem:[%s1 + $0x758] sm:$0xff]
  %v274 = vld [vmem:[%s1 + $0x760] sm:$0xff]
  %v275 = vld [vmem:[%s1 + $0x768] sm:$0xff]
  %v276 = vld [vmem:[%s1 + $0x770] sm:$0xff]
  %v277 = vld [vmem:[%s1 + $0x778] sm:$0xff]
  %v278 = vld [vmem:[%s1 + $0x780] sm:$0xff]
  %v279 = vld [vmem:[%s1 + $0x788] sm:$0xff]
  %v280 = vld [vmem:[%s1 + $0x790] sm:$0xff]
  %v281 = vld [vmem:[%s1 + $0x798] sm:$0xff]
  %v282 = vld [vmem:[%s1 + $0x7a0] sm:$0xff]
  %v283 = vld [vmem:[%s1 + $0x7a8] sm:$0xff]
  %v284 = vld [vmem:[%s1 + $0x7b0] sm:$0xff]
  %v285 = vld [vmem:[%s1 + $0x7b8] sm:$0xff]
  %v286 = vld [vmem:[%s1 + $0x7c0] sm:$0xff]
  %v287 = vld [vmem:[%s1 + $0x7c8] sm:$0xff]
  %v288 = vld [vmem:[%s1 + $0x7d0] sm:$0xff]
  %v289 = vld [vmem:[%s1 + $0x7d8] sm:$0xff]
  %v290 = vld [vmem:[%s1 + $0x7e0] sm:$0xff]
  %v291 = vld [vmem:[%s1 + $0x7e8] sm:$0xff]
  %v292 = vld [vmem:[%s1 + $0x7f0] sm:$0xff]
  %v293 = vld [vmem:[%s1 + $0x7f8] sm:$0xff]
  %v294 = vld [vmem:[%s2] sm:$0xff]
  %v296 = vlaneseq
  %v297 = vshrl.u32 %v296, 7
  %v298 = vsub.s32 0, %v297
  %v299 = vrot.slane %v294, %v298
  %v300 = vlaneseq
  %v301 = vshrl.u32 %v300, 7
  %v302 = vsub.s32 1, %v301
  %v303 = vrot.slane %v294, %v302
  %v304 = vlaneseq
  %v305 = vshrl.u32 %v304, 7
  %v306 = vsub.s32 2, %v305
  %v307 = vrot.slane %v294, %v306
  %v308 = vlaneseq
  %v309 = vshrl.u32 %v308, 7
  %v310 = vsub.s32 3, %v309
  %v311 = vrot.slane %v294, %v310
  %v312 = vlaneseq
  %v313 = vshrl.u32 %v312, 7
  %v314 = vsub.s32 4, %v313
  %v315 = vrot.slane %v294, %v314
  %v316 = vlaneseq
  %v317 = vshrl.u32 %v316, 7
  %v318 = vsub.s32 5, %v317
  %v319 = vrot.slane %v294, %v318
  %v320 = vlaneseq
  %v321 = vshrl.u32 %v320, 7
  %v322 = vsub.s32 6, %v321
  %v323 = vrot.slane %v294, %v322
  %v324 = vlaneseq
  %v325 = vshrl.u32 %v324, 7
  %v326 = vsub.s32 7, %v325
  %v327 = vrot.slane %v294, %v326
  %v360 = vunpack.c.l.b16 %v14
  %v361 = vunpack.c.h.b16 %v14
  %v362 = vunpack.c.l.b16 %v15
  %v363 = vunpack.c.h.b16 %v15
  %v364 = vunpack.c.l.b16 %v16
  %v365 = vunpack.c.h.b16 %v16
  %v366 = vunpack.c.l.b16 %v17
  %v367 = vunpack.c.h.b16 %v17
  %v368 = vunpack.c.l.b16 %v18
  %v369 = vunpack.c.h.b16 %v18
  %v370 = vunpack.c.l.b16 %v19
  %v371 = vunpack.c.h.b16 %v19
  %v372 = vunpack.c.l.b16 %v20
  %v373 = vunpack.c.h.b16 %v20
  %v374 = vunpack.c.l.b16 %v21
  %v375 = vunpack.c.h.b16 %v21
  %v376 = vunpack.c.l.b16 %v22
  %v377 = vunpack.c.h.b16 %v22
  %v378 = vunpack.c.l.b16 %v23
  %v379 = vunpack.c.h.b16 %v23
  %v380 = vunpack.c.l.b16 %v24
  %v381 = vunpack.c.h.b16 %v24
  %v382 = vunpack.c.l.b16 %v25
  %v383 = vunpack.c.h.b16 %v25
  %v384 = vunpack.c.l.b16 %v26
  %v385 = vunpack.c.h.b16 %v26
  %v386 = vunpack.c.l.b16 %v27
  %v387 = vunpack.c.h.b16 %v27
  %v388 = vunpack.c.l.b16 %v28
  %v389 = vunpack.c.h.b16 %v28
  %v390 = vunpack.c.l.b16 %v29
  %v391 = vunpack.c.h.b16 %v29
  %v392 = vunpack.c.l.b16 %v30
  %v393 = vunpack.c.h.b16 %v30
  %v394 = vunpack.c.l.b16 %v31
  %v395 = vunpack.c.h.b16 %v31
  %v396 = vunpack.c.l.b16 %v32
  %v397 = vunpack.c.h.b16 %v32
  %v398 = vunpack.c.l.b16 %v33
  %v399 = vunpack.c.h.b16 %v33
  %v400 = vunpack.c.l.b16 %v34
  %v401 = vunpack.c.h.b16 %v34
  %v402 = vunpack.c.l.b16 %v35
  %v403 = vunpack.c.h.b16 %v35
  %v404 = vunpack.c.l.b16 %v36
  %v405 = vunpack.c.h.b16 %v36
  %v406 = vunpack.c.l.b16 %v37
  %v407 = vunpack.c.h.b16 %v37
  %v408 = vpack.c.b16 %v364, %v360
  %v409 = vpack.c.b16 %v365, %v361
  %v410 = vpack.c.b16 %v366, %v362
  %v411 = vpack.c.b16 %v367, %v363
  %v412 = vpack.c.b16 %v372, %v368
  %v413 = vpack.c.b16 %v373, %v369
  %v414 = vpack.c.b16 %v374, %v370
  %v415 = vpack.c.b16 %v375, %v371
  %v416 = vpack.c.b16 %v380, %v376
  %v417 = vpack.c.b16 %v381, %v377
  %v418 = vpack.c.b16 %v382, %v378
  %v419 = vpack.c.b16 %v383, %v379
  %v420 = vpack.c.b16 %v388, %v384
  %v421 = vpack.c.b16 %v389, %v385
  %v422 = vpack.c.b16 %v390, %v386
  %v423 = vpack.c.b16 %v391, %v387
  %v424 = vpack.c.b16 %v396, %v392
  %v425 = vpack.c.b16 %v397, %v393
  %v426 = vpack.c.b16 %v398, %v394
  %v427 = vpack.c.b16 %v399, %v395
  %v428 = vpack.c.b16 %v404, %v400
  %v429 = vpack.c.b16 %v405, %v401
  %v430 = vpack.c.b16 %v406, %v402
  %v431 = vpack.c.b16 %v407, %v403
  %v712 = vunpack.c.l.b16 %v38
  %v713 = vunpack.c.h.b16 %v38
  %v714 = vunpack.c.l.b16 %v39
  %v715 = vunpack.c.h.b16 %v39
  %v716 = vunpack.c.l.b16 %v40
  %v717 = vunpack.c.h.b16 %v40
  %v718 = vunpack.c.l.b16 %v41
  %v719 = vunpack.c.h.b16 %v41
  %v720 = vunpack.c.l.b16 %v42
  %v721 = vunpack.c.h.b16 %v42
  %v722 = vunpack.c.l.b16 %v43
  %v723 = vunpack.c.h.b16 %v43
  %v724 = vunpack.c.l.b16 %v44
  %v725 = vunpack.c.h.b16 %v44
  %v726 = vunpack.c.l.b16 %v45
  %v727 = vunpack.c.h.b16 %v45
  %v728 = vunpack.c.l.b16 %v46
  %v729 = vunpack.c.h.b16 %v46
  %v730 = vunpack.c.l.b16 %v47
  %v731 = vunpack.c.h.b16 %v47
  %v732 = vunpack.c.l.b16 %v48
  %v733 = vunpack.c.h.b16 %v48
  %v734 = vunpack.c.l.b16 %v49
  %v735 = vunpack.c.h.b16 %v49
  %v736 = vunpack.c.l.b16 %v50
  %v737 = vunpack.c.h.b16 %v50
  %v738 = vunpack.c.l.b16 %v51
  %v739 = vunpack.c.h.b16 %v51
  %v740 = vunpack.c.l.b16 %v52
  %v741 = vunpack.c.h.b16 %v52
  %v742 = vunpack.c.l.b16 %v53
  %v743 = vunpack.c.h.b16 %v53
  %v744 = vunpack.c.l.b16 %v54
  %v745 = vunpack.c.h.b16 %v54
  %v746 = vunpack.c.l.b16 %v55
  %v747 = vunpack.c.h.b16 %v55
  %v748 = vunpack.c.l.b16 %v56
  %v749 = vunpack.c.h.b16 %v56
  %v750 = vunpack.c.l.b16 %v57
  %v751 = vunpack.c.h.b16 %v57
  %v752 = vunpack.c.l.b16 %v58
  %v753 = vunpack.c.h.b16 %v58
  %v754 = vunpack.c.l.b16 %v59
  %v755 = vunpack.c.h.b16 %v59
  %v756 = vunpack.c.l.b16 %v60
  %v757 = vunpack.c.h.b16 %v60
  %v758 = vunpack.c.l.b16 %v61
  %v759 = vunpack.c.h.b16 %v61
  %v760 = vunpack.c.l.b16 %v62
  %v761 = vunpack.c.h.b16 %v62
  %v762 = vunpack.c.l.b16 %v63
  %v763 = vunpack.c.h.b16 %v63
  %v764 = vunpack.c.l.b16 %v64
  %v765 = vunpack.c.h.b16 %v64
  %v766 = vunpack.c.l.b16 %v65
  %v767 = vunpack.c.h.b16 %v65
  %v768 = vunpack.c.l.b16 %v66
  %v769 = vunpack.c.h.b16 %v66
  %v770 = vunpack.c.l.b16 %v67
  %v771 = vunpack.c.h.b16 %v67
  %v772 = vunpack.c.l.b16 %v68
  %v773 = vunpack.c.h.b16 %v68
  %v774 = vunpack.c.l.b16 %v69
  %v775 = vunpack.c.h.b16 %v69
  %v776 = vunpack.c.l.b16 %v70
  %v777 = vunpack.c.h.b16 %v70
  %v778 = vunpack.c.l.b16 %v71
  %v779 = vunpack.c.h.b16 %v71
  %v780 = vunpack.c.l.b16 %v72
  %v781 = vunpack.c.h.b16 %v72
  %v782 = vunpack.c.l.b16 %v73
  %v783 = vunpack.c.h.b16 %v73
  %v784 = vunpack.c.l.b16 %v74
  %v785 = vunpack.c.h.b16 %v74
  %v786 = vunpack.c.l.b16 %v75
  %v787 = vunpack.c.h.b16 %v75
  %v788 = vunpack.c.l.b16 %v76
  %v789 = vunpack.c.h.b16 %v76
  %v790 = vunpack.c.l.b16 %v77
  %v791 = vunpack.c.h.b16 %v77
  %v792 = vunpack.c.l.b16 %v78
  %v793 = vunpack.c.h.b16 %v78
  %v794 = vunpack.c.l.b16 %v79
  %v795 = vunpack.c.h.b16 %v79
  %v796 = vunpack.c.l.b16 %v80
  %v797 = vunpack.c.h.b16 %v80
  %v798 = vunpack.c.l.b16 %v81
  %v799 = vunpack.c.h.b16 %v81
  %v800 = vunpack.c.l.b16 %v82
  %v801 = vunpack.c.h.b16 %v82
  %v802 = vunpack.c.l.b16 %v83
  %v803 = vunpack.c.h.b16 %v83
  %v804 = vunpack.c.l.b16 %v84
  %v805 = vunpack.c.h.b16 %v84
  %v806 = vunpack.c.l.b16 %v85
  %v807 = vunpack.c.h.b16 %v85
  %v808 = vunpack.c.l.b16 %v86
  %v809 = vunpack.c.h.b16 %v86
  %v810 = vunpack.c.l.b16 %v87
  %v811 = vunpack.c.h.b16 %v87
  %v812 = vunpack.c.l.b16 %v88
  %v813 = vunpack.c.h.b16 %v88
  %v814 = vunpack.c.l.b16 %v89
  %v815 = vunpack.c.h.b16 %v89
  %v816 = vunpack.c.l.b16 %v90
  %v817 = vunpack.c.h.b16 %v90
  %v818 = vunpack.c.l.b16 %v91
  %v819 = vunpack.c.h.b16 %v91
  %v820 = vunpack.c.l.b16 %v92
  %v821 = vunpack.c.h.b16 %v92
  %v822 = vunpack.c.l.b16 %v93
  %v823 = vunpack.c.h.b16 %v93
  %v824 = vunpack.c.l.b16 %v94
  %v825 = vunpack.c.h.b16 %v94
  %v826 = vunpack.c.l.b16 %v95
  %v827 = vunpack.c.h.b16 %v95
  %v828 = vunpack.c.l.b16 %v96
  %v829 = vunpack.c.h.b16 %v96
  %v830 = vunpack.c.l.b16 %v97
  %v831 = vunpack.c.h.b16 %v97
  %v832 = vunpack.c.l.b16 %v98
  %v833 = vunpack.c.h.b16 %v98
  %v834 = vunpack.c.l.b16 %v99
  %v835 = vunpack.c.h.b16 %v99
  %v836 = vunpack.c.l.b16 %v100
  %v837 = vunpack.c.h.b16 %v100
  %v838 = vunpack.c.l.b16 %v101
  %v839 = vunpack.c.h.b16 %v101
  %v840 = vunpack.c.l.b16 %v102
  %v841 = vunpack.c.h.b16 %v102
  %v842 = vunpack.c.l.b16 %v103
  %v843 = vunpack.c.h.b16 %v103
  %v844 = vunpack.c.l.b16 %v104
  %v845 = vunpack.c.h.b16 %v104
  %v846 = vunpack.c.l.b16 %v105
  %v847 = vunpack.c.h.b16 %v105
  %v848 = vunpack.c.l.b16 %v106
  %v849 = vunpack.c.h.b16 %v106
  %v850 = vunpack.c.l.b16 %v107
  %v851 = vunpack.c.h.b16 %v107
  %v852 = vunpack.c.l.b16 %v108
  %v853 = vunpack.c.h.b16 %v108
  %v854 = vunpack.c.l.b16 %v109
  %v855 = vunpack.c.h.b16 %v109
  %v856 = vunpack.c.l.b16 %v110
  %v857 = vunpack.c.h.b16 %v110
  %v858 = vunpack.c.l.b16 %v111
  %v859 = vunpack.c.h.b16 %v111
  %v860 = vunpack.c.l.b16 %v112
  %v861 = vunpack.c.h.b16 %v112
  %v862 = vunpack.c.l.b16 %v113
  %v863 = vunpack.c.h.b16 %v113
  %v864 = vunpack.c.l.b16 %v114
  %v865 = vunpack.c.h.b16 %v114
  %v866 = vunpack.c.l.b16 %v115
  %v867 = vunpack.c.h.b16 %v115
  %v868 = vunpack.c.l.b16 %v116
  %v869 = vunpack.c.h.b16 %v116
  %v870 = vunpack.c.l.b16 %v117
  %v871 = vunpack.c.h.b16 %v117
  %v872 = vunpack.c.l.b16 %v118
  %v873 = vunpack.c.h.b16 %v118
  %v874 = vunpack.c.l.b16 %v119
  %v875 = vunpack.c.h.b16 %v119
  %v876 = vunpack.c.l.b16 %v120
  %v877 = vunpack.c.h.b16 %v120
  %v878 = vunpack.c.l.b16 %v121
  %v879 = vunpack.c.h.b16 %v121
  %v880 = vunpack.c.l.b16 %v122
  %v881 = vunpack.c.h.b16 %v122
  %v882 = vunpack.c.l.b16 %v123
  %v883 = vunpack.c.h.b16 %v123
  %v884 = vunpack.c.l.b16 %v124
  %v885 = vunpack.c.h.b16 %v124
  %v886 = vunpack.c.l.b16 %v125
  %v887 = vunpack.c.h.b16 %v125
  %v888 = vunpack.c.l.b16 %v126
  %v889 = vunpack.c.h.b16 %v126
  %v890 = vunpack.c.l.b16 %v127
  %v891 = vunpack.c.h.b16 %v127
  %v892 = vunpack.c.l.b16 %v128
  %v893 = vunpack.c.h.b16 %v128
  %v894 = vunpack.c.l.b16 %v129
  %v895 = vunpack.c.h.b16 %v129
  %v896 = vunpack.c.l.b16 %v130
  %v897 = vunpack.c.h.b16 %v130
  %v898 = vunpack.c.l.b16 %v131
  %v899 = vunpack.c.h.b16 %v131
  %v900 = vunpack.c.l.b16 %v132
  %v901 = vunpack.c.h.b16 %v132
  %v902 = vunpack.c.l.b16 %v133
  %v903 = vunpack.c.h.b16 %v133
  %v904 = vunpack.c.l.b16 %v134
  %v905 = vunpack.c.h.b16 %v134
  %v906 = vunpack.c.l.b16 %v135
  %v907 = vunpack.c.h.b16 %v135
  %v908 = vunpack.c.l.b16 %v136
  %v909 = vunpack.c.h.b16 %v136
  %v910 = vunpack.c.l.b16 %v137
  %v911 = vunpack.c.h.b16 %v137
  %v912 = vunpack.c.l.b16 %v138
  %v913 = vunpack.c.h.b16 %v138
  %v914 = vunpack.c.l.b16 %v139
  %v915 = vunpack.c.h.b16 %v139
  %v916 = vunpack.c.l.b16 %v140
  %v917 = vunpack.c.h.b16 %v140
  %v918 = vunpack.c.l.b16 %v141
  %v919 = vunpack.c.h.b16 %v141
  %v920 = vunpack.c.l.b16 %v142
  %v921 = vunpack.c.h.b16 %v142
  %v922 = vunpack.c.l.b16 %v143
  %v923 = vunpack.c.h.b16 %v143
  %v924 = vunpack.c.l.b16 %v144
  %v925 = vunpack.c.h.b16 %v144
  %v926 = vunpack.c.l.b16 %v145
  %v927 = vunpack.c.h.b16 %v145
  %v928 = vunpack.c.l.b16 %v146
  %v929 = vunpack.c.h.b16 %v146
  %v930 = vunpack.c.l.b16 %v147
  %v931 = vunpack.c.h.b16 %v147
  %v932 = vunpack.c.l.b16 %v148
  %v933 = vunpack.c.h.b16 %v148
  %v934 = vunpack.c.l.b16 %v149
  %v935 = vunpack.c.h.b16 %v149
  %v936 = vunpack.c.l.b16 %v150
  %v937 = vunpack.c.h.b16 %v150
  %v938 = vunpack.c.l.b16 %v151
  %v939 = vunpack.c.h.b16 %v151
  %v940 = vunpack.c.l.b16 %v152
  %v941 = vunpack.c.h.b16 %v152
  %v942 = vunpack.c.l.b16 %v153
  %v943 = vunpack.c.h.b16 %v153
  %v944 = vunpack.c.l.b16 %v154
  %v945 = vunpack.c.h.b16 %v154
  %v946 = vunpack.c.l.b16 %v155
  %v947 = vunpack.c.h.b16 %v155
  %v948 = vunpack.c.l.b16 %v156
  %v949 = vunpack.c.h.b16 %v156
  %v950 = vunpack.c.l.b16 %v157
  %v951 = vunpack.c.h.b16 %v157
  %v952 = vunpack.c.l.b16 %v158
  %v953 = vunpack.c.h.b16 %v158
  %v954 = vunpack.c.l.b16 %v159
  %v955 = vunpack.c.h.b16 %v159
  %v956 = vunpack.c.l.b16 %v160
  %v957 = vunpack.c.h.b16 %v160
  %v958 = vunpack.c.l.b16 %v161
  %v959 = vunpack.c.h.b16 %v161
  %v960 = vunpack.c.l.b16 %v162
  %v961 = vunpack.c.h.b16 %v162
  %v962 = vunpack.c.l.b16 %v163
  %v963 = vunpack.c.h.b16 %v163
  %v964 = vunpack.c.l.b16 %v164
  %v965 = vunpack.c.h.b16 %v164
  %v966 = vunpack.c.l.b16 %v165
  %v967 = vunpack.c.h.b16 %v165
  %v968 = vunpack.c.l.b16 %v166
  %v969 = vunpack.c.h.b16 %v166
  %v970 = vunpack.c.l.b16 %v167
  %v971 = vunpack.c.h.b16 %v167
  %v972 = vunpack.c.l.b16 %v168
  %v973 = vunpack.c.h.b16 %v168
  %v974 = vunpack.c.l.b16 %v169
  %v975 = vunpack.c.h.b16 %v169
  %v976 = vunpack.c.l.b16 %v170
  %v977 = vunpack.c.h.b16 %v170
  %v978 = vunpack.c.l.b16 %v171
  %v979 = vunpack.c.h.b16 %v171
  %v980 = vunpack.c.l.b16 %v172
  %v981 = vunpack.c.h.b16 %v172
  %v982 = vunpack.c.l.b16 %v173
  %v983 = vunpack.c.h.b16 %v173
  %v984 = vunpack.c.l.b16 %v174
  %v985 = vunpack.c.h.b16 %v174
  %v986 = vunpack.c.l.b16 %v175
  %v987 = vunpack.c.h.b16 %v175
  %v988 = vunpack.c.l.b16 %v176
  %v989 = vunpack.c.h.b16 %v176
  %v990 = vunpack.c.l.b16 %v177
  %v991 = vunpack.c.h.b16 %v177
  %v992 = vunpack.c.l.b16 %v178
  %v993 = vunpack.c.h.b16 %v178
  %v994 = vunpack.c.l.b16 %v179
  %v995 = vunpack.c.h.b16 %v179
  %v996 = vunpack.c.l.b16 %v180
  %v997 = vunpack.c.h.b16 %v180
  %v998 = vunpack.c.l.b16 %v181
  %v999 = vunpack.c.h.b16 %v181
  %v1000 = vunpack.c.l.b16 %v182
  %v1001 = vunpack.c.h.b16 %v182
  %v1002 = vunpack.c.l.b16 %v183
  %v1003 = vunpack.c.h.b16 %v183
  %v1004 = vunpack.c.l.b16 %v184
  %v1005 = vunpack.c.h.b16 %v184
  %v1006 = vunpack.c.l.b16 %v185
  %v1007 = vunpack.c.h.b16 %v185
  %v1008 = vunpack.c.l.b16 %v186
  %v1009 = vunpack.c.h.b16 %v186
  %v1010 = vunpack.c.l.b16 %v187
  %v1011 = vunpack.c.h.b16 %v187
  %v1012 = vunpack.c.l.b16 %v188
  %v1013 = vunpack.c.h.b16 %v188
  %v1014 = vunpack.c.l.b16 %v189
  %v1015 = vunpack.c.h.b16 %v189
  %v1016 = vunpack.c.l.b16 %v190
  %v1017 = vunpack.c.h.b16 %v190
  %v1018 = vunpack.c.l.b16 %v191
  %v1019 = vunpack.c.h.b16 %v191
  %v1020 = vunpack.c.l.b16 %v192
  %v1021 = vunpack.c.h.b16 %v192
  %v1022 = vunpack.c.l.b16 %v193
  %v1023 = vunpack.c.h.b16 %v193
  %v1024 = vunpack.c.l.b16 %v194
  %v1025 = vunpack.c.h.b16 %v194
  %v1026 = vunpack.c.l.b16 %v195
  %v1027 = vunpack.c.h.b16 %v195
  %v1028 = vunpack.c.l.b16 %v196
  %v1029 = vunpack.c.h.b16 %v196
  %v1030 = vunpack.c.l.b16 %v197
  %v1031 = vunpack.c.h.b16 %v197
  %v1032 = vunpack.c.l.b16 %v198
  %v1033 = vunpack.c.h.b16 %v198
  %v1034 = vunpack.c.l.b16 %v199
  %v1035 = vunpack.c.h.b16 %v199
  %v1036 = vunpack.c.l.b16 %v200
  %v1037 = vunpack.c.h.b16 %v200
  %v1038 = vunpack.c.l.b16 %v201
  %v1039 = vunpack.c.h.b16 %v201
  %v1040 = vunpack.c.l.b16 %v202
  %v1041 = vunpack.c.h.b16 %v202
  %v1042 = vunpack.c.l.b16 %v203
  %v1043 = vunpack.c.h.b16 %v203
  %v1044 = vunpack.c.l.b16 %v204
  %v1045 = vunpack.c.h.b16 %v204
  %v1046 = vunpack.c.l.b16 %v205
  %v1047 = vunpack.c.h.b16 %v205
  %v1048 = vunpack.c.l.b16 %v206
  %v1049 = vunpack.c.h.b16 %v206
  %v1050 = vunpack.c.l.b16 %v207
  %v1051 = vunpack.c.h.b16 %v207
  %v1052 = vunpack.c.l.b16 %v208
  %v1053 = vunpack.c.h.b16 %v208
  %v1054 = vunpack.c.l.b16 %v209
  %v1055 = vunpack.c.h.b16 %v209
  %v1056 = vunpack.c.l.b16 %v210
  %v1057 = vunpack.c.h.b16 %v210
  %v1058 = vunpack.c.l.b16 %v211
  %v1059 = vunpack.c.h.b16 %v211
  %v1060 = vunpack.c.l.b16 %v212
  %v1061 = vunpack.c.h.b16 %v212
  %v1062 = vunpack.c.l.b16 %v213
  %v1063 = vunpack.c.h.b16 %v213
  %v1064 = vunpack.c.l.b16 %v214
  %v1065 = vunpack.c.h.b16 %v214
  %v1066 = vunpack.c.l.b16 %v215
  %v1067 = vunpack.c.h.b16 %v215
  %v1068 = vunpack.c.l.b16 %v216
  %v1069 = vunpack.c.h.b16 %v216
  %v1070 = vunpack.c.l.b16 %v217
  %v1071 = vunpack.c.h.b16 %v217
  %v1072 = vunpack.c.l.b16 %v218
  %v1073 = vunpack.c.h.b16 %v218
  %v1074 = vunpack.c.l.b16 %v219
  %v1075 = vunpack.c.h.b16 %v219
  %v1076 = vunpack.c.l.b16 %v220
  %v1077 = vunpack.c.h.b16 %v220
  %v1078 = vunpack.c.l.b16 %v221
  %v1079 = vunpack.c.h.b16 %v221
  %v1080 = vunpack.c.l.b16 %v222
  %v1081 = vunpack.c.h.b16 %v222
  %v1082 = vunpack.c.l.b16 %v223
  %v1083 = vunpack.c.h.b16 %v223
  %v1084 = vunpack.c.l.b16 %v224
  %v1085 = vunpack.c.h.b16 %v224
  %v1086 = vunpack.c.l.b16 %v225
  %v1087 = vunpack.c.h.b16 %v225
  %v1088 = vunpack.c.l.b16 %v226
  %v1089 = vunpack.c.h.b16 %v226
  %v1090 = vunpack.c.l.b16 %v227
  %v1091 = vunpack.c.h.b16 %v227
  %v1092 = vunpack.c.l.b16 %v228
  %v1093 = vunpack.c.h.b16 %v228
  %v1094 = vunpack.c.l.b16 %v229
  %v1095 = vunpack.c.h.b16 %v229
  %v1096 = vunpack.c.l.b16 %v230
  %v1097 = vunpack.c.h.b16 %v230
  %v1098 = vunpack.c.l.b16 %v231
  %v1099 = vunpack.c.h.b16 %v231
  %v1100 = vunpack.c.l.b16 %v232
  %v1101 = vunpack.c.h.b16 %v232
  %v1102 = vunpack.c.l.b16 %v233
  %v1103 = vunpack.c.h.b16 %v233
  %v1104 = vunpack.c.l.b16 %v234
  %v1105 = vunpack.c.h.b16 %v234
  %v1106 = vunpack.c.l.b16 %v235
  %v1107 = vunpack.c.h.b16 %v235
  %v1108 = vunpack.c.l.b16 %v236
  %v1109 = vunpack.c.h.b16 %v236
  %v1110 = vunpack.c.l.b16 %v237
  %v1111 = vunpack.c.h.b16 %v237
  %v1112 = vunpack.c.l.b16 %v238
  %v1113 = vunpack.c.h.b16 %v238
  %v1114 = vunpack.c.l.b16 %v239
  %v1115 = vunpack.c.h.b16 %v239
  %v1116 = vunpack.c.l.b16 %v240
  %v1117 = vunpack.c.h.b16 %v240
  %v1118 = vunpack.c.l.b16 %v241
  %v1119 = vunpack.c.h.b16 %v241
  %v1120 = vunpack.c.l.b16 %v242
  %v1121 = vunpack.c.h.b16 %v242
  %v1122 = vunpack.c.l.b16 %v243
  %v1123 = vunpack.c.h.b16 %v243
  %v1124 = vunpack.c.l.b16 %v244
  %v1125 = vunpack.c.h.b16 %v244
  %v1126 = vunpack.c.l.b16 %v245
  %v1127 = vunpack.c.h.b16 %v245
  %v1128 = vunpack.c.l.b16 %v246
  %v1129 = vunpack.c.h.b16 %v246
  %v1130 = vunpack.c.l.b16 %v247
  %v1131 = vunpack.c.h.b16 %v247
  %v1132 = vunpack.c.l.b16 %v248
  %v1133 = vunpack.c.h.b16 %v248
  %v1134 = vunpack.c.l.b16 %v249
  %v1135 = vunpack.c.h.b16 %v249
  %v1136 = vunpack.c.l.b16 %v250
  %v1137 = vunpack.c.h.b16 %v250
  %v1138 = vunpack.c.l.b16 %v251
  %v1139 = vunpack.c.h.b16 %v251
  %v1140 = vunpack.c.l.b16 %v252
  %v1141 = vunpack.c.h.b16 %v252
  %v1142 = vunpack.c.l.b16 %v253
  %v1143 = vunpack.c.h.b16 %v253
  %v1144 = vunpack.c.l.b16 %v254
  %v1145 = vunpack.c.h.b16 %v254
  %v1146 = vunpack.c.l.b16 %v255
  %v1147 = vunpack.c.h.b16 %v255
  %v1148 = vunpack.c.l.b16 %v256
  %v1149 = vunpack.c.h.b16 %v256
  %v1150 = vunpack.c.l.b16 %v257
  %v1151 = vunpack.c.h.b16 %v257
  %v1152 = vunpack.c.l.b16 %v258
  %v1153 = vunpack.c.h.b16 %v258
  %v1154 = vunpack.c.l.b16 %v259
  %v1155 = vunpack.c.h.b16 %v259
  %v1156 = vunpack.c.l.b16 %v260
  %v1157 = vunpack.c.h.b16 %v260
  %v1158 = vunpack.c.l.b16 %v261
  %v1159 = vunpack.c.h.b16 %v261
  %v1160 = vunpack.c.l.b16 %v262
  %v1161 = vunpack.c.h.b16 %v262
  %v1162 = vunpack.c.l.b16 %v263
  %v1163 = vunpack.c.h.b16 %v263
  %v1164 = vunpack.c.l.b16 %v264
  %v1165 = vunpack.c.h.b16 %v264
  %v1166 = vunpack.c.l.b16 %v265
  %v1167 = vunpack.c.h.b16 %v265
  %v1168 = vunpack.c.l.b16 %v266
  %v1169 = vunpack.c.h.b16 %v266
  %v1170 = vunpack.c.l.b16 %v267
  %v1171 = vunpack.c.h.b16 %v267
  %v1172 = vunpack.c.l.b16 %v268
  %v1173 = vunpack.c.h.b16 %v268
  %v1174 = vunpack.c.l.b16 %v269
  %v1175 = vunpack.c.h.b16 %v269
  %v1176 = vunpack.c.l.b16 %v270
  %v1177 = vunpack.c.h.b16 %v270
  %v1178 = vunpack.c.l.b16 %v271
  %v1179 = vunpack.c.h.b16 %v271
  %v1180 = vunpack.c.l.b16 %v272
  %v1181 = vunpack.c.h.b16 %v272
  %v1182 = vunpack.c.l.b16 %v273
  %v1183 = vunpack.c.h.b16 %v273
  %v1184 = vunpack.c.l.b16 %v274
  %v1185 = vunpack.c.h.b16 %v274
  %v1186 = vunpack.c.l.b16 %v275
  %v1187 = vunpack.c.h.b16 %v275
  %v1188 = vunpack.c.l.b16 %v276
  %v1189 = vunpack.c.h.b16 %v276
  %v1190 = vunpack.c.l.b16 %v277
  %v1191 = vunpack.c.h.b16 %v277
  %v1192 = vunpack.c.l.b16 %v278
  %v1193 = vunpack.c.h.b16 %v278
  %v1194 = vunpack.c.l.b16 %v279
  %v1195 = vunpack.c.h.b16 %v279
  %v1196 = vunpack.c.l.b16 %v280
  %v1197 = vunpack.c.h.b16 %v280
  %v1198 = vunpack.c.l.b16 %v281
  %v1199 = vunpack.c.h.b16 %v281
  %v1200 = vunpack.c.l.b16 %v282
  %v1201 = vunpack.c.h.b16 %v282
  %v1202 = vunpack.c.l.b16 %v283
  %v1203 = vunpack.c.h.b16 %v283
  %v1204 = vunpack.c.l.b16 %v284
  %v1205 = vunpack.c.h.b16 %v284
  %v1206 = vunpack.c.l.b16 %v285
  %v1207 = vunpack.c.h.b16 %v285
  %v1208 = vunpack.c.l.b16 %v286
  %v1209 = vunpack.c.h.b16 %v286
  %v1210 = vunpack.c.l.b16 %v287
  %v1211 = vunpack.c.h.b16 %v287
  %v1212 = vunpack.c.l.b16 %v288
  %v1213 = vunpack.c.h.b16 %v288
  %v1214 = vunpack.c.l.b16 %v289
  %v1215 = vunpack.c.h.b16 %v289
  %v1216 = vunpack.c.l.b16 %v290
  %v1217 = vunpack.c.h.b16 %v290
  %v1218 = vunpack.c.l.b16 %v291
  %v1219 = vunpack.c.h.b16 %v291
  %v1220 = vunpack.c.l.b16 %v292
  %v1221 = vunpack.c.h.b16 %v292
  %v1222 = vunpack.c.l.b16 %v293
  %v1223 = vunpack.c.h.b16 %v293
  %v1224 = vpack.c.b16 %v720, %v712
  %v1225 = vpack.c.b16 %v721, %v713
  %v1226 = vpack.c.b16 %v722, %v714
  %v1227 = vpack.c.b16 %v723, %v715
  %v1228 = vpack.c.b16 %v724, %v716
  %v1229 = vpack.c.b16 %v725, %v717
  %v1230 = vpack.c.b16 %v726, %v718
  %v1231 = vpack.c.b16 %v727, %v719
  %v1232 = vpack.c.b16 %v736, %v728
  %v1233 = vpack.c.b16 %v737, %v729
  %v1234 = vpack.c.b16 %v738, %v730
  %v1235 = vpack.c.b16 %v739, %v731
  %v1236 = vpack.c.b16 %v740, %v732
  %v1237 = vpack.c.b16 %v741, %v733
  %v1238 = vpack.c.b16 %v742, %v734
  %v1239 = vpack.c.b16 %v743, %v735
  %v1240 = vpack.c.b16 %v752, %v744
  %v1241 = vpack.c.b16 %v753, %v745
  %v1242 = vpack.c.b16 %v754, %v746
  %v1243 = vpack.c.b16 %v755, %v747
  %v1244 = vpack.c.b16 %v756, %v748
  %v1245 = vpack.c.b16 %v757, %v749
  %v1246 = vpack.c.b16 %v758, %v750
  %v1247 = vpack.c.b16 %v759, %v751
  %v1248 = vpack.c.b16 %v768, %v760
  %v1249 = vpack.c.b16 %v769, %v761
  %v1250 = vpack.c.b16 %v770, %v762
  %v1251 = vpack.c.b16 %v771, %v763
  %v1252 = vpack.c.b16 %v772, %v764
  %v1253 = vpack.c.b16 %v773, %v765
  %v1254 = vpack.c.b16 %v774, %v766
  %v1255 = vpack.c.b16 %v775, %v767
  %v1256 = vpack.c.b16 %v784, %v776
  %v1257 = vpack.c.b16 %v785, %v777
  %v1258 = vpack.c.b16 %v786, %v778
  %v1259 = vpack.c.b16 %v787, %v779
  %v1260 = vpack.c.b16 %v788, %v780
  %v1261 = vpack.c.b16 %v789, %v781
  %v1262 = vpack.c.b16 %v790, %v782
  %v1263 = vpack.c.b16 %v791, %v783
  %v1264 = vpack.c.b16 %v800, %v792
  %v1265 = vpack.c.b16 %v801, %v793
  %v1266 = vpack.c.b16 %v802, %v794
  %v1267 = vpack.c.b16 %v803, %v795
  %v1268 = vpack.c.b16 %v804, %v796
  %v1269 = vpack.c.b16 %v805, %v797
  %v1270 = vpack.c.b16 %v806, %v798
  %v1271 = vpack.c.b16 %v807, %v799
  %v1272 = vpack.c.b16 %v816, %v808
  %v1273 = vpack.c.b16 %v817, %v809
  %v1274 = vpack.c.b16 %v818, %v810
  %v1275 = vpack.c.b16 %v819, %v811
  %v1276 = vpack.c.b16 %v820, %v812
  %v1277 = vpack.c.b16 %v821, %v813
  %v1278 = vpack.c.b16 %v822, %v814
  %v1279 = vpack.c.b16 %v823, %v815
  %v1280 = vpack.c.b16 %v832, %v824
  %v1281 = vpack.c.b16 %v833, %v825
  %v1282 = vpack.c.b16 %v834, %v826
  %v1283 = vpack.c.b16 %v835, %v827
  %v1284 = vpack.c.b16 %v836, %v828
  %v1285 = vpack.c.b16 %v837, %v829
  %v1286 = vpack.c.b16 %v838, %v830
  %v1287 = vpack.c.b16 %v839, %v831
  %v1288 = vpack.c.b16 %v848, %v840
  %v1289 = vpack.c.b16 %v849, %v841
  %v1290 = vpack.c.b16 %v850, %v842
  %v1291 = vpack.c.b16 %v851, %v843
  %v1292 = vpack.c.b16 %v852, %v844
  %v1293 = vpack.c.b16 %v853, %v845
  %v1294 = vpack.c.b16 %v854, %v846
  %v1295 = vpack.c.b16 %v855, %v847
  %v1296 = vpack.c.b16 %v864, %v856
  %v1297 = vpack.c.b16 %v865, %v857
  %v1298 = vpack.c.b16 %v866, %v858
  %v1299 = vpack.c.b16 %v867, %v859
  %v1300 = vpack.c.b16 %v868, %v860
  %v1301 = vpack.c.b16 %v869, %v861
  %v1302 = vpack.c.b16 %v870, %v862
  %v1303 = vpack.c.b16 %v871, %v863
  %v1304 = vpack.c.b16 %v880, %v872
  %v1305 = vpack.c.b16 %v881, %v873
  %v1306 = vpack.c.b16 %v882, %v874
  %v1307 = vpack.c.b16 %v883, %v875
  %v1308 = vpack.c.b16 %v884, %v876
  %v1309 = vpack.c.b16 %v885, %v877
  %v1310 = vpack.c.b16 %v886, %v878
  %v1311 = vpack.c.b16 %v887, %v879
  %v1312 = vpack.c.b16 %v896, %v888
  %v1313 = vpack.c.b16 %v897, %v889
  %v1314 = vpack.c.b16 %v898, %v890
  %v1315 = vpack.c.b16 %v899, %v891
  %v1316 = vpack.c.b16 %v900, %v892
  %v1317 = vpack.c.b16 %v901, %v893
  %v1318 = vpack.c.b16 %v902, %v894
  %v1319 = vpack.c.b16 %v903, %v895
  %v1320 = vpack.c.b16 %v912, %v904
  %v1321 = vpack.c.b16 %v913, %v905
  %v1322 = vpack.c.b16 %v914, %v906
  %v1323 = vpack.c.b16 %v915, %v907
  %v1324 = vpack.c.b16 %v916, %v908
  %v1325 = vpack.c.b16 %v917, %v909
  %v1326 = vpack.c.b16 %v918, %v910
  %v1327 = vpack.c.b16 %v919, %v911
  %v1328 = vpack.c.b16 %v928, %v920
  %v1329 = vpack.c.b16 %v929, %v921
  %v1330 = vpack.c.b16 %v930, %v922
  %v1331 = vpack.c.b16 %v931, %v923
  %v1332 = vpack.c.b16 %v932, %v924
  %v1333 = vpack.c.b16 %v933, %v925
  %v1334 = vpack.c.b16 %v934, %v926
  %v1335 = vpack.c.b16 %v935, %v927
  %v1336 = vpack.c.b16 %v944, %v936
  %v1337 = vpack.c.b16 %v945, %v937
  %v1338 = vpack.c.b16 %v946, %v938
  %v1339 = vpack.c.b16 %v947, %v939
  %v1340 = vpack.c.b16 %v948, %v940
  %v1341 = vpack.c.b16 %v949, %v941
  %v1342 = vpack.c.b16 %v950, %v942
  %v1343 = vpack.c.b16 %v951, %v943
  %v1344 = vpack.c.b16 %v960, %v952
  %v1345 = vpack.c.b16 %v961, %v953
  %v1346 = vpack.c.b16 %v962, %v954
  %v1347 = vpack.c.b16 %v963, %v955
  %v1348 = vpack.c.b16 %v964, %v956
  %v1349 = vpack.c.b16 %v965, %v957
  %v1350 = vpack.c.b16 %v966, %v958
  %v1351 = vpack.c.b16 %v967, %v959
  %v1352 = vpack.c.b16 %v976, %v968
  %v1353 = vpack.c.b16 %v977, %v969
  %v1354 = vpack.c.b16 %v978, %v970
  %v1355 = vpack.c.b16 %v979, %v971
  %v1356 = vpack.c.b16 %v980, %v972
  %v1357 = vpack.c.b16 %v981, %v973
  %v1358 = vpack.c.b16 %v982, %v974
  %v1359 = vpack.c.b16 %v983, %v975
  %v1360 = vpack.c.b16 %v992, %v984
  %v1361 = vpack.c.b16 %v993, %v985
  %v1362 = vpack.c.b16 %v994, %v986
  %v1363 = vpack.c.b16 %v995, %v987
  %v1364 = vpack.c.b16 %v996, %v988
  %v1365 = vpack.c.b16 %v997, %v989
  %v1366 = vpack.c.b16 %v998, %v990
  %v1367 = vpack.c.b16 %v999, %v991
  %v1368 = vpack.c.b16 %v1008, %v1000
  %v1369 = vpack.c.b16 %v1009, %v1001
  %v1370 = vpack.c.b16 %v1010, %v1002
  %v1371 = vpack.c.b16 %v1011, %v1003
  %v1372 = vpack.c.b16 %v1012, %v1004
  %v1373 = vpack.c.b16 %v1013, %v1005
  %v1374 = vpack.c.b16 %v1014, %v1006
  %v1375 = vpack.c.b16 %v1015, %v1007
  %v1376 = vpack.c.b16 %v1024, %v1016
  %v1377 = vpack.c.b16 %v1025, %v1017
  %v1378 = vpack.c.b16 %v1026, %v1018
  %v1379 = vpack.c.b16 %v1027, %v1019
  %v1380 = vpack.c.b16 %v1028, %v1020
  %v1381 = vpack.c.b16 %v1029, %v1021
  %v1382 = vpack.c.b16 %v1030, %v1022
  %v1383 = vpack.c.b16 %v1031, %v1023
  %v1384 = vpack.c.b16 %v1040, %v1032
  %v1385 = vpack.c.b16 %v1041, %v1033
  %v1386 = vpack.c.b16 %v1042, %v1034
  %v1387 = vpack.c.b16 %v1043, %v1035
  %v1388 = vpack.c.b16 %v1044, %v1036
  %v1389 = vpack.c.b16 %v1045, %v1037
  %v1390 = vpack.c.b16 %v1046, %v1038
  %v1391 = vpack.c.b16 %v1047, %v1039
  %v1392 = vpack.c.b16 %v1056, %v1048
  %v1393 = vpack.c.b16 %v1057, %v1049
  %v1394 = vpack.c.b16 %v1058, %v1050
  %v1395 = vpack.c.b16 %v1059, %v1051
  %v1396 = vpack.c.b16 %v1060, %v1052
  %v1397 = vpack.c.b16 %v1061, %v1053
  %v1398 = vpack.c.b16 %v1062, %v1054
  %v1399 = vpack.c.b16 %v1063, %v1055
  %v1400 = vpack.c.b16 %v1072, %v1064
  %v1401 = vpack.c.b16 %v1073, %v1065
  %v1402 = vpack.c.b16 %v1074, %v1066
  %v1403 = vpack.c.b16 %v1075, %v1067
  %v1404 = vpack.c.b16 %v1076, %v1068
  %v1405 = vpack.c.b16 %v1077, %v1069
  %v1406 = vpack.c.b16 %v1078, %v1070
  %v1407 = vpack.c.b16 %v1079, %v1071
  %v1408 = vpack.c.b16 %v1088, %v1080
  %v1409 = vpack.c.b16 %v1089, %v1081
  %v1410 = vpack.c.b16 %v1090, %v1082
  %v1411 = vpack.c.b16 %v1091, %v1083
  %v1412 = vpack.c.b16 %v1092, %v1084
  %v1413 = vpack.c.b16 %v1093, %v1085
  %v1414 = vpack.c.b16 %v1094, %v1086
  %v1415 = vpack.c.b16 %v1095, %v1087
  %v1416 = vpack.c.b16 %v1104, %v1096
  %v1417 = vpack.c.b16 %v1105, %v1097
  %v1418 = vpack.c.b16 %v1106, %v1098
  %v1419 = vpack.c.b16 %v1107, %v1099
  %v1420 = vpack.c.b16 %v1108, %v1100
  %v1421 = vpack.c.b16 %v1109, %v1101
  %v1422 = vpack.c.b16 %v1110, %v1102
  %v1423 = vpack.c.b16 %v1111, %v1103
  %v1424 = vpack.c.b16 %v1120, %v1112
  %v1425 = vpack.c.b16 %v1121, %v1113
  %v1426 = vpack.c.b16 %v1122, %v1114
  %v1427 = vpack.c.b16 %v1123, %v1115
  %v1428 = vpack.c.b16 %v1124, %v1116
  %v1429 = vpack.c.b16 %v1125, %v1117
  %v1430 = vpack.c.b16 %v1126, %v1118
  %v1431 = vpack.c.b16 %v1127, %v1119
  %v1432 = vpack.c.b16 %v1136, %v1128
  %v1433 = vpack.c.b16 %v1137, %v1129
  %v1434 = vpack.c.b16 %v1138, %v1130
  %v1435 = vpack.c.b16 %v1139, %v1131
  %v1436 = vpack.c.b16 %v1140, %v1132
  %v1437 = vpack.c.b16 %v1141, %v1133
  %v1438 = vpack.c.b16 %v1142, %v1134
  %v1439 = vpack.c.b16 %v1143, %v1135
  %v1440 = vpack.c.b16 %v1152, %v1144
  %v1441 = vpack.c.b16 %v1153, %v1145
  %v1442 = vpack.c.b16 %v1154, %v1146
  %v1443 = vpack.c.b16 %v1155, %v1147
  %v1444 = vpack.c.b16 %v1156, %v1148
  %v1445 = vpack.c.b16 %v1157, %v1149
  %v1446 = vpack.c.b16 %v1158, %v1150
  %v1447 = vpack.c.b16 %v1159, %v1151
  %v1448 = vpack.c.b16 %v1168, %v1160
  %v1449 = vpack.c.b16 %v1169, %v1161
  %v1450 = vpack.c.b16 %v1170, %v1162
  %v1451 = vpack.c.b16 %v1171, %v1163
  %v1452 = vpack.c.b16 %v1172, %v1164
  %v1453 = vpack.c.b16 %v1173, %v1165
  %v1454 = vpack.c.b16 %v1174, %v1166
  %v1455 = vpack.c.b16 %v1175, %v1167
  %v1456 = vpack.c.b16 %v1184, %v1176
  %v1457 = vpack.c.b16 %v1185, %v1177
  %v1458 = vpack.c.b16 %v1186, %v1178
  %v1459 = vpack.c.b16 %v1187, %v1179
  %v1460 = vpack.c.b16 %v1188, %v1180
  %v1461 = vpack.c.b16 %v1189, %v1181
  %v1462 = vpack.c.b16 %v1190, %v1182
  %v1463 = vpack.c.b16 %v1191, %v1183
  %v1464 = vpack.c.b16 %v1200, %v1192
  %v1465 = vpack.c.b16 %v1201, %v1193
  %v1466 = vpack.c.b16 %v1202, %v1194
  %v1467 = vpack.c.b16 %v1203, %v1195
  %v1468 = vpack.c.b16 %v1204, %v1196
  %v1469 = vpack.c.b16 %v1205, %v1197
  %v1470 = vpack.c.b16 %v1206, %v1198
  %v1471 = vpack.c.b16 %v1207, %v1199
  %v1472 = vpack.c.b16 %v1216, %v1208
  %v1473 = vpack.c.b16 %v1217, %v1209
  %v1474 = vpack.c.b16 %v1218, %v1210
  %v1475 = vpack.c.b16 %v1219, %v1211
  %v1476 = vpack.c.b16 %v1220, %v1212
  %v1477 = vpack.c.b16 %v1221, %v1213
  %v1478 = vpack.c.b16 %v1222, %v1214
  %v1479 = vpack.c.b16 %v1223, %v1215
  %1736 = vmatprep.subr.bf16.mxu0 %v1281
  %1737 = vmatpush1.bf16.msra.mxu0 %v1280
  %1738 = vmatprep.subr.bf16.mxu0 %v1273
  %1739 = vmatpush1.bf16.msra.mxu0 %v1272
  %1740 = vmatprep.subr.bf16.mxu0 %v1265
  %1741 = vmatpush1.bf16.msra.mxu0 %v1264
  %1742 = vmatprep.subr.bf16.mxu0 %v1257
  %1743 = vmatpush1.bf16.msra.mxu0 %v1256
  %1744 = vmatprep.subr.bf16.mxu0 %v1249
  %1745 = vmatpush1.bf16.msra.mxu0 %v1248
  %1746 = vmatprep.subr.bf16.mxu0 %v1241
  %1747 = vmatpush1.bf16.msra.mxu0 %v1240
  %1748 = vmatprep.subr.bf16.mxu0 %v1233
  %1749 = vmatpush1.bf16.msra.mxu0 %v1232
  %1750 = vmatprep.subr.bf16.mxu0 %v1225
  %1751 = vmatpush1.bf16.msra.mxu0 %v1224
  %1752 = vmatprep.subr.bf16.mxu0 %v1345
  %1753 = vmatpush2.bf16.msra.mxu0 %v1344
  %1754 = vmatprep.subr.bf16.mxu0 %v1337
  %1755 = vmatpush2.bf16.msra.mxu0 %v1336
  %1756 = vmatprep.subr.bf16.mxu0 %v1329
  %1757 = vmatpush2.bf16.msra.mxu0 %v1328
  %1758 = vmatprep.subr.bf16.mxu0 %v1321
  %1759 = vmatpush2.bf16.msra.mxu0 %v1320
  %1760 = vmatprep.subr.bf16.mxu0 %v1313
  %1761 = vmatpush2.bf16.msra.mxu0 %v1312
  %1762 = vmatprep.subr.bf16.mxu0 %v1305
  %1763 = vmatpush2.bf16.msra.mxu0 %v1304
  %1764 = vmatprep.subr.bf16.mxu0 %v1297
  %1765 = vmatpush2.bf16.msra.mxu0 %v1296
  %1766 = vmatprep.subr.bf16.mxu0 %v1289
  %1767 = vmatpush2.bf16.msra.mxu0 %v1288
  %1768 = vmatprep.mubr.bf16.mxu0 %v409
  %1769 = vmatmul.mubr.bf16.gmra.mxu0 %v408
  %v1770 = vpop.f32.mrf.mxu0
  %v1771 = vadd.f32 %v299, %v1770
  %v1772 = vpop.f32.mrf.mxu0
  %v1773 = vadd.f32 %v303, %v1772
  %v1774 = vpop.f32.mrf.mxu0
  %v1775 = vadd.f32 %v299, %v1774
  %v1776 = vpop.f32.mrf.mxu0
  %v1777 = vadd.f32 %v303, %v1776
  %1778 = vmatprep.mubr.bf16.mxu0 %v413
  %1779 = vmatmul.mubr.bf16.gmra.mxu0 %v412
  %v1780 = vpop.f32.mrf.mxu0
  %v1781 = vadd.f32 %v299, %v1780
  %v1782 = vpop.f32.mrf.mxu0
  %v1783 = vadd.f32 %v303, %v1782
  %v1784 = vpop.f32.mrf.mxu0
  %v1785 = vadd.f32 %v299, %v1784
  %v1786 = vpop.f32.mrf.mxu0
  %v1787 = vadd.f32 %v303, %v1786
  %1788 = vmatprep.mubr.bf16.mxu0 %v417
  %1789 = vmatmul.mubr.bf16.gmra.mxu0 %v416
  %v1790 = vpop.f32.mrf.mxu0
  %v1791 = vadd.f32 %v299, %v1790
  %v1792 = vpop.f32.mrf.mxu0
  %v1793 = vadd.f32 %v303, %v1792
  %v1794 = vpop.f32.mrf.mxu0
  %v1795 = vadd.f32 %v299, %v1794
  %v1796 = vpop.f32.mrf.mxu0
  %v1797 = vadd.f32 %v303, %v1796
  %1798 = vmatprep.mubr.bf16.mxu0 %v421
  %1799 = vmatmul.mubr.bf16.gmra.mxu0 %v420
  %v1800 = vpop.f32.mrf.mxu0
  %v1801 = vadd.f32 %v299, %v1800
  %v1802 = vpop.f32.mrf.mxu0
  %v1803 = vadd.f32 %v303, %v1802
  %v1804 = vpop.f32.mrf.mxu0
  %v1805 = vadd.f32 %v299, %v1804
  %v1806 = vpop.f32.mrf.mxu0
  %v1807 = vadd.f32 %v303, %v1806
  %1808 = vmatprep.mubr.bf16.mxu0 %v425
  %1809 = vmatmul.mubr.bf16.gmra.mxu0 %v424
  %v1810 = vpop.f32.mrf.mxu0
  %v1811 = vadd.f32 %v299, %v1810
  %v1812 = vpop.f32.mrf.mxu0
  %v1813 = vadd.f32 %v303, %v1812
  %v1814 = vpop.f32.mrf.mxu0
  %v1815 = vadd.f32 %v299, %v1814
  %v1816 = vpop.f32.mrf.mxu0
  %v1817 = vadd.f32 %v303, %v1816
  %1818 = vmatprep.mubr.bf16.mxu0 %v429
  %1819 = vmatmul.mubr.bf16.gmra.mxu0 %v428
  %v1820 = vpop.f32.mrf.mxu0
  %v1821 = vadd.f32 %v299, %v1820
  %v1822 = vpop.f32.mrf.mxu0
  %v1823 = vadd.f32 %v303, %v1822
  %v1824 = vpop.f32.mrf.mxu0
  %v1825 = vadd.f32 %v299, %v1824
  %v1826 = vpop.f32.mrf.mxu0
  %v1827 = vadd.f32 %v303, %v1826
  %1828 = vdwg.mxu0
  %1829 = vmatprep.subr.bf16.mxu0 %v1409
  %1830 = vmatpush1.bf16.msra.mxu0 %v1408
  %1831 = vmatprep.subr.bf16.mxu0 %v1401
  %1832 = vmatpush1.bf16.msra.mxu0 %v1400
  %1833 = vmatprep.subr.bf16.mxu0 %v1393
  %1834 = vmatpush1.bf16.msra.mxu0 %v1392
  %1835 = vmatprep.subr.bf16.mxu0 %v1385
  %1836 = vmatpush1.bf16.msra.mxu0 %v1384
  %1837 = vmatprep.subr.bf16.mxu0 %v1377
  %1838 = vmatpush1.bf16.msra.mxu0 %v1376
  %1839 = vmatprep.subr.bf16.mxu0 %v1369
  %1840 = vmatpush1.bf16.msra.mxu0 %v1368
  %1841 = vmatprep.subr.bf16.mxu0 %v1361
  %1842 = vmatpush1.bf16.msra.mxu0 %v1360
  %1843 = vmatprep.subr.bf16.mxu0 %v1353
  %1844 = vmatpush1.bf16.msra.mxu0 %v1352
  %1845 = vmatprep.subr.bf16.mxu0 %v1473
  %1846 = vmatpush2.bf16.msra.mxu0 %v1472
  %1847 = vmatprep.subr.bf16.mxu0 %v1465
  %1848 = vmatpush2.bf16.msra.mxu0 %v1464
  %1849 = vmatprep.subr.bf16.mxu0 %v1457
  %1850 = vmatpush2.bf16.msra.mxu0 %v1456
  %1851 = vmatprep.subr.bf16.mxu0 %v1449
  %1852 = vmatpush2.bf16.msra.mxu0 %v1448
  %1853 = vmatprep.subr.bf16.mxu0 %v1441
  %1854 = vmatpush2.bf16.msra.mxu0 %v1440
  %1855 = vmatprep.subr.bf16.mxu0 %v1433
  %1856 = vmatpush2.bf16.msra.mxu0 %v1432
  %1857 = vmatprep.subr.bf16.mxu0 %v1425
  %1858 = vmatpush2.bf16.msra.mxu0 %v1424
  %1859 = vmatprep.subr.bf16.mxu0 %v1417
  %1860 = vmatpush2.bf16.msra.mxu0 %v1416
  %1861 = vmatprep.mubr.bf16.mxu0 %v411
  %1862 = vmatmul.mubr.bf16.gmra.mxu0 %v410
  %v1863 = vpop.f32.mrf.mxu0
  %v1864 = vadd.f32 %v1771, %v1863
  %v1865 = vpop.f32.mrf.mxu0
  %v1866 = vadd.f32 %v1773, %v1865
  %v1867 = vpop.f32.mrf.mxu0
  %v1868 = vadd.f32 %v1775, %v1867
  %v1869 = vpop.f32.mrf.mxu0
  %v1870 = vadd.f32 %v1777, %v1869
  %1871 = vmatprep.mubr.bf16.mxu0 %v415
  %1872 = vmatmul.mubr.bf16.gmra.mxu0 %v414
  %v1873 = vpop.f32.mrf.mxu0
  %v1874 = vadd.f32 %v1781, %v1873
  %v1875 = vpop.f32.mrf.mxu0
  %v1876 = vadd.f32 %v1783, %v1875
  %v1877 = vpop.f32.mrf.mxu0
  %v1878 = vadd.f32 %v1785, %v1877
  %v1879 = vpop.f32.mrf.mxu0
  %v1880 = vadd.f32 %v1787, %v1879
  %1881 = vmatprep.mubr.bf16.mxu0 %v419
  %1882 = vmatmul.mubr.bf16.gmra.mxu0 %v418
  %v1883 = vpop.f32.mrf.mxu0
  %v1884 = vadd.f32 %v1791, %v1883
  %v1885 = vpop.f32.mrf.mxu0
  %v1886 = vadd.f32 %v1793, %v1885
  %v1887 = vpop.f32.mrf.mxu0
  %v1888 = vadd.f32 %v1795, %v1887
  %v1889 = vpop.f32.mrf.mxu0
  %v1890 = vadd.f32 %v1797, %v1889
  %1891 = vmatprep.mubr.bf16.mxu0 %v423
  %1892 = vmatmul.mubr.bf16.gmra.mxu0 %v422
  %v1893 = vpop.f32.mrf.mxu0
  %v1894 = vadd.f32 %v1801, %v1893
  %v1895 = vpop.f32.mrf.mxu0
  %v1896 = vadd.f32 %v1803, %v1895
  %v1897 = vpop.f32.mrf.mxu0
  %v1898 = vadd.f32 %v1805, %v1897
  %v1899 = vpop.f32.mrf.mxu0
  %v1900 = vadd.f32 %v1807, %v1899
  %1901 = vmatprep.mubr.bf16.mxu0 %v427
  %1902 = vmatmul.mubr.bf16.gmra.mxu0 %v426
  %v1903 = vpop.f32.mrf.mxu0
  %v1904 = vadd.f32 %v1811, %v1903
  %v1905 = vpop.f32.mrf.mxu0
  %v1906 = vadd.f32 %v1813, %v1905
  %v1907 = vpop.f32.mrf.mxu0
  %v1908 = vadd.f32 %v1815, %v1907
  %v1909 = vpop.f32.mrf.mxu0
  %v1910 = vadd.f32 %v1817, %v1909
  %1911 = vmatprep.mubr.bf16.mxu0 %v431
  %1912 = vmatmul.mubr.bf16.gmra.mxu0 %v430
  %v1913 = vpop.f32.mrf.mxu0
  %v1914 = vadd.f32 %v1821, %v1913
  %v1915 = vpop.f32.mrf.mxu0
  %v1916 = vadd.f32 %v1823, %v1915
  %v1917 = vpop.f32.mrf.mxu0
  %v1918 = vadd.f32 %v1825, %v1917
  %v1919 = vpop.f32.mrf.mxu0
  %v1920 = vadd.f32 %v1827, %v1919
  %1921 = vdwg.mxu0
  %1922 = vmatprep.subr.bf16.mxu0 %v1283
  %1923 = vmatpush1.bf16.msra.mxu0 %v1282
  %1924 = vmatprep.subr.bf16.mxu0 %v1275
  %1925 = vmatpush1.bf16.msra.mxu0 %v1274
  %1926 = vmatprep.subr.bf16.mxu0 %v1267
  %1927 = vmatpush1.bf16.msra.mxu0 %v1266
  %1928 = vmatprep.subr.bf16.mxu0 %v1259
  %1929 = vmatpush1.bf16.msra.mxu0 %v1258
  %1930 = vmatprep.subr.bf16.mxu0 %v1251
  %1931 = vmatpush1.bf16.msra.mxu0 %v1250
  %1932 = vmatprep.subr.bf16.mxu0 %v1243
  %1933 = vmatpush1.bf16.msra.mxu0 %v1242
  %1934 = vmatprep.subr.bf16.mxu0 %v1235
  %1935 = vmatpush1.bf16.msra.mxu0 %v1234
  %1936 = vmatprep.subr.bf16.mxu0 %v1227
  %1937 = vmatpush1.bf16.msra.mxu0 %v1226
  %1938 = vmatprep.subr.bf16.mxu0 %v1347
  %1939 = vmatpush2.bf16.msra.mxu0 %v1346
  %1940 = vmatprep.subr.bf16.mxu0 %v1339
  %1941 = vmatpush2.bf16.msra.mxu0 %v1338
  %1942 = vmatprep.subr.bf16.mxu0 %v1331
  %1943 = vmatpush2.bf16.msra.mxu0 %v1330
  %1944 = vmatprep.subr.bf16.mxu0 %v1323
  %1945 = vmatpush2.bf16.msra.mxu0 %v1322
  %1946 = vmatprep.subr.bf16.mxu0 %v1315
  %1947 = vmatpush2.bf16.msra.mxu0 %v1314
  %1948 = vmatprep.subr.bf16.mxu0 %v1307
  %1949 = vmatpush2.bf16.msra.mxu0 %v1306
  %1950 = vmatprep.subr.bf16.mxu0 %v1299
  %1951 = vmatpush2.bf16.msra.mxu0 %v1298
  %1952 = vmatprep.subr.bf16.mxu0 %v1291
  %1953 = vmatpush2.bf16.msra.mxu0 %v1290
  %1954 = vmatprep.mubr.bf16.mxu0 %v409
  %1955 = vmatmul.mubr.bf16.gmra.mxu0 %v408
  %v1956 = vpop.f32.mrf.mxu0
  %v1957 = vadd.f32 %v307, %v1956
  %v1958 = vpop.f32.mrf.mxu0
  %v1959 = vadd.f32 %v311, %v1958
  %v1960 = vpop.f32.mrf.mxu0
  %v1961 = vadd.f32 %v307, %v1960
  %v1962 = vpop.f32.mrf.mxu0
  %v1963 = vadd.f32 %v311, %v1962
  %1964 = vmatprep.mubr.bf16.mxu0 %v413
  %1965 = vmatmul.mubr.bf16.gmra.mxu0 %v412
  %v1966 = vpop.f32.mrf.mxu0
  %v1967 = vadd.f32 %v307, %v1966
  %v1968 = vpop.f32.mrf.mxu0
  %v1969 = vadd.f32 %v311, %v1968
  %v1970 = vpop.f32.mrf.mxu0
  %v1971 = vadd.f32 %v307, %v1970
  %v1972 = vpop.f32.mrf.mxu0
  %v1973 = vadd.f32 %v311, %v1972
  %1974 = vmatprep.mubr.bf16.mxu0 %v417
  %1975 = vmatmul.mubr.bf16.gmra.mxu0 %v416
  %v1976 = vpop.f32.mrf.mxu0
  %v1977 = vadd.f32 %v307, %v1976
  %v1978 = vpop.f32.mrf.mxu0
  %v1979 = vadd.f32 %v311, %v1978
  %v1980 = vpop.f32.mrf.mxu0
  %v1981 = vadd.f32 %v307, %v1980
  %v1982 = vpop.f32.mrf.mxu0
  %v1983 = vadd.f32 %v311, %v1982
  %1984 = vmatprep.mubr.bf16.mxu0 %v421
  %1985 = vmatmul.mubr.bf16.gmra.mxu0 %v420
  %v1986 = vpop.f32.mrf.mxu0
  %v1987 = vadd.f32 %v307, %v1986
  %v1988 = vpop.f32.mrf.mxu0
  %v1989 = vadd.f32 %v311, %v1988
  %v1990 = vpop.f32.mrf.mxu0
  %v1991 = vadd.f32 %v307, %v1990
  %v1992 = vpop.f32.mrf.mxu0
  %v1993 = vadd.f32 %v311, %v1992
  %1994 = vmatprep.mubr.bf16.mxu0 %v425
  %1995 = vmatmul.mubr.bf16.gmra.mxu0 %v424
  %v1996 = vpop.f32.mrf.mxu0
  %v1997 = vadd.f32 %v307, %v1996
  %v1998 = vpop.f32.mrf.mxu0
  %v1999 = vadd.f32 %v311, %v1998
  %v2000 = vpop.f32.mrf.mxu0
  %v2001 = vadd.f32 %v307, %v2000
  %v2002 = vpop.f32.mrf.mxu0
  %v2003 = vadd.f32 %v311, %v2002
  %2004 = vmatprep.mubr.bf16.mxu0 %v429
  %2005 = vmatmul.mubr.bf16.gmra.mxu0 %v428
  %v2006 = vpop.f32.mrf.mxu0
  %v2007 = vadd.f32 %v307, %v2006
  %v2008 = vpop.f32.mrf.mxu0
  %v2009 = vadd.f32 %v311, %v2008
  %v2010 = vpop.f32.mrf.mxu0
  %v2011 = vadd.f32 %v307, %v2010
  %v2012 = vpop.f32.mrf.mxu0
  %v2013 = vadd.f32 %v311, %v2012
  %2014 = vdwg.mxu0
  %2015 = vmatprep.subr.bf16.mxu0 %v1411
  %2016 = vmatpush1.bf16.msra.mxu0 %v1410
  %2017 = vmatprep.subr.bf16.mxu0 %v1403
  %2018 = vmatpush1.bf16.msra.mxu0 %v1402
  %2019 = vmatprep.subr.bf16.mxu0 %v1395
  %2020 = vmatpush1.bf16.msra.mxu0 %v1394
  %2021 = vmatprep.subr.bf16.mxu0 %v1387
  %2022 = vmatpush1.bf16.msra.mxu0 %v1386
  %2023 = vmatprep.subr.bf16.mxu0 %v1379
  %2024 = vmatpush1.bf16.msra.mxu0 %v1378
  %2025 = vmatprep.subr.bf16.mxu0 %v1371
  %2026 = vmatpush1.bf16.msra.mxu0 %v1370
  %2027 = vmatprep.subr.bf16.mxu0 %v1363
  %2028 = vmatpush1.bf16.msra.mxu0 %v1362
  %2029 = vmatprep.subr.bf16.mxu0 %v1355
  %2030 = vmatpush1.bf16.msra.mxu0 %v1354
  %2031 = vmatprep.subr.bf16.mxu0 %v1475
  %2032 = vmatpush2.bf16.msra.mxu0 %v1474
  %2033 = vmatprep.subr.bf16.mxu0 %v1467
  %2034 = vmatpush2.bf16.msra.mxu0 %v1466
  %2035 = vmatprep.subr.bf16.mxu0 %v1459
  %2036 = vmatpush2.bf16.msra.mxu0 %v1458
  %2037 = vmatprep.subr.bf16.mxu0 %v1451
  %2038 = vmatpush2.bf16.msra.mxu0 %v1450
  %2039 = vmatprep.subr.bf16.mxu0 %v1443
  %2040 = vmatpush2.bf16.msra.mxu0 %v1442
  %2041 = vmatprep.subr.bf16.mxu0 %v1435
  %2042 = vmatpush2.bf16.msra.mxu0 %v1434
  %2043 = vmatprep.subr.bf16.mxu0 %v1427
  %2044 = vmatpush2.bf16.msra.mxu0 %v1426
  %2045 = vmatprep.subr.bf16.mxu0 %v1419
  %2046 = vmatpush2.bf16.msra.mxu0 %v1418
  %2047 = vmatprep.mubr.bf16.mxu0 %v411
  %2048 = vmatmul.mubr.bf16.gmra.mxu0 %v410
  %v2049 = vpop.f32.mrf.mxu0
  %v2050 = vadd.f32 %v1957, %v2049
  %v2051 = vpop.f32.mrf.mxu0
  %v2052 = vadd.f32 %v1959, %v2051
  %v2053 = vpop.f32.mrf.mxu0
  %v2054 = vadd.f32 %v1961, %v2053
  %v2055 = vpop.f32.mrf.mxu0
  %v2056 = vadd.f32 %v1963, %v2055
  %2057 = vmatprep.mubr.bf16.mxu0 %v415
  %2058 = vmatmul.mubr.bf16.gmra.mxu0 %v414
  %v2059 = vpop.f32.mrf.mxu0
  %v2060 = vadd.f32 %v1967, %v2059
  %v2061 = vpop.f32.mrf.mxu0
  %v2062 = vadd.f32 %v1969, %v2061
  %v2063 = vpop.f32.mrf.mxu0
  %v2064 = vadd.f32 %v1971, %v2063
  %v2065 = vpop.f32.mrf.mxu0
  %v2066 = vadd.f32 %v1973, %v2065
  %2067 = vmatprep.mubr.bf16.mxu0 %v419
  %2068 = vmatmul.mubr.bf16.gmra.mxu0 %v418
  %v2069 = vpop.f32.mrf.mxu0
  %v2070 = vadd.f32 %v1977, %v2069
  %v2071 = vpop.f32.mrf.mxu0
  %v2072 = vadd.f32 %v1979, %v2071
  %v2073 = vpop.f32.mrf.mxu0
  %v2074 = vadd.f32 %v1981, %v2073
  %v2075 = vpop.f32.mrf.mxu0
  %v2076 = vadd.f32 %v1983, %v2075
  %2077 = vmatprep.mubr.bf16.mxu0 %v423
  %2078 = vmatmul.mubr.bf16.gmra.mxu0 %v422
  %v2079 = vpop.f32.mrf.mxu0
  %v2080 = vadd.f32 %v1987, %v2079
  %v2081 = vpop.f32.mrf.mxu0
  %v2082 = vadd.f32 %v1989, %v2081
  %v2083 = vpop.f32.mrf.mxu0
  %v2084 = vadd.f32 %v1991, %v2083
  %v2085 = vpop.f32.mrf.mxu0
  %v2086 = vadd.f32 %v1993, %v2085
  %2087 = vmatprep.mubr.bf16.mxu0 %v427
  %2088 = vmatmul.mubr.bf16.gmra.mxu0 %v426
  %v2089 = vpop.f32.mrf.mxu0
  %v2090 = vadd.f32 %v1997, %v2089
  %v2091 = vpop.f32.mrf.mxu0
  %v2092 = vadd.f32 %v1999, %v2091
  %v2093 = vpop.f32.mrf.mxu0
  %v2094 = vadd.f32 %v2001, %v2093
  %v2095 = vpop.f32.mrf.mxu0
  %v2096 = vadd.f32 %v2003, %v2095
  %2097 = vmatprep.mubr.bf16.mxu0 %v431
  %2098 = vmatmul.mubr.bf16.gmra.mxu0 %v430
  %v2099 = vpop.f32.mrf.mxu0
  %v2100 = vadd.f32 %v2007, %v2099
  %v2101 = vpop.f32.mrf.mxu0
  %v2102 = vadd.f32 %v2009, %v2101
  %v2103 = vpop.f32.mrf.mxu0
  %v2104 = vadd.f32 %v2011, %v2103
  %v2105 = vpop.f32.mrf.mxu0
  %v2106 = vadd.f32 %v2013, %v2105
  %2107 = vdwg.mxu0
  %2108 = vmatprep.subr.bf16.mxu0 %v1285
  %2109 = vmatpush1.bf16.msra.mxu0 %v1284
  %2110 = vmatprep.subr.bf16.mxu0 %v1277
  %2111 = vmatpush1.bf16.msra.mxu0 %v1276
  %2112 = vmatprep.subr.bf16.mxu0 %v1269
  %2113 = vmatpush1.bf16.msra.mxu0 %v1268
  %2114 = vmatprep.subr.bf16.mxu0 %v1261
  %2115 = vmatpush1.bf16.msra.mxu0 %v1260
  %2116 = vmatprep.subr.bf16.mxu0 %v1253
  %2117 = vmatpush1.bf16.msra.mxu0 %v1252
  %2118 = vmatprep.subr.bf16.mxu0 %v1245
  %2119 = vmatpush1.bf16.msra.mxu0 %v1244
  %2120 = vmatprep.subr.bf16.mxu0 %v1237
  %2121 = vmatpush1.bf16.msra.mxu0 %v1236
  %2122 = vmatprep.subr.bf16.mxu0 %v1229
  %2123 = vmatpush1.bf16.msra.mxu0 %v1228
  %2124 = vmatprep.subr.bf16.mxu0 %v1349
  %2125 = vmatpush2.bf16.msra.mxu0 %v1348
  %2126 = vmatprep.subr.bf16.mxu0 %v1341
  %2127 = vmatpush2.bf16.msra.mxu0 %v1340
  %2128 = vmatprep.subr.bf16.mxu0 %v1333
  %2129 = vmatpush2.bf16.msra.mxu0 %v1332
  %2130 = vmatprep.subr.bf16.mxu0 %v1325
  %2131 = vmatpush2.bf16.msra.mxu0 %v1324
  %2132 = vmatprep.subr.bf16.mxu0 %v1317
  %2133 = vmatpush2.bf16.msra.mxu0 %v1316
  %2134 = vmatprep.subr.bf16.mxu0 %v1309
  %2135 = vmatpush2.bf16.msra.mxu0 %v1308
  %2136 = vmatprep.subr.bf16.mxu0 %v1301
  %2137 = vmatpush2.bf16.msra.mxu0 %v1300
  %2138 = vmatprep.subr.bf16.mxu0 %v1293
  %2139 = vmatpush2.bf16.msra.mxu0 %v1292
  %2140 = vmatprep.mubr.bf16.mxu0 %v409
  %2141 = vmatmul.mubr.bf16.gmra.mxu0 %v408
  %v2142 = vpop.f32.mrf.mxu0
  %v2143 = vadd.f32 %v315, %v2142
  %v2144 = vpop.f32.mrf.mxu0
  %v2145 = vadd.f32 %v319, %v2144
  %v2146 = vpop.f32.mrf.mxu0
  %v2147 = vadd.f32 %v315, %v2146
  %v2148 = vpop.f32.mrf.mxu0
  %v2149 = vadd.f32 %v319, %v2148
  %2150 = vmatprep.mubr.bf16.mxu0 %v413
  %2151 = vmatmul.mubr.bf16.gmra.mxu0 %v412
  %v2152 = vpop.f32.mrf.mxu0
  %v2153 = vadd.f32 %v315, %v2152
  %v2154 = vpop.f32.mrf.mxu0
  %v2155 = vadd.f32 %v319, %v2154
  %v2156 = vpop.f32.mrf.mxu0
  %v2157 = vadd.f32 %v315, %v2156
  %v2158 = vpop.f32.mrf.mxu0
  %v2159 = vadd.f32 %v319, %v2158
  %2160 = vmatprep.mubr.bf16.mxu0 %v417
  %2161 = vmatmul.mubr.bf16.gmra.mxu0 %v416
  %v2162 = vpop.f32.mrf.mxu0
  %v2163 = vadd.f32 %v315, %v2162
  %v2164 = vpop.f32.mrf.mxu0
  %v2165 = vadd.f32 %v319, %v2164
  %v2166 = vpop.f32.mrf.mxu0
  %v2167 = vadd.f32 %v315, %v2166
  %v2168 = vpop.f32.mrf.mxu0
  %v2169 = vadd.f32 %v319, %v2168
  %2170 = vmatprep.mubr.bf16.mxu0 %v421
  %2171 = vmatmul.mubr.bf16.gmra.mxu0 %v420
  %v2172 = vpop.f32.mrf.mxu0
  %v2173 = vadd.f32 %v315, %v2172
  %v2174 = vpop.f32.mrf.mxu0
  %v2175 = vadd.f32 %v319, %v2174
  %v2176 = vpop.f32.mrf.mxu0
  %v2177 = vadd.f32 %v315, %v2176
  %v2178 = vpop.f32.mrf.mxu0
  %v2179 = vadd.f32 %v319, %v2178
  %2180 = vmatprep.mubr.bf16.mxu0 %v425
  %2181 = vmatmul.mubr.bf16.gmra.mxu0 %v424
  %v2182 = vpop.f32.mrf.mxu0
  %v2183 = vadd.f32 %v315, %v2182
  %v2184 = vpop.f32.mrf.mxu0
  %v2185 = vadd.f32 %v319, %v2184
  %v2186 = vpop.f32.mrf.mxu0
  %v2187 = vadd.f32 %v315, %v2186
  %v2188 = vpop.f32.mrf.mxu0
  %v2189 = vadd.f32 %v319, %v2188
  %2190 = vmatprep.mubr.bf16.mxu0 %v429
  %2191 = vmatmul.mubr.bf16.gmra.mxu0 %v428
  %v2192 = vpop.f32.mrf.mxu0
  %v2193 = vadd.f32 %v315, %v2192
  %v2194 = vpop.f32.mrf.mxu0
  %v2195 = vadd.f32 %v319, %v2194
  %v2196 = vpop.f32.mrf.mxu0
  %v2197 = vadd.f32 %v315, %v2196
  %v2198 = vpop.f32.mrf.mxu0
  %v2199 = vadd.f32 %v319, %v2198
  %2200 = vdwg.mxu0
  %2201 = vmatprep.subr.bf16.mxu0 %v1413
  %2202 = vmatpush1.bf16.msra.mxu0 %v1412
  %2203 = vmatprep.subr.bf16.mxu0 %v1405
  %2204 = vmatpush1.bf16.msra.mxu0 %v1404
  %2205 = vmatprep.subr.bf16.mxu0 %v1397
  %2206 = vmatpush1.bf16.msra.mxu0 %v1396
  %2207 = vmatprep.subr.bf16.mxu0 %v1389
  %2208 = vmatpush1.bf16.msra.mxu0 %v1388
  %2209 = vmatprep.subr.bf16.mxu0 %v1381
  %2210 = vmatpush1.bf16.msra.mxu0 %v1380
  %2211 = vmatprep.subr.bf16.mxu0 %v1373
  %2212 = vmatpush1.bf16.msra.mxu0 %v1372
  %2213 = vmatprep.subr.bf16.mxu0 %v1365
  %2214 = vmatpush1.bf16.msra.mxu0 %v1364
  %2215 = vmatprep.subr.bf16.mxu0 %v1357
  %2216 = vmatpush1.bf16.msra.mxu0 %v1356
  %2217 = vmatprep.subr.bf16.mxu0 %v1477
  %2218 = vmatpush2.bf16.msra.mxu0 %v1476
  %2219 = vmatprep.subr.bf16.mxu0 %v1469
  %2220 = vmatpush2.bf16.msra.mxu0 %v1468
  %2221 = vmatprep.subr.bf16.mxu0 %v1461
  %2222 = vmatpush2.bf16.msra.mxu0 %v1460
  %2223 = vmatprep.subr.bf16.mxu0 %v1453
  %2224 = vmatpush2.bf16.msra.mxu0 %v1452
  %2225 = vmatprep.subr.bf16.mxu0 %v1445
  %2226 = vmatpush2.bf16.msra.mxu0 %v1444
  %2227 = vmatprep.subr.bf16.mxu0 %v1437
  %2228 = vmatpush2.bf16.msra.mxu0 %v1436
  %2229 = vmatprep.subr.bf16.mxu0 %v1429
  %2230 = vmatpush2.bf16.msra.mxu0 %v1428
  %2231 = vmatprep.subr.bf16.mxu0 %v1421
  %2232 = vmatpush2.bf16.msra.mxu0 %v1420
  %2233 = vmatprep.mubr.bf16.mxu0 %v411
  %2234 = vmatmul.mubr.bf16.gmra.mxu0 %v410
  %v2235 = vpop.f32.mrf.mxu0
  %v2236 = vadd.f32 %v2143, %v2235
  %v2237 = vpop.f32.mrf.mxu0
  %v2238 = vadd.f32 %v2145, %v2237
  %v2239 = vpop.f32.mrf.mxu0
  %v2240 = vadd.f32 %v2147, %v2239
  %v2241 = vpop.f32.mrf.mxu0
  %v2242 = vadd.f32 %v2149, %v2241
  %2243 = vmatprep.mubr.bf16.mxu0 %v415
  %2244 = vmatmul.mubr.bf16.gmra.mxu0 %v414
  %v2245 = vpop.f32.mrf.mxu0
  %v2246 = vadd.f32 %v2153, %v2245
  %v2247 = vpop.f32.mrf.mxu0
  %v2248 = vadd.f32 %v2155, %v2247
  %v2249 = vpop.f32.mrf.mxu0
  %v2250 = vadd.f32 %v2157, %v2249
  %v2251 = vpop.f32.mrf.mxu0
  %v2252 = vadd.f32 %v2159, %v2251
  %2253 = vmatprep.mubr.bf16.mxu0 %v419
  %2254 = vmatmul.mubr.bf16.gmra.mxu0 %v418
  %v2255 = vpop.f32.mrf.mxu0
  %v2256 = vadd.f32 %v2163, %v2255
  %v2257 = vpop.f32.mrf.mxu0
  %v2258 = vadd.f32 %v2165, %v2257
  %v2259 = vpop.f32.mrf.mxu0
  %v2260 = vadd.f32 %v2167, %v2259
  %v2261 = vpop.f32.mrf.mxu0
  %v2262 = vadd.f32 %v2169, %v2261
  %2263 = vmatprep.mubr.bf16.mxu0 %v423
  %2264 = vmatmul.mubr.bf16.gmra.mxu0 %v422
  %v2265 = vpop.f32.mrf.mxu0
  %v2266 = vadd.f32 %v2173, %v2265
  %v2267 = vpop.f32.mrf.mxu0
  %v2268 = vadd.f32 %v2175, %v2267
  %v2269 = vpop.f32.mrf.mxu0
  %v2270 = vadd.f32 %v2177, %v2269
  %v2271 = vpop.f32.mrf.mxu0
  %v2272 = vadd.f32 %v2179, %v2271
  %2273 = vmatprep.mubr.bf16.mxu0 %v427
  %2274 = vmatmul.mubr.bf16.gmra.mxu0 %v426
  %v2275 = vpop.f32.mrf.mxu0
  %v2276 = vadd.f32 %v2183, %v2275
  %v2277 = vpop.f32.mrf.mxu0
  %v2278 = vadd.f32 %v2185, %v2277
  %v2279 = vpop.f32.mrf.mxu0
  %v2280 = vadd.f32 %v2187, %v2279
  %v2281 = vpop.f32.mrf.mxu0
  %v2282 = vadd.f32 %v2189, %v2281
  %2283 = vmatprep.mubr.bf16.mxu0 %v431
  %2284 = vmatmul.mubr.bf16.gmra.mxu0 %v430
  %v2285 = vpop.f32.mrf.mxu0
  %v2286 = vadd.f32 %v2193, %v2285
  %v2287 = vpop.f32.mrf.mxu0
  %v2288 = vadd.f32 %v2195, %v2287
  %v2289 = vpop.f32.mrf.mxu0
  %v2290 = vadd.f32 %v2197, %v2289
  %v2291 = vpop.f32.mrf.mxu0
  %v2292 = vadd.f32 %v2199, %v2291
  %2293 = vdwg.mxu0
  %2294 = vmatprep.subr.bf16.mxu0 %v1287
  %2295 = vmatpush1.bf16.msra.mxu0 %v1286
  %2296 = vmatprep.subr.bf16.mxu0 %v1279
  %2297 = vmatpush1.bf16.msra.mxu0 %v1278
  %2298 = vmatprep.subr.bf16.mxu0 %v1271
  %2299 = vmatpush1.bf16.msra.mxu0 %v1270
  %2300 = vmatprep.subr.bf16.mxu0 %v1263
  %2301 = vmatpush1.bf16.msra.mxu0 %v1262
  %2302 = vmatprep.subr.bf16.mxu0 %v1255
  %2303 = vmatpush1.bf16.msra.mxu0 %v1254
  %2304 = vmatprep.subr.bf16.mxu0 %v1247
  %2305 = vmatpush1.bf16.msra.mxu0 %v1246
  %2306 = vmatprep.subr.bf16.mxu0 %v1239
  %2307 = vmatpush1.bf16.msra.mxu0 %v1238
  %2308 = vmatprep.subr.bf16.mxu0 %v1231
  %2309 = vmatpush1.bf16.msra.mxu0 %v1230
  %2310 = vmatprep.subr.bf16.mxu0 %v1351
  %2311 = vmatpush2.bf16.msra.mxu0 %v1350
  %2312 = vmatprep.subr.bf16.mxu0 %v1343
  %2313 = vmatpush2.bf16.msra.mxu0 %v1342
  %2314 = vmatprep.subr.bf16.mxu0 %v1335
  %2315 = vmatpush2.bf16.msra.mxu0 %v1334
  %2316 = vmatprep.subr.bf16.mxu0 %v1327
  %2317 = vmatpush2.bf16.msra.mxu0 %v1326
  %2318 = vmatprep.subr.bf16.mxu0 %v1319
  %2319 = vmatpush2.bf16.msra.mxu0 %v1318
  %2320 = vmatprep.subr.bf16.mxu0 %v1311
  %2321 = vmatpush2.bf16.msra.mxu0 %v1310
  %2322 = vmatprep.subr.bf16.mxu0 %v1303
  %2323 = vmatpush2.bf16.msra.mxu0 %v1302
  %2324 = vmatprep.subr.bf16.mxu0 %v1295
  %2325 = vmatpush2.bf16.msra.mxu0 %v1294
  %2326 = vmatprep.mubr.bf16.mxu0 %v409
  %2327 = vmatmul.mubr.bf16.gmra.mxu0 %v408
  %v2328 = vpop.f32.mrf.mxu0
  %v2329 = vadd.f32 %v323, %v2328
  %v2330 = vpop.f32.mrf.mxu0
  %v2331 = vadd.f32 %v327, %v2330
  %v2332 = vpop.f32.mrf.mxu0
  %v2333 = vadd.f32 %v323, %v2332
  %v2334 = vpop.f32.mrf.mxu0
  %v2335 = vadd.f32 %v327, %v2334
  %2336 = vmatprep.mubr.bf16.mxu0 %v413
  %2337 = vmatmul.mubr.bf16.gmra.mxu0 %v412
  %v2338 = vpop.f32.mrf.mxu0
  %v2339 = vadd.f32 %v323, %v2338
  %v2340 = vpop.f32.mrf.mxu0
  %v2341 = vadd.f32 %v327, %v2340
  %v2342 = vpop.f32.mrf.mxu0
  %v2343 = vadd.f32 %v323, %v2342
  %v2344 = vpop.f32.mrf.mxu0
  %v2345 = vadd.f32 %v327, %v2344
  %2346 = vmatprep.mubr.bf16.mxu0 %v417
  %2347 = vmatmul.mubr.bf16.gmra.mxu0 %v416
  %v2348 = vpop.f32.mrf.mxu0
  %v2349 = vadd.f32 %v323, %v2348
  %v2350 = vpop.f32.mrf.mxu0
  %v2351 = vadd.f32 %v327, %v2350
  %v2352 = vpop.f32.mrf.mxu0
  %v2353 = vadd.f32 %v323, %v2352
  %v2354 = vpop.f32.mrf.mxu0
  %v2355 = vadd.f32 %v327, %v2354
  %2356 = vmatprep.mubr.bf16.mxu0 %v421
  %2357 = vmatmul.mubr.bf16.gmra.mxu0 %v420
  %v2358 = vpop.f32.mrf.mxu0
  %v2359 = vadd.f32 %v323, %v2358
  %v2360 = vpop.f32.mrf.mxu0
  %v2361 = vadd.f32 %v327, %v2360
  %v2362 = vpop.f32.mrf.mxu0
  %v2363 = vadd.f32 %v323, %v2362
  %v2364 = vpop.f32.mrf.mxu0
  %v2365 = vadd.f32 %v327, %v2364
  %2366 = vmatprep.mubr.bf16.mxu0 %v425
  %2367 = vmatmul.mubr.bf16.gmra.mxu0 %v424
  %v2368 = vpop.f32.mrf.mxu0
  %v2369 = vadd.f32 %v323, %v2368
  %v2370 = vpop.f32.mrf.mxu0
  %v2371 = vadd.f32 %v327, %v2370
  %v2372 = vpop.f32.mrf.mxu0
  %v2373 = vadd.f32 %v323, %v2372
  %v2374 = vpop.f32.mrf.mxu0
  %v2375 = vadd.f32 %v327, %v2374
  %2376 = vmatprep.mubr.bf16.mxu0 %v429
  %2377 = vmatmul.mubr.bf16.gmra.mxu0 %v428
  %v2378 = vpop.f32.mrf.mxu0
  %v2379 = vadd.f32 %v323, %v2378
  %v2380 = vpop.f32.mrf.mxu0
  %v2381 = vadd.f32 %v327, %v2380
  %v2382 = vpop.f32.mrf.mxu0
  %v2383 = vadd.f32 %v323, %v2382
  %v2384 = vpop.f32.mrf.mxu0
  %v2385 = vadd.f32 %v327, %v2384
  %2386 = vdwg.mxu0
  %2387 = vmatprep.subr.bf16.mxu0 %v1415
  %2388 = vmatpush1.bf16.msra.mxu0 %v1414
  %2389 = vmatprep.subr.bf16.mxu0 %v1407
  %2390 = vmatpush1.bf16.msra.mxu0 %v1406
  %2391 = vmatprep.subr.bf16.mxu0 %v1399
  %2392 = vmatpush1.bf16.msra.mxu0 %v1398
  %2393 = vmatprep.subr.bf16.mxu0 %v1391
  %2394 = vmatpush1.bf16.msra.mxu0 %v1390
  %2395 = vmatprep.subr.bf16.mxu0 %v1383
  %2396 = vmatpush1.bf16.msra.mxu0 %v1382
  %2397 = vmatprep.subr.bf16.mxu0 %v1375
  %2398 = vmatpush1.bf16.msra.mxu0 %v1374
  %2399 = vmatprep.subr.bf16.mxu0 %v1367
  %2400 = vmatpush1.bf16.msra.mxu0 %v1366
  %2401 = vmatprep.subr.bf16.mxu0 %v1359
  %2402 = vmatpush1.bf16.msra.mxu0 %v1358
  %2403 = vmatprep.subr.bf16.mxu0 %v1479
  %2404 = vmatpush2.bf16.msra.mxu0 %v1478
  %2405 = vmatprep.subr.bf16.mxu0 %v1471
  %2406 = vmatpush2.bf16.msra.mxu0 %v1470
  %2407 = vmatprep.subr.bf16.mxu0 %v1463
  %2408 = vmatpush2.bf16.msra.mxu0 %v1462
  %2409 = vmatprep.subr.bf16.mxu0 %v1455
  %2410 = vmatpush2.bf16.msra.mxu0 %v1454
  %2411 = vmatprep.subr.bf16.mxu0 %v1447
  %2412 = vmatpush2.bf16.msra.mxu0 %v1446
  %2413 = vmatprep.subr.bf16.mxu0 %v1439
  %2414 = vmatpush2.bf16.msra.mxu0 %v1438
  %2415 = vmatprep.subr.bf16.mxu0 %v1431
  %2416 = vmatpush2.bf16.msra.mxu0 %v1430
  %2417 = vmatprep.subr.bf16.mxu0 %v1423
  %2418 = vmatpush2.bf16.msra.mxu0 %v1422
  %2419 = vmatprep.mubr.bf16.mxu0 %v411
  %2420 = vmatmul.mubr.bf16.gmra.mxu0 %v410
  %v2421 = vpop.f32.mrf.mxu0
  %v2422 = vadd.f32 %v2329, %v2421
  %v2423 = vpop.f32.mrf.mxu0
  %v2424 = vadd.f32 %v2331, %v2423
  %v2425 = vpop.f32.mrf.mxu0
  %v2426 = vadd.f32 %v2333, %v2425
  %v2427 = vpop.f32.mrf.mxu0
  %v2428 = vadd.f32 %v2335, %v2427
  %2429 = vmatprep.mubr.bf16.mxu0 %v415
  %2430 = vmatmul.mubr.bf16.gmra.mxu0 %v414
  %v2431 = vpop.f32.mrf.mxu0
  %v2432 = vadd.f32 %v2339, %v2431
  %v2433 = vpop.f32.mrf.mxu0
  %v2434 = vadd.f32 %v2341, %v2433
  %v2435 = vpop.f32.mrf.mxu0
  %v2436 = vadd.f32 %v2343, %v2435
  %v2437 = vpop.f32.mrf.mxu0
  %v2438 = vadd.f32 %v2345, %v2437
  %2439 = vmatprep.mubr.bf16.mxu0 %v419
  %2440 = vmatmul.mubr.bf16.gmra.mxu0 %v418
  %v2441 = vpop.f32.mrf.mxu0
  %v2442 = vadd.f32 %v2349, %v2441
  %v2443 = vpop.f32.mrf.mxu0
  %v2444 = vadd.f32 %v2351, %v2443
  %v2445 = vpop.f32.mrf.mxu0
  %v2446 = vadd.f32 %v2353, %v2445
  %v2447 = vpop.f32.mrf.mxu0
  %v2448 = vadd.f32 %v2355, %v2447
  %2449 = vmatprep.mubr.bf16.mxu0 %v423
  %2450 = vmatmul.mubr.bf16.gmra.mxu0 %v422
  %v2451 = vpop.f32.mrf.mxu0
  %v2452 = vadd.f32 %v2359, %v2451
  %v2453 = vpop.f32.mrf.mxu0
  %v2454 = vadd.f32 %v2361, %v2453
  %v2455 = vpop.f32.mrf.mxu0
  %v2456 = vadd.f32 %v2363, %v2455
  %v2457 = vpop.f32.mrf.mxu0
  %v2458 = vadd.f32 %v2365, %v2457
  %2459 = vmatprep.mubr.bf16.mxu0 %v427
  %2460 = vmatmul.mubr.bf16.gmra.mxu0 %v426
  %v2461 = vpop.f32.mrf.mxu0
  %v2462 = vadd.f32 %v2369, %v2461
  %v2463 = vpop.f32.mrf.mxu0
  %v2464 = vadd.f32 %v2371, %v2463
  %v2465 = vpop.f32.mrf.mxu0
  %v2466 = vadd.f32 %v2373, %v2465
  %v2467 = vpop.f32.mrf.mxu0
  %v2468 = vadd.f32 %v2375, %v2467
  %2469 = vmatprep.mubr.bf16.mxu0 %v431
  %2470 = vmatmul.mubr.bf16.gmra.mxu0 %v430
  %v2471 = vpop.f32.mrf.mxu0
  %v2472 = vadd.f32 %v2379, %v2471
  %v2473 = vpop.f32.mrf.mxu0
  %v2474 = vadd.f32 %v2381, %v2473
  %v2475 = vpop.f32.mrf.mxu0
  %v2476 = vadd.f32 %v2383, %v2475
  %v2477 = vpop.f32.mrf.mxu0
  %v2478 = vadd.f32 %v2385, %v2477
  %2479 = vdwg.mxu0
  %v2480 = vpack.c.bf16 %v1868, %v1864
  %v2481 = vpack.c.bf16 %v1870, %v1866
  %v2482 = vpack.c.bf16 %v2054, %v2050
  %v2483 = vpack.c.bf16 %v2056, %v2052
  %v2484 = vpack.c.bf16 %v2240, %v2236
  %v2485 = vpack.c.bf16 %v2242, %v2238
  %v2486 = vpack.c.bf16 %v2426, %v2422
  %v2487 = vpack.c.bf16 %v2428, %v2424
  %v2488 = vpack.c.bf16 %v1878, %v1874
  %v2489 = vpack.c.bf16 %v1880, %v1876
  %v2490 = vpack.c.bf16 %v2064, %v2060
  %v2491 = vpack.c.bf16 %v2066, %v2062
  %v2492 = vpack.c.bf16 %v2250, %v2246
  %v2493 = vpack.c.bf16 %v2252, %v2248
  %v2494 = vpack.c.bf16 %v2436, %v2432
  %v2495 = vpack.c.bf16 %v2438, %v2434
  %v2496 = vpack.c.bf16 %v1888, %v1884
  %v2497 = vpack.c.bf16 %v1890, %v1886
  %v2498 = vpack.c.bf16 %v2074, %v2070
  %v2499 = vpack.c.bf16 %v2076, %v2072
  %v2500 = vpack.c.bf16 %v2260, %v2256
  %v2501 = vpack.c.bf16 %v2262, %v2258
  %v2502 = vpack.c.bf16 %v2446, %v2442
  %v2503 = vpack.c.bf16 %v2448, %v2444
  %v2504 = vpack.c.bf16 %v1898, %v1894
  %v2505 = vpack.c.bf16 %v1900, %v1896
  %v2506 = vpack.c.bf16 %v2084, %v2080
  %v2507 = vpack.c.bf16 %v2086, %v2082
  %v2508 = vpack.c.bf16 %v2270, %v2266
  %v2509 = vpack.c.bf16 %v2272, %v2268
  %v2510 = vpack.c.bf16 %v2456, %v2452
  %v2511 = vpack.c.bf16 %v2458, %v2454
  %v2512 = vpack.c.bf16 %v1908, %v1904
  %v2513 = vpack.c.bf16 %v1910, %v1906
  %v2514 = vpack.c.bf16 %v2094, %v2090
  %v2515 = vpack.c.bf16 %v2096, %v2092
  %v2516 = vpack.c.bf16 %v2280, %v2276
  %v2517 = vpack.c.bf16 %v2282, %v2278
  %v2518 = vpack.c.bf16 %v2466, %v2462
  %v2519 = vpack.c.bf16 %v2468, %v2464
  %v2520 = vpack.c.bf16 %v1918, %v1914
  %v2521 = vpack.c.bf16 %v1920, %v1916
  %v2522 = vpack.c.bf16 %v2104, %v2100
  %v2523 = vpack.c.bf16 %v2106, %v2102
  %v2524 = vpack.c.bf16 %v2290, %v2286
  %v2525 = vpack.c.bf16 %v2292, %v2288
  %v2526 = vpack.c.bf16 %v2476, %v2472
  %v2527 = vpack.c.bf16 %v2478, %v2474
  %v2576 = vunpack.c.l.b16 %v2480
  %v2577 = vunpack.c.l.b16 %v2481
  %v2578 = vunpack.c.l.b16 %v2482
  %v2579 = vunpack.c.l.b16 %v2483
  %v2580 = vunpack.c.l.b16 %v2484
  %v2581 = vunpack.c.l.b16 %v2485
  %v2582 = vunpack.c.l.b16 %v2486
  %v2583 = vunpack.c.l.b16 %v2487
  %v2584 = vunpack.c.h.b16 %v2480
  %v2585 = vunpack.c.h.b16 %v2481
  %v2586 = vunpack.c.h.b16 %v2482
  %v2587 = vunpack.c.h.b16 %v2483
  %v2588 = vunpack.c.h.b16 %v2484
  %v2589 = vunpack.c.h.b16 %v2485
  %v2590 = vunpack.c.h.b16 %v2486
  %v2591 = vunpack.c.h.b16 %v2487
  %v2592 = vunpack.c.l.b16 %v2488
  %v2593 = vunpack.c.l.b16 %v2489
  %v2594 = vunpack.c.l.b16 %v2490
  %v2595 = vunpack.c.l.b16 %v2491
  %v2596 = vunpack.c.l.b16 %v2492
  %v2597 = vunpack.c.l.b16 %v2493
  %v2598 = vunpack.c.l.b16 %v2494
  %v2599 = vunpack.c.l.b16 %v2495
  %v2600 = vunpack.c.h.b16 %v2488
  %v2601 = vunpack.c.h.b16 %v2489
  %v2602 = vunpack.c.h.b16 %v2490
  %v2603 = vunpack.c.h.b16 %v2491
  %v2604 = vunpack.c.h.b16 %v2492
  %v2605 = vunpack.c.h.b16 %v2493
  %v2606 = vunpack.c.h.b16 %v2494
  %v2607 = vunpack.c.h.b16 %v2495
  %v2608 = vunpack.c.l.b16 %v2496
  %v2609 = vunpack.c.l.b16 %v2497
  %v2610 = vunpack.c.l.b16 %v2498
  %v2611 = vunpack.c.l.b16 %v2499
  %v2612 = vunpack.c.l.b16 %v2500
  %v2613 = vunpack.c.l.b16 %v2501
  %v2614 = vunpack.c.l.b16 %v2502
  %v2615 = vunpack.c.l.b16 %v2503
  %v2616 = vunpack.c.h.b16 %v2496
  %v2617 = vunpack.c.h.b16 %v2497
  %v2618 = vunpack.c.h.b16 %v2498
  %v2619 = vunpack.c.h.b16 %v2499
  %v2620 = vunpack.c.h.b16 %v2500
  %v2621 = vunpack.c.h.b16 %v2501
  %v2622 = vunpack.c.h.b16 %v2502
  %v2623 = vunpack.c.h.b16 %v2503
  %v2624 = vunpack.c.l.b16 %v2504
  %v2625 = vunpack.c.l.b16 %v2505
  %v2626 = vunpack.c.l.b16 %v2506
  %v2627 = vunpack.c.l.b16 %v2507
  %v2628 = vunpack.c.l.b16 %v2508
  %v2629 = vunpack.c.l.b16 %v2509
  %v2630 = vunpack.c.l.b16 %v2510
  %v2631 = vunpack.c.l.b16 %v2511
  %v2632 = vunpack.c.h.b16 %v2504
  %v2633 = vunpack.c.h.b16 %v2505
  %v2634 = vunpack.c.h.b16 %v2506
  %v2635 = vunpack.c.h.b16 %v2507
  %v2636 = vunpack.c.h.b16 %v2508
  %v2637 = vunpack.c.h.b16 %v2509
  %v2638 = vunpack.c.h.b16 %v2510
  %v2639 = vunpack.c.h.b16 %v2511
  %v2640 = vunpack.c.l.b16 %v2512
  %v2641 = vunpack.c.l.b16 %v2513
  %v2642 = vunpack.c.l.b16 %v2514
  %v2643 = vunpack.c.l.b16 %v2515
  %v2644 = vunpack.c.l.b16 %v2516
  %v2645 = vunpack.c.l.b16 %v2517
  %v2646 = vunpack.c.l.b16 %v2518
  %v2647 = vunpack.c.l.b16 %v2519
  %v2648 = vunpack.c.h.b16 %v2512
  %v2649 = vunpack.c.h.b16 %v2513
  %v2650 = vunpack.c.h.b16 %v2514
  %v2651 = vunpack.c.h.b16 %v2515
  %v2652 = vunpack.c.h.b16 %v2516
  %v2653 = vunpack.c.h.b16 %v2517
  %v2654 = vunpack.c.h.b16 %v2518
  %v2655 = vunpack.c.h.b16 %v2519
  %v2656 = vunpack.c.l.b16 %v2520
  %v2657 = vunpack.c.l.b16 %v2521
  %v2658 = vunpack.c.l.b16 %v2522
  %v2659 = vunpack.c.l.b16 %v2523
  %v2660 = vunpack.c.l.b16 %v2524
  %v2661 = vunpack.c.l.b16 %v2525
  %v2662 = vunpack.c.l.b16 %v2526
  %v2663 = vunpack.c.l.b16 %v2527
  %v2664 = vunpack.c.h.b16 %v2520
  %v2665 = vunpack.c.h.b16 %v2521
  %v2666 = vunpack.c.h.b16 %v2522
  %v2667 = vunpack.c.h.b16 %v2523
  %v2668 = vunpack.c.h.b16 %v2524
  %v2669 = vunpack.c.h.b16 %v2525
  %v2670 = vunpack.c.h.b16 %v2526
  %v2671 = vunpack.c.h.b16 %v2527
  %v2672 = vpack.c.b16 %v2577, %v2576
  %v2673 = vpack.c.b16 %v2579, %v2578
  %v2674 = vpack.c.b16 %v2581, %v2580
  %v2675 = vpack.c.b16 %v2583, %v2582
  %v2676 = vpack.c.b16 %v2585, %v2584
  %v2677 = vpack.c.b16 %v2587, %v2586
  %v2678 = vpack.c.b16 %v2589, %v2588
  %v2679 = vpack.c.b16 %v2591, %v2590
  %v2680 = vpack.c.b16 %v2593, %v2592
  %v2681 = vpack.c.b16 %v2595, %v2594
  %v2682 = vpack.c.b16 %v2597, %v2596
  %v2683 = vpack.c.b16 %v2599, %v2598
  %v2684 = vpack.c.b16 %v2601, %v2600
  %v2685 = vpack.c.b16 %v2603, %v2602
  %v2686 = vpack.c.b16 %v2605, %v2604
  %v2687 = vpack.c.b16 %v2607, %v2606
  %v2688 = vpack.c.b16 %v2609, %v2608
  %v2689 = vpack.c.b16 %v2611, %v2610
  %v2690 = vpack.c.b16 %v2613, %v2612
  %v2691 = vpack.c.b16 %v2615, %v2614
  %v2692 = vpack.c.b16 %v2617, %v2616
  %v2693 = vpack.c.b16 %v2619, %v2618
  %v2694 = vpack.c.b16 %v2621, %v2620
  %v2695 = vpack.c.b16 %v2623, %v2622
  %v2696 = vpack.c.b16 %v2625, %v2624
  %v2697 = vpack.c.b16 %v2627, %v2626
  %v2698 = vpack.c.b16 %v2629, %v2628
  %v2699 = vpack.c.b16 %v2631, %v2630
  %v2700 = vpack.c.b16 %v2633, %v2632
  %v2701 = vpack.c.b16 %v2635, %v2634
  %v2702 = vpack.c.b16 %v2637, %v2636
  %v2703 = vpack.c.b16 %v2639, %v2638
  %v2704 = vpack.c.b16 %v2641, %v2640
  %v2705 = vpack.c.b16 %v2643, %v2642
  %v2706 = vpack.c.b16 %v2645, %v2644
  %v2707 = vpack.c.b16 %v2647, %v2646
  %v2708 = vpack.c.b16 %v2649, %v2648
  %v2709 = vpack.c.b16 %v2651, %v2650
  %v2710 = vpack.c.b16 %v2653, %v2652
  %v2711 = vpack.c.b16 %v2655, %v2654
  %v2712 = vpack.c.b16 %v2657, %v2656
  %v2713 = vpack.c.b16 %v2659, %v2658
  %v2714 = vpack.c.b16 %v2661, %v2660
  %v2715 = vpack.c.b16 %v2663, %v2662
  %v2716 = vpack.c.b16 %v2665, %v2664
  %v2717 = vpack.c.b16 %v2667, %v2666
  %v2718 = vpack.c.b16 %v2669, %v2668
  %v2719 = vpack.c.b16 %v2671, %v2670
  %2768 = vst [vmem:[%s3] sm:$0xff] %v2672
  %2769 = vst [vmem:[%s3 + $0x8] sm:$0xff] %v2673
  %2770 = vst [vmem:[%s3 + $0x10] sm:$0xff] %v2674
  %2771 = vst [vmem:[%s3 + $0x18] sm:$0xff] %v2675
  %2772 = vst [vmem:[%s3 + $0x20] sm:$0xff] %v2676
  %2773 = vst [vmem:[%s3 + $0x28] sm:$0xff] %v2677
  %2774 = vst [vmem:[%s3 + $0x30] sm:$0xff] %v2678
  %2775 = vst [vmem:[%s3 + $0x38] sm:$0xff] %v2679
  %2776 = vst [vmem:[%s3 + $0x40] sm:$0xff] %v2680
  %2777 = vst [vmem:[%s3 + $0x48] sm:$0xff] %v2681
  %2778 = vst [vmem:[%s3 + $0x50] sm:$0xff] %v2682
  %2779 = vst [vmem:[%s3 + $0x58] sm:$0xff] %v2683
  %2780 = vst [vmem:[%s3 + $0x60] sm:$0xff] %v2684
  %2781 = vst [vmem:[%s3 + $0x68] sm:$0xff] %v2685
  %2782 = vst [vmem:[%s3 + $0x70] sm:$0xff] %v2686
  %2783 = vst [vmem:[%s3 + $0x78] sm:$0xff] %v2687
  %2784 = vst [vmem:[%s3 + $0x80] sm:$0xff] %v2688
  %2785 = vst [vmem:[%s3 + $0x88] sm:$0xff] %v2689
  %2786 = vst [vmem:[%s3 + $0x90] sm:$0xff] %v2690
  %2787 = vst [vmem:[%s3 + $0x98] sm:$0xff] %v2691
  %2788 = vst [vmem:[%s3 + $0xa0] sm:$0xff] %v2692
  %2789 = vst [vmem:[%s3 + $0xa8] sm:$0xff] %v2693
  %2790 = vst [vmem:[%s3 + $0xb0] sm:$0xff] %v2694
  %2791 = vst [vmem:[%s3 + $0xb8] sm:$0xff] %v2695
  %2792 = vst [vmem:[%s3 + $0xc0] sm:$0xff] %v2696
  %2793 = vst [vmem:[%s3 + $0xc8] sm:$0xff] %v2697
  %2794 = vst [vmem:[%s3 + $0xd0] sm:$0xff] %v2698
  %2795 = vst [vmem:[%s3 + $0xd8] sm:$0xff] %v2699
  %2796 = vst [vmem:[%s3 + $0xe0] sm:$0xff] %v2700
  %2797 = vst [vmem:[%s3 + $0xe8] sm:$0xff] %v2701
  %2798 = vst [vmem:[%s3 + $0xf0] sm:$0xff] %v2702
  %2799 = vst [vmem:[%s3 + $0xf8] sm:$0xff] %v2703
  %2800 = vst [vmem:[%s3 + $0x100] sm:$0xff] %v2704
  %2801 = vst [vmem:[%s3 + $0x108] sm:$0xff] %v2705
  %2802 = vst [vmem:[%s3 + $0x110] sm:$0xff] %v2706
  %2803 = vst [vmem:[%s3 + $0x118] sm:$0xff] %v2707
  %2804 = vst [vmem:[%s3 + $0x120] sm:$0xff] %v2708
  %2805 = vst [vmem:[%s3 + $0x128] sm:$0xff] %v2709
  %2806 = vst [vmem:[%s3 + $0x130] sm:$0xff] %v2710
  %2807 = vst [vmem:[%s3 + $0x138] sm:$0xff] %v2711
  %2808 = vst [vmem:[%s3 + $0x140] sm:$0xff] %v2712
  %2809 = vst [vmem:[%s3 + $0x148] sm:$0xff] %v2713
  %2810 = vst [vmem:[%s3 + $0x150] sm:$0xff] %v2714
  %2811 = vst [vmem:[%s3 + $0x158] sm:$0xff] %v2715
  %2812 = vst [vmem:[%s3 + $0x160] sm:$0xff] %v2716
  %2813 = vst [vmem:[%s3 + $0x168] sm:$0xff] %v2717
  %2814 = vst [vmem:[%s3 + $0x170] sm:$0xff] %v2718
  %2815 = vst [vmem:[%s3 + $0x178] sm:$0xff] %v2719
  // Predicated region
  $region14: #{custom_model_forward.12} parent=0 // pred_check
    _
  $region15: #{custom_model_forward.12} parent=0 // pred_check_branch
    %2817 = sbr.rel (0) target = $region17
  $region16: #{custom_model_forward.12} parent=0 // pred_region
    _
  $region17: #{custom_model_forward.12} parent=0 // pred_fallthru
    _
  // Predicated region
  $region18: #{custom_model_forward.12} parent=0 // pred_check
    _
  $region19: #{custom_model_forward.12} parent=0 // pred_check_branch
    %2819 = sbr.rel (0) target = $region21
  $region20: #{custom_model_forward.12} parent=0 // pred_region
    _
  $region21: #{custom_model_forward.12} parent=0 // pred_fallthru
    _

// kernel: custom_model_forward.14
$region0: #{custom_model_forward.14}
  #allocation0 [shape = 'u32[]', space=smem, size = 0x4, offset = 0x4, fixed_abs, tag = 'smem constant byte address 0x4 - core index']
  #allocation1 [shape = 'u32[144,128]{1,0:T(1,128)}', space=vmem, size = 0x12000, scoped, tag = 'internal scratch']
  %s0 = inlined_call_operand.vmem [shape: bf16[32,512], index: 0, kind: input, shape index: {}, may-alias: {0,3}]
  %s1 = inlined_call_operand.vmem [shape: bf16[512,512], index: 1, kind: input, shape index: {}]
  %s2 = inlined_call_operand.vmem [shape: f32[1,512], index: 2, kind: input, shape index: {}]
  %s3 = inlined_call_operand.vmem [shape: bf16[32,512], index: 3, kind: input, shape index: {}, may-alias: {0,3}]
  %s4 = inlined_call_operand.vmem [shape: bf16[32,512], index: 4, kind: output, shape index: {}]
  %s5 = sld [smem:[#allocation0]]
  $region26: #{custom_model_forward.14} parent=0
    _
  %s7 = ssub.s32 1, %s5
  %s8 = scalar_select 0, %s7, %s5
  // Predicated region
  $region2: #{custom_model_forward.14} parent=0 // pred_check
    _
  $region3: #{custom_model_forward.14} parent=0 // pred_check_branch
    %10 = sbr.rel (0) target = $region5
  $region4: #{custom_model_forward.14} parent=0 // pred_region
    _
  $region5: #{custom_model_forward.14} parent=0 // pred_fallthru
    _
  // Predicated region
  $region6: #{custom_model_forward.14} parent=0 // pred_check
    _
  $region7: #{custom_model_forward.14} parent=0 // pred_check_branch
    %12 = sbr.rel (0) target = $region9
  $region8: #{custom_model_forward.14} parent=0 // pred_region
    _
  $region9: #{custom_model_forward.14} parent=0 // pred_fallthru
    _
  // Predicated region
  $region10: #{custom_model_forward.14} parent=0 // pred_check
    _
  $region11: #{custom_model_forward.14} parent=0 // pred_check_branch
    %14 = sbr.rel (0) target = $region13
  $region12: #{custom_model_forward.14} parent=0 // pred_region
    _
  $region13: #{custom_model_forward.14} parent=0 // pred_fallthru
    _
  // Predicated region
  $region14: #{custom_model_forward.14} parent=0 // pred_check
    _
  $region15: #{custom_model_forward.14} parent=0 // pred_check_branch
    %16 = sbr.rel (0) target = $region17
  $region16: #{custom_model_forward.14} parent=0 // pred_region
    _
  $region17: #{custom_model_forward.14} parent=0 // pred_fallthru
    _
  %v17 = vld [vmem:[%s0] sm:$0xff]
  %v18 = vld [vmem:[%s0 + $0x8] sm:$0xff]
  %v19 = vld [vmem:[%s0 + $0x10] sm:$0xff]
  %v20 = vld [vmem:[%s0 + $0x18] sm:$0xff]
  %v21 = vld [vmem:[%s0 + $0x20] sm:$0xff]
  %v22 = vld [vmem:[%s0 + $0x28] sm:$0xff]
  %v23 = vld [vmem:[%s0 + $0x30] sm:$0xff]
  %v24 = vld [vmem:[%s0 + $0x38] sm:$0xff]
  %v25 = vld [vmem:[%s1] sm:$0xff]
  %v26 = vld [vmem:[%s1 + $0x8] sm:$0xff]
  %v27 = vld [vmem:[%s1 + $0x10] sm:$0xff]
  %v28 = vld [vmem:[%s1 + $0x18] sm:$0xff]
  %v29 = vld [vmem:[%s1 + $0x20] sm:$0xff]
  %v30 = vld [vmem:[%s1 + $0x28] sm:$0xff]
  %v31 = vld [vmem:[%s1 + $0x30] sm:$0xff]
  %v32 = vld [vmem:[%s1 + $0x38] sm:$0xff]
  %v33 = vld [vmem:[%s1 + $0x40] sm:$0xff]
  %v34 = vld [vmem:[%s1 + $0x48] sm:$0xff]
  %v35 = vld [vmem:[%s1 + $0x50] sm:$0xff]
  %v36 = vld [vmem:[%s1 + $0x58] sm:$0xff]
  %v37 = vld [vmem:[%s1 + $0x60] sm:$0xff]
  %v38 = vld [vmem:[%s1 + $0x68] sm:$0xff]
  %v39 = vld [vmem:[%s1 + $0x70] sm:$0xff]
  %v40 = vld [vmem:[%s1 + $0x78] sm:$0xff]
  %v41 = vld [vmem:[%s1 + $0x80] sm:$0xff]
  %v42 = vld [vmem:[%s1 + $0x88] sm:$0xff]
  %v43 = vld [vmem:[%s1 + $0x90] sm:$0xff]
  %v44 = vld [vmem:[%s1 + $0x98] sm:$0xff]
  %v45 = vld [vmem:[%s1 + $0xa0] sm:$0xff]
  %v46 = vld [vmem:[%s1 + $0xa8] sm:$0xff]
  %v47 = vld [vmem:[%s1 + $0xb0] sm:$0xff]
  %v48 = vld [vmem:[%s1 + $0xb8] sm:$0xff]
  %v49 = vld [vmem:[%s1 + $0xc0] sm:$0xff]
  %v50 = vld [vmem:[%s1 + $0xc8] sm:$0xff]
  %v51 = vld [vmem:[%s1 + $0xd0] sm:$0xff]
  %v52 = vld [vmem:[%s1 + $0xd8] sm:$0xff]
  %v53 = vld [vmem:[%s1 + $0xe0] sm:$0xff]
  %v54 = vld [vmem:[%s1 + $0xe8] sm:$0xff]
  %v55 = vld [vmem:[%s1 + $0xf0] sm:$0xff]
  %v56 = vld [vmem:[%s1 + $0xf8] sm:$0xff]
  %v57 = vld [vmem:[%s1 + $0x100] sm:$0xff]
  %v58 = vld [vmem:[%s1 + $0x108] sm:$0xff]
  %v59 = vld [vmem:[%s1 + $0x110] sm:$0xff]
  %v60 = vld [vmem:[%s1 + $0x118] sm:$0xff]
  %v61 = vld [vmem:[%s1 + $0x120] sm:$0xff]
  %v62 = vld [vmem:[%s1 + $0x128] sm:$0xff]
  %v63 = vld [vmem:[%s1 + $0x130] sm:$0xff]
  %v64 = vld [vmem:[%s1 + $0x138] sm:$0xff]
  %v65 = vld [vmem:[%s1 + $0x140] sm:$0xff]
  %v66 = vld [vmem:[%s1 + $0x148] sm:$0xff]
  %v67 = vld [vmem:[%s1 + $0x150] sm:$0xff]
  %v68 = vld [vmem:[%s1 + $0x158] sm:$0xff]
  %v69 = vld [vmem:[%s1 + $0x160] sm:$0xff]
  %v70 = vld [vmem:[%s1 + $0x168] sm:$0xff]
  %v71 = vld [vmem:[%s1 + $0x170] sm:$0xff]
  %v72 = vld [vmem:[%s1 + $0x178] sm:$0xff]
  %v73 = vld [vmem:[%s1 + $0x180] sm:$0xff]
  %v74 = vld [vmem:[%s1 + $0x188] sm:$0xff]
  %v75 = vld [vmem:[%s1 + $0x190] sm:$0xff]
  %v76 = vld [vmem:[%s1 + $0x198] sm:$0xff]
  %v77 = vld [vmem:[%s1 + $0x1a0] sm:$0xff]
  %v78 = vld [vmem:[%s1 + $0x1a8] sm:$0xff]
  %v79 = vld [vmem:[%s1 + $0x1b0] sm:$0xff]
  %v80 = vld [vmem:[%s1 + $0x1b8] sm:$0xff]
  %v81 = vld [vmem:[%s1 + $0x1c0] sm:$0xff]
  %v82 = vld [vmem:[%s1 + $0x1c8] sm:$0xff]
  %v83 = vld [vmem:[%s1 + $0x1d0] sm:$0xff]
  %v84 = vld [vmem:[%s1 + $0x1d8] sm:$0xff]
  %v85 = vld [vmem:[%s1 + $0x1e0] sm:$0xff]
  %v86 = vld [vmem:[%s1 + $0x1e8] sm:$0xff]
  %v87 = vld [vmem:[%s1 + $0x1f0] sm:$0xff]
  %v88 = vld [vmem:[%s1 + $0x1f8] sm:$0xff]
  %v89 = vld [vmem:[%s1 + $0x200] sm:$0xff]
  %v90 = vld [vmem:[%s1 + $0x208] sm:$0xff]
  %v91 = vld [vmem:[%s1 + $0x210] sm:$0xff]
  %v92 = vld [vmem:[%s1 + $0x218] sm:$0xff]
  %v93 = vld [vmem:[%s1 + $0x220] sm:$0xff]
  %v94 = vld [vmem:[%s1 + $0x228] sm:$0xff]
  %v95 = vld [vmem:[%s1 + $0x230] sm:$0xff]
  %v96 = vld [vmem:[%s1 + $0x238] sm:$0xff]
  %v97 = vld [vmem:[%s1 + $0x240] sm:$0xff]
  %v98 = vld [vmem:[%s1 + $0x248] sm:$0xff]
  %v99 = vld [vmem:[%s1 + $0x250] sm:$0xff]
  %v100 = vld [vmem:[%s1 + $0x258] sm:$0xff]
  %v101 = vld [vmem:[%s1 + $0x260] sm:$0xff]
  %v102 = vld [vmem:[%s1 + $0x268] sm:$0xff]
  %v103 = vld [vmem:[%s1 + $0x270] sm:$0xff]
  %v104 = vld [vmem:[%s1 + $0x278] sm:$0xff]
  %v105 = vld [vmem:[%s1 + $0x280] sm:$0xff]
  %v106 = vld [vmem:[%s1 + $0x288] sm:$0xff]
  %v107 = vld [vmem:[%s1 + $0x290] sm:$0xff]
  %v108 = vld [vmem:[%s1 + $0x298] sm:$0xff]
  %v109 = vld [vmem:[%s1 + $0x2a0] sm:$0xff]
  %v110 = vld [vmem:[%s1 + $0x2a8] sm:$0xff]
  %v111 = vld [vmem:[%s1 + $0x2b0] sm:$0xff]
  %v112 = vld [vmem:[%s1 + $0x2b8] sm:$0xff]
  %v113 = vld [vmem:[%s1 + $0x2c0] sm:$0xff]
  %v114 = vld [vmem:[%s1 + $0x2c8] sm:$0xff]
  %v115 = vld [vmem:[%s1 + $0x2d0] sm:$0xff]
  %v116 = vld [vmem:[%s1 + $0x2d8] sm:$0xff]
  %v117 = vld [vmem:[%s1 + $0x2e0] sm:$0xff]
  %v118 = vld [vmem:[%s1 + $0x2e8] sm:$0xff]
  %v119 = vld [vmem:[%s1 + $0x2f0] sm:$0xff]
  %v120 = vld [vmem:[%s1 + $0x2f8] sm:$0xff]
  %v121 = vld [vmem:[%s1 + $0x300] sm:$0xff]
  %v122 = vld [vmem:[%s1 + $0x308] sm:$0xff]
  %v123 = vld [vmem:[%s1 + $0x310] sm:$0xff]
  %v124 = vld [vmem:[%s1 + $0x318] sm:$0xff]
  %v125 = vld [vmem:[%s1 + $0x320] sm:$0xff]
  %v126 = vld [vmem:[%s1 + $0x328] sm:$0xff]
  %v127 = vld [vmem:[%s1 + $0x330] sm:$0xff]
  %v128 = vld [vmem:[%s1 + $0x338] sm:$0xff]
  %v129 = vld [vmem:[%s1 + $0x340] sm:$0xff]
  %v130 = vld [vmem:[%s1 + $0x348] sm:$0xff]
  %v131 = vld [vmem:[%s1 + $0x350] sm:$0xff]
  %v132 = vld [vmem:[%s1 + $0x358] sm:$0xff]
  %v133 = vld [vmem:[%s1 + $0x360] sm:$0xff]
  %v134 = vld [vmem:[%s1 + $0x368] sm:$0xff]
  %v135 = vld [vmem:[%s1 + $0x370] sm:$0xff]
  %v136 = vld [vmem:[%s1 + $0x378] sm:$0xff]
  %v137 = vld [vmem:[%s1 + $0x380] sm:$0xff]
  %v138 = vld [vmem:[%s1 + $0x388] sm:$0xff]
  %v139 = vld [vmem:[%s1 + $0x390] sm:$0xff]
  %v140 = vld [vmem:[%s1 + $0x398] sm:$0xff]
  %v141 = vld [vmem:[%s1 + $0x3a0] sm:$0xff]
  %v142 = vld [vmem:[%s1 + $0x3a8] sm:$0xff]
  %v143 = vld [vmem:[%s1 + $0x3b0] sm:$0xff]
  %v144 = vld [vmem:[%s1 + $0x3b8] sm:$0xff]
  %v145 = vld [vmem:[%s1 + $0x3c0] sm:$0xff]
  %v146 = vld [vmem:[%s1 + $0x3c8] sm:$0xff]
  %v147 = vld [vmem:[%s1 + $0x3d0] sm:$0xff]
  %v148 = vld [vmem:[%s1 + $0x3d8] sm:$0xff]
  %v149 = vld [vmem:[%s1 + $0x3e0] sm:$0xff]
  %v150 = vld [vmem:[%s1 + $0x3e8] sm:$0xff]
  %v151 = vld [vmem:[%s1 + $0x3f0] sm:$0xff]
  %v152 = vld [vmem:[%s1 + $0x3f8] sm:$0xff]
  %v153 = vld [vmem:[%s2] sm:$0xf]
  %v155 = vlaneseq
  %v156 = vshrl.u32 %v155, 7
  %v157 = vsub.s32 0, %v156
  %v158 = vrot.slane %v153, %v157
  %v159 = vlaneseq
  %v160 = vshrl.u32 %v159, 7
  %v161 = vsub.s32 1, %v160
  %v162 = vrot.slane %v153, %v161
  %v163 = vlaneseq
  %v164 = vshrl.u32 %v163, 7
  %v165 = vsub.s32 2, %v164
  %v166 = vrot.slane %v153, %v165
  %v167 = vlaneseq
  %v168 = vshrl.u32 %v167, 7
  %v169 = vsub.s32 3, %v168
  %v170 = vrot.slane %v153, %v169
  %v183 = vunpack.c.l.b16 %v17
  %v184 = vunpack.c.h.b16 %v17
  %v185 = vunpack.c.l.b16 %v18
  %v186 = vunpack.c.h.b16 %v18
  %v187 = vunpack.c.l.b16 %v19
  %v188 = vunpack.c.h.b16 %v19
  %v189 = vunpack.c.l.b16 %v20
  %v190 = vunpack.c.h.b16 %v20
  %v191 = vunpack.c.l.b16 %v21
  %v192 = vunpack.c.h.b16 %v21
  %v193 = vunpack.c.l.b16 %v22
  %v194 = vunpack.c.h.b16 %v22
  %v195 = vunpack.c.l.b16 %v23
  %v196 = vunpack.c.h.b16 %v23
  %v197 = vunpack.c.l.b16 %v24
  %v198 = vunpack.c.h.b16 %v24
  %v199 = vpack.c.b16 %v187, %v183
  %v200 = vpack.c.b16 %v188, %v184
  %v201 = vpack.c.b16 %v189, %v185
  %v202 = vpack.c.b16 %v190, %v186
  %v203 = vpack.c.b16 %v195, %v191
  %v204 = vpack.c.b16 %v196, %v192
  %v205 = vpack.c.b16 %v197, %v193
  %v206 = vpack.c.b16 %v198, %v194
  %v343 = vunpack.c.l.b16 %v25
  %v344 = vunpack.c.h.b16 %v25
  %v345 = vunpack.c.l.b16 %v26
  %v346 = vunpack.c.h.b16 %v26
  %v347 = vunpack.c.l.b16 %v27
  %v348 = vunpack.c.h.b16 %v27
  %v349 = vunpack.c.l.b16 %v28
  %v350 = vunpack.c.h.b16 %v28
  %v351 = vunpack.c.l.b16 %v29
  %v352 = vunpack.c.h.b16 %v29
  %v353 = vunpack.c.l.b16 %v30
  %v354 = vunpack.c.h.b16 %v30
  %v355 = vunpack.c.l.b16 %v31
  %v356 = vunpack.c.h.b16 %v31
  %v357 = vunpack.c.l.b16 %v32
  %v358 = vunpack.c.h.b16 %v32
  %v359 = vunpack.c.l.b16 %v33
  %v360 = vunpack.c.h.b16 %v33
  %v361 = vunpack.c.l.b16 %v34
  %v362 = vunpack.c.h.b16 %v34
  %v363 = vunpack.c.l.b16 %v35
  %v364 = vunpack.c.h.b16 %v35
  %v365 = vunpack.c.l.b16 %v36
  %v366 = vunpack.c.h.b16 %v36
  %v367 = vunpack.c.l.b16 %v37
  %v368 = vunpack.c.h.b16 %v37
  %v369 = vunpack.c.l.b16 %v38
  %v370 = vunpack.c.h.b16 %v38
  %v371 = vunpack.c.l.b16 %v39
  %v372 = vunpack.c.h.b16 %v39
  %v373 = vunpack.c.l.b16 %v40
  %v374 = vunpack.c.h.b16 %v40
  %v375 = vunpack.c.l.b16 %v41
  %v376 = vunpack.c.h.b16 %v41
  %v377 = vunpack.c.l.b16 %v42
  %v378 = vunpack.c.h.b16 %v42
  %v379 = vunpack.c.l.b16 %v43
  %v380 = vunpack.c.h.b16 %v43
  %v381 = vunpack.c.l.b16 %v44
  %v382 = vunpack.c.h.b16 %v44
  %v383 = vunpack.c.l.b16 %v45
  %v384 = vunpack.c.h.b16 %v45
  %v385 = vunpack.c.l.b16 %v46
  %v386 = vunpack.c.h.b16 %v46
  %v387 = vunpack.c.l.b16 %v47
  %v388 = vunpack.c.h.b16 %v47
  %v389 = vunpack.c.l.b16 %v48
  %v390 = vunpack.c.h.b16 %v48
  %v391 = vunpack.c.l.b16 %v49
  %v392 = vunpack.c.h.b16 %v49
  %v393 = vunpack.c.l.b16 %v50
  %v394 = vunpack.c.h.b16 %v50
  %v395 = vunpack.c.l.b16 %v51
  %v396 = vunpack.c.h.b16 %v51
  %v397 = vunpack.c.l.b16 %v52
  %v398 = vunpack.c.h.b16 %v52
  %v399 = vunpack.c.l.b16 %v53
  %v400 = vunpack.c.h.b16 %v53
  %v401 = vunpack.c.l.b16 %v54
  %v402 = vunpack.c.h.b16 %v54
  %v403 = vunpack.c.l.b16 %v55
  %v404 = vunpack.c.h.b16 %v55
  %v405 = vunpack.c.l.b16 %v56
  %v406 = vunpack.c.h.b16 %v56
  %v407 = vunpack.c.l.b16 %v57
  %v408 = vunpack.c.h.b16 %v57
  %v409 = vunpack.c.l.b16 %v58
  %v410 = vunpack.c.h.b16 %v58
  %v411 = vunpack.c.l.b16 %v59
  %v412 = vunpack.c.h.b16 %v59
  %v413 = vunpack.c.l.b16 %v60
  %v414 = vunpack.c.h.b16 %v60
  %v415 = vunpack.c.l.b16 %v61
  %v416 = vunpack.c.h.b16 %v61
  %v417 = vunpack.c.l.b16 %v62
  %v418 = vunpack.c.h.b16 %v62
  %v419 = vunpack.c.l.b16 %v63
  %v420 = vunpack.c.h.b16 %v63
  %v421 = vunpack.c.l.b16 %v64
  %v422 = vunpack.c.h.b16 %v64
  %v423 = vunpack.c.l.b16 %v65
  %v424 = vunpack.c.h.b16 %v65
  %v425 = vunpack.c.l.b16 %v66
  %v426 = vunpack.c.h.b16 %v66
  %v427 = vunpack.c.l.b16 %v67
  %v428 = vunpack.c.h.b16 %v67
  %v429 = vunpack.c.l.b16 %v68
  %v430 = vunpack.c.h.b16 %v68
  %v431 = vunpack.c.l.b16 %v69
  %v432 = vunpack.c.h.b16 %v69
  %v433 = vunpack.c.l.b16 %v70
  %v434 = vunpack.c.h.b16 %v70
  %v435 = vunpack.c.l.b16 %v71
  %v436 = vunpack.c.h.b16 %v71
  %v437 = vunpack.c.l.b16 %v72
  %v438 = vunpack.c.h.b16 %v72
  %v439 = vunpack.c.l.b16 %v73
  %v440 = vunpack.c.h.b16 %v73
  %v441 = vunpack.c.l.b16 %v74
  %v442 = vunpack.c.h.b16 %v74
  %v443 = vunpack.c.l.b16 %v75
  %v444 = vunpack.c.h.b16 %v75
  %v445 = vunpack.c.l.b16 %v76
  %v446 = vunpack.c.h.b16 %v76
  %v447 = vunpack.c.l.b16 %v77
  %v448 = vunpack.c.h.b16 %v77
  %v449 = vunpack.c.l.b16 %v78
  %v450 = vunpack.c.h.b16 %v78
  %v451 = vunpack.c.l.b16 %v79
  %v452 = vunpack.c.h.b16 %v79
  %v453 = vunpack.c.l.b16 %v80
  %v454 = vunpack.c.h.b16 %v80
  %v455 = vunpack.c.l.b16 %v81
  %v456 = vunpack.c.h.b16 %v81
  %v457 = vunpack.c.l.b16 %v82
  %v458 = vunpack.c.h.b16 %v82
  %v459 = vunpack.c.l.b16 %v83
  %v460 = vunpack.c.h.b16 %v83
  %v461 = vunpack.c.l.b16 %v84
  %v462 = vunpack.c.h.b16 %v84
  %v463 = vunpack.c.l.b16 %v85
  %v464 = vunpack.c.h.b16 %v85
  %v465 = vunpack.c.l.b16 %v86
  %v466 = vunpack.c.h.b16 %v86
  %v467 = vunpack.c.l.b16 %v87
  %v468 = vunpack.c.h.b16 %v87
  %v469 = vunpack.c.l.b16 %v88
  %v470 = vunpack.c.h.b16 %v88
  %v471 = vunpack.c.l.b16 %v89
  %v472 = vunpack.c.h.b16 %v89
  %v473 = vunpack.c.l.b16 %v90
  %v474 = vunpack.c.h.b16 %v90
  %v475 = vunpack.c.l.b16 %v91
  %v476 = vunpack.c.h.b16 %v91
  %v477 = vunpack.c.l.b16 %v92
  %v478 = vunpack.c.h.b16 %v92
  %v479 = vunpack.c.l.b16 %v93
  %v480 = vunpack.c.h.b16 %v93
  %v481 = vunpack.c.l.b16 %v94
  %v482 = vunpack.c.h.b16 %v94
  %v483 = vunpack.c.l.b16 %v95
  %v484 = vunpack.c.h.b16 %v95
  %v485 = vunpack.c.l.b16 %v96
  %v486 = vunpack.c.h.b16 %v96
  %v487 = vunpack.c.l.b16 %v97
  %v488 = vunpack.c.h.b16 %v97
  %v489 = vunpack.c.l.b16 %v98
  %v490 = vunpack.c.h.b16 %v98
  %v491 = vunpack.c.l.b16 %v99
  %v492 = vunpack.c.h.b16 %v99
  %v493 = vunpack.c.l.b16 %v100
  %v494 = vunpack.c.h.b16 %v100
  %v495 = vunpack.c.l.b16 %v101
  %v496 = vunpack.c.h.b16 %v101
  %v497 = vunpack.c.l.b16 %v102
  %v498 = vunpack.c.h.b16 %v102
  %v499 = vunpack.c.l.b16 %v103
  %v500 = vunpack.c.h.b16 %v103
  %v501 = vunpack.c.l.b16 %v104
  %v502 = vunpack.c.h.b16 %v104
  %v503 = vunpack.c.l.b16 %v105
  %v504 = vunpack.c.h.b16 %v105
  %v505 = vunpack.c.l.b16 %v106
  %v506 = vunpack.c.h.b16 %v106
  %v507 = vunpack.c.l.b16 %v107
  %v508 = vunpack.c.h.b16 %v107
  %v509 = vunpack.c.l.b16 %v108
  %v510 = vunpack.c.h.b16 %v108
  %v511 = vunpack.c.l.b16 %v109
  %v512 = vunpack.c.h.b16 %v109
  %v513 = vunpack.c.l.b16 %v110
  %v514 = vunpack.c.h.b16 %v110
  %v515 = vunpack.c.l.b16 %v111
  %v516 = vunpack.c.h.b16 %v111
  %v517 = vunpack.c.l.b16 %v112
  %v518 = vunpack.c.h.b16 %v112
  %v519 = vunpack.c.l.b16 %v113
  %v520 = vunpack.c.h.b16 %v113
  %v521 = vunpack.c.l.b16 %v114
  %v522 = vunpack.c.h.b16 %v114
  %v523 = vunpack.c.l.b16 %v115
  %v524 = vunpack.c.h.b16 %v115
  %v525 = vunpack.c.l.b16 %v116
  %v526 = vunpack.c.h.b16 %v116
  %v527 = vunpack.c.l.b16 %v117
  %v528 = vunpack.c.h.b16 %v117
  %v529 = vunpack.c.l.b16 %v118
  %v530 = vunpack.c.h.b16 %v118
  %v531 = vunpack.c.l.b16 %v119
  %v532 = vunpack.c.h.b16 %v119
  %v533 = vunpack.c.l.b16 %v120
  %v534 = vunpack.c.h.b16 %v120
  %v535 = vunpack.c.l.b16 %v121
  %v536 = vunpack.c.h.b16 %v121
  %v537 = vunpack.c.l.b16 %v122
  %v538 = vunpack.c.h.b16 %v122
  %v539 = vunpack.c.l.b16 %v123
  %v540 = vunpack.c.h.b16 %v123
  %v541 = vunpack.c.l.b16 %v124
  %v542 = vunpack.c.h.b16 %v124
  %v543 = vunpack.c.l.b16 %v125
  %v544 = vunpack.c.h.b16 %v125
  %v545 = vunpack.c.l.b16 %v126
  %v546 = vunpack.c.h.b16 %v126
  %v547 = vunpack.c.l.b16 %v127
  %v548 = vunpack.c.h.b16 %v127
  %v549 = vunpack.c.l.b16 %v128
  %v550 = vunpack.c.h.b16 %v128
  %v551 = vunpack.c.l.b16 %v129
  %v552 = vunpack.c.h.b16 %v129
  %v553 = vunpack.c.l.b16 %v130
  %v554 = vunpack.c.h.b16 %v130
  %v555 = vunpack.c.l.b16 %v131
  %v556 = vunpack.c.h.b16 %v131
  %v557 = vunpack.c.l.b16 %v132
  %v558 = vunpack.c.h.b16 %v132
  %v559 = vunpack.c.l.b16 %v133
  %v560 = vunpack.c.h.b16 %v133
  %v561 = vunpack.c.l.b16 %v134
  %v562 = vunpack.c.h.b16 %v134
  %v563 = vunpack.c.l.b16 %v135
  %v564 = vunpack.c.h.b16 %v135
  %v565 = vunpack.c.l.b16 %v136
  %v566 = vunpack.c.h.b16 %v136
  %v567 = vunpack.c.l.b16 %v137
  %v568 = vunpack.c.h.b16 %v137
  %v569 = vunpack.c.l.b16 %v138
  %v570 = vunpack.c.h.b16 %v138
  %v571 = vunpack.c.l.b16 %v139
  %v572 = vunpack.c.h.b16 %v139
  %v573 = vunpack.c.l.b16 %v140
  %v574 = vunpack.c.h.b16 %v140
  %v575 = vunpack.c.l.b16 %v141
  %v576 = vunpack.c.h.b16 %v141
  %v577 = vunpack.c.l.b16 %v142
  %v578 = vunpack.c.h.b16 %v142
  %v579 = vunpack.c.l.b16 %v143
  %v580 = vunpack.c.h.b16 %v143
  %v581 = vunpack.c.l.b16 %v144
  %v582 = vunpack.c.h.b16 %v144
  %v583 = vunpack.c.l.b16 %v145
  %v584 = vunpack.c.h.b16 %v145
  %v585 = vunpack.c.l.b16 %v146
  %v586 = vunpack.c.h.b16 %v146
  %v587 = vunpack.c.l.b16 %v147
  %v588 = vunpack.c.h.b16 %v147
  %v589 = vunpack.c.l.b16 %v148
  %v590 = vunpack.c.h.b16 %v148
  %v591 = vunpack.c.l.b16 %v149
  %v592 = vunpack.c.h.b16 %v149
  %v593 = vunpack.c.l.b16 %v150
  %v594 = vunpack.c.h.b16 %v150
  %v595 = vunpack.c.l.b16 %v151
  %v596 = vunpack.c.h.b16 %v151
  %v597 = vunpack.c.l.b16 %v152
  %v598 = vunpack.c.h.b16 %v152
  %v599 = vpack.c.b16 %v347, %v343
  %v600 = vpack.c.b16 %v348, %v344
  %v601 = vpack.c.b16 %v349, %v345
  %v602 = vpack.c.b16 %v350, %v346
  %v603 = vpack.c.b16 %v355, %v351
  %v604 = vpack.c.b16 %v356, %v352
  %v605 = vpack.c.b16 %v357, %v353
  %v606 = vpack.c.b16 %v358, %v354
  %v607 = vpack.c.b16 %v363, %v359
  %v608 = vpack.c.b16 %v364, %v360
  %v609 = vpack.c.b16 %v365, %v361
  %v610 = vpack.c.b16 %v366, %v362
  %v611 = vpack.c.b16 %v371, %v367
  %v612 = vpack.c.b16 %v372, %v368
  %v613 = vpack.c.b16 %v373, %v369
  %v614 = vpack.c.b16 %v374, %v370
  %v615 = vpack.c.b16 %v379, %v375
  %v616 = vpack.c.b16 %v380, %v376
  %v617 = vpack.c.b16 %v381, %v377
  %v618 = vpack.c.b16 %v382, %v378
  %v619 = vpack.c.b16 %v387, %v383
  %v620 = vpack.c.b16 %v388, %v384
  %v621 = vpack.c.b16 %v389, %v385
  %v622 = vpack.c.b16 %v390, %v386
  %v623 = vpack.c.b16 %v395, %v391
  %v624 = vpack.c.b16 %v396, %v392
  %v625 = vpack.c.b16 %v397, %v393
  %v626 = vpack.c.b16 %v398, %v394
  %v627 = vpack.c.b16 %v403, %v399
  %v628 = vpack.c.b16 %v404, %v400
  %v629 = vpack.c.b16 %v405, %v401
  %v630 = vpack.c.b16 %v406, %v402
  %v631 = vpack.c.b16 %v411, %v407
  %v632 = vpack.c.b16 %v412, %v408
  %v633 = vpack.c.b16 %v413, %v409
  %v634 = vpack.c.b16 %v414, %v410
  %v635 = vpack.c.b16 %v419, %v415
  %v636 = vpack.c.b16 %v420, %v416
  %v637 = vpack.c.b16 %v421, %v417
  %v638 = vpack.c.b16 %v422, %v418
  %v639 = vpack.c.b16 %v427, %v423
  %v640 = vpack.c.b16 %v428, %v424
  %v641 = vpack.c.b16 %v429, %v425
  %v642 = vpack.c.b16 %v430, %v426
  %v643 = vpack.c.b16 %v435, %v431
  %v644 = vpack.c.b16 %v436, %v432
  %v645 = vpack.c.b16 %v437, %v433
  %v646 = vpack.c.b16 %v438, %v434
  %v647 = vpack.c.b16 %v443, %v439
  %v648 = vpack.c.b16 %v444, %v440
  %v649 = vpack.c.b16 %v445, %v441
  %v650 = vpack.c.b16 %v446, %v442
  %v651 = vpack.c.b16 %v451, %v447
  %v652 = vpack.c.b16 %v452, %v448
  %v653 = vpack.c.b16 %v453, %v449
  %v654 = vpack.c.b16 %v454, %v450
  %v655 = vpack.c.b16 %v459, %v455
  %v656 = vpack.c.b16 %v460, %v456
  %v657 = vpack.c.b16 %v461, %v457
  %v658 = vpack.c.b16 %v462, %v458
  %v659 = vpack.c.b16 %v467, %v463
  %v660 = vpack.c.b16 %v468, %v464
  %v661 = vpack.c.b16 %v469, %v465
  %v662 = vpack.c.b16 %v470, %v466
  %v663 = vpack.c.b16 %v475, %v471
  %v664 = vpack.c.b16 %v476, %v472
  %v665 = vpack.c.b16 %v477, %v473
  %v666 = vpack.c.b16 %v478, %v474
  %v667 = vpack.c.b16 %v483, %v479
  %v668 = vpack.c.b16 %v484, %v480
  %v669 = vpack.c.b16 %v485, %v481
  %v670 = vpack.c.b16 %v486, %v482
  %v671 = vpack.c.b16 %v491, %v487
  %v672 = vpack.c.b16 %v492, %v488
  %v673 = vpack.c.b16 %v493, %v489
  %v674 = vpack.c.b16 %v494, %v490
  %v675 = vpack.c.b16 %v499, %v495
  %v676 = vpack.c.b16 %v500, %v496
  %v677 = vpack.c.b16 %v501, %v497
  %v678 = vpack.c.b16 %v502, %v498
  %v679 = vpack.c.b16 %v507, %v503
  %v680 = vpack.c.b16 %v508, %v504
  %v681 = vpack.c.b16 %v509, %v505
  %v682 = vpack.c.b16 %v510, %v506
  %v683 = vpack.c.b16 %v515, %v511
  %v684 = vpack.c.b16 %v516, %v512
  %v685 = vpack.c.b16 %v517, %v513
  %v686 = vpack.c.b16 %v518, %v514
  %v687 = vpack.c.b16 %v523, %v519
  %v688 = vpack.c.b16 %v524, %v520
  %v689 = vpack.c.b16 %v525, %v521
  %v690 = vpack.c.b16 %v526, %v522
  %v691 = vpack.c.b16 %v531, %v527
  %v692 = vpack.c.b16 %v532, %v528
  %v693 = vpack.c.b16 %v533, %v529
  %v694 = vpack.c.b16 %v534, %v530
  %v695 = vpack.c.b16 %v539, %v535
  %v696 = vpack.c.b16 %v540, %v536
  %v697 = vpack.c.b16 %v541, %v537
  %v698 = vpack.c.b16 %v542, %v538
  %v699 = vpack.c.b16 %v547, %v543
  %v700 = vpack.c.b16 %v548, %v544
  %v701 = vpack.c.b16 %v549, %v545
  %v702 = vpack.c.b16 %v550, %v546
  %v703 = vpack.c.b16 %v555, %v551
  %v704 = vpack.c.b16 %v556, %v552
  %v705 = vpack.c.b16 %v557, %v553
  %v706 = vpack.c.b16 %v558, %v554
  %v707 = vpack.c.b16 %v563, %v559
  %v708 = vpack.c.b16 %v564, %v560
  %v709 = vpack.c.b16 %v565, %v561
  %v710 = vpack.c.b16 %v566, %v562
  %v711 = vpack.c.b16 %v571, %v567
  %v712 = vpack.c.b16 %v572, %v568
  %v713 = vpack.c.b16 %v573, %v569
  %v714 = vpack.c.b16 %v574, %v570
  %v715 = vpack.c.b16 %v579, %v575
  %v716 = vpack.c.b16 %v580, %v576
  %v717 = vpack.c.b16 %v581, %v577
  %v718 = vpack.c.b16 %v582, %v578
  %v719 = vpack.c.b16 %v587, %v583
  %v720 = vpack.c.b16 %v588, %v584
  %v721 = vpack.c.b16 %v589, %v585
  %v722 = vpack.c.b16 %v590, %v586
  %v723 = vpack.c.b16 %v595, %v591
  %v724 = vpack.c.b16 %v596, %v592
  %v725 = vpack.c.b16 %v597, %v593
  %v726 = vpack.c.b16 %v598, %v594
  %855 = vmatprep.subr.bf16.mxu0 %v628
  %856 = vmatpush1.bf16.msra.mxu0 %v627
  %857 = vmatprep.subr.bf16.mxu0 %v624
  %858 = vmatpush1.bf16.msra.mxu0 %v623
  %859 = vmatprep.subr.bf16.mxu0 %v620
  %860 = vmatpush1.bf16.msra.mxu0 %v619
  %861 = vmatprep.subr.bf16.mxu0 %v616
  %862 = vmatpush1.bf16.msra.mxu0 %v615
  %863 = vmatprep.subr.bf16.mxu0 %v612
  %864 = vmatpush1.bf16.msra.mxu0 %v611
  %865 = vmatprep.subr.bf16.mxu0 %v608
  %866 = vmatpush1.bf16.msra.mxu0 %v607
  %867 = vmatprep.subr.bf16.mxu0 %v604
  %868 = vmatpush1.bf16.msra.mxu0 %v603
  %869 = vmatprep.subr.bf16.mxu0 %v600
  %870 = vmatpush1.bf16.msra.mxu0 %v599
  %871 = vmatprep.subr.bf16.mxu0 %v660
  %872 = vmatpush2.bf16.msra.mxu0 %v659
  %873 = vmatprep.subr.bf16.mxu0 %v656
  %874 = vmatpush2.bf16.msra.mxu0 %v655
  %875 = vmatprep.subr.bf16.mxu0 %v652
  %876 = vmatpush2.bf16.msra.mxu0 %v651
  %877 = vmatprep.subr.bf16.mxu0 %v648
  %878 = vmatpush2.bf16.msra.mxu0 %v647
  %879 = vmatprep.subr.bf16.mxu0 %v644
  %880 = vmatpush2.bf16.msra.mxu0 %v643
  %881 = vmatprep.subr.bf16.mxu0 %v640
  %882 = vmatpush2.bf16.msra.mxu0 %v639
  %883 = vmatprep.subr.bf16.mxu0 %v636
  %884 = vmatpush2.bf16.msra.mxu0 %v635
  %885 = vmatprep.subr.bf16.mxu0 %v632
  %886 = vmatpush2.bf16.msra.mxu0 %v631
  %887 = vmatprep.mubr.bf16.mxu0 %v200
  %888 = vmatmul.mubr.bf16.gmra.mxu0 %v199
  %v889 = vpop.f32.mrf.mxu0
  %v890 = vadd.f32 %v158, %v889
  %v891 = vpop.f32.mrf.mxu0
  %v892 = vadd.f32 %v162, %v891
  %v893 = vpop.f32.mrf.mxu0
  %v894 = vadd.f32 %v158, %v893
  %v895 = vpop.f32.mrf.mxu0
  %v896 = vadd.f32 %v162, %v895
  %897 = vmatprep.mubr.bf16.mxu0 %v204
  %898 = vmatmul.mubr.bf16.gmra.mxu0 %v203
  %v899 = vpop.f32.mrf.mxu0
  %v900 = vadd.f32 %v158, %v899
  %v901 = vpop.f32.mrf.mxu0
  %v902 = vadd.f32 %v162, %v901
  %v903 = vpop.f32.mrf.mxu0
  %v904 = vadd.f32 %v158, %v903
  %v905 = vpop.f32.mrf.mxu0
  %v906 = vadd.f32 %v162, %v905
  %907 = vdwg.mxu0
  %908 = vmatprep.subr.bf16.mxu0 %v692
  %909 = vmatpush1.bf16.msra.mxu0 %v691
  %910 = vmatprep.subr.bf16.mxu0 %v688
  %911 = vmatpush1.bf16.msra.mxu0 %v687
  %912 = vmatprep.subr.bf16.mxu0 %v684
  %913 = vmatpush1.bf16.msra.mxu0 %v683
  %914 = vmatprep.subr.bf16.mxu0 %v680
  %915 = vmatpush1.bf16.msra.mxu0 %v679
  %916 = vmatprep.subr.bf16.mxu0 %v676
  %917 = vmatpush1.bf16.msra.mxu0 %v675
  %918 = vmatprep.subr.bf16.mxu0 %v672
  %919 = vmatpush1.bf16.msra.mxu0 %v671
  %920 = vmatprep.subr.bf16.mxu0 %v668
  %921 = vmatpush1.bf16.msra.mxu0 %v667
  %922 = vmatprep.subr.bf16.mxu0 %v664
  %923 = vmatpush1.bf16.msra.mxu0 %v663
  %924 = vmatprep.subr.bf16.mxu0 %v724
  %925 = vmatpush2.bf16.msra.mxu0 %v723
  %926 = vmatprep.subr.bf16.mxu0 %v720
  %927 = vmatpush2.bf16.msra.mxu0 %v719
  %928 = vmatprep.subr.bf16.mxu0 %v716
  %929 = vmatpush2.bf16.msra.mxu0 %v715
  %930 = vmatprep.subr.bf16.mxu0 %v712
  %931 = vmatpush2.bf16.msra.mxu0 %v711
  %932 = vmatprep.subr.bf16.mxu0 %v708
  %933 = vmatpush2.bf16.msra.mxu0 %v707
  %934 = vmatprep.subr.bf16.mxu0 %v704
  %935 = vmatpush2.bf16.msra.mxu0 %v703
  %936 = vmatprep.subr.bf16.mxu0 %v700
  %937 = vmatpush2.bf16.msra.mxu0 %v699
  %938 = vmatprep.subr.bf16.mxu0 %v696
  %939 = vmatpush2.bf16.msra.mxu0 %v695
  %940 = vmatprep.mubr.bf16.mxu0 %v202
  %941 = vmatmul.mubr.bf16.gmra.mxu0 %v201
  %v942 = vpop.f32.mrf.mxu0
  %v943 = vadd.f32 %v890, %v942
  %v944 = vpop.f32.mrf.mxu0
  %v945 = vadd.f32 %v892, %v944
  %v946 = vpop.f32.mrf.mxu0
  %v947 = vadd.f32 %v894, %v946
  %v948 = vpop.f32.mrf.mxu0
  %v949 = vadd.f32 %v896, %v948
  %950 = vmatprep.mubr.bf16.mxu0 %v206
  %951 = vmatmul.mubr.bf16.gmra.mxu0 %v205
  %v952 = vpop.f32.mrf.mxu0
  %v953 = vadd.f32 %v900, %v952
  %v954 = vpop.f32.mrf.mxu0
  %v955 = vadd.f32 %v902, %v954
  %v956 = vpop.f32.mrf.mxu0
  %v957 = vadd.f32 %v904, %v956
  %v958 = vpop.f32.mrf.mxu0
  %v959 = vadd.f32 %v906, %v958
  %960 = vdwg.mxu0
  %961 = vmatprep.subr.bf16.mxu0 %v630
  %962 = vmatpush1.bf16.msra.mxu0 %v629
  %963 = vmatprep.subr.bf16.mxu0 %v626
  %964 = vmatpush1.bf16.msra.mxu0 %v625
  %965 = vmatprep.subr.bf16.mxu0 %v622
  %966 = vmatpush1.bf16.msra.mxu0 %v621
  %967 = vmatprep.subr.bf16.mxu0 %v618
  %968 = vmatpush1.bf16.msra.mxu0 %v617
  %969 = vmatprep.subr.bf16.mxu0 %v614
  %970 = vmatpush1.bf16.msra.mxu0 %v613
  %971 = vmatprep.subr.bf16.mxu0 %v610
  %972 = vmatpush1.bf16.msra.mxu0 %v609
  %973 = vmatprep.subr.bf16.mxu0 %v606
  %974 = vmatpush1.bf16.msra.mxu0 %v605
  %975 = vmatprep.subr.bf16.mxu0 %v602
  %976 = vmatpush1.bf16.msra.mxu0 %v601
  %977 = vmatprep.subr.bf16.mxu0 %v662
  %978 = vmatpush2.bf16.msra.mxu0 %v661
  %979 = vmatprep.subr.bf16.mxu0 %v658
  %980 = vmatpush2.bf16.msra.mxu0 %v657
  %981 = vmatprep.subr.bf16.mxu0 %v654
  %982 = vmatpush2.bf16.msra.mxu0 %v653
  %983 = vmatprep.subr.bf16.mxu0 %v650
  %984 = vmatpush2.bf16.msra.mxu0 %v649
  %985 = vmatprep.subr.bf16.mxu0 %v646
  %986 = vmatpush2.bf16.msra.mxu0 %v645
  %987 = vmatprep.subr.bf16.mxu0 %v642
  %988 = vmatpush2.bf16.msra.mxu0 %v641
  %989 = vmatprep.subr.bf16.mxu0 %v638
  %990 = vmatpush2.bf16.msra.mxu0 %v637
  %991 = vmatprep.subr.bf16.mxu0 %v634
  %992 = vmatpush2.bf16.msra.mxu0 %v633
  %993 = vmatprep.mubr.bf16.mxu0 %v200
  %994 = vmatmul.mubr.bf16.gmra.mxu0 %v199
  %v995 = vpop.f32.mrf.mxu0
  %v996 = vadd.f32 %v166, %v995
  %v997 = vpop.f32.mrf.mxu0
  %v998 = vadd.f32 %v170, %v997
  %v999 = vpop.f32.mrf.mxu0
  %v1000 = vadd.f32 %v166, %v999
  %v1001 = vpop.f32.mrf.mxu0
  %v1002 = vadd.f32 %v170, %v1001
  %1003 = vmatprep.mubr.bf16.mxu0 %v204
  %1004 = vmatmul.mubr.bf16.gmra.mxu0 %v203
  %v1005 = vpop.f32.mrf.mxu0
  %v1006 = vadd.f32 %v166, %v1005
  %v1007 = vpop.f32.mrf.mxu0
  %v1008 = vadd.f32 %v170, %v1007
  %v1009 = vpop.f32.mrf.mxu0
  %v1010 = vadd.f32 %v166, %v1009
  %v1011 = vpop.f32.mrf.mxu0
  %v1012 = vadd.f32 %v170, %v1011
  %1013 = vdwg.mxu0
  %1014 = vmatprep.subr.bf16.mxu0 %v694
  %1015 = vmatpush1.bf16.msra.mxu0 %v693
  %1016 = vmatprep.subr.bf16.mxu0 %v690
  %1017 = vmatpush1.bf16.msra.mxu0 %v689
  %1018 = vmatprep.subr.bf16.mxu0 %v686
  %1019 = vmatpush1.bf16.msra.mxu0 %v685
  %1020 = vmatprep.subr.bf16.mxu0 %v682
  %1021 = vmatpush1.bf16.msra.mxu0 %v681
  %1022 = vmatprep.subr.bf16.mxu0 %v678
  %1023 = vmatpush1.bf16.msra.mxu0 %v677
  %1024 = vmatprep.subr.bf16.mxu0 %v674
  %1025 = vmatpush1.bf16.msra.mxu0 %v673
  %1026 = vmatprep.subr.bf16.mxu0 %v670
  %1027 = vmatpush1.bf16.msra.mxu0 %v669
  %1028 = vmatprep.subr.bf16.mxu0 %v666
  %1029 = vmatpush1.bf16.msra.mxu0 %v665
  %1030 = vmatprep.subr.bf16.mxu0 %v726
  %1031 = vmatpush2.bf16.msra.mxu0 %v725
  %1032 = vmatprep.subr.bf16.mxu0 %v722
  %1033 = vmatpush2.bf16.msra.mxu0 %v721
  %1034 = vmatprep.subr.bf16.mxu0 %v718
  %1035 = vmatpush2.bf16.msra.mxu0 %v717
  %1036 = vmatprep.subr.bf16.mxu0 %v714
  %1037 = vmatpush2.bf16.msra.mxu0 %v713
  %1038 = vmatprep.subr.bf16.mxu0 %v710
  %1039 = vmatpush2.bf16.msra.mxu0 %v709
  %1040 = vmatprep.subr.bf16.mxu0 %v706
  %1041 = vmatpush2.bf16.msra.mxu0 %v705
  %1042 = vmatprep.subr.bf16.mxu0 %v702
  %1043 = vmatpush2.bf16.msra.mxu0 %v701
  %1044 = vmatprep.subr.bf16.mxu0 %v698
  %1045 = vmatpush2.bf16.msra.mxu0 %v697
  %1046 = vmatprep.mubr.bf16.mxu0 %v202
  %1047 = vmatmul.mubr.bf16.gmra.mxu0 %v201
  %v1048 = vpop.f32.mrf.mxu0
  %v1049 = vadd.f32 %v996, %v1048
  %v1050 = vpop.f32.mrf.mxu0
  %v1051 = vadd.f32 %v998, %v1050
  %v1052 = vpop.f32.mrf.mxu0
  %v1053 = vadd.f32 %v1000, %v1052
  %v1054 = vpop.f32.mrf.mxu0
  %v1055 = vadd.f32 %v1002, %v1054
  %1056 = vmatprep.mubr.bf16.mxu0 %v206
  %1057 = vmatmul.mubr.bf16.gmra.mxu0 %v205
  %v1058 = vpop.f32.mrf.mxu0
  %v1059 = vadd.f32 %v1006, %v1058
  %v1060 = vpop.f32.mrf.mxu0
  %v1061 = vadd.f32 %v1008, %v1060
  %v1062 = vpop.f32.mrf.mxu0
  %v1063 = vadd.f32 %v1010, %v1062
  %v1064 = vpop.f32.mrf.mxu0
  %v1065 = vadd.f32 %v1012, %v1064
  %1066 = vdwg.mxu0
  %v1067 = vmul.f32 %v943, %v943
  %v1068 = vmul.f32 %v945, %v945
  %v1069 = vmul.f32 %v1049, %v1049
  %v1070 = vmul.f32 %v1051, %v1051
  %v1071 = vmul.f32 %v947, %v947
  %v1072 = vmul.f32 %v949, %v949
  %v1073 = vmul.f32 %v1053, %v1053
  %v1074 = vmul.f32 %v1055, %v1055
  %v1075 = vmul.f32 %v953, %v953
  %v1076 = vmul.f32 %v955, %v955
  %v1077 = vmul.f32 %v1059, %v1059
  %v1078 = vmul.f32 %v1061, %v1061
  %v1079 = vmul.f32 %v957, %v957
  %v1080 = vmul.f32 %v959, %v959
  %v1081 = vmul.f32 %v1063, %v1063
  %v1082 = vmul.f32 %v1065, %v1065
  %v1083 = vmul.f32 %v943, %v1067
  %v1084 = vmul.f32 %v945, %v1068
  %v1085 = vmul.f32 %v1049, %v1069
  %v1086 = vmul.f32 %v1051, %v1070
  %v1087 = vmul.f32 %v947, %v1071
  %v1088 = vmul.f32 %v949, %v1072
  %v1089 = vmul.f32 %v1053, %v1073
  %v1090 = vmul.f32 %v1055, %v1074
  %v1091 = vmul.f32 %v953, %v1075
  %v1092 = vmul.f32 %v955, %v1076
  %v1093 = vmul.f32 %v1059, %v1077
  %v1094 = vmul.f32 %v1061, %v1078
  %v1095 = vmul.f32 %v957, %v1079
  %v1096 = vmul.f32 %v959, %v1080
  %v1097 = vmul.f32 %v1063, %v1081
  %v1098 = vmul.f32 %v1065, %v1082
  %v1099 = vmul.f32 %v1083, 0.044715
  %v1100 = vmul.f32 %v1084, 0.044715
  %v1101 = vmul.f32 %v1085, 0.044715
  %v1102 = vmul.f32 %v1086, 0.044715
  %v1103 = vmul.f32 %v1087, 0.044715
  %v1104 = vmul.f32 %v1088, 0.044715
  %v1105 = vmul.f32 %v1089, 0.044715
  %v1106 = vmul.f32 %v1090, 0.044715
  %v1107 = vmul.f32 %v1091, 0.044715
  %v1108 = vmul.f32 %v1092, 0.044715
  %v1109 = vmul.f32 %v1093, 0.044715
  %v1110 = vmul.f32 %v1094, 0.044715
  %v1111 = vmul.f32 %v1095, 0.044715
  %v1112 = vmul.f32 %v1096, 0.044715
  %v1113 = vmul.f32 %v1097, 0.044715
  %v1114 = vmul.f32 %v1098, 0.044715
  %v1115 = vadd.f32 %v943, %v1099
  %v1116 = vadd.f32 %v945, %v1100
  %v1117 = vadd.f32 %v1049, %v1101
  %v1118 = vadd.f32 %v1051, %v1102
  %v1119 = vadd.f32 %v947, %v1103
  %v1120 = vadd.f32 %v949, %v1104
  %v1121 = vadd.f32 %v1053, %v1105
  %v1122 = vadd.f32 %v1055, %v1106
  %v1123 = vadd.f32 %v953, %v1107
  %v1124 = vadd.f32 %v955, %v1108
  %v1125 = vadd.f32 %v1059, %v1109
  %v1126 = vadd.f32 %v1061, %v1110
  %v1127 = vadd.f32 %v957, %v1111
  %v1128 = vadd.f32 %v959, %v1112
  %v1129 = vadd.f32 %v1063, %v1113
  %v1130 = vadd.f32 %v1065, %v1114
  %v1131 = vmul.f32 %v1115, 0.7978846
  %v1132 = vmul.f32 %v1116, 0.7978846
  %v1133 = vmul.f32 %v1117, 0.7978846
  %v1134 = vmul.f32 %v1118, 0.7978846
  %v1135 = vmul.f32 %v1119, 0.7978846
  %v1136 = vmul.f32 %v1120, 0.7978846
  %v1137 = vmul.f32 %v1121, 0.7978846
  %v1138 = vmul.f32 %v1122, 0.7978846
  %v1139 = vmul.f32 %v1123, 0.7978846
  %v1140 = vmul.f32 %v1124, 0.7978846
  %v1141 = vmul.f32 %v1125, 0.7978846
  %v1142 = vmul.f32 %v1126, 0.7978846
  %v1143 = vmul.f32 %v1127, 0.7978846
  %v1144 = vmul.f32 %v1128, 0.7978846
  %v1145 = vmul.f32 %v1129, 0.7978846
  %v1146 = vmul.f32 %v1130, 0.7978846
  %v1147 = vtanh.pop %v1131
  %v1148 = vtanh.pop %v1132
  %v1149 = vtanh.pop %v1133
  %v1150 = vtanh.pop %v1134
  %v1151 = vtanh.pop %v1135
  %v1152 = vtanh.pop %v1136
  %v1153 = vtanh.pop %v1137
  %v1154 = vtanh.pop %v1138
  %v1155 = vtanh.pop %v1139
  %v1156 = vtanh.pop %v1140
  %v1157 = vtanh.pop %v1141
  %v1158 = vtanh.pop %v1142
  %v1159 = vtanh.pop %v1143
  %v1160 = vtanh.pop %v1144
  %v1161 = vtanh.pop %v1145
  %v1162 = vtanh.pop %v1146
  %v1163 = vadd.f32 %v1147, 1.0
  %v1164 = vadd.f32 %v1148, 1.0
  %v1165 = vadd.f32 %v1149, 1.0
  %v1166 = vadd.f32 %v1150, 1.0
  %v1167 = vadd.f32 %v1151, 1.0
  %v1168 = vadd.f32 %v1152, 1.0
  %v1169 = vadd.f32 %v1153, 1.0
  %v1170 = vadd.f32 %v1154, 1.0
  %v1171 = vadd.f32 %v1155, 1.0
  %v1172 = vadd.f32 %v1156, 1.0
  %v1173 = vadd.f32 %v1157, 1.0
  %v1174 = vadd.f32 %v1158, 1.0
  %v1175 = vadd.f32 %v1159, 1.0
  %v1176 = vadd.f32 %v1160, 1.0
  %v1177 = vadd.f32 %v1161, 1.0
  %v1178 = vadd.f32 %v1162, 1.0
  %v1179 = vmul.f32 %v1163, 0.5
  %v1180 = vmul.f32 %v1164, 0.5
  %v1181 = vmul.f32 %v1165, 0.5
  %v1182 = vmul.f32 %v1166, 0.5
  %v1183 = vmul.f32 %v1167, 0.5
  %v1184 = vmul.f32 %v1168, 0.5
  %v1185 = vmul.f32 %v1169, 0.5
  %v1186 = vmul.f32 %v1170, 0.5
  %v1187 = vmul.f32 %v1171, 0.5
  %v1188 = vmul.f32 %v1172, 0.5
  %v1189 = vmul.f32 %v1173, 0.5
  %v1190 = vmul.f32 %v1174, 0.5
  %v1191 = vmul.f32 %v1175, 0.5
  %v1192 = vmul.f32 %v1176, 0.5
  %v1193 = vmul.f32 %v1177, 0.5
  %v1194 = vmul.f32 %v1178, 0.5
  %v1195 = vmul.f32 %v943, %v1179
  %v1196 = vmul.f32 %v945, %v1180
  %v1197 = vmul.f32 %v1049, %v1181
  %v1198 = vmul.f32 %v1051, %v1182
  %v1199 = vmul.f32 %v947, %v1183
  %v1200 = vmul.f32 %v949, %v1184
  %v1201 = vmul.f32 %v1053, %v1185
  %v1202 = vmul.f32 %v1055, %v1186
  %v1203 = vmul.f32 %v953, %v1187
  %v1204 = vmul.f32 %v955, %v1188
  %v1205 = vmul.f32 %v1059, %v1189
  %v1206 = vmul.f32 %v1061, %v1190
  %v1207 = vmul.f32 %v957, %v1191
  %v1208 = vmul.f32 %v959, %v1192
  %v1209 = vmul.f32 %v1063, %v1193
  %v1210 = vmul.f32 %v1065, %v1194
  %v1211 = vld [vmem:[%s3] sm:$0xff]
  %v1212 = vld [vmem:[%s3 + $0x8] sm:$0xff]
  %v1213 = vld [vmem:[%s3 + $0x10] sm:$0xff]
  %v1214 = vld [vmem:[%s3 + $0x18] sm:$0xff]
  %v1215 = vld [vmem:[%s3 + $0x20] sm:$0xff]
  %v1216 = vld [vmem:[%s3 + $0x28] sm:$0xff]
  %v1217 = vld [vmem:[%s3 + $0x30] sm:$0xff]
  %v1218 = vld [vmem:[%s3 + $0x38] sm:$0xff]
  %v1219 = vunpack.c.l.bf16 %v1211
  %v1220 = vunpack.c.h.bf16 %v1211
  %v1221 = vunpack.c.l.bf16 %v1212
  %v1222 = vunpack.c.h.bf16 %v1212
  %v1223 = vunpack.c.l.bf16 %v1213
  %v1224 = vunpack.c.h.bf16 %v1213
  %v1225 = vunpack.c.l.bf16 %v1214
  %v1226 = vunpack.c.h.bf16 %v1214
  %v1227 = vunpack.c.l.bf16 %v1215
  %v1228 = vunpack.c.h.bf16 %v1215
  %v1229 = vunpack.c.l.bf16 %v1216
  %v1230 = vunpack.c.h.bf16 %v1216
  %v1231 = vunpack.c.l.bf16 %v1217
  %v1232 = vunpack.c.h.bf16 %v1217
  %v1233 = vunpack.c.l.bf16 %v1218
  %v1234 = vunpack.c.h.bf16 %v1218
  %v1235 = vadd.f32 %v1195, %v1219
  %v1236 = vadd.f32 %v1196, %v1220
  %v1237 = vadd.f32 %v1197, %v1221
  %v1238 = vadd.f32 %v1198, %v1222
  %v1239 = vadd.f32 %v1199, %v1223
  %v1240 = vadd.f32 %v1200, %v1224
  %v1241 = vadd.f32 %v1201, %v1225
  %v1242 = vadd.f32 %v1202, %v1226
  %v1243 = vadd.f32 %v1203, %v1227
  %v1244 = vadd.f32 %v1204, %v1228
  %v1245 = vadd.f32 %v1205, %v1229
  %v1246 = vadd.f32 %v1206, %v1230
  %v1247 = vadd.f32 %v1207, %v1231
  %v1248 = vadd.f32 %v1208, %v1232
  %v1249 = vadd.f32 %v1209, %v1233
  %v1250 = vadd.f32 %v1210, %v1234
  %v1251 = vpack.c.bf16 %v1239, %v1235
  %v1252 = vpack.c.bf16 %v1240, %v1236
  %v1253 = vpack.c.bf16 %v1241, %v1237
  %v1254 = vpack.c.bf16 %v1242, %v1238
  %v1255 = vpack.c.bf16 %v1247, %v1243
  %v1256 = vpack.c.bf16 %v1248, %v1244
  %v1257 = vpack.c.bf16 %v1249, %v1245
  %v1258 = vpack.c.bf16 %v1250, %v1246
  %v1267 = vunpack.c.l.b16 %v1251
  %v1268 = vunpack.c.l.b16 %v1252
  %v1269 = vunpack.c.l.b16 %v1253
  %v1270 = vunpack.c.l.b16 %v1254
  %v1271 = vunpack.c.h.b16 %v1251
  %v1272 = vunpack.c.h.b16 %v1252
  %v1273 = vunpack.c.h.b16 %v1253
  %v1274 = vunpack.c.h.b16 %v1254
  %v1275 = vunpack.c.l.b16 %v1255
  %v1276 = vunpack.c.l.b16 %v1256
  %v1277 = vunpack.c.l.b16 %v1257
  %v1278 = vunpack.c.l.b16 %v1258
  %v1279 = vunpack.c.h.b16 %v1255
  %v1280 = vunpack.c.h.b16 %v1256
  %v1281 = vunpack.c.h.b16 %v1257
  %v1282 = vunpack.c.h.b16 %v1258
  %v1283 = vpack.c.b16 %v1268, %v1267
  %v1284 = vpack.c.b16 %v1270, %v1269
  %v1285 = vpack.c.b16 %v1272, %v1271
  %v1286 = vpack.c.b16 %v1274, %v1273
  %v1287 = vpack.c.b16 %v1276, %v1275
  %v1288 = vpack.c.b16 %v1278, %v1277
  %v1289 = vpack.c.b16 %v1280, %v1279
  %v1290 = vpack.c.b16 %v1282, %v1281
  %1299 = vst [vmem:[%s4] sm:$0xff] %v1283
  %1300 = vst [vmem:[%s4 + $0x8] sm:$0xff] %v1284
  %1301 = vst [vmem:[%s4 + $0x10] sm:$0xff] %v1285
  %1302 = vst [vmem:[%s4 + $0x18] sm:$0xff] %v1286
  %1303 = vst [vmem:[%s4 + $0x20] sm:$0xff] %v1287
  %1304 = vst [vmem:[%s4 + $0x28] sm:$0xff] %v1288
  %1305 = vst [vmem:[%s4 + $0x30] sm:$0xff] %v1289
  %1306 = vst [vmem:[%s4 + $0x38] sm:$0xff] %v1290
  // Predicated region
  $region18: #{custom_model_forward.14} parent=0 // pred_check
    _
  $region19: #{custom_model_forward.14} parent=0 // pred_check_branch
    %1308 = sbr.rel (0) target = $region21
  $region20: #{custom_model_forward.14} parent=0 // pred_region
    _
  $region21: #{custom_model_forward.14} parent=0 // pred_fallthru
    _
  // Predicated region
  $region22: #{custom_model_forward.14} parent=0 // pred_check
    _
  $region23: #{custom_model_forward.14} parent=0 // pred_check_branch
    %1310 = sbr.rel (0) target = $region25
  $region24: #{custom_model_forward.14} parent=0 // pred_region
    _
  $region25: #{custom_model_forward.14} parent=0 // pred_fallthru
    _

// kernel: custom_model_forward.15
$region0: #{custom_model_forward.15}
  #allocation0 [shape = 'u32[]', space=smem, size = 0x4, offset = 0x4, fixed_abs, tag = 'smem constant byte address 0x4 - core index']
  #allocation1 [shape = 'u32[144,128]{1,0:T(1,128)}', space=vmem, size = 0x12000, scoped, tag = 'internal scratch']
  %s0 = inlined_call_operand.vmem [shape: bf16[32,512], index: 0, kind: input, shape index: {}]
  %s1 = inlined_call_operand.vmem [shape: bf16[512,256], index: 1, kind: input, shape index: {}]
  %s2 = inlined_call_operand.vmem [shape: f32[1,256], index: 2, kind: input, shape index: {}]
  %s3 = inlined_call_operand.hbm [shape: f32[32,256], index: 3, kind: output, shape index: {}]
  %s4 = sld [smem:[#allocation0]]
  $region22: #{custom_model_forward.15} parent=0
    _
  %s6 = ssub.s32 1, %s4
  %s7 = scalar_select 0, %s6, %s4
  $region1: #{custom_model_forward.15} parent=0
    #allocation2 [shape = 'u8[32768]{0}', space=vmem, size = 0x8000, scoped, tag = 'output window, operand 0, single buffered']
    #allocation3 [shape = 's32[1]{0}', space=sflag, size = 0x4, scoped, tag = 'scoped memory for custom_model_forward.15']
    %8 = vsyncpa [#allocation3], 0
    // Predicated region
    $region2: #{custom_model_forward.15} parent=1 // pred_check
      _
    $region3: #{custom_model_forward.15} parent=1 // pred_check_branch
      %10 = sbr.rel (0) target = $region5
    $region4: #{custom_model_forward.15} parent=1 // pred_region
      _
    $region5: #{custom_model_forward.15} parent=1 // pred_fallthru
      _
    // Predicated region
    $region6: #{custom_model_forward.15} parent=1 // pred_check
      _
    $region7: #{custom_model_forward.15} parent=1 // pred_check_branch
      %12 = sbr.rel (0) target = $region9
    $region8: #{custom_model_forward.15} parent=1 // pred_region
      _
    $region9: #{custom_model_forward.15} parent=1 // pred_fallthru
      _
    // Predicated region
    $region10: #{custom_model_forward.15} parent=1 // pred_check
      _
    $region11: #{custom_model_forward.15} parent=1 // pred_check_branch
      %14 = sbr.rel (0) target = $region13
    $region12: #{custom_model_forward.15} parent=1 // pred_region
      _
    $region13: #{custom_model_forward.15} parent=1 // pred_fallthru
      _
    %v15 = vld [vmem:[%s0] sm:$0xff]
    %v16 = vld [vmem:[%s0 + $0x8] sm:$0xff]
    %v17 = vld [vmem:[%s0 + $0x10] sm:$0xff]
    %v18 = vld [vmem:[%s0 + $0x18] sm:$0xff]
    %v19 = vld [vmem:[%s0 + $0x20] sm:$0xff]
    %v20 = vld [vmem:[%s0 + $0x28] sm:$0xff]
    %v21 = vld [vmem:[%s0 + $0x30] sm:$0xff]
    %v22 = vld [vmem:[%s0 + $0x38] sm:$0xff]
    %v23 = vld [vmem:[%s1] sm:$0xff]
    %v24 = vld [vmem:[%s1 + $0x8] sm:$0xff]
    %v25 = vld [vmem:[%s1 + $0x10] sm:$0xff]
    %v26 = vld [vmem:[%s1 + $0x18] sm:$0xff]
    %v27 = vld [vmem:[%s1 + $0x20] sm:$0xff]
    %v28 = vld [vmem:[%s1 + $0x28] sm:$0xff]
    %v29 = vld [vmem:[%s1 + $0x30] sm:$0xff]
    %v30 = vld [vmem:[%s1 + $0x38] sm:$0xff]
    %v31 = vld [vmem:[%s1 + $0x40] sm:$0xff]
    %v32 = vld [vmem:[%s1 + $0x48] sm:$0xff]
    %v33 = vld [vmem:[%s1 + $0x50] sm:$0xff]
    %v34 = vld [vmem:[%s1 + $0x58] sm:$0xff]
    %v35 = vld [vmem:[%s1 + $0x60] sm:$0xff]
    %v36 = vld [vmem:[%s1 + $0x68] sm:$0xff]
    %v37 = vld [vmem:[%s1 + $0x70] sm:$0xff]
    %v38 = vld [vmem:[%s1 + $0x78] sm:$0xff]
    %v39 = vld [vmem:[%s1 + $0x80] sm:$0xff]
    %v40 = vld [vmem:[%s1 + $0x88] sm:$0xff]
    %v41 = vld [vmem:[%s1 + $0x90] sm:$0xff]
    %v42 = vld [vmem:[%s1 + $0x98] sm:$0xff]
    %v43 = vld [vmem:[%s1 + $0xa0] sm:$0xff]
    %v44 = vld [vmem:[%s1 + $0xa8] sm:$0xff]
    %v45 = vld [vmem:[%s1 + $0xb0] sm:$0xff]
    %v46 = vld [vmem:[%s1 + $0xb8] sm:$0xff]
    %v47 = vld [vmem:[%s1 + $0xc0] sm:$0xff]
    %v48 = vld [vmem:[%s1 + $0xc8] sm:$0xff]
    %v49 = vld [vmem:[%s1 + $0xd0] sm:$0xff]
    %v50 = vld [vmem:[%s1 + $0xd8] sm:$0xff]
    %v51 = vld [vmem:[%s1 + $0xe0] sm:$0xff]
    %v52 = vld [vmem:[%s1 + $0xe8] sm:$0xff]
    %v53 = vld [vmem:[%s1 + $0xf0] sm:$0xff]
    %v54 = vld [vmem:[%s1 + $0xf8] sm:$0xff]
    %v55 = vld [vmem:[%s1 + $0x100] sm:$0xff]
    %v56 = vld [vmem:[%s1 + $0x108] sm:$0xff]
    %v57 = vld [vmem:[%s1 + $0x110] sm:$0xff]
    %v58 = vld [vmem:[%s1 + $0x118] sm:$0xff]
    %v59 = vld [vmem:[%s1 + $0x120] sm:$0xff]
    %v60 = vld [vmem:[%s1 + $0x128] sm:$0xff]
    %v61 = vld [vmem:[%s1 + $0x130] sm:$0xff]
    %v62 = vld [vmem:[%s1 + $0x138] sm:$0xff]
    %v63 = vld [vmem:[%s1 + $0x140] sm:$0xff]
    %v64 = vld [vmem:[%s1 + $0x148] sm:$0xff]
    %v65 = vld [vmem:[%s1 + $0x150] sm:$0xff]
    %v66 = vld [vmem:[%s1 + $0x158] sm:$0xff]
    %v67 = vld [vmem:[%s1 + $0x160] sm:$0xff]
    %v68 = vld [vmem:[%s1 + $0x168] sm:$0xff]
    %v69 = vld [vmem:[%s1 + $0x170] sm:$0xff]
    %v70 = vld [vmem:[%s1 + $0x178] sm:$0xff]
    %v71 = vld [vmem:[%s1 + $0x180] sm:$0xff]
    %v72 = vld [vmem:[%s1 + $0x188] sm:$0xff]
    %v73 = vld [vmem:[%s1 + $0x190] sm:$0xff]
    %v74 = vld [vmem:[%s1 + $0x198] sm:$0xff]
    %v75 = vld [vmem:[%s1 + $0x1a0] sm:$0xff]
    %v76 = vld [vmem:[%s1 + $0x1a8] sm:$0xff]
    %v77 = vld [vmem:[%s1 + $0x1b0] sm:$0xff]
    %v78 = vld [vmem:[%s1 + $0x1b8] sm:$0xff]
    %v79 = vld [vmem:[%s1 + $0x1c0] sm:$0xff]
    %v80 = vld [vmem:[%s1 + $0x1c8] sm:$0xff]
    %v81 = vld [vmem:[%s1 + $0x1d0] sm:$0xff]
    %v82 = vld [vmem:[%s1 + $0x1d8] sm:$0xff]
    %v83 = vld [vmem:[%s1 + $0x1e0] sm:$0xff]
    %v84 = vld [vmem:[%s1 + $0x1e8] sm:$0xff]
    %v85 = vld [vmem:[%s1 + $0x1f0] sm:$0xff]
    %v86 = vld [vmem:[%s1 + $0x1f8] sm:$0xff]
    %v87 = vld [vmem:[%s2] sm:$0x3]
    %v89 = vlaneseq
    %v90 = vshrl.u32 %v89, 7
    %v91 = vsub.s32 0, %v90
    %v92 = vrot.slane %v87, %v91
    %v93 = vlaneseq
    %v94 = vshrl.u32 %v93, 7
    %v95 = vsub.s32 1, %v94
    %v96 = vrot.slane %v87, %v95
    %v107 = vunpack.c.l.b16 %v15
    %v108 = vunpack.c.h.b16 %v15
    %v109 = vunpack.c.l.b16 %v16
    %v110 = vunpack.c.h.b16 %v16
    %v111 = vunpack.c.l.b16 %v17
    %v112 = vunpack.c.h.b16 %v17
    %v113 = vunpack.c.l.b16 %v18
    %v114 = vunpack.c.h.b16 %v18
    %v115 = vunpack.c.l.b16 %v19
    %v116 = vunpack.c.h.b16 %v19
    %v117 = vunpack.c.l.b16 %v20
    %v118 = vunpack.c.h.b16 %v20
    %v119 = vunpack.c.l.b16 %v21
    %v120 = vunpack.c.h.b16 %v21
    %v121 = vunpack.c.l.b16 %v22
    %v122 = vunpack.c.h.b16 %v22
    %v123 = vpack.c.b16 %v111, %v107
    %v124 = vpack.c.b16 %v112, %v108
    %v125 = vpack.c.b16 %v113, %v109
    %v126 = vpack.c.b16 %v114, %v110
    %v127 = vpack.c.b16 %v119, %v115
    %v128 = vpack.c.b16 %v120, %v116
    %v129 = vpack.c.b16 %v121, %v117
    %v130 = vpack.c.b16 %v122, %v118
    %v203 = vunpack.c.l.b16 %v23
    %v204 = vunpack.c.h.b16 %v23
    %v205 = vunpack.c.l.b16 %v24
    %v206 = vunpack.c.h.b16 %v24
    %v207 = vunpack.c.l.b16 %v25
    %v208 = vunpack.c.h.b16 %v25
    %v209 = vunpack.c.l.b16 %v26
    %v210 = vunpack.c.h.b16 %v26
    %v211 = vunpack.c.l.b16 %v27
    %v212 = vunpack.c.h.b16 %v27
    %v213 = vunpack.c.l.b16 %v28
    %v214 = vunpack.c.h.b16 %v28
    %v215 = vunpack.c.l.b16 %v29
    %v216 = vunpack.c.h.b16 %v29
    %v217 = vunpack.c.l.b16 %v30
    %v218 = vunpack.c.h.b16 %v30
    %v219 = vunpack.c.l.b16 %v31
    %v220 = vunpack.c.h.b16 %v31
    %v221 = vunpack.c.l.b16 %v32
    %v222 = vunpack.c.h.b16 %v32
    %v223 = vunpack.c.l.b16 %v33
    %v224 = vunpack.c.h.b16 %v33
    %v225 = vunpack.c.l.b16 %v34
    %v226 = vunpack.c.h.b16 %v34
    %v227 = vunpack.c.l.b16 %v35
    %v228 = vunpack.c.h.b16 %v35
    %v229 = vunpack.c.l.b16 %v36
    %v230 = vunpack.c.h.b16 %v36
    %v231 = vunpack.c.l.b16 %v37
    %v232 = vunpack.c.h.b16 %v37
    %v233 = vunpack.c.l.b16 %v38
    %v234 = vunpack.c.h.b16 %v38
    %v235 = vunpack.c.l.b16 %v39
    %v236 = vunpack.c.h.b16 %v39
    %v237 = vunpack.c.l.b16 %v40
    %v238 = vunpack.c.h.b16 %v40
    %v239 = vunpack.c.l.b16 %v41
    %v240 = vunpack.c.h.b16 %v41
    %v241 = vunpack.c.l.b16 %v42
    %v242 = vunpack.c.h.b16 %v42
    %v243 = vunpack.c.l.b16 %v43
    %v244 = vunpack.c.h.b16 %v43
    %v245 = vunpack.c.l.b16 %v44
    %v246 = vunpack.c.h.b16 %v44
    %v247 = vunpack.c.l.b16 %v45
    %v248 = vunpack.c.h.b16 %v45
    %v249 = vunpack.c.l.b16 %v46
    %v250 = vunpack.c.h.b16 %v46
    %v251 = vunpack.c.l.b16 %v47
    %v252 = vunpack.c.h.b16 %v47
    %v253 = vunpack.c.l.b16 %v48
    %v254 = vunpack.c.h.b16 %v48
    %v255 = vunpack.c.l.b16 %v49
    %v256 = vunpack.c.h.b16 %v49
    %v257 = vunpack.c.l.b16 %v50
    %v258 = vunpack.c.h.b16 %v50
    %v259 = vunpack.c.l.b16 %v51
    %v260 = vunpack.c.h.b16 %v51
    %v261 = vunpack.c.l.b16 %v52
    %v262 = vunpack.c.h.b16 %v52
    %v263 = vunpack.c.l.b16 %v53
    %v264 = vunpack.c.h.b16 %v53
    %v265 = vunpack.c.l.b16 %v54
    %v266 = vunpack.c.h.b16 %v54
    %v267 = vunpack.c.l.b16 %v55
    %v268 = vunpack.c.h.b16 %v55
    %v269 = vunpack.c.l.b16 %v56
    %v270 = vunpack.c.h.b16 %v56
    %v271 = vunpack.c.l.b16 %v57
    %v272 = vunpack.c.h.b16 %v57
    %v273 = vunpack.c.l.b16 %v58
    %v274 = vunpack.c.h.b16 %v58
    %v275 = vunpack.c.l.b16 %v59
    %v276 = vunpack.c.h.b16 %v59
    %v277 = vunpack.c.l.b16 %v60
    %v278 = vunpack.c.h.b16 %v60
    %v279 = vunpack.c.l.b16 %v61
    %v280 = vunpack.c.h.b16 %v61
    %v281 = vunpack.c.l.b16 %v62
    %v282 = vunpack.c.h.b16 %v62
    %v283 = vunpack.c.l.b16 %v63
    %v284 = vunpack.c.h.b16 %v63
    %v285 = vunpack.c.l.b16 %v64
    %v286 = vunpack.c.h.b16 %v64
    %v287 = vunpack.c.l.b16 %v65
    %v288 = vunpack.c.h.b16 %v65
    %v289 = vunpack.c.l.b16 %v66
    %v290 = vunpack.c.h.b16 %v66
    %v291 = vunpack.c.l.b16 %v67
    %v292 = vunpack.c.h.b16 %v67
    %v293 = vunpack.c.l.b16 %v68
    %v294 = vunpack.c.h.b16 %v68
    %v295 = vunpack.c.l.b16 %v69
    %v296 = vunpack.c.h.b16 %v69
    %v297 = vunpack.c.l.b16 %v70
    %v298 = vunpack.c.h.b16 %v70
    %v299 = vunpack.c.l.b16 %v71
    %v300 = vunpack.c.h.b16 %v71
    %v301 = vunpack.c.l.b16 %v72
    %v302 = vunpack.c.h.b16 %v72
    %v303 = vunpack.c.l.b16 %v73
    %v304 = vunpack.c.h.b16 %v73
    %v305 = vunpack.c.l.b16 %v74
    %v306 = vunpack.c.h.b16 %v74
    %v307 = vunpack.c.l.b16 %v75
    %v308 = vunpack.c.h.b16 %v75
    %v309 = vunpack.c.l.b16 %v76
    %v310 = vunpack.c.h.b16 %v76
    %v311 = vunpack.c.l.b16 %v77
    %v312 = vunpack.c.h.b16 %v77
    %v313 = vunpack.c.l.b16 %v78
    %v314 = vunpack.c.h.b16 %v78
    %v315 = vunpack.c.l.b16 %v79
    %v316 = vunpack.c.h.b16 %v79
    %v317 = vunpack.c.l.b16 %v80
    %v318 = vunpack.c.h.b16 %v80
    %v319 = vunpack.c.l.b16 %v81
    %v320 = vunpack.c.h.b16 %v81
    %v321 = vunpack.c.l.b16 %v82
    %v322 = vunpack.c.h.b16 %v82
    %v323 = vunpack.c.l.b16 %v83
    %v324 = vunpack.c.h.b16 %v83
    %v325 = vunpack.c.l.b16 %v84
    %v326 = vunpack.c.h.b16 %v84
    %v327 = vunpack.c.l.b16 %v85
    %v328 = vunpack.c.h.b16 %v85
    %v329 = vunpack.c.l.b16 %v86
    %v330 = vunpack.c.h.b16 %v86
    %v331 = vpack.c.b16 %v205, %v203
    %v332 = vpack.c.b16 %v206, %v204
    %v333 = vpack.c.b16 %v209, %v207
    %v334 = vpack.c.b16 %v210, %v208
    %v335 = vpack.c.b16 %v213, %v211
    %v336 = vpack.c.b16 %v214, %v212
    %v337 = vpack.c.b16 %v217, %v215
    %v338 = vpack.c.b16 %v218, %v216
    %v339 = vpack.c.b16 %v221, %v219
    %v340 = vpack.c.b16 %v222, %v220
    %v341 = vpack.c.b16 %v225, %v223
    %v342 = vpack.c.b16 %v226, %v224
    %v343 = vpack.c.b16 %v229, %v227
    %v344 = vpack.c.b16 %v230, %v228
    %v345 = vpack.c.b16 %v233, %v231
    %v346 = vpack.c.b16 %v234, %v232
    %v347 = vpack.c.b16 %v237, %v235
    %v348 = vpack.c.b16 %v238, %v236
    %v349 = vpack.c.b16 %v241, %v239
    %v350 = vpack.c.b16 %v242, %v240
    %v351 = vpack.c.b16 %v245, %v243
    %v352 = vpack.c.b16 %v246, %v244
    %v353 = vpack.c.b16 %v249, %v247
    %v354 = vpack.c.b16 %v250, %v248
    %v355 = vpack.c.b16 %v253, %v251
    %v356 = vpack.c.b16 %v254, %v252
    %v357 = vpack.c.b16 %v257, %v255
    %v358 = vpack.c.b16 %v258, %v256
    %v359 = vpack.c.b16 %v261, %v259
    %v360 = vpack.c.b16 %v262, %v260
    %v361 = vpack.c.b16 %v265, %v263
    %v362 = vpack.c.b16 %v266, %v264
    %v363 = vpack.c.b16 %v269, %v267
    %v364 = vpack.c.b16 %v270, %v268
    %v365 = vpack.c.b16 %v273, %v271
    %v366 = vpack.c.b16 %v274, %v272
    %v367 = vpack.c.b16 %v277, %v275
    %v368 = vpack.c.b16 %v278, %v276
    %v369 = vpack.c.b16 %v281, %v279
    %v370 = vpack.c.b16 %v282, %v280
    %v371 = vpack.c.b16 %v285, %v283
    %v372 = vpack.c.b16 %v286, %v284
    %v373 = vpack.c.b16 %v289, %v287
    %v374 = vpack.c.b16 %v290, %v288
    %v375 = vpack.c.b16 %v293, %v291
    %v376 = vpack.c.b16 %v294, %v292
    %v377 = vpack.c.b16 %v297, %v295
    %v378 = vpack.c.b16 %v298, %v296
    %v379 = vpack.c.b16 %v301, %v299
    %v380 = vpack.c.b16 %v302, %v300
    %v381 = vpack.c.b16 %v305, %v303
    %v382 = vpack.c.b16 %v306, %v304
    %v383 = vpack.c.b16 %v309, %v307
    %v384 = vpack.c.b16 %v310, %v308
    %v385 = vpack.c.b16 %v313, %v311
    %v386 = vpack.c.b16 %v314, %v312
    %v387 = vpack.c.b16 %v317, %v315
    %v388 = vpack.c.b16 %v318, %v316
    %v389 = vpack.c.b16 %v321, %v319
    %v390 = vpack.c.b16 %v322, %v320
    %v391 = vpack.c.b16 %v325, %v323
    %v392 = vpack.c.b16 %v326, %v324
    %v393 = vpack.c.b16 %v329, %v327
    %v394 = vpack.c.b16 %v330, %v328
    %459 = vmatprep.subr.bf16.mxu0 %v346
    %460 = vmatpush1.bf16.msra.mxu0 %v345
    %461 = vmatprep.subr.bf16.mxu0 %v344
    %462 = vmatpush1.bf16.msra.mxu0 %v343
    %463 = vmatprep.subr.bf16.mxu0 %v342
    %464 = vmatpush1.bf16.msra.mxu0 %v341
    %465 = vmatprep.subr.bf16.mxu0 %v340
    %466 = vmatpush1.bf16.msra.mxu0 %v339
    %467 = vmatprep.subr.bf16.mxu0 %v338
    %468 = vmatpush1.bf16.msra.mxu0 %v337
    %469 = vmatprep.subr.bf16.mxu0 %v336
    %470 = vmatpush1.bf16.msra.mxu0 %v335
    %471 = vmatprep.subr.bf16.mxu0 %v334
    %472 = vmatpush1.bf16.msra.mxu0 %v333
    %473 = vmatprep.subr.bf16.mxu0 %v332
    %474 = vmatpush1.bf16.msra.mxu0 %v331
    %475 = vmatprep.subr.bf16.mxu0 %v362
    %476 = vmatpush2.bf16.msra.mxu0 %v361
    %477 = vmatprep.subr.bf16.mxu0 %v360
    %478 = vmatpush2.bf16.msra.mxu0 %v359
    %479 = vmatprep.subr.bf16.mxu0 %v358
    %480 = vmatpush2.bf16.msra.mxu0 %v357
    %481 = vmatprep.subr.bf16.mxu0 %v356
    %482 = vmatpush2.bf16.msra.mxu0 %v355
    %483 = vmatprep.subr.bf16.mxu0 %v354
    %484 = vmatpush2.bf16.msra.mxu0 %v353
    %485 = vmatprep.subr.bf16.mxu0 %v352
    %486 = vmatpush2.bf16.msra.mxu0 %v351
    %487 = vmatprep.subr.bf16.mxu0 %v350
    %488 = vmatpush2.bf16.msra.mxu0 %v349
    %489 = vmatprep.subr.bf16.mxu0 %v348
    %490 = vmatpush2.bf16.msra.mxu0 %v347
    %491 = vmatprep.mubr.bf16.mxu0 %v124
    %492 = vmatmul.mubr.bf16.gmra.mxu0 %v123
    %v493 = vpop.f32.mrf.mxu0
    %v494 = vadd.f32 %v92, %v493
    %v495 = vpop.f32.mrf.mxu0
    %v496 = vadd.f32 %v96, %v495
    %v497 = vpop.f32.mrf.mxu0
    %v498 = vadd.f32 %v92, %v497
    %v499 = vpop.f32.mrf.mxu0
    %v500 = vadd.f32 %v96, %v499
    %501 = vmatprep.mubr.bf16.mxu0 %v128
    %502 = vmatmul.mubr.bf16.gmra.mxu0 %v127
    %v503 = vpop.f32.mrf.mxu0
    %v504 = vadd.f32 %v92, %v503
    %v505 = vpop.f32.mrf.mxu0
    %v506 = vadd.f32 %v96, %v505
    %v507 = vpop.f32.mrf.mxu0
    %v508 = vadd.f32 %v92, %v507
    %v509 = vpop.f32.mrf.mxu0
    %v510 = vadd.f32 %v96, %v509
    %511 = vdwg.mxu0
    %512 = vmatprep.subr.bf16.mxu0 %v378
    %513 = vmatpush1.bf16.msra.mxu0 %v377
    %514 = vmatprep.subr.bf16.mxu0 %v376
    %515 = vmatpush1.bf16.msra.mxu0 %v375
    %516 = vmatprep.subr.bf16.mxu0 %v374
    %517 = vmatpush1.bf16.msra.mxu0 %v373
    %518 = vmatprep.subr.bf16.mxu0 %v372
    %519 = vmatpush1.bf16.msra.mxu0 %v371
    %520 = vmatprep.subr.bf16.mxu0 %v370
    %521 = vmatpush1.bf16.msra.mxu0 %v369
    %522 = vmatprep.subr.bf16.mxu0 %v368
    %523 = vmatpush1.bf16.msra.mxu0 %v367
    %524 = vmatprep.subr.bf16.mxu0 %v366
    %525 = vmatpush1.bf16.msra.mxu0 %v365
    %526 = vmatprep.subr.bf16.mxu0 %v364
    %527 = vmatpush1.bf16.msra.mxu0 %v363
    %528 = vmatprep.subr.bf16.mxu0 %v394
    %529 = vmatpush2.bf16.msra.mxu0 %v393
    %530 = vmatprep.subr.bf16.mxu0 %v392
    %531 = vmatpush2.bf16.msra.mxu0 %v391
    %532 = vmatprep.subr.bf16.mxu0 %v390
    %533 = vmatpush2.bf16.msra.mxu0 %v389
    %534 = vmatprep.subr.bf16.mxu0 %v388
    %535 = vmatpush2.bf16.msra.mxu0 %v387
    %536 = vmatprep.subr.bf16.mxu0 %v386
    %537 = vmatpush2.bf16.msra.mxu0 %v385
    %538 = vmatprep.subr.bf16.mxu0 %v384
    %539 = vmatpush2.bf16.msra.mxu0 %v383
    %540 = vmatprep.subr.bf16.mxu0 %v382
    %541 = vmatpush2.bf16.msra.mxu0 %v381
    %542 = vmatprep.subr.bf16.mxu0 %v380
    %543 = vmatpush2.bf16.msra.mxu0 %v379
    %544 = vmatprep.mubr.bf16.mxu0 %v126
    %545 = vmatmul.mubr.bf16.gmra.mxu0 %v125
    %v546 = vpop.f32.mrf.mxu0
    %v547 = vadd.f32 %v494, %v546
    %v548 = vpop.f32.mrf.mxu0
    %v549 = vadd.f32 %v496, %v548
    %v550 = vpop.f32.mrf.mxu0
    %v551 = vadd.f32 %v498, %v550
    %v552 = vpop.f32.mrf.mxu0
    %v553 = vadd.f32 %v500, %v552
    %554 = vmatprep.mubr.bf16.mxu0 %v130
    %555 = vmatmul.mubr.bf16.gmra.mxu0 %v129
    %v556 = vpop.f32.mrf.mxu0
    %v557 = vadd.f32 %v504, %v556
    %v558 = vpop.f32.mrf.mxu0
    %v559 = vadd.f32 %v506, %v558
    %v560 = vpop.f32.mrf.mxu0
    %v561 = vadd.f32 %v508, %v560
    %v562 = vpop.f32.mrf.mxu0
    %v563 = vadd.f32 %v510, %v562
    %564 = vdwg.mxu0
    %565 = vst [vmem:[#allocation2] sm:$0xff] %v547
    %566 = vst [vmem:[#allocation2 + $0x8] sm:$0xff] %v549
    %567 = vst [vmem:[#allocation2 + $0x10] sm:$0xff] %v551
    %568 = vst [vmem:[#allocation2 + $0x18] sm:$0xff] %v553
    %569 = vst [vmem:[#allocation2 + $0x20] sm:$0xff] %v557
    %570 = vst [vmem:[#allocation2 + $0x28] sm:$0xff] %v559
    %571 = vst [vmem:[#allocation2 + $0x30] sm:$0xff] %v561
    %572 = vst [vmem:[#allocation2 + $0x38] sm:$0xff] %v563
    // Predicated region
    $region14: #{custom_model_forward.15} parent=1 // pred_check
      _
    $region15: #{custom_model_forward.15} parent=1 // pred_check_branch
      %574 = sbr.rel (0) target = $region17
    $region16: #{custom_model_forward.15} parent=1 // pred_region
      %s576 = ssub.s32 1024, 1024
      %577 = vsyncadd [#allocation3], %s576
      %s578 = sshll.u32 [#allocation2], 4
      %s579 = int_to_ptr.vmem [resolvable:$true] %s578
      %584 = dma.vmem_to_hbm [thread:$0]  %s579, 1024, %s3, [#allocation3], 256, 256, 16
    $region17: #{custom_model_forward.15} parent=1 // pred_fallthru
      _
    // Predicated region
    $region18: #{custom_model_forward.15} parent=1 // pred_check
      _
    $region19: #{custom_model_forward.15} parent=1 // pred_check_branch
      %586 = sbr.rel (0) target = $region21
    $region20: #{custom_model_forward.15} parent=1 // pred_region
      %587 = dma.done [#allocation3], 1024
    $region21: #{custom_model_forward.15} parent=1 // pred_fallthru
      _
    %588 = vsyncpa [#allocation3], 1

</llo_original>
